<compile_context>
chip_gen: v7x
topology: tpu7x:2x2x1
jax: 0.10.0
libtpu: 0.0.40
codegen_flags: <defaults>
</compile_context>

<pallas_src>
import functools
import math

import jax
import jax.numpy as jnp
from jax import lax
from jax.experimental import pallas as pl
from jax.experimental.pallas import tpu as pltpu

# ----------------------------- configuration -------------------------------
B = 2                      # batch
C = 3                      # channels
HW = 32                    # raw input spatial size

# teacher (attention-rollout source)
T_PATCH = 8
T_GRID = HW // T_PATCH         # 4
T_NPATCH = T_GRID * T_GRID     # 16
S_REAL = T_NPATCH + 1          # 17 tokens (cls + patches)
SP = 32                        # padded token count
T_DIM = 64
T_HEADS = 4
T_DH = T_DIM // T_HEADS
T_LAYERS = 2
T_PDIM = C * T_PATCH * T_PATCH  # 192
DISCARD_RATIO = 0.95
N2 = S_REAL * S_REAL            # 289 real attention entries
K_KEEP = N2 - int(N2 * DISCARD_RATIO)  # 15 kept values
PACK_W = 384                    # packed comparand lanes  (>= 289, mult of 128)
PACK_H = 320                    # packed candidate sublanes (>= 289, mult of 8)
CHUNK = 64                      # candidate chunk height for the count pass

# student
S_IMG = 224
S_PATCH = 16
S_GRID = S_IMG // S_PATCH      # 14
S_NPATCH = S_GRID * S_GRID     # 196
S_PDIM = C * S_PATCH * S_PATCH  # 768
S_HID = 128
N_CLASSES = 10
OUT_PAD = 128                  # lane-dense output slab


# ----------------------------- helpers (glue) ------------------------------
def patchify(x, patch):
    """[B, C, H, W] -> [B, n_patches, C*patch*patch] (channel-major per patch)."""
    b, c, hh, ww = x.shape
    gh, gw = hh // patch, ww // patch
    x = x.reshape(b, c, gh, patch, gw, patch)
    x = x.transpose(0, 2, 4, 1, 3, 5)          # [B, gh, gw, C, ph, pw]
    return x.reshape(b, gh * gw, c * patch * patch)


def _bilinear_matrix(out_size, in_size):
    """Half-pixel (align_corners=False) bilinear resize matrix [out, in]."""
    src = (jnp.arange(out_size, dtype=jnp.float32) + 0.5) * (in_size / out_size) - 0.5
    lo = jnp.floor(src)
    w_hi = src - lo
    lo_i = jnp.clip(lo.astype(jnp.int32), 0, in_size - 1)
    hi_i = jnp.clip(lo.astype(jnp.int32) + 1, 0, in_size - 1)
    rows = jnp.arange(out_size)
    m = jnp.zeros((out_size, in_size), jnp.float32)
    m = m.at[rows, lo_i].add(1.0 - w_hi)
    m = m.at[rows, hi_i].add(w_hi)
    return m


# -------------- fused teacher (patch-embed + attention + rollout) ----------
def _teacher_rollout_kernel(pp_ref, wpatch_ref, tokb_ref, wqkv_ref, wo_ref,
                            hm_ref, bd_ref, rpack_ref, mrow_ref, ppack_ref,
                            qcol_ref, out_ref):
    f32 = jnp.float32
    bf16 = jnp.bfloat16

    # patch embedding; cls row of pp is zero so tok_bias supplies cls+pos.
    tok = jnp.dot(pp_ref[0], wpatch_ref[...],
                  preferred_element_type=f32) + tokb_ref[...]        # [32, 64] f32

    # small in-kernel constants (built once per grid step, before the layer loop)
    r32 = lax.broadcasted_iota(jnp.int32, (SP, SP), 0)
    c32 = lax.broadcasted_iota(jnp.int32, (SP, SP), 1)
    eye = (r32 == c32).astype(f32)
    is_00 = (r32 == 0) & (c32 == 0)                 # cls->cls entry never discarded
    lane128 = lax.broadcasted_iota(jnp.int32, (1, T_HEADS * SP), 1)
    key_mask = jnp.where((lane128 % SP) < S_REAL, 0.0, -1e30).astype(f32)  # [1,128]

    hm = hm_ref[...]        # [128, 64] bf16 head-column selector
    bd = bd_ref[...]        # [128,128] bf16 block-diag ones
    rpack = rpack_ref[...]  # [32, 384] f32 one-hot (row packing)
    mrow = mrow_ref[...]    # [32, 384] f32 mask     (row packing)
    ppack = ppack_ref[...]  # [320, 32] f32 one-hot  (col packing)
    qcol = qcol_ref[...]    # [320, 32] f32 mask     (col packing)

    result = None           # rollout product (full matrix, layers 0..L-2)
    cls_row = None          # [1,32] cls row after the last layer
    for l in range(T_LAYERS):
        tok_b = tok.astype(bf16)
        # full-width QKV projections (1/sqrt(d_h) folded into wq at init)
        q = jnp.dot(tok_b, wqkv_ref[3 * l + 0], preferred_element_type=f32)
        k = jnp.dot(tok_b, wqkv_ref[3 * l + 1], preferred_element_type=f32)
        v = jnp.dot(tok_b, wqkv_ref[3 * l + 2], preferred_element_type=f32)

        # stacked per-head K / V: rows h*32..h*32+31 = k (resp. v) masked to head h
        kstack = jnp.concatenate([k.astype(bf16)] * T_HEADS, axis=0) * hm  # [128,64]
        vstack = jnp.concatenate([v.astype(bf16)] * T_HEADS, axis=0) * hm  # [128,64]

        # scores[i, h*32+j] = q_h[i] . k_h[j]  — one MXU op
        scores = lax.dot_general(q.astype(bf16), kstack,
                                 (((1,), (1,)), ((), ())),
                                 preferred_element_type=f32)               # [32,128]
        scores = scores + key_mask
        m = jnp.max(scores, axis=-1, keepdims=True)       # row-global max (valid per block)
        e = jnp.exp(scores - m)
        den = jnp.dot(e, bd, preferred_element_type=f32)  # per-head denominators
        att = e / den                                     # [32,128] exact softmax

        # 'max' head fusion over the four 32-lane blocks
        a_fused = jnp.maximum(
            jnp.maximum(att[:, 0 * SP:1 * SP], att[:, 1 * SP:2 * SP]),
            jnp.maximum(att[:, 2 * SP:3 * SP], att[:, 3 * SP:4 * SP]))     # [32,32]

        ctx = jnp.dot(att.astype(bf16), vstack, preferred_element_type=f32)  # [32,64]
        tok = tok + jnp.dot(ctx.astype(bf16), wo_ref[l],
                            preferred_element_type=f32)
        # TODO(synk): synthetic teacher skips the MLP block of a full ViT layer.

        # ---- vectorised top-K threshold (rank/count, no serial max chain) ----
        # Pack the 289 real values along lanes (comparands) and along sublanes
        # (candidates) via one-hot matmuls; padded slots hold exactly 0.0 which
        # is below every (strictly positive) real softmax value.
        row_vals = jnp.sum(
            jnp.dot(a_fused, rpack, preferred_element_type=f32) * mrow,
            axis=0, keepdims=True)                                        # [1, 384]
        col_vals = jnp.sum(
            jnp.dot(ppack, a_fused, preferred_element_type=f32) * qcol,
            axis=1, keepdims=True)                                        # [320, 1]

        chunk_mins = []
        for cch in range(PACK_H // CHUNK):
            col_c = col_vals[cch * CHUNK:(cch + 1) * CHUNK, :]            # [64, 1]
            cnt = jnp.sum((row_vals > col_c).astype(f32), axis=1,
                          keepdims=True)                                  # strict-greater count
            cand = jnp.where(cnt < float(K_KEEP), col_c, jnp.inf)
            chunk_mins.append(jnp.min(cand))
        thr = functools.reduce(jnp.minimum, chunk_mins)
        # TODO(synk): ties at the threshold are kept (torch.topk keeps exactly k).

        a = jnp.where((a_fused >= thr) | is_00, a_fused, 0.0)
        a = (a + eye) * 0.5
        if l < T_LAYERS - 1:
            a = a / jnp.sum(a, axis=-1, keepdims=True)
            result = a if result is None else jnp.dot(
                a, result, preferred_element_type=f32)
        else:
            # only the cls row of the final product is ever used
            arow = a[0:1, :]
            arow = arow / jnp.sum(arow, axis=-1, keepdims=True)           # [1,32]
            cls_row = arow if result is None else jnp.dot(
                arow, result, preferred_element_type=f32)                 # [1,32]

    # per-batch normalisation by the max over the 16 patch entries (lanes 1..16)
    lane32 = lax.broadcasted_iota(jnp.int32, (1, SP), 1)
    patch_sel = (lane32 >= 1) & (lane32 < S_REAL)
    mmax = jnp.max(jnp.where(patch_sel, cls_row, -jnp.inf))
    cls_norm = cls_row / mmax                                             # [1,32]
    out_ref[0] = jnp.concatenate(
        [cls_norm, jnp.zeros((1, OUT_PAD - SP), f32)], axis=1)            # [1,128]


def attention_rollout(x, params):
    patches = patchify(x, T_PATCH)                                # [B, 16, 192]
    pp = jnp.zeros((B, SP, T_PDIM), jnp.bfloat16)
    pp = pp.at[:, 1:S_REAL, :].set(patches.astype(jnp.bfloat16))  # row 0 = cls slot

    out = pl.pallas_call(
        _teacher_rollout_kernel,
        out_shape=jax.ShapeDtypeStruct((B, 1, OUT_PAD), jnp.float32),
        grid=(B,),
        in_specs=[
            pl.BlockSpec((1, SP, T_PDIM), lambda b: (b, 0, 0)),
            pl.BlockSpec((T_PDIM, T_DIM), lambda b: (0, 0)),
            pl.BlockSpec((SP, T_DIM), lambda b: (0, 0)),
            pl.BlockSpec((T_LAYERS * 3, T_DIM, T_DIM), lambda b: (0, 0, 0)),
            pl.BlockSpec((T_LAYERS, T_DIM, T_DIM), lambda b: (0, 0, 0)),
            pl.BlockSpec((T_HEADS * SP, T_DIM), lambda b: (0, 0)),
            pl.BlockSpec((T_HEADS * SP, T_HEADS * SP), lambda b: (0, 0)),
            pl.BlockSpec((SP, PACK_W), lambda b: (0, 0)),
            pl.BlockSpec((SP, PACK_W), lambda b: (0, 0)),
            pl.BlockSpec((PACK_H, SP), lambda b: (0, 0)),
            pl.BlockSpec((PACK_H, SP), lambda b: (0, 0)),
        ],
        out_specs=pl.BlockSpec((1, 1, OUT_PAD), lambda b: (b, 0, 0)),
        compiler_params=pltpu.CompilerParams(dimension_semantics=("parallel",)),
    )(pp, params["t_wpatch"], params["t_tok_bias"], params["t_wqkv"],
      params["t_wo"], params["t_hm"], params["t_bd"], params["t_rpack"],
      params["t_mrow"], params["t_ppack"], params["t_qcol"])

    # cls-row attention to the 16 patches, already max-normalised in-kernel
    return out[:, 0, 1:S_REAL].reshape(B, T_GRID, T_GRID)


# ------------------------------ student kernel -----------------------------
def _student_kernel(p_ref, w1_ref, b1_ref, w2_ref, b2_ref, o_ref):
    h = jnp.dot(p_ref[0], w1_ref[...],
                preferred_element_type=jnp.float32) + b1_ref[...]      # [196,128]
    h = jax.nn.gelu(h, approximate=True)   # TODO(synk): torch default GELU is exact erf
    pooled = jnp.mean(h, axis=0, keepdims=True)                        # [1, 128]
    o_ref[0] = jnp.dot(pooled.astype(jnp.bfloat16), w2_ref[...],
                       preferred_element_type=jnp.float32) + b2_ref[...]


def student_forward(x, params):
    # torchvision resize(x, (224,224), antialias=True): antialias is a no-op on
    # upscale, so this is half-pixel bilinear expressed as two constant matmuls.
    # TODO(synk): verify bit-level parity with torchvision's resize kernel.
    rh = params["s_resize_h"]                                # [224, 32]
    rw = params["s_resize_w"]                                # [224, 32]
    x224 = jnp.einsum("oh,bchw,pw->bcop", rh, x, rw)          # [B,3,224,224]
    patches = patchify(x224.astype(jnp.bfloat16), S_PATCH)    # [B,196,768] bf16

    logits_pad = pl.pallas_call(
        _student_kernel,
        out_shape=jax.ShapeDtypeStruct((B, 1, OUT_PAD), jnp.float32),
        grid=(B,),
        in_specs=[
            pl.BlockSpec((1, S_NPATCH, S_PDIM), lambda b: (b, 0, 0)),
            pl.BlockSpec((S_PDIM, S_HID), lambda b: (0, 0)),
            pl.BlockSpec((1, S_HID), lambda b: (0, 0)),
            pl.BlockSpec((S_HID, OUT_PAD), lambda b: (0, 0)),
            pl.BlockSpec((1, OUT_PAD), lambda b: (0, 0)),
        ],
        out_specs=pl.BlockSpec((1, 1, OUT_PAD), lambda b: (b, 0, 0)),
        compiler_params=pltpu.CompilerParams(dimension_semantics=("parallel",)),
    )(patches, params["s_w1"], params["s_b1"], params["s_w2"], params["s_b2"])
    return logits_pad[:, 0, :N_CLASSES]                       # [B, 10]


# ------------------------------- full forward ------------------------------
def new_model_forward(x, params):
    target = attention_rollout(x, params)    # teacher rollout on the raw input
    output = student_forward(x, params)      # student on the 224x224 resize
    return output, target


# --------------------------- deterministic params --------------------------
def init_params(key):
    ks = jax.random.split(key, 16)
    p = {}

    # teacher patch embedding / cls / pos  -> packed kernel inputs
    t_patch_w = 0.05 * jax.random.normal(ks[0], (T_PDIM, T_DIM), jnp.float32)
    t_cls = 0.05 * jax.random.normal(ks[1], (1, 1, T_DIM), jnp.float32)
    t_pos = 0.05 * jax.random.normal(ks[2], (1, S_REAL, T_DIM), jnp.float32)
    tok_bias = jnp.zeros((SP, T_DIM), jnp.float32)
    tok_bias = tok_bias.at[0].set(t_cls[0, 0] + t_pos[0, 0])
    tok_bias = tok_bias.at[1:S_REAL].set(t_pos[0, 1:])
    p["t_wpatch"] = t_patch_w.astype(jnp.bfloat16)
    p["t_tok_bias"] = tok_bias

    # teacher attention weights: [wq*scale, wk, wv] per layer
    scale = 1.0 / math.sqrt(T_DH)
    wqkv_list, wo_list = [], []
    for l in range(T_LAYERS):
        base = 5 + 4 * l
        wq = 0.1 * jax.random.normal(ks[base + 0], (T_DIM, T_DIM), jnp.float32) * scale
        wk = 0.1 * jax.random.normal(ks[base + 1], (T_DIM, T_DIM), jnp.float32)
        wv = 0.1 * jax.random.normal(ks[base + 2], (T_DIM, T_DIM), jnp.float32)
        wo = 0.1 * jax.random.normal(ks[base + 3], (T_DIM, T_DIM), jnp.float32)
        wqkv_list += [wq, wk, wv]
        wo_list.append(wo)
    p["t_wqkv"] = jnp.stack(wqkv_list, axis=0).astype(jnp.bfloat16)  # [L*3, 64, 64]
    p["t_wo"] = jnp.stack(wo_list, axis=0).astype(jnp.bfloat16)      # [L, 64, 64]

    # teacher kernel constants
    rr = jnp.arange(T_HEADS * SP)[:, None]
    dd = jnp.arange(T_DIM)[None, :]
    p["t_hm"] = ((dd // T_DH) == (rr // SP)).astype(jnp.bfloat16)    # [128, 64]
    jj = jnp.arange(T_HEADS * SP)[:, None]
    cc = jnp.arange(T_HEADS * SP)[None, :]
    p["t_bd"] = ((jj // SP) == (cc // SP)).astype(jnp.bfloat16)      # [128,128]
    # packing selectors: value at packed position n (n = 17*i + j) = a_fused[i, j]
    cw = jnp.arange(PACK_W)[None, :]
    srow = jnp.arange(SP)[:, None]
    p["t_rpack"] = ((srow == (cw % S_REAL)) & (cw < N2)).astype(jnp.float32)   # [32,384]
    p["t_mrow"] = ((srow == (cw // S_REAL)) & (cw < N2)).astype(jnp.float32)   # [32,384]
    sh = jnp.arange(PACK_H)[:, None]
    slan = jnp.arange(SP)[None, :]
    p["t_ppack"] = (((sh // S_REAL) == slan) & (sh < N2)).astype(jnp.float32)  # [320,32]
    p["t_qcol"] = (((sh % S_REAL) == slan) & (sh < N2)).astype(jnp.float32)    # [320,32]

    # student
    p["s_w1"] = (0.02 * jax.random.normal(ks[3], (S_PDIM, S_HID), jnp.float32)
                 ).astype(jnp.bfloat16)
    p["s_b1"] = jnp.zeros((1, S_HID), jnp.float32)
    s_w2 = 0.02 * jax.random.normal(ks[4], (S_HID, N_CLASSES), jnp.float32)
    p["s_w2"] = (jnp.zeros((S_HID, OUT_PAD), jnp.float32)
                 .at[:, :N_CLASSES].set(s_w2)).astype(jnp.bfloat16)
    p["s_b2"] = jnp.zeros((1, OUT_PAD), jnp.float32)
    p["s_resize_h"] = _bilinear_matrix(S_IMG, HW)
    p["s_resize_w"] = _bilinear_matrix(S_IMG, HW)
    return p


if __name__ == "__main__":
    key = jax.random.PRNGKey(0)
    kx, kp = jax.random.split(key)
    params = init_params(kp)
    x = jax.random.normal(kx, (B, C, HW, HW), jnp.float32)

    fwd = jax.jit(functools.partial(new_model_forward, params=params))
    output, target = fwd(x)
    jax.block_until_ready((output, target))

    assert output.shape == (B, N_CLASSES)
    assert target.shape == (B, T_GRID, T_GRID)
    print("KERNEL_OK")
</pallas_src>

<mosaic_0001>
module attributes {stable_mosaic.version = 11 : i64} {
  func.func @_student_kernel(%arg0: i32, %arg1: memref<1x196x768xbf16, #tpu.memory_space<vmem>>, %arg2: memref<768x128xbf16, #tpu.memory_space<vmem>>, %arg3: memref<1x128xf32, #tpu.memory_space<vmem>>, %arg4: memref<128x128xbf16, #tpu.memory_space<vmem>>, %arg5: memref<1x128xf32, #tpu.memory_space<vmem>>, %arg6: memref<1x1x128xf32, #tpu.memory_space<vmem>>) attributes {dimension_semantics = [#tpu.dimension_semantics<parallel>], iteration_bounds = array<i64: 2>, scalar_prefetch = 0 : i64, scratch_operands = 0 : i64, tpu.core_type = #tpu.core_type<tc>, window_params = [{transform_indices = @transform_0, window_bounds = array<i64: 1, 196, 768>}, {pipeline_mode = #tpu.pipeline_mode<synchronous>, transform_indices = @transform_1, window_bounds = array<i64: 768, 128>}, {pipeline_mode = #tpu.pipeline_mode<synchronous>, transform_indices = @transform_2, window_bounds = array<i64: 1, 128>}, {pipeline_mode = #tpu.pipeline_mode<synchronous>, transform_indices = @transform_3, window_bounds = array<i64: 128, 128>}, {pipeline_mode = #tpu.pipeline_mode<synchronous>, transform_indices = @transform_4, window_bounds = array<i64: 1, 128>}, {transform_indices = @transform_5, window_bounds = array<i64: 1, 1, 128>}]} {
    %c0 = arith.constant 0 : index
    %c0_0 = arith.constant 0 : index
    %c0_1 = arith.constant 0 : index
    %0 = vector.load %arg1[%c0, %c0_0, %c0_1] : memref<1x196x768xbf16, #tpu.memory_space<vmem>>, vector<1x196x768xbf16>
    %1 = vector.shape_cast %0 : vector<1x196x768xbf16> to vector<196x768xbf16>
    %c0_2 = arith.constant 0 : index
    %c0_3 = arith.constant 0 : index
    %2 = vector.load %arg2[%c0_2, %c0_3] : memref<768x128xbf16, #tpu.memory_space<vmem>>, vector<768x128xbf16>
    %cst = arith.constant dense<0.000000e+00> : vector<196x128xf32>
    %3 = tpu.matmul %1, %2, %cst {dimension_numbers = #tpu.dot_dimension_numbers<[1], [0], [0], [1], [0, 0, 1, 1], [], []>} : vector<196x768xbf16>, vector<768x128xbf16>, vector<196x128xf32> -> vector<196x128xf32>
    %c0_4 = arith.constant 0 : index
    %c0_5 = arith.constant 0 : index
    %4 = vector.load %arg3[%c0_4, %c0_5] : memref<1x128xf32, #tpu.memory_space<vmem>>, vector<1x128xf32>
    %5 = vector.broadcast %4 : vector<1x128xf32> to vector<196x128xf32>
    %6 = arith.addf %3, %5 : vector<196x128xf32>
    %7 = arith.mulf %6, %6 : vector<196x128xf32>
    %8 = arith.mulf %6, %7 : vector<196x128xf32>
    %cst_6 = arith.constant 4.471500e-02 : f32
    %9 = vector.broadcast %cst_6 : f32 to vector<196x128xf32>
    %10 = arith.mulf %9, %8 : vector<196x128xf32>
    %11 = arith.addf %6, %10 : vector<196x128xf32>
    %cst_7 = arith.constant 0.797884583 : f32
    %12 = vector.broadcast %cst_7 : f32 to vector<196x128xf32>
    %13 = arith.mulf %12, %11 : vector<196x128xf32>
    %14 = math.tanh %13 : vector<196x128xf32>
    %cst_8 = arith.constant 1.000000e+00 : f32
    %15 = vector.broadcast %cst_8 : f32 to vector<196x128xf32>
    %16 = arith.addf %15, %14 : vector<196x128xf32>
    %cst_9 = arith.constant 5.000000e-01 : f32
    %17 = vector.broadcast %cst_9 : f32 to vector<196x128xf32>
    %18 = arith.mulf %17, %16 : vector<196x128xf32>
    %19 = arith.mulf %6, %18 : vector<196x128xf32>
    %cst_10 = arith.constant dense<0.000000e+00> : vector<128xf32>
    %20 = vector.multi_reduction <add>, %19, %cst_10 [0] : vector<196x128xf32> to vector<128xf32>
    %21 = vector.shape_cast %20 : vector<128xf32> to vector<1x128xf32>
    %cst_11 = arith.constant 1.960000e+02 : f32
    %22 = vector.broadcast %cst_11 : f32 to vector<1x128xf32>
    %23 = arith.divf %21, %22 : vector<1x128xf32>
    %24 = arith.truncf %23 : vector<1x128xf32> to vector<1x128xbf16>
    %c0_12 = arith.constant 0 : index
    %c0_13 = arith.constant 0 : index
    %25 = vector.load %arg4[%c0_12, %c0_13] : memref<128x128xbf16, #tpu.memory_space<vmem>>, vector<128x128xbf16>
    %cst_14 = arith.constant dense<0.000000e+00> : vector<1x128xf32>
    %26 = tpu.matmul %24, %25, %cst_14 {dimension_numbers = #tpu.dot_dimension_numbers<[1], [0], [0], [1], [0, 0, 1, 1], [], []>} : vector<1x128xbf16>, vector<128x128xbf16>, vector<1x128xf32> -> vector<1x128xf32>
    %c0_15 = arith.constant 0 : index
    %c0_16 = arith.constant 0 : index
    %27 = vector.load %arg5[%c0_15, %c0_16] : memref<1x128xf32, #tpu.memory_space<vmem>>, vector<1x128xf32>
    %28 = arith.addf %26, %27 : vector<1x128xf32>
    %c0_17 = arith.constant 0 : index
    %c0_18 = arith.constant 0 : index
    %c0_19 = arith.constant 0 : index
    %29 = vector.load %arg6[%c0_17, %c0_18, %c0_19] : memref<1x1x128xf32, #tpu.memory_space<vmem>>, vector<1x1x128xf32>
    %30 = vector.shape_cast %29 : vector<1x1x128xf32> to vector<1x128xf32>
    %31 = vector.shape_cast %28 : vector<1x128xf32> to vector<1x1x128xf32>
    tpu.vector_store %arg6[%c0_17, %c0_18, %c0_19], %31 {strides = array<i32>} : memref<1x1x128xf32, #tpu.memory_space<vmem>>, vector<1x1x128xf32>,
    return
  }
  func.func @transform_0(%arg0: i32) -> (i32, i32, i32) {
    %c0_i32 = arith.constant 0 : i32
    %c0_i32_0 = arith.constant 0 : i32
    %c0_i32_1 = arith.constant 0 : i32
    return %arg0, %c0_i32, %c0_i32_0 : i32, i32, i32
  }
  func.func @transform_1(%arg0: i32) -> (i32, i32) {
    %c0_i32 = arith.constant 0 : i32
    %c0_i32_0 = arith.constant 0 : i32
    %c0_i32_1 = arith.constant 0 : i32
    return %c0_i32, %c0_i32_0 : i32, i32
  }
  func.func @transform_2(%arg0: i32) -> (i32, i32) {
    %c0_i32 = arith.constant 0 : i32
    %c0_i32_0 = arith.constant 0 : i32
    %c0_i32_1 = arith.constant 0 : i32
    return %c0_i32, %c0_i32_0 : i32, i32
  }
  func.func @transform_3(%arg0: i32) -> (i32, i32) {
    %c0_i32 = arith.constant 0 : i32
    %c0_i32_0 = arith.constant 0 : i32
    %c0_i32_1 = arith.constant 0 : i32
    return %c0_i32, %c0_i32_0 : i32, i32
  }
  func.func @transform_4(%arg0: i32) -> (i32, i32) {
    %c0_i32 = arith.constant 0 : i32
    %c0_i32_0 = arith.constant 0 : i32
    %c0_i32_1 = arith.constant 0 : i32
    return %c0_i32, %c0_i32_0 : i32, i32
  }
  func.func @transform_5(%arg0: i32) -> (i32, i32, i32) {
    %c0_i32 = arith.constant 0 : i32
    %c0_i32_0 = arith.constant 0 : i32
    %c0_i32_1 = arith.constant 0 : i32
    return %arg0, %c0_i32, %c0_i32_0 : i32, i32, i32
  }
}

module attributes {stable_mosaic.version = 11 : i64} {
  func.func @_teacher_rollout_kernel(%arg0: i32, %arg1: memref<1x32x192xbf16, #tpu.memory_space<vmem>>, %arg2: memref<192x64xbf16, #tpu.memory_space<vmem>>, %arg3: memref<32x64xf32, #tpu.memory_space<vmem>>, %arg4: memref<6x64x64xbf16, #tpu.memory_space<vmem>>, %arg5: memref<2x64x64xbf16, #tpu.memory_space<vmem>>, %arg6: memref<128x64xbf16, #tpu.memory_space<vmem>>, %arg7: memref<128x128xbf16, #tpu.memory_space<vmem>>, %arg8: memref<32x384xf32, #tpu.memory_space<vmem>>, %arg9: memref<32x384xf32, #tpu.memory_space<vmem>>, %arg10: memref<320x32xf32, #tpu.memory_space<vmem>>, %arg11: memref<320x32xf32, #tpu.memory_space<vmem>>, %arg12: memref<1x1x128xf32, #tpu.memory_space<vmem>>) attributes {dimension_semantics = [#tpu.dimension_semantics<parallel>], iteration_bounds = array<i64: 2>, scalar_prefetch = 0 : i64, scratch_operands = 0 : i64, tpu.core_type = #tpu.core_type<tc>, window_params = [{transform_indices = @transform_0, window_bounds = array<i64: 1, 32, 192>}, {pipeline_mode = #tpu.pipeline_mode<synchronous>, transform_indices = @transform_1, window_bounds = array<i64: 192, 64>}, {pipeline_mode = #tpu.pipeline_mode<synchronous>, transform_indices = @transform_2, window_bounds = array<i64: 32, 64>}, {pipeline_mode = #tpu.pipeline_mode<synchronous>, transform_indices = @transform_3, window_bounds = array<i64: 6, 64, 64>}, {pipeline_mode = #tpu.pipeline_mode<synchronous>, transform_indices = @transform_4, window_bounds = array<i64: 2, 64, 64>}, {pipeline_mode = #tpu.pipeline_mode<synchronous>, transform_indices = @transform_5, window_bounds = array<i64: 128, 64>}, {pipeline_mode = #tpu.pipeline_mode<synchronous>, transform_indices = @transform_6, window_bounds = array<i64: 128, 128>}, {pipeline_mode = #tpu.pipeline_mode<synchronous>, transform_indices = @transform_7, window_bounds = array<i64: 32, 384>}, {pipeline_mode = #tpu.pipeline_mode<synchronous>, transform_indices = @transform_8, window_bounds = array<i64: 32, 384>}, {pipeline_mode = #tpu.pipeline_mode<synchronous>, transform_indices = @transform_9, window_bounds = array<i64: 320, 32>}, {pipeline_mode = #tpu.pipeline_mode<synchronous>, transform_indices = @transform_10, window_bounds = array<i64: 320, 32>}, {transform_indices = @transform_11, window_bounds = array<i64: 1, 1, 128>}]} {
    %c0 = arith.constant 0 : index
    %c0_0 = arith.constant 0 : index
    %c0_1 = arith.constant 0 : index
    %0 = vector.load %arg1[%c0, %c0_0, %c0_1] : memref<1x32x192xbf16, #tpu.memory_space<vmem>>, vector<1x32x192xbf16>
    %1 = vector.shape_cast %0 : vector<1x32x192xbf16> to vector<32x192xbf16>
    %c0_2 = arith.constant 0 : index
    %c0_3 = arith.constant 0 : index
    %2 = vector.load %arg2[%c0_2, %c0_3] : memref<192x64xbf16, #tpu.memory_space<vmem>>, vector<192x64xbf16>
    %cst = arith.constant dense<0.000000e+00> : vector<32x64xf32>
    %3 = tpu.matmul %1, %2, %cst {dimension_numbers = #tpu.dot_dimension_numbers<[1], [0], [0], [1], [0, 0, 1, 1], [], []>} : vector<32x192xbf16>, vector<192x64xbf16>, vector<32x64xf32> -> vector<32x64xf32>
    %c0_4 = arith.constant 0 : index
    %c0_5 = arith.constant 0 : index
    %4 = vector.load %arg3[%c0_4, %c0_5] : memref<32x64xf32, #tpu.memory_space<vmem>>, vector<32x64xf32>
    %5 = arith.addf %3, %4 : vector<32x64xf32>
    %6 = tpu.iota {dimensions = array<i32: 0>} : vector<32x32xi32>
    %7 = tpu.iota {dimensions = array<i32: 1>} : vector<32x32xi32>
    %8 = arith.cmpi eq, %6, %7 : vector<32x32xi32>
    %9 = arith.extui %8 : vector<32x32xi1> to vector<32x32xi32>
    %10 = arith.sitofp %9 : vector<32x32xi32> to vector<32x32xf32>
    %c0_i32 = arith.constant 0 : i32
    %11 = vector.broadcast %c0_i32 : i32 to vector<32x32xi32>
    %12 = arith.cmpi eq, %6, %11 : vector<32x32xi32>
    %c0_i32_6 = arith.constant 0 : i32
    %13 = vector.broadcast %c0_i32_6 : i32 to vector<32x32xi32>
    %14 = arith.cmpi eq, %7, %13 : vector<32x32xi32>
    %15 = arith.andi %12, %14 : vector<32x32xi1>
    %16 = tpu.iota {dimensions = array<i32: 1>} : vector<1x128xi32>
    %c32_i32 = arith.constant 32 : i32
    %c0_i32_7 = arith.constant 0 : i32
    %17 = arith.cmpi eq, %c32_i32, %c0_i32_7 : i32
    %c1_i32 = arith.constant 1 : i32
    %18 = arith.select %17, %c1_i32, %c32_i32 : i32
    %19 = vector.broadcast %18 : i32 to vector<1x128xi32>
    %20 = arith.remsi %16, %19 : vector<1x128xi32>
    %c0_i32_8 = arith.constant 0 : i32
    %21 = vector.broadcast %c0_i32_8 : i32 to vector<1x128xi32>
    %22 = arith.cmpi ne, %20, %21 : vector<1x128xi32>
    %c0_i32_9 = arith.constant 0 : i32
    %23 = vector.broadcast %c0_i32_9 : i32 to vector<1x128xi32>
    %24 = arith.cmpi slt, %20, %23 : vector<1x128xi32>
    %c0_i32_10 = arith.constant 0 : i32
    %25 = arith.cmpi slt, %18, %c0_i32_10 : i32
    %26 = vector.broadcast %25 : i1 to vector<1x128xi1>
    %27 = vector.broadcast %26 : vector<1x128xi1> to vector<1x128xi1>
    %28 = arith.xori %24, %27 : vector<1x128xi1>
    %29 = arith.andi %28, %22 : vector<1x128xi1>
    %30 = vector.broadcast %18 : i32 to vector<1x128xi32>
    %31 = arith.addi %20, %30 : vector<1x128xi32>
    %32 = arith.select %29, %31, %20 : vector<1x128xi1>, vector<1x128xi32>
    %c17_i32 = arith.constant 17 : i32
    %33 = vector.broadcast %c17_i32 : i32 to vector<1x128xi32>
    %34 = arith.cmpi slt, %32, %33 : vector<1x128xi32>
    %cst_11 = arith.constant 0.000000e+00 : f32
    %cst_12 = arith.constant -1.000000e+30 : f32
    %35 = vector.broadcast %cst_11 : f32 to vector<1x128xf32>
    %36 = vector.broadcast %cst_12 : f32 to vector<1x128xf32>
    %37 = arith.select %34, %35, %36 : vector<1x128xi1>, vector<1x128xf32>
    %c0_13 = arith.constant 0 : index
    %c0_14 = arith.constant 0 : index
    %38 = vector.load %arg6[%c0_13, %c0_14] : memref<128x64xbf16, #tpu.memory_space<vmem>>, vector<128x64xbf16>
    %c0_15 = arith.constant 0 : index
    %c0_16 = arith.constant 0 : index
    %39 = vector.load %arg7[%c0_15, %c0_16] : memref<128x128xbf16, #tpu.memory_space<vmem>>, vector<128x128xbf16>
    %c0_17 = arith.constant 0 : index
    %c0_18 = arith.constant 0 : index
    %40 = vector.load %arg8[%c0_17, %c0_18] : memref<32x384xf32, #tpu.memory_space<vmem>>, vector<32x384xf32>
    %c0_19 = arith.constant 0 : index
    %c0_20 = arith.constant 0 : index
    %41 = vector.load %arg9[%c0_19, %c0_20] : memref<32x384xf32, #tpu.memory_space<vmem>>, vector<32x384xf32>
    %c0_21 = arith.constant 0 : index
    %c0_22 = arith.constant 0 : index
    %42 = vector.load %arg10[%c0_21, %c0_22] : memref<320x32xf32, #tpu.memory_space<vmem>>, vector<320x32xf32>
    %c0_23 = arith.constant 0 : index
    %c0_24 = arith.constant 0 : index
    %43 = vector.load %arg11[%c0_23, %c0_24] : memref<320x32xf32, #tpu.memory_space<vmem>>, vector<320x32xf32>
    %44 = arith.truncf %5 : vector<32x64xf32> to vector<32x64xbf16>
    %c0_25 = arith.constant 0 : index
    %c0_26 = arith.constant 0 : index
    %c0_27 = arith.constant 0 : index
    %45 = vector.load %arg4[%c0_25, %c0_26, %c0_27] : memref<6x64x64xbf16, #tpu.memory_space<vmem>>, vector<1x64x64xbf16>
    %46 = vector.shape_cast %45 : vector<1x64x64xbf16> to vector<64x64xbf16>
    %cst_28 = arith.constant dense<0.000000e+00> : vector<32x64xf32>
    %47 = tpu.matmul %44, %46, %cst_28 {dimension_numbers = #tpu.dot_dimension_numbers<[1], [0], [0], [1], [0, 0, 1, 1], [], []>} : vector<32x64xbf16>, vector<64x64xbf16>, vector<32x64xf32> -> vector<32x64xf32>
    %c1 = arith.constant 1 : index
    %c0_29 = arith.constant 0 : index
    %c0_30 = arith.constant 0 : index
    %48 = vector.load %arg4[%c1, %c0_29, %c0_30] : memref<6x64x64xbf16, #tpu.memory_space<vmem>>, vector<1x64x64xbf16>
    %49 = vector.shape_cast %48 : vector<1x64x64xbf16> to vector<64x64xbf16>
    %cst_31 = arith.constant dense<0.000000e+00> : vector<32x64xf32>
    %50 = tpu.matmul %44, %49, %cst_31 {dimension_numbers = #tpu.dot_dimension_numbers<[1], [0], [0], [1], [0, 0, 1, 1], [], []>} : vector<32x64xbf16>, vector<64x64xbf16>, vector<32x64xf32> -> vector<32x64xf32>
    %c2 = arith.constant 2 : index
    %c0_32 = arith.constant 0 : index
    %c0_33 = arith.constant 0 : index
    %51 = vector.load %arg4[%c2, %c0_32, %c0_33] : memref<6x64x64xbf16, #tpu.memory_space<vmem>>, vector<1x64x64xbf16>
    %52 = vector.shape_cast %51 : vector<1x64x64xbf16> to vector<64x64xbf16>
    %cst_34 = arith.constant dense<0.000000e+00> : vector<32x64xf32>
    %53 = tpu.matmul %44, %52, %cst_34 {dimension_numbers = #tpu.dot_dimension_numbers<[1], [0], [0], [1], [0, 0, 1, 1], [], []>} : vector<32x64xbf16>, vector<64x64xbf16>, vector<32x64xf32> -> vector<32x64xf32>
    %54 = arith.truncf %50 : vector<32x64xf32> to vector<32x64xbf16>
    %55 = tpu.concatenate %54, %54, %54, %54 in 0 : vector<32x64xbf16>, vector<32x64xbf16>, vector<32x64xbf16>, vector<32x64xbf16> -> vector<128x64xbf16>
    %56 = arith.mulf %55, %38 : vector<128x64xbf16>
    %57 = arith.truncf %53 : vector<32x64xf32> to vector<32x64xbf16>
    %58 = tpu.concatenate %57, %57, %57, %57 in 0 : vector<32x64xbf16>, vector<32x64xbf16>, vector<32x64xbf16>, vector<32x64xbf16> -> vector<128x64xbf16>
    %59 = arith.mulf %58, %38 : vector<128x64xbf16>
    %60 = arith.truncf %47 : vector<32x64xf32> to vector<32x64xbf16>
    %cst_35 = arith.constant dense<0.000000e+00> : vector<32x128xf32>
    %61 = tpu.matmul %60, %56, %cst_35 {dimension_numbers = #tpu.dot_dimension_numbers<[1], [1], [0], [0], [0, 0, 1, 0], [], []>} : vector<32x64xbf16>, vector<128x64xbf16>, vector<32x128xf32> -> vector<32x128xf32>
    %62 = vector.broadcast %37 : vector<1x128xf32> to vector<32x128xf32>
    %63 = arith.addf %61, %62 : vector<32x128xf32>
    %cst_36 = arith.constant dense<0xFF800000> : vector<32xf32>
    %64 = vector.multi_reduction <maximumf>, %63, %cst_36 [1] : vector<32x128xf32> to vector<32xf32>
    %65 = vector.shape_cast %64 : vector<32xf32> to vector<32x1xf32>
    %66 = vector.broadcast %65 : vector<32x1xf32> to vector<32x128xf32>
    %67 = arith.subf %63, %66 : vector<32x128xf32>
    %68 = math.exp %67 : vector<32x128xf32>
    %cst_37 = arith.constant dense<0.000000e+00> : vector<32x128xf32>
    %69 = tpu.matmul %68, %39, %cst_37 {dimension_numbers = #tpu.dot_dimension_numbers<[1], [0], [0], [1], [0, 0, 1, 1], [], []>} : vector<32x128xf32>, vector<128x128xbf16>, vector<32x128xf32> -> vector<32x128xf32>
    %70 = arith.divf %68, %69 : vector<32x128xf32>
    %71 = vector.extract_strided_slice %70 {offsets = [0, 0], sizes = [32, 32], strides = [1, 1]} : vector<32x128xf32> to vector<32x32xf32>
    %72 = vector.extract_strided_slice %70 {offsets = [0, 32], sizes = [32, 32], strides = [1, 1]} : vector<32x128xf32> to vector<32x32xf32>
    %73 = arith.maximumf %71, %72 : vector<32x32xf32>
    %74 = vector.extract_strided_slice %70 {offsets = [0, 64], sizes = [32, 32], strides = [1, 1]} : vector<32x128xf32> to vector<32x32xf32>
    %75 = vector.extract_strided_slice %70 {offsets = [0, 96], sizes = [32, 32], strides = [1, 1]} : vector<32x128xf32> to vector<32x32xf32>
    %76 = arith.maximumf %74, %75 : vector<32x32xf32>
    %77 = arith.maximumf %73, %76 : vector<32x32xf32>
    %78 = arith.truncf %70 : vector<32x128xf32> to vector<32x128xbf16>
    %cst_38 = arith.constant dense<0.000000e+00> : vector<32x64xf32>
    %79 = tpu.matmul %78, %59, %cst_38 {dimension_numbers = #tpu.dot_dimension_numbers<[1], [0], [0], [1], [0, 0, 1, 1], [], []>} : vector<32x128xbf16>, vector<128x64xbf16>, vector<32x64xf32> -> vector<32x64xf32>
    %80 = arith.truncf %79 : vector<32x64xf32> to vector<32x64xbf16>
    %c0_39 = arith.constant 0 : index
    %c0_40 = arith.constant 0 : index
    %c0_41 = arith.constant 0 : index
    %81 = vector.load %arg5[%c0_39, %c0_40, %c0_41] : memref<2x64x64xbf16, #tpu.memory_space<vmem>>, vector<1x64x64xbf16>
    %82 = vector.shape_cast %81 : vector<1x64x64xbf16> to vector<64x64xbf16>
    %cst_42 = arith.constant dense<0.000000e+00> : vector<32x64xf32>
    %83 = tpu.matmul %80, %82, %cst_42 {dimension_numbers = #tpu.dot_dimension_numbers<[1], [0], [0], [1], [0, 0, 1, 1], [], []>} : vector<32x64xbf16>, vector<64x64xbf16>, vector<32x64xf32> -> vector<32x64xf32>
    %84 = arith.addf %5, %83 : vector<32x64xf32>
    %cst_43 = arith.constant dense<0.000000e+00> : vector<32x384xf32>
    %85 = tpu.matmul %77, %40, %cst_43 {dimension_numbers = #tpu.dot_dimension_numbers<[1], [0], [0], [1], [0, 0, 1, 1], [], []>} : vector<32x32xf32>, vector<32x384xf32>, vector<32x384xf32> -> vector<32x384xf32>
    %86 = arith.mulf %85, %41 : vector<32x384xf32>
    %cst_44 = arith.constant dense<0.000000e+00> : vector<384xf32>
    %87 = vector.multi_reduction <add>, %86, %cst_44 [0] : vector<32x384xf32> to vector<384xf32>
    %88 = vector.shape_cast %87 : vector<384xf32> to vector<1x384xf32>
    %cst_45 = arith.constant dense<0.000000e+00> : vector<320x32xf32>
    %89 = tpu.matmul %42, %77, %cst_45 {dimension_numbers = #tpu.dot_dimension_numbers<[1], [0], [0], [1], [0, 0, 1, 1], [], []>} : vector<320x32xf32>, vector<32x32xf32>, vector<320x32xf32> -> vector<320x32xf32>
    %90 = arith.mulf %89, %43 : vector<320x32xf32>
    %cst_46 = arith.constant dense<0.000000e+00> : vector<320xf32>
    %91 = vector.multi_reduction <add>, %90, %cst_46 [1] : vector<320x32xf32> to vector<320xf32>
    %92 = vector.shape_cast %91 : vector<320xf32> to vector<320x1xf32>
    %93 = vector.extract_strided_slice %92 {offsets = [0, 0], sizes = [64, 1], strides = [1, 1]} : vector<320x1xf32> to vector<64x1xf32>
    %94 = vector.broadcast %88 : vector<1x384xf32> to vector<64x384xf32>
    %95 = vector.broadcast %93 : vector<64x1xf32> to vector<64x384xf32>
    %96 = arith.cmpf ogt, %94, %95 : vector<64x384xf32>
    %97 = arith.extui %96 : vector<64x384xi1> to vector<64x384xi32>
    %98 = arith.sitofp %97 : vector<64x384xi32> to vector<64x384xf32>
    %cst_47 = arith.constant dense<0.000000e+00> : vector<64xf32>
    %99 = vector.multi_reduction <add>, %98, %cst_47 [1] : vector<64x384xf32> to vector<64xf32>
    %100 = vector.shape_cast %99 : vector<64xf32> to vector<64x1xf32>
    %cst_48 = arith.constant 1.500000e+01 : f32
    %101 = vector.broadcast %cst_48 : f32 to vector<64x1xf32>
    %102 = arith.cmpf olt, %100, %101 : vector<64x1xf32>
    %cst_49 = arith.constant 0x7F800000 : f32
    %103 = vector.broadcast %cst_49 : f32 to vector<64x1xf32>
    %104 = arith.select %102, %93, %103 : vector<64x1xi1>, vector<64x1xf32>
    %105 = vector.shape_cast %104 : vector<64x1xf32> to vector<1x64x1xf32>
    %cst_50 = arith.constant dense<0x7F800000> : vector<1xf32>
    %106 = vector.multi_reduction <minimumf>, %105, %cst_50 [1, 2] : vector<1x64x1xf32> to vector<1xf32>
    %107 = vector.shape_cast %106 : vector<1xf32> to vector<1x1x1xf32>
    %108 = vector.extract %107[0, 0, 0] : f32 from vector<1x1x1xf32>
    %109 = vector.extract_strided_slice %92 {offsets = [64, 0], sizes = [64, 1], strides = [1, 1]} : vector<320x1xf32> to vector<64x1xf32>
    %110 = vector.broadcast %88 : vector<1x384xf32> to vector<64x384xf32>
    %111 = vector.broadcast %109 : vector<64x1xf32> to vector<64x384xf32>
    %112 = arith.cmpf ogt, %110, %111 : vector<64x384xf32>
    %113 = arith.extui %112 : vector<64x384xi1> to vector<64x384xi32>
    %114 = arith.sitofp %113 : vector<64x384xi32> to vector<64x384xf32>
    %cst_51 = arith.constant dense<0.000000e+00> : vector<64xf32>
    %115 = vector.multi_reduction <add>, %114, %cst_51 [1] : vector<64x384xf32> to vector<64xf32>
    %116 = vector.shape_cast %115 : vector<64xf32> to vector<64x1xf32>
    %cst_52 = arith.constant 1.500000e+01 : f32
    %117 = vector.broadcast %cst_52 : f32 to vector<64x1xf32>
    %118 = arith.cmpf olt, %116, %117 : vector<64x1xf32>
    %cst_53 = arith.constant 0x7F800000 : f32
    %119 = vector.broadcast %cst_53 : f32 to vector<64x1xf32>
    %120 = arith.select %118, %109, %119 : vector<64x1xi1>, vector<64x1xf32>
    %121 = vector.shape_cast %120 : vector<64x1xf32> to vector<1x64x1xf32>
    %cst_54 = arith.constant dense<0x7F800000> : vector<1xf32>
    %122 = vector.multi_reduction <minimumf>, %121, %cst_54 [1, 2] : vector<1x64x1xf32> to vector<1xf32>
    %123 = vector.shape_cast %122 : vector<1xf32> to vector<1x1x1xf32>
    %124 = vector.extract %123[0, 0, 0] : f32 from vector<1x1x1xf32>
    %125 = vector.extract_strided_slice %92 {offsets = [128, 0], sizes = [64, 1], strides = [1, 1]} : vector<320x1xf32> to vector<64x1xf32>
    %126 = vector.broadcast %88 : vector<1x384xf32> to vector<64x384xf32>
    %127 = vector.broadcast %125 : vector<64x1xf32> to vector<64x384xf32>
    %128 = arith.cmpf ogt, %126, %127 : vector<64x384xf32>
    %129 = arith.extui %128 : vector<64x384xi1> to vector<64x384xi32>
    %130 = arith.sitofp %129 : vector<64x384xi32> to vector<64x384xf32>
    %cst_55 = arith.constant dense<0.000000e+00> : vector<64xf32>
    %131 = vector.multi_reduction <add>, %130, %cst_55 [1] : vector<64x384xf32> to vector<64xf32>
    %132 = vector.shape_cast %131 : vector<64xf32> to vector<64x1xf32>
    %cst_56 = arith.constant 1.500000e+01 : f32
    %133 = vector.broadcast %cst_56 : f32 to vector<64x1xf32>
    %134 = arith.cmpf olt, %132, %133 : vector<64x1xf32>
    %cst_57 = arith.constant 0x7F800000 : f32
    %135 = vector.broadcast %cst_57 : f32 to vector<64x1xf32>
    %136 = arith.select %134, %125, %135 : vector<64x1xi1>, vector<64x1xf32>
    %137 = vector.shape_cast %136 : vector<64x1xf32> to vector<1x64x1xf32>
    %cst_58 = arith.constant dense<0x7F800000> : vector<1xf32>
    %138 = vector.multi_reduction <minimumf>, %137, %cst_58 [1, 2] : vector<1x64x1xf32> to vector<1xf32>
    %139 = vector.shape_cast %138 : vector<1xf32> to vector<1x1x1xf32>
    %140 = vector.extract %139[0, 0, 0] : f32 from vector<1x1x1xf32>
    %141 = vector.extract_strided_slice %92 {offsets = [192, 0], sizes = [64, 1], strides = [1, 1]} : vector<320x1xf32> to vector<64x1xf32>
    %142 = vector.broadcast %88 : vector<1x384xf32> to vector<64x384xf32>
    %143 = vector.broadcast %141 : vector<64x1xf32> to vector<64x384xf32>
    %144 = arith.cmpf ogt, %142, %143 : vector<64x384xf32>
    %145 = arith.extui %144 : vector<64x384xi1> to vector<64x384xi32>
    %146 = arith.sitofp %145 : vector<64x384xi32> to vector<64x384xf32>
    %cst_59 = arith.constant dense<0.000000e+00> : vector<64xf32>
    %147 = vector.multi_reduction <add>, %146, %cst_59 [1] : vector<64x384xf32> to vector<64xf32>
    %148 = vector.shape_cast %147 : vector<64xf32> to vector<64x1xf32>
    %cst_60 = arith.constant 1.500000e+01 : f32
    %149 = vector.broadcast %cst_60 : f32 to vector<64x1xf32>
    %150 = arith.cmpf olt, %148, %149 : vector<64x1xf32>
    %cst_61 = arith.constant 0x7F800000 : f32
    %151 = vector.broadcast %cst_61 : f32 to vector<64x1xf32>
    %152 = arith.select %150, %141, %151 : vector<64x1xi1>, vector<64x1xf32>
    %153 = vector.shape_cast %152 : vector<64x1xf32> to vector<1x64x1xf32>
    %cst_62 = arith.constant dense<0x7F800000> : vector<1xf32>
    %154 = vector.multi_reduction <minimumf>, %153, %cst_62 [1, 2] : vector<1x64x1xf32> to vector<1xf32>
    %155 = vector.shape_cast %154 : vector<1xf32> to vector<1x1x1xf32>
    %156 = vector.extract %155[0, 0, 0] : f32 from vector<1x1x1xf32>
    %157 = vector.extract_strided_slice %92 {offsets = [256, 0], sizes = [64, 1], strides = [1, 1]} : vector<320x1xf32> to vector<64x1xf32>
    %158 = vector.broadcast %88 : vector<1x384xf32> to vector<64x384xf32>
    %159 = vector.broadcast %157 : vector<64x1xf32> to vector<64x384xf32>
    %160 = arith.cmpf ogt, %158, %159 : vector<64x384xf32>
    %161 = arith.extui %160 : vector<64x384xi1> to vector<64x384xi32>
    %162 = arith.sitofp %161 : vector<64x384xi32> to vector<64x384xf32>
    %cst_63 = arith.constant dense<0.000000e+00> : vector<64xf32>
    %163 = vector.multi_reduction <add>, %162, %cst_63 [1] : vector<64x384xf32> to vector<64xf32>
    %164 = vector.shape_cast %163 : vector<64xf32> to vector<64x1xf32>
    %cst_64 = arith.constant 1.500000e+01 : f32
    %165 = vector.broadcast %cst_64 : f32 to vector<64x1xf32>
    %166 = arith.cmpf olt, %164, %165 : vector<64x1xf32>
    %cst_65 = arith.constant 0x7F800000 : f32
    %167 = vector.broadcast %cst_65 : f32 to vector<64x1xf32>
    %168 = arith.select %166, %157, %167 : vector<64x1xi1>, vector<64x1xf32>
    %169 = vector.shape_cast %168 : vector<64x1xf32> to vector<1x64x1xf32>
    %cst_66 = arith.constant dense<0x7F800000> : vector<1xf32>
    %170 = vector.multi_reduction <minimumf>, %169, %cst_66 [1, 2] : vector<1x64x1xf32> to vector<1xf32>
    %171 = vector.shape_cast %170 : vector<1xf32> to vector<1x1x1xf32>
    %172 = vector.extract %171[0, 0, 0] : f32 from vector<1x1x1xf32>
    %173 = arith.minimumf %108, %124 : f32
    %174 = arith.minimumf %173, %140 : f32
    %175 = arith.minimumf %174, %156 : f32
    %176 = arith.minimumf %175, %172 : f32
    %177 = vector.broadcast %176 : f32 to vector<32x32xf32>
    %178 = arith.cmpf oge, %77, %177 : vector<32x32xf32>
    %179 = arith.ori %178, %15 : vector<32x32xi1>
    %cst_67 = arith.constant 0.000000e+00 : f32
    %180 = vector.broadcast %cst_67 : f32 to vector<32x32xf32>
    %181 = arith.select %179, %77, %180 : vector<32x32xi1>, vector<32x32xf32>
    %182 = arith.addf %181, %10 : vector<32x32xf32>
    %cst_68 = arith.constant 5.000000e-01 : f32
    %183 = vector.broadcast %cst_68 : f32 to vector<32x32xf32>
    %184 = arith.mulf %182, %183 : vector<32x32xf32>
    %cst_69 = arith.constant dense<0.000000e+00> : vector<32xf32>
    %185 = vector.multi_reduction <add>, %184, %cst_69 [1] : vector<32x32xf32> to vector<32xf32>
    %186 = vector.shape_cast %185 : vector<32xf32> to vector<32x1xf32>
    %187 = vector.broadcast %186 : vector<32x1xf32> to vector<32x32xf32>
    %188 = arith.divf %184, %187 : vector<32x32xf32>
    %189 = arith.truncf %84 : vector<32x64xf32> to vector<32x64xbf16>
    %c3 = arith.constant 3 : index
    %c0_70 = arith.constant 0 : index
    %c0_71 = arith.constant 0 : index
    %190 = vector.load %arg4[%c3, %c0_70, %c0_71] : memref<6x64x64xbf16, #tpu.memory_space<vmem>>, vector<1x64x64xbf16>
    %191 = vector.shape_cast %190 : vector<1x64x64xbf16> to vector<64x64xbf16>
    %cst_72 = arith.constant dense<0.000000e+00> : vector<32x64xf32>
    %192 = tpu.matmul %189, %191, %cst_72 {dimension_numbers = #tpu.dot_dimension_numbers<[1], [0], [0], [1], [0, 0, 1, 1], [], []>} : vector<32x64xbf16>, vector<64x64xbf16>, vector<32x64xf32> -> vector<32x64xf32>
    %c4 = arith.constant 4 : index
    %c0_73 = arith.constant 0 : index
    %c0_74 = arith.constant 0 : index
    %193 = vector.load %arg4[%c4, %c0_73, %c0_74] : memref<6x64x64xbf16, #tpu.memory_space<vmem>>, vector<1x64x64xbf16>
    %194 = vector.shape_cast %193 : vector<1x64x64xbf16> to vector<64x64xbf16>
    %cst_75 = arith.constant dense<0.000000e+00> : vector<32x64xf32>
    %195 = tpu.matmul %189, %194, %cst_75 {dimension_numbers = #tpu.dot_dimension_numbers<[1], [0], [0], [1], [0, 0, 1, 1], [], []>} : vector<32x64xbf16>, vector<64x64xbf16>, vector<32x64xf32> -> vector<32x64xf32>
    %196 = arith.truncf %195 : vector<32x64xf32> to vector<32x64xbf16>
    %197 = tpu.concatenate %196, %196, %196, %196 in 0 : vector<32x64xbf16>, vector<32x64xbf16>, vector<32x64xbf16>, vector<32x64xbf16> -> vector<128x64xbf16>
    %198 = arith.mulf %197, %38 : vector<128x64xbf16>
    %199 = arith.truncf %192 : vector<32x64xf32> to vector<32x64xbf16>
    %cst_76 = arith.constant dense<0.000000e+00> : vector<32x128xf32>
    %200 = tpu.matmul %199, %198, %cst_76 {dimension_numbers = #tpu.dot_dimension_numbers<[1], [1], [0], [0], [0, 0, 1, 0], [], []>} : vector<32x64xbf16>, vector<128x64xbf16>, vector<32x128xf32> -> vector<32x128xf32>
    %201 = vector.broadcast %37 : vector<1x128xf32> to vector<32x128xf32>
    %202 = arith.addf %200, %201 : vector<32x128xf32>
    %cst_77 = arith.constant dense<0xFF800000> : vector<32xf32>
    %203 = vector.multi_reduction <maximumf>, %202, %cst_77 [1] : vector<32x128xf32> to vector<32xf32>
    %204 = vector.shape_cast %203 : vector<32xf32> to vector<32x1xf32>
    %205 = vector.broadcast %204 : vector<32x1xf32> to vector<32x128xf32>
    %206 = arith.subf %202, %205 : vector<32x128xf32>
    %207 = math.exp %206 : vector<32x128xf32>
    %cst_78 = arith.constant dense<0.000000e+00> : vector<32x128xf32>
    %208 = tpu.matmul %207, %39, %cst_78 {dimension_numbers = #tpu.dot_dimension_numbers<[1], [0], [0], [1], [0, 0, 1, 1], [], []>} : vector<32x128xf32>, vector<128x128xbf16>, vector<32x128xf32> -> vector<32x128xf32>
    %209 = arith.divf %207, %208 : vector<32x128xf32>
    %210 = vector.extract_strided_slice %209 {offsets = [0, 0], sizes = [32, 32], strides = [1, 1]} : vector<32x128xf32> to vector<32x32xf32>
    %211 = vector.extract_strided_slice %209 {offsets = [0, 32], sizes = [32, 32], strides = [1, 1]} : vector<32x128xf32> to vector<32x32xf32>
    %212 = arith.maximumf %210, %211 : vector<32x32xf32>
    %213 = vector.extract_strided_slice %209 {offsets = [0, 64], sizes = [32, 32], strides = [1, 1]} : vector<32x128xf32> to vector<32x32xf32>
    %214 = vector.extract_strided_slice %209 {offsets = [0, 96], sizes = [32, 32], strides = [1, 1]} : vector<32x128xf32> to vector<32x32xf32>
    %215 = arith.maximumf %213, %214 : vector<32x32xf32>
    %216 = arith.maximumf %212, %215 : vector<32x32xf32>
    %cst_79 = arith.constant dense<0.000000e+00> : vector<32x384xf32>
    %217 = tpu.matmul %216, %40, %cst_79 {dimension_numbers = #tpu.dot_dimension_numbers<[1], [0], [0], [1], [0, 0, 1, 1], [], []>} : vector<32x32xf32>, vector<32x384xf32>, vector<32x384xf32> -> vector<32x384xf32>
    %218 = arith.mulf %217, %41 : vector<32x384xf32>
    %cst_80 = arith.constant dense<0.000000e+00> : vector<384xf32>
    %219 = vector.multi_reduction <add>, %218, %cst_80 [0] : vector<32x384xf32> to vector<384xf32>
    %220 = vector.shape_cast %219 : vector<384xf32> to vector<1x384xf32>
    %cst_81 = arith.constant dense<0.000000e+00> : vector<320x32xf32>
    %221 = tpu.matmul %42, %216, %cst_81 {dimension_numbers = #tpu.dot_dimension_numbers<[1], [0], [0], [1], [0, 0, 1, 1], [], []>} : vector<320x32xf32>, vector<32x32xf32>, vector<320x32xf32> -> vector<320x32xf32>
    %222 = arith.mulf %221, %43 : vector<320x32xf32>
    %cst_82 = arith.constant dense<0.000000e+00> : vector<320xf32>
    %223 = vector.multi_reduction <add>, %222, %cst_82 [1] : vector<320x32xf32> to vector<320xf32>
    %224 = vector.shape_cast %223 : vector<320xf32> to vector<320x1xf32>
    %225 = vector.extract_strided_slice %224 {offsets = [0, 0], sizes = [64, 1], strides = [1, 1]} : vector<320x1xf32> to vector<64x1xf32>
    %226 = vector.broadcast %220 : vector<1x384xf32> to vector<64x384xf32>
    %227 = vector.broadcast %225 : vector<64x1xf32> to vector<64x384xf32>
    %228 = arith.cmpf ogt, %226, %227 : vector<64x384xf32>
    %229 = arith.extui %228 : vector<64x384xi1> to vector<64x384xi32>
    %230 = arith.sitofp %229 : vector<64x384xi32> to vector<64x384xf32>
    %cst_83 = arith.constant dense<0.000000e+00> : vector<64xf32>
    %231 = vector.multi_reduction <add>, %230, %cst_83 [1] : vector<64x384xf32> to vector<64xf32>
    %232 = vector.shape_cast %231 : vector<64xf32> to vector<64x1xf32>
    %cst_84 = arith.constant 1.500000e+01 : f32
    %233 = vector.broadcast %cst_84 : f32 to vector<64x1xf32>
    %234 = arith.cmpf olt, %232, %233 : vector<64x1xf32>
    %cst_85 = arith.constant 0x7F800000 : f32
    %235 = vector.broadcast %cst_85 : f32 to vector<64x1xf32>
    %236 = arith.select %234, %225, %235 : vector<64x1xi1>, vector<64x1xf32>
    %237 = vector.shape_cast %236 : vector<64x1xf32> to vector<1x64x1xf32>
    %cst_86 = arith.constant dense<0x7F800000> : vector<1xf32>
    %238 = vector.multi_reduction <minimumf>, %237, %cst_86 [1, 2] : vector<1x64x1xf32> to vector<1xf32>
    %239 = vector.shape_cast %238 : vector<1xf32> to vector<1x1x1xf32>
    %240 = vector.extract %239[0, 0, 0] : f32 from vector<1x1x1xf32>
    %241 = vector.extract_strided_slice %224 {offsets = [64, 0], sizes = [64, 1], strides = [1, 1]} : vector<320x1xf32> to vector<64x1xf32>
    %242 = vector.broadcast %220 : vector<1x384xf32> to vector<64x384xf32>
    %243 = vector.broadcast %241 : vector<64x1xf32> to vector<64x384xf32>
    %244 = arith.cmpf ogt, %242, %243 : vector<64x384xf32>
    %245 = arith.extui %244 : vector<64x384xi1> to vector<64x384xi32>
    %246 = arith.sitofp %245 : vector<64x384xi32> to vector<64x384xf32>
    %cst_87 = arith.constant dense<0.000000e+00> : vector<64xf32>
    %247 = vector.multi_reduction <add>, %246, %cst_87 [1] : vector<64x384xf32> to vector<64xf32>
    %248 = vector.shape_cast %247 : vector<64xf32> to vector<64x1xf32>
    %cst_88 = arith.constant 1.500000e+01 : f32
    %249 = vector.broadcast %cst_88 : f32 to vector<64x1xf32>
    %250 = arith.cmpf olt, %248, %249 : vector<64x1xf32>
    %cst_89 = arith.constant 0x7F800000 : f32
    %251 = vector.broadcast %cst_89 : f32 to vector<64x1xf32>
    %252 = arith.select %250, %241, %251 : vector<64x1xi1>, vector<64x1xf32>
    %253 = vector.shape_cast %252 : vector<64x1xf32> to vector<1x64x1xf32>
    %cst_90 = arith.constant dense<0x7F800000> : vector<1xf32>
    %254 = vector.multi_reduction <minimumf>, %253, %cst_90 [1, 2] : vector<1x64x1xf32> to vector<1xf32>
    %255 = vector.shape_cast %254 : vector<1xf32> to vector<1x1x1xf32>
    %256 = vector.extract %255[0, 0, 0] : f32 from vector<1x1x1xf32>
    %257 = vector.extract_strided_slice %224 {offsets = [128, 0], sizes = [64, 1], strides = [1, 1]} : vector<320x1xf32> to vector<64x1xf32>
    %258 = vector.broadcast %220 : vector<1x384xf32> to vector<64x384xf32>
    %259 = vector.broadcast %257 : vector<64x1xf32> to vector<64x384xf32>
    %260 = arith.cmpf ogt, %258, %259 : vector<64x384xf32>
    %261 = arith.extui %260 : vector<64x384xi1> to vector<64x384xi32>
    %262 = arith.sitofp %261 : vector<64x384xi32> to vector<64x384xf32>
    %cst_91 = arith.constant dense<0.000000e+00> : vector<64xf32>
    %263 = vector.multi_reduction <add>, %262, %cst_91 [1] : vector<64x384xf32> to vector<64xf32>
    %264 = vector.shape_cast %263 : vector<64xf32> to vector<64x1xf32>
    %cst_92 = arith.constant 1.500000e+01 : f32
    %265 = vector.broadcast %cst_92 : f32 to vector<64x1xf32>
    %266 = arith.cmpf olt, %264, %265 : vector<64x1xf32>
    %cst_93 = arith.constant 0x7F800000 : f32
    %267 = vector.broadcast %cst_93 : f32 to vector<64x1xf32>
    %268 = arith.select %266, %257, %267 : vector<64x1xi1>, vector<64x1xf32>
    %269 = vector.shape_cast %268 : vector<64x1xf32> to vector<1x64x1xf32>
    %cst_94 = arith.constant dense<0x7F800000> : vector<1xf32>
    %270 = vector.multi_reduction <minimumf>, %269, %cst_94 [1, 2] : vector<1x64x1xf32> to vector<1xf32>
    %271 = vector.shape_cast %270 : vector<1xf32> to vector<1x1x1xf32>
    %272 = vector.extract %271[0, 0, 0] : f32 from vector<1x1x1xf32>
    %273 = vector.extract_strided_slice %224 {offsets = [192, 0], sizes = [64, 1], strides = [1, 1]} : vector<320x1xf32> to vector<64x1xf32>
    %274 = vector.broadcast %220 : vector<1x384xf32> to vector<64x384xf32>
    %275 = vector.broadcast %273 : vector<64x1xf32> to vector<64x384xf32>
    %276 = arith.cmpf ogt, %274, %275 : vector<64x384xf32>
    %277 = arith.extui %276 : vector<64x384xi1> to vector<64x384xi32>
    %278 = arith.sitofp %277 : vector<64x384xi32> to vector<64x384xf32>
    %cst_95 = arith.constant dense<0.000000e+00> : vector<64xf32>
    %279 = vector.multi_reduction <add>, %278, %cst_95 [1] : vector<64x384xf32> to vector<64xf32>
    %280 = vector.shape_cast %279 : vector<64xf32> to vector<64x1xf32>
    %cst_96 = arith.constant 1.500000e+01 : f32
    %281 = vector.broadcast %cst_96 : f32 to vector<64x1xf32>
    %282 = arith.cmpf olt, %280, %281 : vector<64x1xf32>
    %cst_97 = arith.constant 0x7F800000 : f32
    %283 = vector.broadcast %cst_97 : f32 to vector<64x1xf32>
    %284 = arith.select %282, %273, %283 : vector<64x1xi1>, vector<64x1xf32>
    %285 = vector.shape_cast %284 : vector<64x1xf32> to vector<1x64x1xf32>
    %cst_98 = arith.constant dense<0x7F800000> : vector<1xf32>
    %286 = vector.multi_reduction <minimumf>, %285, %cst_98 [1, 2] : vector<1x64x1xf32> to vector<1xf32>
    %287 = vector.shape_cast %286 : vector<1xf32> to vector<1x1x1xf32>
    %288 = vector.extract %287[0, 0, 0] : f32 from vector<1x1x1xf32>
    %289 = vector.extract_strided_slice %224 {offsets = [256, 0], sizes = [64, 1], strides = [1, 1]} : vector<320x1xf32> to vector<64x1xf32>
    %290 = vector.broadcast %220 : vector<1x384xf32> to vector<64x384xf32>
    %291 = vector.broadcast %289 : vector<64x1xf32> to vector<64x384xf32>
    %292 = arith.cmpf ogt, %290, %291 : vector<64x384xf32>
    %293 = arith.extui %292 : vector<64x384xi1> to vector<64x384xi32>
    %294 = arith.sitofp %293 : vector<64x384xi32> to vector<64x384xf32>
    %cst_99 = arith.constant dense<0.000000e+00> : vector<64xf32>
    %295 = vector.multi_reduction <add>, %294, %cst_99 [1] : vector<64x384xf32> to vector<64xf32>
    %296 = vector.shape_cast %295 : vector<64xf32> to vector<64x1xf32>
    %cst_100 = arith.constant 1.500000e+01 : f32
    %297 = vector.broadcast %cst_100 : f32 to vector<64x1xf32>
    %298 = arith.cmpf olt, %296, %297 : vector<64x1xf32>
    %cst_101 = arith.constant 0x7F800000 : f32
    %299 = vector.broadcast %cst_101 : f32 to vector<64x1xf32>
    %300 = arith.select %298, %289, %299 : vector<64x1xi1>, vector<64x1xf32>
    %301 = vector.shape_cast %300 : vector<64x1xf32> to vector<1x64x1xf32>
    %cst_102 = arith.constant dense<0x7F800000> : vector<1xf32>
    %302 = vector.multi_reduction <minimumf>, %301, %cst_102 [1, 2] : vector<1x64x1xf32> to vector<1xf32>
    %303 = vector.shape_cast %302 : vector<1xf32> to vector<1x1x1xf32>
    %304 = vector.extract %303[0, 0, 0] : f32 from vector<1x1x1xf32>
    %305 = arith.minimumf %240, %256 : f32
    %306 = arith.minimumf %305, %272 : f32
    %307 = arith.minimumf %306, %288 : f32
    %308 = arith.minimumf %307, %304 : f32
    %309 = vector.broadcast %308 : f32 to vector<32x32xf32>
    %310 = arith.cmpf oge, %216, %309 : vector<32x32xf32>
    %311 = arith.ori %310, %15 : vector<32x32xi1>
    %cst_103 = arith.constant 0.000000e+00 : f32
    %312 = vector.broadcast %cst_103 : f32 to vector<32x32xf32>
    %313 = arith.select %311, %216, %312 : vector<32x32xi1>, vector<32x32xf32>
    %314 = arith.addf %313, %10 : vector<32x32xf32>
    %cst_104 = arith.constant 5.000000e-01 : f32
    %315 = vector.broadcast %cst_104 : f32 to vector<32x32xf32>
    %316 = arith.mulf %314, %315 : vector<32x32xf32>
    %317 = vector.extract_strided_slice %316 {offsets = [0, 0], sizes = [1, 32], strides = [1, 1]} : vector<32x32xf32> to vector<1x32xf32>
    %cst_105 = arith.constant dense<0.000000e+00> : vector<1xf32>
    %318 = vector.multi_reduction <add>, %317, %cst_105 [1] : vector<1x32xf32> to vector<1xf32>
    %319 = vector.shape_cast %318 : vector<1xf32> to vector<1x1xf32>
    %320 = vector.broadcast %319 : vector<1x1xf32> to vector<1x32xf32>
    %321 = arith.divf %317, %320 : vector<1x32xf32>
    %cst_106 = arith.constant dense<0.000000e+00> : vector<1x32xf32>
    %322 = tpu.matmul %321, %188, %cst_106 {dimension_numbers = #tpu.dot_dimension_numbers<[1], [0], [0], [1], [0, 0, 1, 1], [], []>} : vector<1x32xf32>, vector<32x32xf32>, vector<1x32xf32> -> vector<1x32xf32>
    %323 = tpu.iota {dimensions = array<i32: 1>} : vector<1x32xi32>
    %c1_i32_107 = arith.constant 1 : i32
    %324 = vector.broadcast %c1_i32_107 : i32 to vector<1x32xi32>
    %325 = arith.cmpi sge, %323, %324 : vector<1x32xi32>
    %c17_i32_108 = arith.constant 17 : i32
    %326 = vector.broadcast %c17_i32_108 : i32 to vector<1x32xi32>
    %327 = arith.cmpi slt, %323, %326 : vector<1x32xi32>
    %328 = arith.andi %325, %327 : vector<1x32xi1>
    %cst_109 = arith.constant 0xFF800000 : f32
    %329 = vector.broadcast %cst_109 : f32 to vector<1x32xf32>
    %330 = arith.select %328, %322, %329 : vector<1x32xi1>, vector<1x32xf32>
    %331 = vector.shape_cast %330 : vector<1x32xf32> to vector<1x1x32xf32>
    %cst_110 = arith.constant dense<0xFF800000> : vector<1xf32>
    %332 = vector.multi_reduction <maximumf>, %331, %cst_110 [1, 2] : vector<1x1x32xf32> to vector<1xf32>
    %333 = vector.shape_cast %332 : vector<1xf32> to vector<1x1x1xf32>
    %334 = vector.extract %333[0, 0, 0] : f32 from vector<1x1x1xf32>
    %335 = vector.broadcast %334 : f32 to vector<1x32xf32>
    %336 = arith.divf %322, %335 : vector<1x32xf32>
    %cst_111 = arith.constant 0.000000e+00 : f32
    %337 = vector.broadcast %cst_111 : f32 to vector<1x96xf32>
    %338 = tpu.concatenate %336, %337 in 1 : vector<1x32xf32>, vector<1x96xf32> -> vector<1x128xf32>
    %c0_112 = arith.constant 0 : index
    %c0_113 = arith.constant 0 : index
    %c0_114 = arith.constant 0 : index
    %339 = vector.load %arg12[%c0_112, %c0_113, %c0_114] : memref<1x1x128xf32, #tpu.memory_space<vmem>>, vector<1x1x128xf32>
    %340 = vector.shape_cast %339 : vector<1x1x128xf32> to vector<1x128xf32>
    %341 = vector.shape_cast %338 : vector<1x128xf32> to vector<1x1x128xf32>
    tpu.vector_store %arg12[%c0_112, %c0_113, %c0_114], %341 {strides = array<i32>} : memref<1x1x128xf32, #tpu.memory_space<vmem>>, vector<1x1x128xf32>,
    return
  }
  func.func @transform_0(%arg0: i32) -> (i32, i32, i32) {
    %c0_i32 = arith.constant 0 : i32
    %c0_i32_0 = arith.constant 0 : i32
    %c0_i32_1 = arith.constant 0 : i32
    return %arg0, %c0_i32, %c0_i32_0 : i32, i32, i32
  }
  func.func @transform_1(%arg0: i32) -> (i32, i32) {
    %c0_i32 = arith.constant 0 : i32
    %c0_i32_0 = arith.constant 0 : i32
    %c0_i32_1 = arith.constant 0 : i32
    return %c0_i32, %c0_i32_0 : i32, i32
  }
  func.func @transform_2(%arg0: i32) -> (i32, i32) {
    %c0_i32 = arith.constant 0 : i32
    %c0_i32_0 = arith.constant 0 : i32
    %c0_i32_1 = arith.constant 0 : i32
    return %c0_i32, %c0_i32_0 : i32, i32
  }
  func.func @transform_3(%arg0: i32) -> (i32, i32, i32) {
    %c0_i32 = arith.constant 0 : i32
    %c0_i32_0 = arith.constant 0 : i32
    %c0_i32_1 = arith.constant 0 : i32
    %c0_i32_2 = arith.constant 0 : i32
    return %c0_i32, %c0_i32_0, %c0_i32_1 : i32, i32, i32
  }
  func.func @transform_4(%arg0: i32) -> (i32, i32, i32) {
    %c0_i32 = arith.constant 0 : i32
    %c0_i32_0 = arith.constant 0 : i32
    %c0_i32_1 = arith.constant 0 : i32
    %c0_i32_2 = arith.constant 0 : i32
    return %c0_i32, %c0_i32_0, %c0_i32_1 : i32, i32, i32
  }
  func.func @transform_5(%arg0: i32) -> (i32, i32) {
    %c0_i32 = arith.constant 0 : i32
    %c0_i32_0 = arith.constant 0 : i32
    %c0_i32_1 = arith.constant 0 : i32
    return %c0_i32, %c0_i32_0 : i32, i32
  }
  func.func @transform_6(%arg0: i32) -> (i32, i32) {
    %c0_i32 = arith.constant 0 : i32
    %c0_i32_0 = arith.constant 0 : i32
    %c0_i32_1 = arith.constant 0 : i32
    return %c0_i32, %c0_i32_0 : i32, i32
  }
  func.func @transform_7(%arg0: i32) -> (i32, i32) {
    %c0_i32 = arith.constant 0 : i32
    %c0_i32_0 = arith.constant 0 : i32
    %c0_i32_1 = arith.constant 0 : i32
    return %c0_i32, %c0_i32_0 : i32, i32
  }
  func.func @transform_8(%arg0: i32) -> (i32, i32) {
    %c0_i32 = arith.constant 0 : i32
    %c0_i32_0 = arith.constant 0 : i32
    %c0_i32_1 = arith.constant 0 : i32
    return %c0_i32, %c0_i32_0 : i32, i32
  }
  func.func @transform_9(%arg0: i32) -> (i32, i32) {
    %c0_i32 = arith.constant 0 : i32
    %c0_i32_0 = arith.constant 0 : i32
    %c0_i32_1 = arith.constant 0 : i32
    return %c0_i32, %c0_i32_0 : i32, i32
  }
  func.func @transform_10(%arg0: i32) -> (i32, i32) {
    %c0_i32 = arith.constant 0 : i32
    %c0_i32_0 = arith.constant 0 : i32
    %c0_i32_1 = arith.constant 0 : i32
    return %c0_i32, %c0_i32_0 : i32, i32
  }
  func.func @transform_11(%arg0: i32) -> (i32, i32, i32) {
    %c0_i32 = arith.constant 0 : i32
    %c0_i32_0 = arith.constant 0 : i32
    %c0_i32_1 = arith.constant 0 : i32
    return %arg0, %c0_i32, %c0_i32_0 : i32, i32, i32
  }
}

</mosaic_0001>

<llo_original>
// kernel: new_model_forward.3
$region0: #{new_model_forward.3}
  #allocation0 [shape = 'u32[]', space=smem, size = 0x4, offset = 0x4, fixed_abs, tag = 'smem constant byte address 0x4 - core index']
  #allocation1 [shape = 'u32[144,128]{1,0:T(1,128)}', space=vmem, size = 0x12000, scoped, tag = 'internal scratch']
  %s0 = inlined_call_operand.vmem [shape: bf16[2,196,768], index: 0, kind: input, shape index: {}]
  %s1 = inlined_call_operand.vmem [shape: bf16[768,128], index: 1, kind: input, shape index: {}]
  %s2 = inlined_call_operand.vmem [shape: f32[1,128], index: 2, kind: input, shape index: {}, may-alias: {2,4}]
  %s3 = inlined_call_operand.vmem [shape: bf16[128,128], index: 3, kind: input, shape index: {}]
  %s4 = inlined_call_operand.vmem [shape: f32[1,128], index: 4, kind: input, shape index: {}, may-alias: {2,4}]
  %s5 = inlined_call_operand.hbm [shape: f32[2,1,128], index: 5, kind: output, shape index: {}]
  %s6 = sld [smem:[#allocation0]]
  $region53: #{new_model_forward.3} parent=0
    _
  %s8 = ssub.s32 1, %s6
  %s9 = scalar_select 0, %s8, %s6
  $region1: #{new_model_forward.3} parent=0
    #allocation2 [shape = 'u8[1024]{0}', space=vmem, size = 0x400, scoped, tag = 'output window, operand 0']
    #allocation3 [shape = 's32[2]{0}', space=sflag, size = 0x8, scoped, tag = 'scoped memory for new_model_forward.3']
    %10 = vsyncpa [#allocation3], 0
    %s11 = scalar_lea.sflag [#allocation3], 1
    %12 = vsyncpa %s11, 0
    loop: start=0, step=1, limit=4
    $region2: #{new_model_forward.3} parent=1 // loop_pre_header
      _
    $region3: #{new_model_forward.3} parent=1 // loop_header
      %s14 = sphi 0, %s18
      %p15 = scmp.ge.s32.totalorder %s14, 4
      %s24 = sphi 0, %s26
      %s27 = sphi 0, %s24
      %s28 = sphi 0, %s27
      %s44 = sphi 0, %s28
      %s48 = sphi 0, %s48
      %s50 = sphi 0, %s48
      %s51 = sphi 0, %s50
      %s65 = sphi 0, %s51
      %s69 = sphi 0, %s69
      %s71 = sphi 0, %s69
      %s72 = sphi 0, %s71
      %s86 = sphi 0, %s72
      %s90 = sphi 0, %s90
      %s92 = sphi 0, %s90
      %s93 = sphi 0, %s92
      %s107 = sphi 0, %s93
      %s111 = sphi 0, %s111
      %s113 = sphi 0, %s111
      %s114 = sphi 0, %s113
      %s128 = sphi 0, %s114
      %s134 = sphi 0, %s136
      %s137 = sphi 0, %s134
      %s138 = sphi 0, %s137
      %s154 = sphi 0, %s138
    $region4: #{new_model_forward.3} parent=1 // loop_header_branch
      %17 = sbr.rel (%p15) target = $region8
    $region5: #{new_model_forward.3} parent=1 // loop_body
      %s19 = ssub.s32 %s14, 1
      %s20 = ssub.s32 %s14, 2
      %s21 = sadd.s32 %s14, 1
      %s22 = ssub.s32 %s14, %s21
      %p23 = scmp.eq.s32.totalorder %s22, 0
      %s25 = sadd.s32 %s24, 1
      %s26 = scalar_select %p23, %s24, %s25
      %p29 = pneg %p23
      %p30 = scmp.eq.s32.totalorder %s14, 1
      %p31 = por %p29, %p30
      %p32 = scmp.ne.s32.totalorder %s24, %s27
      %p33 = scmp.eq.s32.totalorder %s14, 0
      %p34 = por %p32, %p33
      %p35 = scmp.ne.s32.totalorder %s24, %s27
      %p36 = scmp.eq.s32.totalorder %s19, 1
      %p37 = por %p35, %p36
      %p38 = scmp.ne.s32.totalorder %s27, %s28
      %p39 = scmp.eq.s32.totalorder %s19, 0
      %p40 = por %p38, %p39
      %p41 = scmp.ne.s32.totalorder %s27, %s28
      %p42 = scmp.eq.s32.totalorder %s20, 1
      %p43 = por %p41, %p42
      %p45 = scmp.ne.s32.totalorder %s28, %s44
      %p46 = scmp.eq.s32.totalorder %s20, 0
      %p47 = por %p45, %p46
      %s49 = sadd.s32 %s48, 1
      %p52 = scmp.eq.s32.totalorder %s14, 1
      %p53 = scmp.ne.s32.totalorder %s48, %s50
      %p54 = scmp.eq.s32.totalorder %s14, 0
      %p55 = por %p53, %p54
      %p56 = scmp.ne.s32.totalorder %s48, %s50
      %p57 = scmp.eq.s32.totalorder %s19, 1
      %p58 = por %p56, %p57
      %p59 = scmp.ne.s32.totalorder %s50, %s51
      %p60 = scmp.eq.s32.totalorder %s19, 0
      %p61 = por %p59, %p60
      %p62 = scmp.ne.s32.totalorder %s50, %s51
      %p63 = scmp.eq.s32.totalorder %s20, 1
      %p64 = por %p62, %p63
      %p66 = scmp.ne.s32.totalorder %s51, %s65
      %p67 = scmp.eq.s32.totalorder %s20, 0
      %p68 = por %p66, %p67
      %s70 = sadd.s32 %s69, 1
      %p73 = scmp.eq.s32.totalorder %s14, 1
      %p74 = scmp.ne.s32.totalorder %s69, %s71
      %p75 = scmp.eq.s32.totalorder %s14, 0
      %p76 = por %p74, %p75
      %p77 = scmp.ne.s32.totalorder %s69, %s71
      %p78 = scmp.eq.s32.totalorder %s19, 1
      %p79 = por %p77, %p78
      %p80 = scmp.ne.s32.totalorder %s71, %s72
      %p81 = scmp.eq.s32.totalorder %s19, 0
      %p82 = por %p80, %p81
      %p83 = scmp.ne.s32.totalorder %s71, %s72
      %p84 = scmp.eq.s32.totalorder %s20, 1
      %p85 = por %p83, %p84
      %p87 = scmp.ne.s32.totalorder %s72, %s86
      %p88 = scmp.eq.s32.totalorder %s20, 0
      %p89 = por %p87, %p88
      %s91 = sadd.s32 %s90, 1
      %p94 = scmp.eq.s32.totalorder %s14, 1
      %p95 = scmp.ne.s32.totalorder %s90, %s92
      %p96 = scmp.eq.s32.totalorder %s14, 0
      %p97 = por %p95, %p96
      %p98 = scmp.ne.s32.totalorder %s90, %s92
      %p99 = scmp.eq.s32.totalorder %s19, 1
      %p100 = por %p98, %p99
      %p101 = scmp.ne.s32.totalorder %s92, %s93
      %p102 = scmp.eq.s32.totalorder %s19, 0
      %p103 = por %p101, %p102
      %p104 = scmp.ne.s32.totalorder %s92, %s93
      %p105 = scmp.eq.s32.totalorder %s20, 1
      %p106 = por %p104, %p105
      %p108 = scmp.ne.s32.totalorder %s93, %s107
      %p109 = scmp.eq.s32.totalorder %s20, 0
      %p110 = por %p108, %p109
      %s112 = sadd.s32 %s111, 1
      %p115 = scmp.eq.s32.totalorder %s14, 1
      %p116 = scmp.ne.s32.totalorder %s111, %s113
      %p117 = scmp.eq.s32.totalorder %s14, 0
      %p118 = por %p116, %p117
      %p119 = scmp.ne.s32.totalorder %s111, %s113
      %p120 = scmp.eq.s32.totalorder %s19, 1
      %p121 = por %p119, %p120
      %p122 = scmp.ne.s32.totalorder %s113, %s114
      %p123 = scmp.eq.s32.totalorder %s19, 0
      %p124 = por %p122, %p123
      %p125 = scmp.ne.s32.totalorder %s113, %s114
      %p126 = scmp.eq.s32.totalorder %s20, 1
      %p127 = por %p125, %p126
      %p129 = scmp.ne.s32.totalorder %s114, %s128
      %p130 = scmp.eq.s32.totalorder %s20, 0
      %p131 = por %p129, %p130
      %s132 = ssub.s32 %s14, %s21
      %p133 = scmp.eq.s32.totalorder %s132, 0
      %s135 = sadd.s32 %s134, 1
      %s136 = scalar_select %p133, %s134, %s135
      %p139 = pneg %p133
      %p140 = scmp.eq.s32.totalorder %s14, 1
      %p141 = por %p139, %p140
      %p142 = scmp.ne.s32.totalorder %s134, %s137
      %p143 = scmp.eq.s32.totalorder %s14, 0
      %p144 = por %p142, %p143
      %p145 = scmp.ne.s32.totalorder %s134, %s137
      %p146 = scmp.eq.s32.totalorder %s19, 1
      %p147 = por %p145, %p146
      %p148 = scmp.ne.s32.totalorder %s137, %s138
      %p149 = scmp.eq.s32.totalorder %s19, 0
      %p150 = por %p148, %p149
      %p151 = scmp.ne.s32.totalorder %s137, %s138
      %p152 = scmp.eq.s32.totalorder %s20, 1
      %p153 = por %p151, %p152
      %p155 = scmp.ne.s32.totalorder %s138, %s154
      %p156 = scmp.eq.s32.totalorder %s20, 0
      %p157 = por %p155, %p156
      %p158 = scmp.le.s32.totalorder 1, %s14
      %p159 = scmp.lt.s32.totalorder %s14, 3
      %p160 = pnand %p158, %p159
      %p161 = pneg %p160
      // Predicated region
      $region9: #{new_model_forward.3} parent=5 // pred_check
        _
      $region10: #{new_model_forward.3} parent=5 // pred_check_branch
        %163 = sbr.rel (%p160) target = $region12
      $region11: #{new_model_forward.3} parent=5 // pred_region
        %s164 = ssub.s32 %s14, 1
        // Predicated region
        $region13: #{new_model_forward.3} parent=11 // pred_check
          %p165 = pneg %p61
        $region14: #{new_model_forward.3} parent=11 // pred_check_branch
          %167 = sbr.rel (%p165) target = $region16
        $region15: #{new_model_forward.3} parent=11 // pred_region
          _
        $region16: #{new_model_forward.3} parent=11 // pred_fallthru
          _
        // Predicated region
        $region17: #{new_model_forward.3} parent=11 // pred_check
          %p168 = pneg %p82
        $region18: #{new_model_forward.3} parent=11 // pred_check_branch
          %170 = sbr.rel (%p168) target = $region20
        $region19: #{new_model_forward.3} parent=11 // pred_region
          _
        $region20: #{new_model_forward.3} parent=11 // pred_fallthru
          _
        // Predicated region
        $region21: #{new_model_forward.3} parent=11 // pred_check
          %p171 = pneg %p103
        $region22: #{new_model_forward.3} parent=11 // pred_check_branch
          %173 = sbr.rel (%p171) target = $region24
        $region23: #{new_model_forward.3} parent=11 // pred_region
          _
        $region24: #{new_model_forward.3} parent=11 // pred_fallthru
          _
        // Predicated region
        $region25: #{new_model_forward.3} parent=11 // pred_check
          %p174 = pneg %p124
        $region26: #{new_model_forward.3} parent=11 // pred_check_branch
          %176 = sbr.rel (%p174) target = $region28
        $region27: #{new_model_forward.3} parent=11 // pred_region
          _
        $region28: #{new_model_forward.3} parent=11 // pred_fallthru
          _
      $region12: #{new_model_forward.3} parent=5 // pred_fallthru
        _
      %p177 = scmp.lt.s32.totalorder %s14, 2
      // Predicated region
      $region29: #{new_model_forward.3} parent=5 // pred_check
        %p178 = pneg %p177
      $region30: #{new_model_forward.3} parent=5 // pred_check_branch
        %180 = sbr.rel (%p178) target = $region32
      $region31: #{new_model_forward.3} parent=5 // pred_region
        // Predicated region
        $region33: #{new_model_forward.3} parent=31 // pred_check
          %p181 = pneg %p34
        $region34: #{new_model_forward.3} parent=31 // pred_check_branch
          %183 = sbr.rel (%p181) target = $region36
        $region35: #{new_model_forward.3} parent=31 // pred_region
          %p184 = scmp.lt.s32.totalorder %s14, 1
          %s185 = scalar_select %p184, %s14, 1
          %s186 = smul.addr %s185, 150
          %s187 = smul.addr %s186, 4
          %s188 = scalar_lea.vmem %s0, %s187
        $region36: #{new_model_forward.3} parent=31 // pred_fallthru
          _
      $region32: #{new_model_forward.3} parent=5 // pred_fallthru
        _
      %p189 = scmp.le.s32.totalorder 1, %s14
      %p190 = scmp.lt.s32.totalorder %s14, 3
      %p191 = pnand %p189, %p190
      %p192 = pneg %p191
      // Predicated region
      $region37: #{new_model_forward.3} parent=5 // pred_check
        _
      $region38: #{new_model_forward.3} parent=5 // pred_check_branch
        %194 = sbr.rel (%p191) target = $region40
      $region39: #{new_model_forward.3} parent=5 // pred_region
        %s195 = ssub.s32 %s14, 1
        %p196 = scmp.lt.s32.totalorder %s19, 1
        %s197 = scalar_select %p196, %s19, 1
        %s198 = smul.addr %s197, 150
        %s199 = smul.addr %s198, 4
        %s200 = scalar_lea.vmem %s0, %s199
        %p201 = pneg %p40
        %p202 = pneg %p37
        %p203 = pneg %p61
        %p204 = pneg %p58
        %p205 = pneg %p82
        %p206 = pneg %p79
        %p207 = pneg %p103
        %p208 = pneg %p100
        %p209 = pneg %p124
        %p210 = pneg %p121
        %p211 = pneg %p150
        %p212 = pneg %p147
        %s213 = sand.u32 %s137, 1
        %s214 = scalar_lea.sflag [#allocation3], %s213
        %s215 = sand.u32 %s137, 1
        %s216 = scalar_lea.vmem [#allocation2], %s215
        %p217 = scmp.lt.s32.totalorder %s19, 1
        %s218 = scalar_select %p217, %s19, 1
        %s219 = smul.addr %s218, 150
        %s220 = smul.addr %s219, 4
        %s221 = scalar_lea.vmem %s0, %s220
        %v223 = vld [vmem:[%s221] sm:$0xff]
        %v224 = vld [vmem:[%s221 + $0x8] sm:$0xff]
        %v225 = vld [vmem:[%s221 + $0x10] sm:$0xff]
        %v226 = vld [vmem:[%s221 + $0x18] sm:$0xff]
        %v227 = vld [vmem:[%s221 + $0x20] sm:$0xff]
        %v228 = vld [vmem:[%s221 + $0x28] sm:$0xff]
        %v229 = vld [vmem:[%s221 + $0x30] sm:$0xff]
        %v230 = vld [vmem:[%s221 + $0x38] sm:$0xff]
        %v231 = vld [vmem:[%s221 + $0x40] sm:$0xff]
        %v232 = vld [vmem:[%s221 + $0x48] sm:$0xff]
        %v233 = vld [vmem:[%s221 + $0x50] sm:$0xff]
        %v234 = vld [vmem:[%s221 + $0x58] sm:$0xff]
        %v235 = vld [vmem:[%s221 + $0x60] sm:$0xff]
        %v236 = vld [vmem:[%s221 + $0x68] sm:$0xff]
        %v237 = vld [vmem:[%s221 + $0x70] sm:$0xff]
        %v238 = vld [vmem:[%s221 + $0x78] sm:$0xff]
        %v239 = vld [vmem:[%s221 + $0x80] sm:$0xff]
        %v240 = vld [vmem:[%s221 + $0x88] sm:$0xff]
        %v241 = vld [vmem:[%s221 + $0x90] sm:$0xff]
        %v242 = vld [vmem:[%s221 + $0x98] sm:$0xff]
        %v243 = vld [vmem:[%s221 + $0xa0] sm:$0xff]
        %v244 = vld [vmem:[%s221 + $0xa8] sm:$0xff]
        %v245 = vld [vmem:[%s221 + $0xb0] sm:$0xff]
        %v246 = vld [vmem:[%s221 + $0xb8] sm:$0xff]
        %v247 = vld [vmem:[%s221 + $0xc0] sm:$0xff]
        %v248 = vld [vmem:[%s221 + $0xc8] sm:$0xff]
        %v249 = vld [vmem:[%s221 + $0xd0] sm:$0xff]
        %v250 = vld [vmem:[%s221 + $0xd8] sm:$0xff]
        %v251 = vld [vmem:[%s221 + $0xe0] sm:$0xff]
        %v252 = vld [vmem:[%s221 + $0xe8] sm:$0xff]
        %v253 = vld [vmem:[%s221 + $0xf0] sm:$0xff]
        %v254 = vld [vmem:[%s221 + $0xf8] sm:$0xff]
        %v255 = vld [vmem:[%s221 + $0x100] sm:$0xff]
        %v256 = vld [vmem:[%s221 + $0x108] sm:$0xff]
        %v257 = vld [vmem:[%s221 + $0x110] sm:$0xff]
        %v258 = vld [vmem:[%s221 + $0x118] sm:$0xff]
        %v259 = vld [vmem:[%s221 + $0x120] sm:$0xff]
        %v260 = vld [vmem:[%s221 + $0x128] sm:$0xff]
        %v261 = vld [vmem:[%s221 + $0x130] sm:$0xff]
        %v262 = vld [vmem:[%s221 + $0x138] sm:$0xff]
        %v263 = vld [vmem:[%s221 + $0x140] sm:$0xff]
        %v264 = vld [vmem:[%s221 + $0x148] sm:$0xff]
        %v265 = vld [vmem:[%s221 + $0x150] sm:$0xff]
        %v266 = vld [vmem:[%s221 + $0x158] sm:$0xff]
        %v267 = vld [vmem:[%s221 + $0x160] sm:$0xff]
        %v268 = vld [vmem:[%s221 + $0x168] sm:$0xff]
        %v269 = vld [vmem:[%s221 + $0x170] sm:$0xff]
        %v270 = vld [vmem:[%s221 + $0x178] sm:$0xff]
        %v271 = vld [vmem:[%s221 + $0x180] sm:$0xff]
        %v272 = vld [vmem:[%s221 + $0x188] sm:$0xff]
        %v273 = vld [vmem:[%s221 + $0x190] sm:$0xff]
        %v274 = vld [vmem:[%s221 + $0x198] sm:$0xff]
        %v275 = vld [vmem:[%s221 + $0x1a0] sm:$0xff]
        %v276 = vld [vmem:[%s221 + $0x1a8] sm:$0xff]
        %v277 = vld [vmem:[%s221 + $0x1b0] sm:$0xff]
        %v278 = vld [vmem:[%s221 + $0x1b8] sm:$0xff]
        %v279 = vld [vmem:[%s221 + $0x1c0] sm:$0xff]
        %v280 = vld [vmem:[%s221 + $0x1c8] sm:$0xff]
        %v281 = vld [vmem:[%s221 + $0x1d0] sm:$0xff]
        %v282 = vld [vmem:[%s221 + $0x1d8] sm:$0xff]
        %v283 = vld [vmem:[%s221 + $0x1e0] sm:$0xff]
        %v284 = vld [vmem:[%s221 + $0x1e8] sm:$0xff]
        %v285 = vld [vmem:[%s221 + $0x1f0] sm:$0xff]
        %v286 = vld [vmem:[%s221 + $0x1f8] sm:$0xff]
        %v287 = vld [vmem:[%s221 + $0x200] sm:$0xff]
        %v288 = vld [vmem:[%s221 + $0x208] sm:$0xff]
        %v289 = vld [vmem:[%s221 + $0x210] sm:$0xff]
        %v290 = vld [vmem:[%s221 + $0x218] sm:$0xff]
        %v291 = vld [vmem:[%s221 + $0x220] sm:$0xff]
        %v292 = vld [vmem:[%s221 + $0x228] sm:$0xff]
        %v293 = vld [vmem:[%s221 + $0x230] sm:$0xff]
        %v294 = vld [vmem:[%s221 + $0x238] sm:$0xff]
        %v295 = vld [vmem:[%s221 + $0x240] sm:$0x33]
        %v296 = vld [vmem:[%s221 + $0x248] sm:$0x33]
        %v297 = vld [vmem:[%s221 + $0x250] sm:$0x33]
        %v298 = vld [vmem:[%s1] sm:$0xf]
        %v299 = vld [vmem:[%s1 + $0x4] sm:$0xf]
        %v300 = vld [vmem:[%s1 + $0x8] sm:$0xf]
        %v301 = vld [vmem:[%s1 + $0xc] sm:$0xf]
        %v302 = vld [vmem:[%s1 + $0x10] sm:$0xf]
        %v303 = vld [vmem:[%s1 + $0x14] sm:$0xf]
        %v304 = vld [vmem:[%s1 + $0x18] sm:$0xf]
        %v305 = vld [vmem:[%s1 + $0x1c] sm:$0xf]
        %v306 = vld [vmem:[%s1 + $0x20] sm:$0xf]
        %v307 = vld [vmem:[%s1 + $0x24] sm:$0xf]
        %v308 = vld [vmem:[%s1 + $0x28] sm:$0xf]
        %v309 = vld [vmem:[%s1 + $0x2c] sm:$0xf]
        %v310 = vld [vmem:[%s1 + $0x30] sm:$0xf]
        %v311 = vld [vmem:[%s1 + $0x34] sm:$0xf]
        %v312 = vld [vmem:[%s1 + $0x38] sm:$0xf]
        %v313 = vld [vmem:[%s1 + $0x3c] sm:$0xf]
        %v314 = vld [vmem:[%s1 + $0x40] sm:$0xf]
        %v315 = vld [vmem:[%s1 + $0x44] sm:$0xf]
        %v316 = vld [vmem:[%s1 + $0x48] sm:$0xf]
        %v317 = vld [vmem:[%s1 + $0x4c] sm:$0xf]
        %v318 = vld [vmem:[%s1 + $0x50] sm:$0xf]
        %v319 = vld [vmem:[%s1 + $0x54] sm:$0xf]
        %v320 = vld [vmem:[%s1 + $0x58] sm:$0xf]
        %v321 = vld [vmem:[%s1 + $0x5c] sm:$0xf]
        %v322 = vld [vmem:[%s1 + $0x60] sm:$0xf]
        %v323 = vld [vmem:[%s1 + $0x64] sm:$0xf]
        %v324 = vld [vmem:[%s1 + $0x68] sm:$0xf]
        %v325 = vld [vmem:[%s1 + $0x6c] sm:$0xf]
        %v326 = vld [vmem:[%s1 + $0x70] sm:$0xf]
        %v327 = vld [vmem:[%s1 + $0x74] sm:$0xf]
        %v328 = vld [vmem:[%s1 + $0x78] sm:$0xf]
        %v329 = vld [vmem:[%s1 + $0x7c] sm:$0xf]
        %v330 = vld [vmem:[%s1 + $0x80] sm:$0xf]
        %v331 = vld [vmem:[%s1 + $0x84] sm:$0xf]
        %v332 = vld [vmem:[%s1 + $0x88] sm:$0xf]
        %v333 = vld [vmem:[%s1 + $0x8c] sm:$0xf]
        %v334 = vld [vmem:[%s1 + $0x90] sm:$0xf]
        %v335 = vld [vmem:[%s1 + $0x94] sm:$0xf]
        %v336 = vld [vmem:[%s1 + $0x98] sm:$0xf]
        %v337 = vld [vmem:[%s1 + $0x9c] sm:$0xf]
        %v338 = vld [vmem:[%s1 + $0xa0] sm:$0xf]
        %v339 = vld [vmem:[%s1 + $0xa4] sm:$0xf]
        %v340 = vld [vmem:[%s1 + $0xa8] sm:$0xf]
        %v341 = vld [vmem:[%s1 + $0xac] sm:$0xf]
        %v342 = vld [vmem:[%s1 + $0xb0] sm:$0xf]
        %v343 = vld [vmem:[%s1 + $0xb4] sm:$0xf]
        %v344 = vld [vmem:[%s1 + $0xb8] sm:$0xf]
        %v345 = vld [vmem:[%s1 + $0xbc] sm:$0xf]
        %v346 = vld [vmem:[%s1 + $0xc0] sm:$0xf]
        %v347 = vld [vmem:[%s1 + $0xc4] sm:$0xf]
        %v348 = vld [vmem:[%s1 + $0xc8] sm:$0xf]
        %v349 = vld [vmem:[%s1 + $0xcc] sm:$0xf]
        %v350 = vld [vmem:[%s1 + $0xd0] sm:$0xf]
        %v351 = vld [vmem:[%s1 + $0xd4] sm:$0xf]
        %v352 = vld [vmem:[%s1 + $0xd8] sm:$0xf]
        %v353 = vld [vmem:[%s1 + $0xdc] sm:$0xf]
        %v354 = vld [vmem:[%s1 + $0xe0] sm:$0xf]
        %v355 = vld [vmem:[%s1 + $0xe4] sm:$0xf]
        %v356 = vld [vmem:[%s1 + $0xe8] sm:$0xf]
        %v357 = vld [vmem:[%s1 + $0xec] sm:$0xf]
        %v358 = vld [vmem:[%s1 + $0xf0] sm:$0xf]
        %v359 = vld [vmem:[%s1 + $0xf4] sm:$0xf]
        %v360 = vld [vmem:[%s1 + $0xf8] sm:$0xf]
        %v361 = vld [vmem:[%s1 + $0xfc] sm:$0xf]
        %v362 = vld [vmem:[%s1 + $0x100] sm:$0xf]
        %v363 = vld [vmem:[%s1 + $0x104] sm:$0xf]
        %v364 = vld [vmem:[%s1 + $0x108] sm:$0xf]
        %v365 = vld [vmem:[%s1 + $0x10c] sm:$0xf]
        %v366 = vld [vmem:[%s1 + $0x110] sm:$0xf]
        %v367 = vld [vmem:[%s1 + $0x114] sm:$0xf]
        %v368 = vld [vmem:[%s1 + $0x118] sm:$0xf]
        %v369 = vld [vmem:[%s1 + $0x11c] sm:$0xf]
        %v370 = vld [vmem:[%s1 + $0x120] sm:$0xf]
        %v371 = vld [vmem:[%s1 + $0x124] sm:$0xf]
        %v372 = vld [vmem:[%s1 + $0x128] sm:$0xf]
        %v373 = vld [vmem:[%s1 + $0x12c] sm:$0xf]
        %v374 = vld [vmem:[%s1 + $0x130] sm:$0xf]
        %v375 = vld [vmem:[%s1 + $0x134] sm:$0xf]
        %v376 = vld [vmem:[%s1 + $0x138] sm:$0xf]
        %v377 = vld [vmem:[%s1 + $0x13c] sm:$0xf]
        %v378 = vld [vmem:[%s1 + $0x140] sm:$0xf]
        %v379 = vld [vmem:[%s1 + $0x144] sm:$0xf]
        %v380 = vld [vmem:[%s1 + $0x148] sm:$0xf]
        %v381 = vld [vmem:[%s1 + $0x14c] sm:$0xf]
        %v382 = vld [vmem:[%s1 + $0x150] sm:$0xf]
        %v383 = vld [vmem:[%s1 + $0x154] sm:$0xf]
        %v384 = vld [vmem:[%s1 + $0x158] sm:$0xf]
        %v385 = vld [vmem:[%s1 + $0x15c] sm:$0xf]
        %v386 = vld [vmem:[%s1 + $0x160] sm:$0xf]
        %v387 = vld [vmem:[%s1 + $0x164] sm:$0xf]
        %v388 = vld [vmem:[%s1 + $0x168] sm:$0xf]
        %v389 = vld [vmem:[%s1 + $0x16c] sm:$0xf]
        %v390 = vld [vmem:[%s1 + $0x170] sm:$0xf]
        %v391 = vld [vmem:[%s1 + $0x174] sm:$0xf]
        %v392 = vld [vmem:[%s1 + $0x178] sm:$0xf]
        %v393 = vld [vmem:[%s1 + $0x17c] sm:$0xf]
        %v394 = vld [vmem:[%s2] sm:$0x1]
        %v396 = vlaneseq
        %v397 = vshrl.u32 %v396, 7
        %v398 = vsub.s32 0, %v397
        %v399 = vrot.slane %v394, %v398
        %v476 = vunpack.c.l.b16 %v223
        %v477 = vunpack.c.h.b16 %v223
        %v478 = vunpack.c.l.b16 %v224
        %v479 = vunpack.c.h.b16 %v224
        %v480 = vunpack.c.l.b16 %v225
        %v481 = vunpack.c.h.b16 %v225
        %v482 = vunpack.c.l.b16 %v226
        %v483 = vunpack.c.h.b16 %v226
        %v484 = vunpack.c.l.b16 %v227
        %v485 = vunpack.c.h.b16 %v227
        %v486 = vunpack.c.l.b16 %v228
        %v487 = vunpack.c.h.b16 %v228
        %v488 = vunpack.c.l.b16 %v229
        %v489 = vunpack.c.h.b16 %v229
        %v490 = vunpack.c.l.b16 %v230
        %v491 = vunpack.c.h.b16 %v230
        %v492 = vunpack.c.l.b16 %v231
        %v493 = vunpack.c.h.b16 %v231
        %v494 = vunpack.c.l.b16 %v232
        %v495 = vunpack.c.h.b16 %v232
        %v496 = vunpack.c.l.b16 %v233
        %v497 = vunpack.c.h.b16 %v233
        %v498 = vunpack.c.l.b16 %v234
        %v499 = vunpack.c.h.b16 %v234
        %v500 = vunpack.c.l.b16 %v235
        %v501 = vunpack.c.h.b16 %v235
        %v502 = vunpack.c.l.b16 %v236
        %v503 = vunpack.c.h.b16 %v236
        %v504 = vunpack.c.l.b16 %v237
        %v505 = vunpack.c.h.b16 %v237
        %v506 = vunpack.c.l.b16 %v238
        %v507 = vunpack.c.h.b16 %v238
        %v508 = vunpack.c.l.b16 %v239
        %v509 = vunpack.c.h.b16 %v239
        %v510 = vunpack.c.l.b16 %v240
        %v511 = vunpack.c.h.b16 %v240
        %v512 = vunpack.c.l.b16 %v241
        %v513 = vunpack.c.h.b16 %v241
        %v514 = vunpack.c.l.b16 %v242
        %v515 = vunpack.c.h.b16 %v242
        %v516 = vunpack.c.l.b16 %v243
        %v517 = vunpack.c.h.b16 %v243
        %v518 = vunpack.c.l.b16 %v244
        %v519 = vunpack.c.h.b16 %v244
        %v520 = vunpack.c.l.b16 %v245
        %v521 = vunpack.c.h.b16 %v245
        %v522 = vunpack.c.l.b16 %v246
        %v523 = vunpack.c.h.b16 %v246
        %v524 = vunpack.c.l.b16 %v247
        %v525 = vunpack.c.h.b16 %v247
        %v526 = vunpack.c.l.b16 %v248
        %v527 = vunpack.c.h.b16 %v248
        %v528 = vunpack.c.l.b16 %v249
        %v529 = vunpack.c.h.b16 %v249
        %v530 = vunpack.c.l.b16 %v250
        %v531 = vunpack.c.h.b16 %v250
        %v532 = vunpack.c.l.b16 %v251
        %v533 = vunpack.c.h.b16 %v251
        %v534 = vunpack.c.l.b16 %v252
        %v535 = vunpack.c.h.b16 %v252
        %v536 = vunpack.c.l.b16 %v253
        %v537 = vunpack.c.h.b16 %v253
        %v538 = vunpack.c.l.b16 %v254
        %v539 = vunpack.c.h.b16 %v254
        %v540 = vunpack.c.l.b16 %v255
        %v541 = vunpack.c.h.b16 %v255
        %v542 = vunpack.c.l.b16 %v256
        %v543 = vunpack.c.h.b16 %v256
        %v544 = vunpack.c.l.b16 %v257
        %v545 = vunpack.c.h.b16 %v257
        %v546 = vunpack.c.l.b16 %v258
        %v547 = vunpack.c.h.b16 %v258
        %v548 = vunpack.c.l.b16 %v259
        %v549 = vunpack.c.h.b16 %v259
        %v550 = vunpack.c.l.b16 %v260
        %v551 = vunpack.c.h.b16 %v260
        %v552 = vunpack.c.l.b16 %v261
        %v553 = vunpack.c.h.b16 %v261
        %v554 = vunpack.c.l.b16 %v262
        %v555 = vunpack.c.h.b16 %v262
        %v556 = vunpack.c.l.b16 %v263
        %v557 = vunpack.c.h.b16 %v263
        %v558 = vunpack.c.l.b16 %v264
        %v559 = vunpack.c.h.b16 %v264
        %v560 = vunpack.c.l.b16 %v265
        %v561 = vunpack.c.h.b16 %v265
        %v562 = vunpack.c.l.b16 %v266
        %v563 = vunpack.c.h.b16 %v266
        %v564 = vunpack.c.l.b16 %v267
        %v565 = vunpack.c.h.b16 %v267
        %v566 = vunpack.c.l.b16 %v268
        %v567 = vunpack.c.h.b16 %v268
        %v568 = vunpack.c.l.b16 %v269
        %v569 = vunpack.c.h.b16 %v269
        %v570 = vunpack.c.l.b16 %v270
        %v571 = vunpack.c.h.b16 %v270
        %v572 = vunpack.c.l.b16 %v271
        %v573 = vunpack.c.h.b16 %v271
        %v574 = vunpack.c.l.b16 %v272
        %v575 = vunpack.c.h.b16 %v272
        %v576 = vunpack.c.l.b16 %v273
        %v577 = vunpack.c.h.b16 %v273
        %v578 = vunpack.c.l.b16 %v274
        %v579 = vunpack.c.h.b16 %v274
        %v580 = vunpack.c.l.b16 %v275
        %v581 = vunpack.c.h.b16 %v275
        %v582 = vunpack.c.l.b16 %v276
        %v583 = vunpack.c.h.b16 %v276
        %v584 = vunpack.c.l.b16 %v277
        %v585 = vunpack.c.h.b16 %v277
        %v586 = vunpack.c.l.b16 %v278
        %v587 = vunpack.c.h.b16 %v278
        %v588 = vunpack.c.l.b16 %v279
        %v589 = vunpack.c.h.b16 %v279
        %v590 = vunpack.c.l.b16 %v280
        %v591 = vunpack.c.h.b16 %v280
        %v592 = vunpack.c.l.b16 %v281
        %v593 = vunpack.c.h.b16 %v281
        %v594 = vunpack.c.l.b16 %v282
        %v595 = vunpack.c.h.b16 %v282
        %v596 = vunpack.c.l.b16 %v283
        %v597 = vunpack.c.h.b16 %v283
        %v598 = vunpack.c.l.b16 %v284
        %v599 = vunpack.c.h.b16 %v284
        %v600 = vunpack.c.l.b16 %v285
        %v601 = vunpack.c.h.b16 %v285
        %v602 = vunpack.c.l.b16 %v286
        %v603 = vunpack.c.h.b16 %v286
        %v604 = vunpack.c.l.b16 %v287
        %v605 = vunpack.c.h.b16 %v287
        %v606 = vunpack.c.l.b16 %v288
        %v607 = vunpack.c.h.b16 %v288
        %v608 = vunpack.c.l.b16 %v289
        %v609 = vunpack.c.h.b16 %v289
        %v610 = vunpack.c.l.b16 %v290
        %v611 = vunpack.c.h.b16 %v290
        %v612 = vunpack.c.l.b16 %v291
        %v613 = vunpack.c.h.b16 %v291
        %v614 = vunpack.c.l.b16 %v292
        %v615 = vunpack.c.h.b16 %v292
        %v616 = vunpack.c.l.b16 %v293
        %v617 = vunpack.c.h.b16 %v293
        %v618 = vunpack.c.l.b16 %v294
        %v619 = vunpack.c.h.b16 %v294
        %v620 = vunpack.c.l.b16 %v295
        %v621 = vunpack.c.h.b16 %v295
        %v622 = vunpack.c.l.b16 %v296
        %v623 = vunpack.c.h.b16 %v296
        %v624 = vunpack.c.l.b16 %v297
        %v625 = vunpack.c.h.b16 %v297
        %v626 = vpack.c.b16 %v482, %v476
        %v627 = vpack.c.b16 %v483, %v477
        %v628 = vpack.c.b16 %v484, %v478
        %v629 = vpack.c.b16 %v485, %v479
        %v630 = vpack.c.b16 %v486, %v480
        %v631 = vpack.c.b16 %v487, %v481
        %v632 = vpack.c.b16 %v494, %v488
        %v633 = vpack.c.b16 %v495, %v489
        %v634 = vpack.c.b16 %v496, %v490
        %v635 = vpack.c.b16 %v497, %v491
        %v636 = vpack.c.b16 %v498, %v492
        %v637 = vpack.c.b16 %v499, %v493
        %v638 = vpack.c.b16 %v506, %v500
        %v639 = vpack.c.b16 %v507, %v501
        %v640 = vpack.c.b16 %v508, %v502
        %v641 = vpack.c.b16 %v509, %v503
        %v642 = vpack.c.b16 %v510, %v504
        %v643 = vpack.c.b16 %v511, %v505
        %v644 = vpack.c.b16 %v518, %v512
        %v645 = vpack.c.b16 %v519, %v513
        %v646 = vpack.c.b16 %v520, %v514
        %v647 = vpack.c.b16 %v521, %v515
        %v648 = vpack.c.b16 %v522, %v516
        %v649 = vpack.c.b16 %v523, %v517
        %v650 = vpack.c.b16 %v530, %v524
        %v651 = vpack.c.b16 %v531, %v525
        %v652 = vpack.c.b16 %v532, %v526
        %v653 = vpack.c.b16 %v533, %v527
        %v654 = vpack.c.b16 %v534, %v528
        %v655 = vpack.c.b16 %v535, %v529
        %v656 = vpack.c.b16 %v542, %v536
        %v657 = vpack.c.b16 %v543, %v537
        %v658 = vpack.c.b16 %v544, %v538
        %v659 = vpack.c.b16 %v545, %v539
        %v660 = vpack.c.b16 %v546, %v540
        %v661 = vpack.c.b16 %v547, %v541
        %v662 = vpack.c.b16 %v554, %v548
        %v663 = vpack.c.b16 %v555, %v549
        %v664 = vpack.c.b16 %v556, %v550
        %v665 = vpack.c.b16 %v557, %v551
        %v666 = vpack.c.b16 %v558, %v552
        %v667 = vpack.c.b16 %v559, %v553
        %v668 = vpack.c.b16 %v566, %v560
        %v669 = vpack.c.b16 %v567, %v561
        %v670 = vpack.c.b16 %v568, %v562
        %v671 = vpack.c.b16 %v569, %v563
        %v672 = vpack.c.b16 %v570, %v564
        %v673 = vpack.c.b16 %v571, %v565
        %v674 = vpack.c.b16 %v578, %v572
        %v675 = vpack.c.b16 %v579, %v573
        %v676 = vpack.c.b16 %v580, %v574
        %v677 = vpack.c.b16 %v581, %v575
        %v678 = vpack.c.b16 %v582, %v576
        %v679 = vpack.c.b16 %v583, %v577
        %v680 = vpack.c.b16 %v590, %v584
        %v681 = vpack.c.b16 %v591, %v585
        %v682 = vpack.c.b16 %v592, %v586
        %v683 = vpack.c.b16 %v593, %v587
        %v684 = vpack.c.b16 %v594, %v588
        %v685 = vpack.c.b16 %v595, %v589
        %v686 = vpack.c.b16 %v602, %v596
        %v687 = vpack.c.b16 %v603, %v597
        %v688 = vpack.c.b16 %v604, %v598
        %v689 = vpack.c.b16 %v605, %v599
        %v690 = vpack.c.b16 %v606, %v600
        %v691 = vpack.c.b16 %v607, %v601
        %v692 = vpack.c.b16 %v614, %v608
        %v693 = vpack.c.b16 %v615, %v609
        %v694 = vpack.c.b16 %v616, %v610
        %v695 = vpack.c.b16 %v617, %v611
        %v696 = vpack.c.b16 %v618, %v612
        %v697 = vpack.c.b16 %v619, %v613
        %v698 = vpack.c.b16 %v620, %v620
        %v699 = vpack.c.b16 %v621, %v621
        %v700 = vpack.c.b16 %v622, %v622
        %v701 = vpack.c.b16 %v623, %v623
        %v702 = vpack.c.b16 %v624, %v624
        %v703 = vpack.c.b16 %v625, %v625
        %v878 = vunpack.c.l.b16 %v298
        %v879 = vunpack.c.l.b16 %v299
        %v880 = vunpack.c.l.b16 %v300
        %v881 = vunpack.c.l.b16 %v301
        %v882 = vunpack.c.l.b16 %v302
        %v883 = vunpack.c.l.b16 %v303
        %v884 = vunpack.c.l.b16 %v304
        %v885 = vunpack.c.l.b16 %v305
        %v886 = vunpack.c.l.b16 %v306
        %v887 = vunpack.c.l.b16 %v307
        %v888 = vunpack.c.l.b16 %v308
        %v889 = vunpack.c.l.b16 %v309
        %v890 = vunpack.c.l.b16 %v310
        %v891 = vunpack.c.l.b16 %v311
        %v892 = vunpack.c.l.b16 %v312
        %v893 = vunpack.c.l.b16 %v313
        %v894 = vunpack.c.l.b16 %v314
        %v895 = vunpack.c.l.b16 %v315
        %v896 = vunpack.c.l.b16 %v316
        %v897 = vunpack.c.l.b16 %v317
        %v898 = vunpack.c.l.b16 %v318
        %v899 = vunpack.c.l.b16 %v319
        %v900 = vunpack.c.l.b16 %v320
        %v901 = vunpack.c.l.b16 %v321
        %v902 = vunpack.c.l.b16 %v322
        %v903 = vunpack.c.l.b16 %v323
        %v904 = vunpack.c.l.b16 %v324
        %v905 = vunpack.c.l.b16 %v325
        %v906 = vunpack.c.l.b16 %v326
        %v907 = vunpack.c.l.b16 %v327
        %v908 = vunpack.c.l.b16 %v328
        %v909 = vunpack.c.l.b16 %v329
        %v910 = vunpack.c.l.b16 %v330
        %v911 = vunpack.c.l.b16 %v331
        %v912 = vunpack.c.l.b16 %v332
        %v913 = vunpack.c.l.b16 %v333
        %v914 = vunpack.c.l.b16 %v334
        %v915 = vunpack.c.l.b16 %v335
        %v916 = vunpack.c.l.b16 %v336
        %v917 = vunpack.c.l.b16 %v337
        %v918 = vunpack.c.l.b16 %v338
        %v919 = vunpack.c.l.b16 %v339
        %v920 = vunpack.c.l.b16 %v340
        %v921 = vunpack.c.l.b16 %v341
        %v922 = vunpack.c.l.b16 %v342
        %v923 = vunpack.c.l.b16 %v343
        %v924 = vunpack.c.l.b16 %v344
        %v925 = vunpack.c.l.b16 %v345
        %v926 = vunpack.c.l.b16 %v346
        %v927 = vunpack.c.l.b16 %v347
        %v928 = vunpack.c.l.b16 %v348
        %v929 = vunpack.c.l.b16 %v349
        %v930 = vunpack.c.l.b16 %v350
        %v931 = vunpack.c.l.b16 %v351
        %v932 = vunpack.c.l.b16 %v352
        %v933 = vunpack.c.l.b16 %v353
        %v934 = vunpack.c.l.b16 %v354
        %v935 = vunpack.c.l.b16 %v355
        %v936 = vunpack.c.l.b16 %v356
        %v937 = vunpack.c.l.b16 %v357
        %v938 = vunpack.c.l.b16 %v358
        %v939 = vunpack.c.l.b16 %v359
        %v940 = vunpack.c.l.b16 %v360
        %v941 = vunpack.c.l.b16 %v361
        %v942 = vunpack.c.l.b16 %v362
        %v943 = vunpack.c.l.b16 %v363
        %v944 = vunpack.c.l.b16 %v364
        %v945 = vunpack.c.l.b16 %v365
        %v946 = vunpack.c.l.b16 %v366
        %v947 = vunpack.c.l.b16 %v367
        %v948 = vunpack.c.l.b16 %v368
        %v949 = vunpack.c.l.b16 %v369
        %v950 = vunpack.c.l.b16 %v370
        %v951 = vunpack.c.l.b16 %v371
        %v952 = vunpack.c.l.b16 %v372
        %v953 = vunpack.c.l.b16 %v373
        %v954 = vunpack.c.l.b16 %v374
        %v955 = vunpack.c.l.b16 %v375
        %v956 = vunpack.c.l.b16 %v376
        %v957 = vunpack.c.l.b16 %v377
        %v958 = vunpack.c.l.b16 %v378
        %v959 = vunpack.c.l.b16 %v379
        %v960 = vunpack.c.l.b16 %v380
        %v961 = vunpack.c.l.b16 %v381
        %v962 = vunpack.c.l.b16 %v382
        %v963 = vunpack.c.l.b16 %v383
        %v964 = vunpack.c.l.b16 %v384
        %v965 = vunpack.c.l.b16 %v385
        %v966 = vunpack.c.l.b16 %v386
        %v967 = vunpack.c.l.b16 %v387
        %v968 = vunpack.c.l.b16 %v388
        %v969 = vunpack.c.l.b16 %v389
        %v970 = vunpack.c.l.b16 %v390
        %v971 = vunpack.c.l.b16 %v391
        %v972 = vunpack.c.l.b16 %v392
        %v973 = vunpack.c.l.b16 %v393
        %v974 = vpack.c.b16 %v879, %v878
        %v975 = vpack.c.b16 %v881, %v880
        %v976 = vpack.c.b16 %v883, %v882
        %v977 = vpack.c.b16 %v885, %v884
        %v978 = vpack.c.b16 %v887, %v886
        %v979 = vpack.c.b16 %v889, %v888
        %v980 = vpack.c.b16 %v891, %v890
        %v981 = vpack.c.b16 %v893, %v892
        %v982 = vpack.c.b16 %v895, %v894
        %v983 = vpack.c.b16 %v897, %v896
        %v984 = vpack.c.b16 %v899, %v898
        %v985 = vpack.c.b16 %v901, %v900
        %v986 = vpack.c.b16 %v903, %v902
        %v987 = vpack.c.b16 %v905, %v904
        %v988 = vpack.c.b16 %v907, %v906
        %v989 = vpack.c.b16 %v909, %v908
        %v990 = vpack.c.b16 %v911, %v910
        %v991 = vpack.c.b16 %v913, %v912
        %v992 = vpack.c.b16 %v915, %v914
        %v993 = vpack.c.b16 %v917, %v916
        %v994 = vpack.c.b16 %v919, %v918
        %v995 = vpack.c.b16 %v921, %v920
        %v996 = vpack.c.b16 %v923, %v922
        %v997 = vpack.c.b16 %v925, %v924
        %v998 = vpack.c.b16 %v927, %v926
        %v999 = vpack.c.b16 %v929, %v928
        %v1000 = vpack.c.b16 %v931, %v930
        %v1001 = vpack.c.b16 %v933, %v932
        %v1002 = vpack.c.b16 %v935, %v934
        %v1003 = vpack.c.b16 %v937, %v936
        %v1004 = vpack.c.b16 %v939, %v938
        %v1005 = vpack.c.b16 %v941, %v940
        %v1006 = vpack.c.b16 %v943, %v942
        %v1007 = vpack.c.b16 %v945, %v944
        %v1008 = vpack.c.b16 %v947, %v946
        %v1009 = vpack.c.b16 %v949, %v948
        %v1010 = vpack.c.b16 %v951, %v950
        %v1011 = vpack.c.b16 %v953, %v952
        %v1012 = vpack.c.b16 %v955, %v954
        %v1013 = vpack.c.b16 %v957, %v956
        %v1014 = vpack.c.b16 %v959, %v958
        %v1015 = vpack.c.b16 %v961, %v960
        %v1016 = vpack.c.b16 %v963, %v962
        %v1017 = vpack.c.b16 %v965, %v964
        %v1018 = vpack.c.b16 %v967, %v966
        %v1019 = vpack.c.b16 %v969, %v968
        %v1020 = vpack.c.b16 %v971, %v970
        %v1021 = vpack.c.b16 %v973, %v972
        %1070 = vmatprep.subr.bf16.mxu0 0
        %1071 = vmatpush1.bf16.msra.mxu0 %v974
        %1072 = vmatprep.subr.bf16.mxu0 0
        %1073 = vmatpush1.bf16.msra.mxu0 %v975
        %1074 = vmatprep.subr.bf16.mxu0 0
        %1075 = vmatpush1.bf16.msra.mxu0 %v976
        %1076 = vmatprep.subr.bf16.mxu0 0
        %1077 = vmatpush1.bf16.msra.mxu0 %v977
        %1078 = vmatprep.subr.bf16.mxu0 0
        %1079 = vmatpush1.bf16.msra.mxu0 %v978
        %1080 = vmatprep.subr.bf16.mxu0 0
        %1081 = vmatpush1.bf16.msra.mxu0 %v979
        %1082 = vmatprep.subr.bf16.mxu0 0
        %1083 = vmatpush1.bf16.msra.mxu0 %v980
        %1084 = vmatprep.subr.bf16.mxu0 0
        %1085 = vmatpush1.bf16.msra.mxu0 %v981
        %1086 = vmatprep.subr.bf16.mxu0 0
        %1087 = vmatpush1.bf16.msra.mxu0 %v982
        %1088 = vmatprep.subr.bf16.mxu0 0
        %1089 = vmatpush1.bf16.msra.mxu0 %v983
        %1090 = vmatprep.subr.bf16.mxu0 0
        %1091 = vmatpush1.bf16.msra.mxu0 %v984
        %1092 = vmatprep.subr.bf16.mxu0 0
        %1093 = vmatpush1.bf16.msra.mxu0 %v985
        %1094 = vmatprep.subr.bf16.mxu0 0
        %1095 = vmatpush1.bf16.msra.mxu0 %v986
        %1096 = vmatprep.subr.bf16.mxu0 0
        %1097 = vmatpush1.bf16.msra.mxu0 %v987
        %1098 = vmatprep.subr.bf16.mxu0 0
        %1099 = vmatpush1.bf16.msra.mxu0 %v988
        %1100 = vmatprep.subr.bf16.mxu0 0
        %1101 = vmatpush1.bf16.msra.mxu0 %v989
        %1102 = vmatprep.mubr.bf16.mxu0 %v627
        %1103 = vmatmul.mubr.bf16.gmra.mrb[0].mxu0 %v626
        %v1104 = vpop.f32.mrb[0].mxu0
        %v1105 = vadd.f32 %v399, %v1104
        %v1106 = vpop.f32.mrb[0].mxu0
        %v1107 = vpop.f32.mrb[0].mxu0
        %v1108 = vadd.f32 %v399, %v1107
        %v1109 = vpop.f32.mrb[0].mxu0
        %1110 = vmatprep.mubr.bf16.mxu0 %v633
        %1111 = vmatmul.mubr.bf16.gmra.mrb[0].mxu0 %v632
        %v1112 = vpop.f32.mrb[0].mxu0
        %v1113 = vadd.f32 %v399, %v1112
        %v1114 = vpop.f32.mrb[0].mxu0
        %v1115 = vpop.f32.mrb[0].mxu0
        %v1116 = vadd.f32 %v399, %v1115
        %v1117 = vpop.f32.mrb[0].mxu0
        %1118 = vmatprep.mubr.bf16.mxu0 %v639
        %1119 = vmatmul.mubr.bf16.gmra.mrb[0].mxu0 %v638
        %v1120 = vpop.f32.mrb[0].mxu0
        %v1121 = vadd.f32 %v399, %v1120
        %v1122 = vpop.f32.mrb[0].mxu0
        %v1123 = vpop.f32.mrb[0].mxu0
        %v1124 = vadd.f32 %v399, %v1123
        %v1125 = vpop.f32.mrb[0].mxu0
        %1126 = vmatprep.mubr.bf16.mxu0 %v645
        %1127 = vmatmul.mubr.bf16.gmra.mrb[0].mxu0 %v644
        %v1128 = vpop.f32.mrb[0].mxu0
        %v1129 = vadd.f32 %v399, %v1128
        %v1130 = vpop.f32.mrb[0].mxu0
        %v1131 = vpop.f32.mrb[0].mxu0
        %v1132 = vadd.f32 %v399, %v1131
        %v1133 = vpop.f32.mrb[0].mxu0
        %1134 = vmatprep.mubr.bf16.mxu0 %v651
        %1135 = vmatmul.mubr.bf16.gmra.mrb[0].mxu0 %v650
        %v1136 = vpop.f32.mrb[0].mxu0
        %v1137 = vadd.f32 %v399, %v1136
        %v1138 = vpop.f32.mrb[0].mxu0
        %v1139 = vpop.f32.mrb[0].mxu0
        %v1140 = vadd.f32 %v399, %v1139
        %v1141 = vpop.f32.mrb[0].mxu0
        %1142 = vmatprep.mubr.bf16.mxu0 %v657
        %1143 = vmatmul.mubr.bf16.gmra.mrb[0].mxu0 %v656
        %v1144 = vpop.f32.mrb[0].mxu0
        %v1145 = vadd.f32 %v399, %v1144
        %v1146 = vpop.f32.mrb[0].mxu0
        %v1147 = vpop.f32.mrb[0].mxu0
        %v1148 = vadd.f32 %v399, %v1147
        %v1149 = vpop.f32.mrb[0].mxu0
        %1150 = vmatprep.mubr.bf16.mxu0 %v663
        %1151 = vmatmul.mubr.bf16.gmra.mrb[0].mxu0 %v662
        %v1152 = vpop.f32.mrb[0].mxu0
        %v1153 = vadd.f32 %v399, %v1152
        %v1154 = vpop.f32.mrb[0].mxu0
        %v1155 = vpop.f32.mrb[0].mxu0
        %v1156 = vadd.f32 %v399, %v1155
        %v1157 = vpop.f32.mrb[0].mxu0
        %1158 = vmatprep.mubr.bf16.mxu0 %v669
        %1159 = vmatmul.mubr.bf16.gmra.mrb[0].mxu0 %v668
        %v1160 = vpop.f32.mrb[0].mxu0
        %v1161 = vadd.f32 %v399, %v1160
        %v1162 = vpop.f32.mrb[0].mxu0
        %v1163 = vpop.f32.mrb[0].mxu0
        %v1164 = vadd.f32 %v399, %v1163
        %v1165 = vpop.f32.mrb[0].mxu0
        %1166 = vmatprep.mubr.bf16.mxu0 %v675
        %1167 = vmatmul.mubr.bf16.gmra.mrb[0].mxu0 %v674
        %v1168 = vpop.f32.mrb[0].mxu0
        %v1169 = vadd.f32 %v399, %v1168
        %v1170 = vpop.f32.mrb[0].mxu0
        %v1171 = vpop.f32.mrb[0].mxu0
        %v1172 = vadd.f32 %v399, %v1171
        %v1173 = vpop.f32.mrb[0].mxu0
        %1174 = vmatprep.mubr.bf16.mxu0 %v681
        %1175 = vmatmul.mubr.bf16.gmra.mrb[0].mxu0 %v680
        %v1176 = vpop.f32.mrb[0].mxu0
        %v1177 = vadd.f32 %v399, %v1176
        %v1178 = vpop.f32.mrb[0].mxu0
        %v1179 = vpop.f32.mrb[0].mxu0
        %v1180 = vadd.f32 %v399, %v1179
        %v1181 = vpop.f32.mrb[0].mxu0
        %1182 = vmatprep.mubr.bf16.mxu0 %v687
        %1183 = vmatmul.mubr.bf16.gmra.mrb[0].mxu0 %v686
        %v1184 = vpop.f32.mrb[0].mxu0
        %v1185 = vadd.f32 %v399, %v1184
        %v1186 = vpop.f32.mrb[0].mxu0
        %v1187 = vpop.f32.mrb[0].mxu0
        %v1188 = vadd.f32 %v399, %v1187
        %v1189 = vpop.f32.mrb[0].mxu0
        %1190 = vmatprep.mubr.bf16.mxu0 %v693
        %1191 = vmatmul.mubr.bf16.gmra.mrb[0].mxu0 %v692
        %v1192 = vpop.f32.mrb[0].mxu0
        %v1193 = vadd.f32 %v399, %v1192
        %v1194 = vpop.f32.mrb[0].mxu0
        %v1195 = vpop.f32.mrb[0].mxu0
        %v1196 = vadd.f32 %v399, %v1195
        %v1197 = vpop.f32.mrb[0].mxu0
        %1198 = vmatprep.mubr.bf16.mxu0 %v699
        %1199 = vmatmul.mubr.bf16.gmra.mrb[0].mxu0 %v698
        %v1200 = vpop.f32.mrb[0].mxu0
        %v1201 = vadd.f32 %v399, %v1200
        %v1202 = vpop.f32.mrb[0].mxu0
        %v1203 = vpop.f32.mrb[0].mxu0
        %v1204 = vpop.f32.mrb[0].mxu0
        %1205 = vdwg.mxu0
        %1206 = vmatprep.subr.bf16.mxu0 0
        %1207 = vmatpush1.bf16.msra.mxu0 %v990
        %1208 = vmatprep.subr.bf16.mxu0 0
        %1209 = vmatpush1.bf16.msra.mxu0 %v991
        %1210 = vmatprep.subr.bf16.mxu0 0
        %1211 = vmatpush1.bf16.msra.mxu0 %v992
        %1212 = vmatprep.subr.bf16.mxu0 0
        %1213 = vmatpush1.bf16.msra.mxu0 %v993
        %1214 = vmatprep.subr.bf16.mxu0 0
        %1215 = vmatpush1.bf16.msra.mxu0 %v994
        %1216 = vmatprep.subr.bf16.mxu0 0
        %1217 = vmatpush1.bf16.msra.mxu0 %v995
        %1218 = vmatprep.subr.bf16.mxu0 0
        %1219 = vmatpush1.bf16.msra.mxu0 %v996
        %1220 = vmatprep.subr.bf16.mxu0 0
        %1221 = vmatpush1.bf16.msra.mxu0 %v997
        %1222 = vmatprep.subr.bf16.mxu0 0
        %1223 = vmatpush1.bf16.msra.mxu0 %v998
        %1224 = vmatprep.subr.bf16.mxu0 0
        %1225 = vmatpush1.bf16.msra.mxu0 %v999
        %1226 = vmatprep.subr.bf16.mxu0 0
        %1227 = vmatpush1.bf16.msra.mxu0 %v1000
        %1228 = vmatprep.subr.bf16.mxu0 0
        %1229 = vmatpush1.bf16.msra.mxu0 %v1001
        %1230 = vmatprep.subr.bf16.mxu0 0
        %1231 = vmatpush1.bf16.msra.mxu0 %v1002
        %1232 = vmatprep.subr.bf16.mxu0 0
        %1233 = vmatpush1.bf16.msra.mxu0 %v1003
        %1234 = vmatprep.subr.bf16.mxu0 0
        %1235 = vmatpush1.bf16.msra.mxu0 %v1004
        %1236 = vmatprep.subr.bf16.mxu0 0
        %1237 = vmatpush1.bf16.msra.mxu0 %v1005
        %1238 = vmatprep.mubr.bf16.mxu0 %v629
        %1239 = vmatmul.mubr.bf16.gmra.mrb[0].mxu0 %v628
        %v1240 = vpop.f32.mrb[0].mxu0
        %v1241 = vadd.f32 %v1105, %v1240
        %v1242 = vpop.f32.mrb[0].mxu0
        %v1243 = vpop.f32.mrb[0].mxu0
        %v1244 = vadd.f32 %v1108, %v1243
        %v1245 = vpop.f32.mrb[0].mxu0
        %1246 = vmatprep.mubr.bf16.mxu0 %v635
        %1247 = vmatmul.mubr.bf16.gmra.mrb[0].mxu0 %v634
        %v1248 = vpop.f32.mrb[0].mxu0
        %v1249 = vadd.f32 %v1113, %v1248
        %v1250 = vpop.f32.mrb[0].mxu0
        %v1251 = vpop.f32.mrb[0].mxu0
        %v1252 = vadd.f32 %v1116, %v1251
        %v1253 = vpop.f32.mrb[0].mxu0
        %1254 = vmatprep.mubr.bf16.mxu0 %v641
        %1255 = vmatmul.mubr.bf16.gmra.mrb[0].mxu0 %v640
        %v1256 = vpop.f32.mrb[0].mxu0
        %v1257 = vadd.f32 %v1121, %v1256
        %v1258 = vpop.f32.mrb[0].mxu0
        %v1259 = vpop.f32.mrb[0].mxu0
        %v1260 = vadd.f32 %v1124, %v1259
        %v1261 = vpop.f32.mrb[0].mxu0
        %1262 = vmatprep.mubr.bf16.mxu0 %v647
        %1263 = vmatmul.mubr.bf16.gmra.mrb[0].mxu0 %v646
        %v1264 = vpop.f32.mrb[0].mxu0
        %v1265 = vadd.f32 %v1129, %v1264
        %v1266 = vpop.f32.mrb[0].mxu0
        %v1267 = vpop.f32.mrb[0].mxu0
        %v1268 = vadd.f32 %v1132, %v1267
        %v1269 = vpop.f32.mrb[0].mxu0
        %1270 = vmatprep.mubr.bf16.mxu0 %v653
        %1271 = vmatmul.mubr.bf16.gmra.mrb[0].mxu0 %v652
        %v1272 = vpop.f32.mrb[0].mxu0
        %v1273 = vadd.f32 %v1137, %v1272
        %v1274 = vpop.f32.mrb[0].mxu0
        %v1275 = vpop.f32.mrb[0].mxu0
        %v1276 = vadd.f32 %v1140, %v1275
        %v1277 = vpop.f32.mrb[0].mxu0
        %1278 = vmatprep.mubr.bf16.mxu0 %v659
        %1279 = vmatmul.mubr.bf16.gmra.mrb[0].mxu0 %v658
        %v1280 = vpop.f32.mrb[0].mxu0
        %v1281 = vadd.f32 %v1145, %v1280
        %v1282 = vpop.f32.mrb[0].mxu0
        %v1283 = vpop.f32.mrb[0].mxu0
        %v1284 = vadd.f32 %v1148, %v1283
        %v1285 = vpop.f32.mrb[0].mxu0
        %1286 = vmatprep.mubr.bf16.mxu0 %v665
        %1287 = vmatmul.mubr.bf16.gmra.mrb[0].mxu0 %v664
        %v1288 = vpop.f32.mrb[0].mxu0
        %v1289 = vadd.f32 %v1153, %v1288
        %v1290 = vpop.f32.mrb[0].mxu0
        %v1291 = vpop.f32.mrb[0].mxu0
        %v1292 = vadd.f32 %v1156, %v1291
        %v1293 = vpop.f32.mrb[0].mxu0
        %1294 = vmatprep.mubr.bf16.mxu0 %v671
        %1295 = vmatmul.mubr.bf16.gmra.mrb[0].mxu0 %v670
        %v1296 = vpop.f32.mrb[0].mxu0
        %v1297 = vadd.f32 %v1161, %v1296
        %v1298 = vpop.f32.mrb[0].mxu0
        %v1299 = vpop.f32.mrb[0].mxu0
        %v1300 = vadd.f32 %v1164, %v1299
        %v1301 = vpop.f32.mrb[0].mxu0
        %1302 = vmatprep.mubr.bf16.mxu0 %v677
        %1303 = vmatmul.mubr.bf16.gmra.mrb[0].mxu0 %v676
        %v1304 = vpop.f32.mrb[0].mxu0
        %v1305 = vadd.f32 %v1169, %v1304
        %v1306 = vpop.f32.mrb[0].mxu0
        %v1307 = vpop.f32.mrb[0].mxu0
        %v1308 = vadd.f32 %v1172, %v1307
        %v1309 = vpop.f32.mrb[0].mxu0
        %1310 = vmatprep.mubr.bf16.mxu0 %v683
        %1311 = vmatmul.mubr.bf16.gmra.mrb[0].mxu0 %v682
        %v1312 = vpop.f32.mrb[0].mxu0
        %v1313 = vadd.f32 %v1177, %v1312
        %v1314 = vpop.f32.mrb[0].mxu0
        %v1315 = vpop.f32.mrb[0].mxu0
        %v1316 = vadd.f32 %v1180, %v1315
        %v1317 = vpop.f32.mrb[0].mxu0
        %1318 = vmatprep.mubr.bf16.mxu0 %v689
        %1319 = vmatmul.mubr.bf16.gmra.mrb[0].mxu0 %v688
        %v1320 = vpop.f32.mrb[0].mxu0
        %v1321 = vadd.f32 %v1185, %v1320
        %v1322 = vpop.f32.mrb[0].mxu0
        %v1323 = vpop.f32.mrb[0].mxu0
        %v1324 = vadd.f32 %v1188, %v1323
        %v1325 = vpop.f32.mrb[0].mxu0
        %1326 = vmatprep.mubr.bf16.mxu0 %v695
        %1327 = vmatmul.mubr.bf16.gmra.mrb[0].mxu0 %v694
        %v1328 = vpop.f32.mrb[0].mxu0
        %v1329 = vadd.f32 %v1193, %v1328
        %v1330 = vpop.f32.mrb[0].mxu0
        %v1331 = vpop.f32.mrb[0].mxu0
        %v1332 = vadd.f32 %v1196, %v1331
        %v1333 = vpop.f32.mrb[0].mxu0
        %1334 = vmatprep.mubr.bf16.mxu0 %v701
        %1335 = vmatmul.mubr.bf16.gmra.mrb[0].mxu0 %v700
        %v1336 = vpop.f32.mrb[0].mxu0
        %v1337 = vadd.f32 %v1201, %v1336
        %v1338 = vpop.f32.mrb[0].mxu0
        %v1339 = vpop.f32.mrb[0].mxu0
        %v1340 = vpop.f32.mrb[0].mxu0
        %1341 = vdwg.mxu0
        %1342 = vmatprep.subr.bf16.mxu0 0
        %1343 = vmatpush1.bf16.msra.mxu0 %v1006
        %1344 = vmatprep.subr.bf16.mxu0 0
        %1345 = vmatpush1.bf16.msra.mxu0 %v1007
        %1346 = vmatprep.subr.bf16.mxu0 0
        %1347 = vmatpush1.bf16.msra.mxu0 %v1008
        %1348 = vmatprep.subr.bf16.mxu0 0
        %1349 = vmatpush1.bf16.msra.mxu0 %v1009
        %1350 = vmatprep.subr.bf16.mxu0 0
        %1351 = vmatpush1.bf16.msra.mxu0 %v1010
        %1352 = vmatprep.subr.bf16.mxu0 0
        %1353 = vmatpush1.bf16.msra.mxu0 %v1011
        %1354 = vmatprep.subr.bf16.mxu0 0
        %1355 = vmatpush1.bf16.msra.mxu0 %v1012
        %1356 = vmatprep.subr.bf16.mxu0 0
        %1357 = vmatpush1.bf16.msra.mxu0 %v1013
        %1358 = vmatprep.subr.bf16.mxu0 0
        %1359 = vmatpush1.bf16.msra.mxu0 %v1014
        %1360 = vmatprep.subr.bf16.mxu0 0
        %1361 = vmatpush1.bf16.msra.mxu0 %v1015
        %1362 = vmatprep.subr.bf16.mxu0 0
        %1363 = vmatpush1.bf16.msra.mxu0 %v1016
        %1364 = vmatprep.subr.bf16.mxu0 0
        %1365 = vmatpush1.bf16.msra.mxu0 %v1017
        %1366 = vmatprep.subr.bf16.mxu0 0
        %1367 = vmatpush1.bf16.msra.mxu0 %v1018
        %1368 = vmatprep.subr.bf16.mxu0 0
        %1369 = vmatpush1.bf16.msra.mxu0 %v1019
        %1370 = vmatprep.subr.bf16.mxu0 0
        %1371 = vmatpush1.bf16.msra.mxu0 %v1020
        %1372 = vmatprep.subr.bf16.mxu0 0
        %1373 = vmatpush1.bf16.msra.mxu0 %v1021
        %1374 = vmatprep.mubr.bf16.mxu0 %v631
        %1375 = vmatmul.mubr.bf16.gmra.mrb[0].mxu0 %v630
        %v1376 = vpop.f32.mrb[0].mxu0
        %v1377 = vadd.f32 %v1241, %v1376
        %v1378 = vpop.f32.mrb[0].mxu0
        %v1379 = vpop.f32.mrb[0].mxu0
        %v1380 = vadd.f32 %v1244, %v1379
        %v1381 = vpop.f32.mrb[0].mxu0
        %1382 = vmatprep.mubr.bf16.mxu0 %v637
        %1383 = vmatmul.mubr.bf16.gmra.mrb[0].mxu0 %v636
        %v1384 = vpop.f32.mrb[0].mxu0
        %v1385 = vadd.f32 %v1249, %v1384
        %v1386 = vpop.f32.mrb[0].mxu0
        %v1387 = vpop.f32.mrb[0].mxu0
        %v1388 = vadd.f32 %v1252, %v1387
        %v1389 = vpop.f32.mrb[0].mxu0
        %1390 = vmatprep.mubr.bf16.mxu0 %v643
        %1391 = vmatmul.mubr.bf16.gmra.mrb[0].mxu0 %v642
        %v1392 = vpop.f32.mrb[0].mxu0
        %v1393 = vadd.f32 %v1257, %v1392
        %v1394 = vpop.f32.mrb[0].mxu0
        %v1395 = vpop.f32.mrb[0].mxu0
        %v1396 = vadd.f32 %v1260, %v1395
        %v1397 = vpop.f32.mrb[0].mxu0
        %1398 = vmatprep.mubr.bf16.mxu0 %v649
        %1399 = vmatmul.mubr.bf16.gmra.mrb[0].mxu0 %v648
        %v1400 = vpop.f32.mrb[0].mxu0
        %v1401 = vadd.f32 %v1265, %v1400
        %v1402 = vpop.f32.mrb[0].mxu0
        %v1403 = vpop.f32.mrb[0].mxu0
        %v1404 = vadd.f32 %v1268, %v1403
        %v1405 = vpop.f32.mrb[0].mxu0
        %1406 = vmatprep.mubr.bf16.mxu0 %v655
        %1407 = vmatmul.mubr.bf16.gmra.mrb[0].mxu0 %v654
        %v1408 = vpop.f32.mrb[0].mxu0
        %v1409 = vadd.f32 %v1273, %v1408
        %v1410 = vpop.f32.mrb[0].mxu0
        %v1411 = vpop.f32.mrb[0].mxu0
        %v1412 = vadd.f32 %v1276, %v1411
        %v1413 = vpop.f32.mrb[0].mxu0
        %1414 = vmatprep.mubr.bf16.mxu0 %v661
        %1415 = vmatmul.mubr.bf16.gmra.mrb[0].mxu0 %v660
        %v1416 = vpop.f32.mrb[0].mxu0
        %v1417 = vadd.f32 %v1281, %v1416
        %v1418 = vpop.f32.mrb[0].mxu0
        %v1419 = vpop.f32.mrb[0].mxu0
        %v1420 = vadd.f32 %v1284, %v1419
        %v1421 = vpop.f32.mrb[0].mxu0
        %1422 = vmatprep.mubr.bf16.mxu0 %v667
        %1423 = vmatmul.mubr.bf16.gmra.mrb[0].mxu0 %v666
        %v1424 = vpop.f32.mrb[0].mxu0
        %v1425 = vadd.f32 %v1289, %v1424
        %v1426 = vpop.f32.mrb[0].mxu0
        %v1427 = vpop.f32.mrb[0].mxu0
        %v1428 = vadd.f32 %v1292, %v1427
        %v1429 = vpop.f32.mrb[0].mxu0
        %1430 = vmatprep.mubr.bf16.mxu0 %v673
        %1431 = vmatmul.mubr.bf16.gmra.mrb[0].mxu0 %v672
        %v1432 = vpop.f32.mrb[0].mxu0
        %v1433 = vadd.f32 %v1297, %v1432
        %v1434 = vpop.f32.mrb[0].mxu0
        %v1435 = vpop.f32.mrb[0].mxu0
        %v1436 = vadd.f32 %v1300, %v1435
        %v1437 = vpop.f32.mrb[0].mxu0
        %1438 = vmatprep.mubr.bf16.mxu0 %v679
        %1439 = vmatmul.mubr.bf16.gmra.mrb[0].mxu0 %v678
        %v1440 = vpop.f32.mrb[0].mxu0
        %v1441 = vadd.f32 %v1305, %v1440
        %v1442 = vpop.f32.mrb[0].mxu0
        %v1443 = vpop.f32.mrb[0].mxu0
        %v1444 = vadd.f32 %v1308, %v1443
        %v1445 = vpop.f32.mrb[0].mxu0
        %1446 = vmatprep.mubr.bf16.mxu0 %v685
        %1447 = vmatmul.mubr.bf16.gmra.mrb[0].mxu0 %v684
        %v1448 = vpop.f32.mrb[0].mxu0
        %v1449 = vadd.f32 %v1313, %v1448
        %v1450 = vpop.f32.mrb[0].mxu0
        %v1451 = vpop.f32.mrb[0].mxu0
        %v1452 = vadd.f32 %v1316, %v1451
        %v1453 = vpop.f32.mrb[0].mxu0
        %1454 = vmatprep.mubr.bf16.mxu0 %v691
        %1455 = vmatmul.mubr.bf16.gmra.mrb[0].mxu0 %v690
        %v1456 = vpop.f32.mrb[0].mxu0
        %v1457 = vadd.f32 %v1321, %v1456
        %v1458 = vpop.f32.mrb[0].mxu0
        %v1459 = vpop.f32.mrb[0].mxu0
        %v1460 = vadd.f32 %v1324, %v1459
        %v1461 = vpop.f32.mrb[0].mxu0
        %1462 = vmatprep.mubr.bf16.mxu0 %v697
        %1463 = vmatmul.mubr.bf16.gmra.mrb[0].mxu0 %v696
        %v1464 = vpop.f32.mrb[0].mxu0
        %v1465 = vadd.f32 %v1329, %v1464
        %v1466 = vpop.f32.mrb[0].mxu0
        %v1467 = vpop.f32.mrb[0].mxu0
        %v1468 = vadd.f32 %v1332, %v1467
        %v1469 = vpop.f32.mrb[0].mxu0
        %1470 = vmatprep.mubr.bf16.mxu0 %v703
        %1471 = vmatmul.mubr.bf16.gmra.mrb[0].mxu0 %v702
        %v1472 = vpop.f32.mrb[0].mxu0
        %v1473 = vadd.f32 %v1337, %v1472
        %v1474 = vpop.f32.mrb[0].mxu0
        %v1475 = vpop.f32.mrb[0].mxu0
        %v1476 = vpop.f32.mrb[0].mxu0
        %1477 = vdwg.mxu0
        %v1478 = vmul.f32 %v1377, %v1377
        %v1479 = vmul.f32 %v1380, %v1380
        %v1480 = vmul.f32 %v1385, %v1385
        %v1481 = vmul.f32 %v1388, %v1388
        %v1482 = vmul.f32 %v1393, %v1393
        %v1483 = vmul.f32 %v1396, %v1396
        %v1484 = vmul.f32 %v1401, %v1401
        %v1485 = vmul.f32 %v1404, %v1404
        %v1486 = vmul.f32 %v1409, %v1409
        %v1487 = vmul.f32 %v1412, %v1412
        %v1488 = vmul.f32 %v1417, %v1417
        %v1489 = vmul.f32 %v1420, %v1420
        %v1490 = vmul.f32 %v1425, %v1425
        %v1491 = vmul.f32 %v1428, %v1428
        %v1492 = vmul.f32 %v1433, %v1433
        %v1493 = vmul.f32 %v1436, %v1436
        %v1494 = vmul.f32 %v1441, %v1441
        %v1495 = vmul.f32 %v1444, %v1444
        %v1496 = vmul.f32 %v1449, %v1449
        %v1497 = vmul.f32 %v1452, %v1452
        %v1498 = vmul.f32 %v1457, %v1457
        %v1499 = vmul.f32 %v1460, %v1460
        %v1500 = vmul.f32 %v1465, %v1465
        %v1501 = vmul.f32 %v1468, %v1468
        %v1502 = vmul.f32 %v1473, %v1473
        %v1503 = vmul.f32 %v1377, %v1478
        %v1504 = vmul.f32 %v1380, %v1479
        %v1505 = vmul.f32 %v1385, %v1480
        %v1506 = vmul.f32 %v1388, %v1481
        %v1507 = vmul.f32 %v1393, %v1482
        %v1508 = vmul.f32 %v1396, %v1483
        %v1509 = vmul.f32 %v1401, %v1484
        %v1510 = vmul.f32 %v1404, %v1485
        %v1511 = vmul.f32 %v1409, %v1486
        %v1512 = vmul.f32 %v1412, %v1487
        %v1513 = vmul.f32 %v1417, %v1488
        %v1514 = vmul.f32 %v1420, %v1489
        %v1515 = vmul.f32 %v1425, %v1490
        %v1516 = vmul.f32 %v1428, %v1491
        %v1517 = vmul.f32 %v1433, %v1492
        %v1518 = vmul.f32 %v1436, %v1493
        %v1519 = vmul.f32 %v1441, %v1494
        %v1520 = vmul.f32 %v1444, %v1495
        %v1521 = vmul.f32 %v1449, %v1496
        %v1522 = vmul.f32 %v1452, %v1497
        %v1523 = vmul.f32 %v1457, %v1498
        %v1524 = vmul.f32 %v1460, %v1499
        %v1525 = vmul.f32 %v1465, %v1500
        %v1526 = vmul.f32 %v1468, %v1501
        %v1527 = vmul.f32 %v1473, %v1502
        %v1528 = vmul.f32 %v1503, 0.044715
        %v1529 = vmul.f32 %v1504, 0.044715
        %v1530 = vmul.f32 %v1505, 0.044715
        %v1531 = vmul.f32 %v1506, 0.044715
        %v1532 = vmul.f32 %v1507, 0.044715
        %v1533 = vmul.f32 %v1508, 0.044715
        %v1534 = vmul.f32 %v1509, 0.044715
        %v1535 = vmul.f32 %v1510, 0.044715
        %v1536 = vmul.f32 %v1511, 0.044715
        %v1537 = vmul.f32 %v1512, 0.044715
        %v1538 = vmul.f32 %v1513, 0.044715
        %v1539 = vmul.f32 %v1514, 0.044715
        %v1540 = vmul.f32 %v1515, 0.044715
        %v1541 = vmul.f32 %v1516, 0.044715
        %v1542 = vmul.f32 %v1517, 0.044715
        %v1543 = vmul.f32 %v1518, 0.044715
        %v1544 = vmul.f32 %v1519, 0.044715
        %v1545 = vmul.f32 %v1520, 0.044715
        %v1546 = vmul.f32 %v1521, 0.044715
        %v1547 = vmul.f32 %v1522, 0.044715
        %v1548 = vmul.f32 %v1523, 0.044715
        %v1549 = vmul.f32 %v1524, 0.044715
        %v1550 = vmul.f32 %v1525, 0.044715
        %v1551 = vmul.f32 %v1526, 0.044715
        %v1552 = vmul.f32 %v1527, 0.044715
        %v1553 = vadd.f32 %v1377, %v1528
        %v1554 = vadd.f32 %v1380, %v1529
        %v1555 = vadd.f32 %v1385, %v1530
        %v1556 = vadd.f32 %v1388, %v1531
        %v1557 = vadd.f32 %v1393, %v1532
        %v1558 = vadd.f32 %v1396, %v1533
        %v1559 = vadd.f32 %v1401, %v1534
        %v1560 = vadd.f32 %v1404, %v1535
        %v1561 = vadd.f32 %v1409, %v1536
        %v1562 = vadd.f32 %v1412, %v1537
        %v1563 = vadd.f32 %v1417, %v1538
        %v1564 = vadd.f32 %v1420, %v1539
        %v1565 = vadd.f32 %v1425, %v1540
        %v1566 = vadd.f32 %v1428, %v1541
        %v1567 = vadd.f32 %v1433, %v1542
        %v1568 = vadd.f32 %v1436, %v1543
        %v1569 = vadd.f32 %v1441, %v1544
        %v1570 = vadd.f32 %v1444, %v1545
        %v1571 = vadd.f32 %v1449, %v1546
        %v1572 = vadd.f32 %v1452, %v1547
        %v1573 = vadd.f32 %v1457, %v1548
        %v1574 = vadd.f32 %v1460, %v1549
        %v1575 = vadd.f32 %v1465, %v1550
        %v1576 = vadd.f32 %v1468, %v1551
        %v1577 = vadd.f32 %v1473, %v1552
        %v1578 = vmul.f32 %v1553, 0.7978846
        %v1579 = vmul.f32 %v1554, 0.7978846
        %v1580 = vmul.f32 %v1555, 0.7978846
        %v1581 = vmul.f32 %v1556, 0.7978846
        %v1582 = vmul.f32 %v1557, 0.7978846
        %v1583 = vmul.f32 %v1558, 0.7978846
        %v1584 = vmul.f32 %v1559, 0.7978846
        %v1585 = vmul.f32 %v1560, 0.7978846
        %v1586 = vmul.f32 %v1561, 0.7978846
        %v1587 = vmul.f32 %v1562, 0.7978846
        %v1588 = vmul.f32 %v1563, 0.7978846
        %v1589 = vmul.f32 %v1564, 0.7978846
        %v1590 = vmul.f32 %v1565, 0.7978846
        %v1591 = vmul.f32 %v1566, 0.7978846
        %v1592 = vmul.f32 %v1567, 0.7978846
        %v1593 = vmul.f32 %v1568, 0.7978846
        %v1594 = vmul.f32 %v1569, 0.7978846
        %v1595 = vmul.f32 %v1570, 0.7978846
        %v1596 = vmul.f32 %v1571, 0.7978846
        %v1597 = vmul.f32 %v1572, 0.7978846
        %v1598 = vmul.f32 %v1573, 0.7978846
        %v1599 = vmul.f32 %v1574, 0.7978846
        %v1600 = vmul.f32 %v1575, 0.7978846
        %v1601 = vmul.f32 %v1576, 0.7978846
        %v1602 = vmul.f32 %v1577, 0.7978846
        %v1603 = vtanh.pop %v1578
        %v1604 = vtanh.pop %v1579
        %v1605 = vtanh.pop %v1580
        %v1606 = vtanh.pop %v1581
        %v1607 = vtanh.pop %v1582
        %v1608 = vtanh.pop %v1583
        %v1609 = vtanh.pop %v1584
        %v1610 = vtanh.pop %v1585
        %v1611 = vtanh.pop %v1586
        %v1612 = vtanh.pop %v1587
        %v1613 = vtanh.pop %v1588
        %v1614 = vtanh.pop %v1589
        %v1615 = vtanh.pop %v1590
        %v1616 = vtanh.pop %v1591
        %v1617 = vtanh.pop %v1592
        %v1618 = vtanh.pop %v1593
        %v1619 = vtanh.pop %v1594
        %v1620 = vtanh.pop %v1595
        %v1621 = vtanh.pop %v1596
        %v1622 = vtanh.pop %v1597
        %v1623 = vtanh.pop %v1598
        %v1624 = vtanh.pop %v1599
        %v1625 = vtanh.pop %v1600
        %v1626 = vtanh.pop %v1601
        %v1627 = vtanh.pop %v1602
        %v1628 = vadd.f32 %v1603, 1.0
        %v1629 = vadd.f32 %v1604, 1.0
        %v1630 = vadd.f32 %v1605, 1.0
        %v1631 = vadd.f32 %v1606, 1.0
        %v1632 = vadd.f32 %v1607, 1.0
        %v1633 = vadd.f32 %v1608, 1.0
        %v1634 = vadd.f32 %v1609, 1.0
        %v1635 = vadd.f32 %v1610, 1.0
        %v1636 = vadd.f32 %v1611, 1.0
        %v1637 = vadd.f32 %v1612, 1.0
        %v1638 = vadd.f32 %v1613, 1.0
        %v1639 = vadd.f32 %v1614, 1.0
        %v1640 = vadd.f32 %v1615, 1.0
        %v1641 = vadd.f32 %v1616, 1.0
        %v1642 = vadd.f32 %v1617, 1.0
        %v1643 = vadd.f32 %v1618, 1.0
        %v1644 = vadd.f32 %v1619, 1.0
        %v1645 = vadd.f32 %v1620, 1.0
        %v1646 = vadd.f32 %v1621, 1.0
        %v1647 = vadd.f32 %v1622, 1.0
        %v1648 = vadd.f32 %v1623, 1.0
        %v1649 = vadd.f32 %v1624, 1.0
        %v1650 = vadd.f32 %v1625, 1.0
        %v1651 = vadd.f32 %v1626, 1.0
        %v1652 = vadd.f32 %v1627, 1.0
        %v1653 = vmul.f32 %v1628, 0.5
        %v1654 = vmul.f32 %v1629, 0.5
        %v1655 = vmul.f32 %v1630, 0.5
        %v1656 = vmul.f32 %v1631, 0.5
        %v1657 = vmul.f32 %v1632, 0.5
        %v1658 = vmul.f32 %v1633, 0.5
        %v1659 = vmul.f32 %v1634, 0.5
        %v1660 = vmul.f32 %v1635, 0.5
        %v1661 = vmul.f32 %v1636, 0.5
        %v1662 = vmul.f32 %v1637, 0.5
        %v1663 = vmul.f32 %v1638, 0.5
        %v1664 = vmul.f32 %v1639, 0.5
        %v1665 = vmul.f32 %v1640, 0.5
        %v1666 = vmul.f32 %v1641, 0.5
        %v1667 = vmul.f32 %v1642, 0.5
        %v1668 = vmul.f32 %v1643, 0.5
        %v1669 = vmul.f32 %v1644, 0.5
        %v1670 = vmul.f32 %v1645, 0.5
        %v1671 = vmul.f32 %v1646, 0.5
        %v1672 = vmul.f32 %v1647, 0.5
        %v1673 = vmul.f32 %v1648, 0.5
        %v1674 = vmul.f32 %v1649, 0.5
        %v1675 = vmul.f32 %v1650, 0.5
        %v1676 = vmul.f32 %v1651, 0.5
        %v1677 = vmul.f32 %v1652, 0.5
        %v1678 = vmul.f32 %v1377, %v1653
        %v1679 = vmul.f32 %v1380, %v1654
        %v1680 = vmul.f32 %v1385, %v1655
        %v1681 = vmul.f32 %v1388, %v1656
        %v1682 = vmul.f32 %v1393, %v1657
        %v1683 = vmul.f32 %v1396, %v1658
        %v1684 = vmul.f32 %v1401, %v1659
        %v1685 = vmul.f32 %v1404, %v1660
        %v1686 = vmul.f32 %v1409, %v1661
        %v1687 = vmul.f32 %v1412, %v1662
        %v1688 = vmul.f32 %v1417, %v1663
        %v1689 = vmul.f32 %v1420, %v1664
        %v1690 = vmul.f32 %v1425, %v1665
        %v1691 = vmul.f32 %v1428, %v1666
        %v1692 = vmul.f32 %v1433, %v1667
        %v1693 = vmul.f32 %v1436, %v1668
        %v1694 = vmul.f32 %v1441, %v1669
        %v1695 = vmul.f32 %v1444, %v1670
        %v1696 = vmul.f32 %v1449, %v1671
        %v1697 = vmul.f32 %v1452, %v1672
        %v1698 = vmul.f32 %v1457, %v1673
        %v1699 = vmul.f32 %v1460, %v1674
        %v1700 = vmul.f32 %v1465, %v1675
        %v1701 = vmul.f32 %v1468, %v1676
        %v1702 = vmul.f32 %v1473, %v1677
        %v1703 = vadd.f32 %v1678, %v1679
        %v1704 = vadd.f32 %v1703, %v1680
        %v1705 = vadd.f32 %v1704, %v1681
        %v1706 = vadd.f32 %v1705, %v1682
        %v1707 = vadd.f32 %v1706, %v1683
        %v1708 = vadd.f32 %v1707, %v1684
        %v1709 = vadd.f32 %v1708, %v1685
        %v1710 = vadd.f32 %v1709, %v1686
        %v1711 = vadd.f32 %v1710, %v1687
        %v1712 = vadd.f32 %v1711, %v1688
        %v1713 = vadd.f32 %v1712, %v1689
        %v1714 = vadd.f32 %v1713, %v1690
        %v1715 = vadd.f32 %v1714, %v1691
        %v1716 = vadd.f32 %v1715, %v1692
        %v1717 = vadd.f32 %v1716, %v1693
        %v1718 = vadd.f32 %v1717, %v1694
        %v1719 = vadd.f32 %v1718, %v1695
        %v1720 = vadd.f32 %v1719, %v1696
        %v1721 = vadd.f32 %v1720, %v1697
        %v1722 = vadd.f32 %v1721, %v1698
        %v1723 = vadd.f32 %v1722, %v1699
        %v1724 = vadd.f32 %v1723, %v1700
        %v1725 = vadd.f32 %v1724, %v1701
        %vm1726 = vcmask 1043456
        %v1727 = vsel %vm1726, %v1702, 0.0
        %v1728 = vadd.f32 %v1725, %v1727
        %v1729 = vrot.slane %v1728, 4
        %v1730 = vadd.f32 %v1728, %v1729
        %v1731 = vrot.slane %v1730, 2
        %v1732 = vadd.f32 %v1730, %v1731
        %v1733 = vrot.slane %v1732, 1
        %v1734 = vadd.f32 %v1732, %v1733
        %v1735 = vrcp.pop 196.0
        %v1736 = vmul.f32 %v1734, %v1735
        %v1737 = vpack.c.bf16 %v1736, %v1736
        %v1738 = vld [vmem:[%s3] sm:$0xf]
        %v1739 = vld [vmem:[%s3 + $0x4] sm:$0xf]
        %v1740 = vld [vmem:[%s3 + $0x8] sm:$0xf]
        %v1741 = vld [vmem:[%s3 + $0xc] sm:$0xf]
        %v1742 = vld [vmem:[%s3 + $0x10] sm:$0xf]
        %v1743 = vld [vmem:[%s3 + $0x14] sm:$0xf]
        %v1744 = vld [vmem:[%s3 + $0x18] sm:$0xf]
        %v1745 = vld [vmem:[%s3 + $0x1c] sm:$0xf]
        %v1746 = vld [vmem:[%s3 + $0x20] sm:$0xf]
        %v1747 = vld [vmem:[%s3 + $0x24] sm:$0xf]
        %v1748 = vld [vmem:[%s3 + $0x28] sm:$0xf]
        %v1749 = vld [vmem:[%s3 + $0x2c] sm:$0xf]
        %v1750 = vld [vmem:[%s3 + $0x30] sm:$0xf]
        %v1751 = vld [vmem:[%s3 + $0x34] sm:$0xf]
        %v1752 = vld [vmem:[%s3 + $0x38] sm:$0xf]
        %v1753 = vld [vmem:[%s3 + $0x3c] sm:$0xf]
        %v1754 = vld [vmem:[%s4] sm:$0x1]
        %v1771 = vunpack.c.l.b16 %v1738
        %v1772 = vunpack.c.l.b16 %v1739
        %v1773 = vunpack.c.l.b16 %v1740
        %v1774 = vunpack.c.l.b16 %v1741
        %v1775 = vunpack.c.l.b16 %v1742
        %v1776 = vunpack.c.l.b16 %v1743
        %v1777 = vunpack.c.l.b16 %v1744
        %v1778 = vunpack.c.l.b16 %v1745
        %v1779 = vunpack.c.l.b16 %v1746
        %v1780 = vunpack.c.l.b16 %v1747
        %v1781 = vunpack.c.l.b16 %v1748
        %v1782 = vunpack.c.l.b16 %v1749
        %v1783 = vunpack.c.l.b16 %v1750
        %v1784 = vunpack.c.l.b16 %v1751
        %v1785 = vunpack.c.l.b16 %v1752
        %v1786 = vunpack.c.l.b16 %v1753
        %v1787 = vpack.c.b16 %v1772, %v1771
        %v1788 = vpack.c.b16 %v1774, %v1773
        %v1789 = vpack.c.b16 %v1776, %v1775
        %v1790 = vpack.c.b16 %v1778, %v1777
        %v1791 = vpack.c.b16 %v1780, %v1779
        %v1792 = vpack.c.b16 %v1782, %v1781
        %v1793 = vpack.c.b16 %v1784, %v1783
        %v1794 = vpack.c.b16 %v1786, %v1785
        %1803 = vmatprep.subr.bf16.mxu0 0
        %1804 = vmatpush1.bf16.msra.mxu0 %v1787
        %1805 = vmatprep.subr.bf16.mxu0 0
        %1806 = vmatpush1.bf16.msra.mxu0 %v1788
        %1807 = vmatprep.subr.bf16.mxu0 0
        %1808 = vmatpush1.bf16.msra.mxu0 %v1789
        %1809 = vmatprep.subr.bf16.mxu0 0
        %1810 = vmatpush1.bf16.msra.mxu0 %v1790
        %1811 = vmatprep.subr.bf16.mxu0 0
        %1812 = vmatpush1.bf16.msra.mxu0 %v1791
        %1813 = vmatprep.subr.bf16.mxu0 0
        %1814 = vmatpush1.bf16.msra.mxu0 %v1792
        %1815 = vmatprep.subr.bf16.mxu0 0
        %1816 = vmatpush1.bf16.msra.mxu0 %v1793
        %1817 = vmatprep.subr.bf16.mxu0 0
        %1818 = vmatpush1.bf16.msra.mxu0 %v1794
        %1819 = vmatprep.subr.bf16.mxu0 0
        %1820 = vmatpush1.bf16.msra.mxu0 0
        %1821 = vmatprep.subr.bf16.mxu0 0
        %1822 = vmatpush1.bf16.msra.mxu0 0
        %1823 = vmatprep.subr.bf16.mxu0 0
        %1824 = vmatpush1.bf16.msra.mxu0 0
        %1825 = vmatprep.subr.bf16.mxu0 0
        %1826 = vmatpush1.bf16.msra.mxu0 0
        %1827 = vmatprep.subr.bf16.mxu0 0
        %1828 = vmatpush1.bf16.msra.mxu0 0
        %1829 = vmatprep.subr.bf16.mxu0 0
        %1830 = vmatpush1.bf16.msra.mxu0 0
        %1831 = vmatprep.subr.bf16.mxu0 0
        %1832 = vmatpush1.bf16.msra.mxu0 0
        %1833 = vmatprep.subr.bf16.mxu0 0
        %1834 = vmatpush1.bf16.msra.mxu0 0
        %1835 = vmatprep.mubr.bf16.mxu0 0
        %1836 = vmatmul.mubr.bf16.gmra.mrb[0].mxu0 %v1737
        %v1837 = vpop.f32.mrb[0].mxu0
        %v1838 = vadd.f32 %v1754, %v1837
        %v1839 = vpop.f32.mrb[0].mxu0
        %v1840 = vpop.f32.mrb[0].mxu0
        %v1841 = vpop.f32.mrb[0].mxu0
        %1842 = vdwg.mxu0
        %1843 = vst [vmem:[%s216] sm:$0x1] %v1838
        %s1844 = sand.u32 %s137, 1
        %s1845 = scalar_lea.sflag [#allocation3], %s1844
        %s1846 = sand.u32 %s137, 1
        %s1847 = scalar_lea.vmem [#allocation2], %s1846
        // Predicated region
        $region41: #{new_model_forward.3} parent=39 // pred_check
          %p1848 = pneg %p147
        $region42: #{new_model_forward.3} parent=39 // pred_check_branch
          %1850 = sbr.rel (%p1848) target = $region44
        $region43: #{new_model_forward.3} parent=39 // pred_region
          %s1852 = ssub.s32 16, 16
          %1853 = vsyncadd %s1845, %s1852
          %s1854 = smul.addr %s19, 16
          %s1855 = scalar_lea.hbm %s5, %s1854
          %s1857 = sshll.u32 %s1847, 4
          %s1858 = int_to_ptr.vmem [resolvable:$true] %s1857
          %1860 = dma.vmem_to_hbm [thread:$0]  %s1858, 16, %s1855, %s1845
        $region44: #{new_model_forward.3} parent=39 // pred_fallthru
          _
      $region40: #{new_model_forward.3} parent=5 // pred_fallthru
        _
      %p1861 = scmp.le.s32.totalorder 2, %s14
      // Predicated region
      $region45: #{new_model_forward.3} parent=5 // pred_check
        %p1862 = pneg %p1861
      $region46: #{new_model_forward.3} parent=5 // pred_check_branch
        %1864 = sbr.rel (%p1862) target = $region48
      $region47: #{new_model_forward.3} parent=5 // pred_region
        %s1865 = ssub.s32 %s14, 2
        // Predicated region
        $region49: #{new_model_forward.3} parent=47 // pred_check
          %p1866 = pneg %p153
        $region50: #{new_model_forward.3} parent=47 // pred_check_branch
          %1868 = sbr.rel (%p1866) target = $region52
        $region51: #{new_model_forward.3} parent=47 // pred_region
          %s1869 = sand.u32 %s138, 1
          %s1870 = scalar_lea.sflag [#allocation3], %s1869
          %s1871 = sand.u32 %s138, 1
          %s1872 = scalar_lea.vmem [#allocation2], %s1871
          %1873 = dma.done %s1870, 16
        $region52: #{new_model_forward.3} parent=47 // pred_fallthru
          _
      $region48: #{new_model_forward.3} parent=5 // pred_fallthru
        _
    $region6: #{new_model_forward.3} parent=1 // loop_footer
      %s18 = sadd.s32 1, %s14
    $region7: #{new_model_forward.3} parent=1 // loop_footer_branch
      %13 = sbr.rel target = $region3
    $region8: #{new_model_forward.3} parent=1 // loop_exit
      _
    %1874 = vsyncpa [#allocation3], 1
    %s1875 = scalar_lea.sflag [#allocation3], 1
    %1876 = vsyncpa %s1875, 1

// kernel: squeeze.2
$region0: #{squeeze.2}
  %s0 = inlined_call_operand.vmem [shape: f32[2,16], index: 0, kind: input, shape index: {}]
  %s1 = inlined_call_operand.hbm [shape: f32[2,4,4], index: 1, kind: output, shape index: {}]
  $region1: #{squeeze.2} parent=0
    #allocation0 [shape = 'u8[4096]{0}', space=vmem, size = 0x1000, scoped, tag = 'operand span for operand 1']
    #allocation1 [shape = 's32[1]{0}', space=sflag, size = 0x4, scoped, tag = 'scoped memory for squeeze.2']
    #allocation2 [shape = 'u8[8192]{0}', space=vmem, size = 0x2000, scoped, tag = 'scoped mem for output reshape']
    #allocation3 [shape = 'u8[4096]{0}', space=vmem, size = 0x1000, scoped, tag = 'scoped mem for input reshape']
    %2 = vsyncpa [#allocation1], 0
    %s4 = sshllo.u32 0, 2
    %v5 = vld [vmem:[%s0] sm:%s4]
    %6 = vst [vmem:[#allocation3] sm:%s4] %v5
    %v7 = vld [vmem:[#allocation3] sm:$0x3]
    %vm8 = vcmask 31744
    %9 = vst.msk [vmem:[#allocation2] ss:$8 sm:$0x3] %vm8, %v7
    %v10 = vld [vmem:[#allocation3] sm:$0x3]
    %11 = vrot.lane.b32.xlu0 %v10, 124
    %v12 = vpop.permute.xlu0 %11
    %vm13 = vcmask 31744
    %s14 = scalar_lea.vmem [#allocation2], 1
    %15 = vst.msk [vmem:[%s14] ss:$8 sm:$0x3] %vm13, %v12
    %v16 = vld [vmem:[#allocation3] sm:$0x3]
    %17 = vrot.lane.b32.xlu0 %v16, 120
    %v18 = vpop.permute.xlu0 %17
    %vm19 = vcmask 31744
    %s20 = scalar_lea.vmem [#allocation2], 2
    %21 = vst.msk [vmem:[%s20] ss:$8 sm:$0x3] %vm19, %v18
    %v22 = vld [vmem:[#allocation3] sm:$0x3]
    %23 = vrot.lane.b32.xlu0 %v22, 116
    %v24 = vpop.permute.xlu0 %23
    %vm25 = vcmask 31744
    %s26 = scalar_lea.vmem [#allocation2], 3
    %27 = vst.msk [vmem:[%s26] ss:$8 sm:$0x3] %vm25, %v24
    %s29 = sshllo.u32 0, 4
    %v31 = vld [vmem:[#allocation2] sm:%s29]
    %s32 = sshllo.u32 0, 4
    %33 = vst [vmem:[#allocation0] sm:%s32] %v31
    %s34 = scalar_lea.vmem [#allocation2], 8
    %v35 = vld [vmem:[%s34] sm:%s29]
    %s36 = sshllo.u32 0, 4
    %s37 = scalar_lea.vmem [#allocation0], 4
    %38 = vst [vmem:[%s37] sm:%s36] %v35
    %s40 = ssub.s32 128, 128
    %41 = vsyncadd [#allocation1], %s40
    %s43 = sshll.u32 [#allocation0], 4
    %s44 = int_to_ptr.vmem [resolvable:$true] %s43
    %46 = dma.vmem_to_hbm [thread:$0]  %s44, 128, %s1, [#allocation1]
    %47 = dma.done [#allocation1], 128
    %48 = vsyncpa [#allocation1], 1

// kernel: new_model_forward.2
$region0: #{new_model_forward.2}
  #allocation0 [shape = 'u32[]', space=smem, size = 0x4, offset = 0x4, fixed_abs, tag = 'smem constant byte address 0x4 - core index']
  #allocation1 [shape = 'u32[144,128]{1,0:T(1,128)}', space=vmem, size = 0x12000, scoped, tag = 'internal scratch']
  %s0 = inlined_call_operand.vmem [shape: bf16[2,32,192], index: 0, kind: input, shape index: {}]
  %s1 = inlined_call_operand.vmem [shape: bf16[192,64], index: 1, kind: input, shape index: {}]
  %s2 = inlined_call_operand.vmem [shape: f32[32,64], index: 2, kind: input, shape index: {}]
  %s3 = inlined_call_operand.vmem [shape: bf16[6,64,64], index: 3, kind: input, shape index: {}]
  %s4 = inlined_call_operand.vmem [shape: bf16[2,64,64], index: 4, kind: input, shape index: {}]
  %s5 = inlined_call_operand.vmem [shape: bf16[128,64], index: 5, kind: input, shape index: {}]
  %s6 = inlined_call_operand.vmem [shape: bf16[128,128], index: 6, kind: input, shape index: {}]
  %s7 = inlined_call_operand.vmem [shape: f32[32,384], index: 7, kind: input, shape index: {}]
  %s8 = inlined_call_operand.vmem [shape: f32[32,384], index: 8, kind: input, shape index: {}]
  %s9 = inlined_call_operand.vmem [shape: f32[320,32], index: 9, kind: input, shape index: {}]
  %s10 = inlined_call_operand.vmem [shape: f32[320,32], index: 10, kind: input, shape index: {}]
  %s11 = inlined_call_operand.vmem [shape: f32[2,1,128], index: 11, kind: output, shape index: {}]
  %s12 = sld [smem:[#allocation0]]
  $region77: #{new_model_forward.2} parent=0
    _
  %s14 = ssub.s32 1, %s12
  %s15 = scalar_select 0, %s14, %s12
  loop: start=0, step=1, limit=4
  $region2: #{new_model_forward.2} parent=0 // loop_pre_header
    _
  $region3: #{new_model_forward.2} parent=0 // loop_header
    %s17 = sphi 0, %s21
    %p18 = scmp.ge.s32.totalorder %s17, 4
    %s27 = sphi 0, %s29
    %s30 = sphi 0, %s27
    %s31 = sphi 0, %s30
    %s47 = sphi 0, %s31
    %s51 = sphi 0, %s51
    %s53 = sphi 0, %s51
    %s54 = sphi 0, %s53
    %s68 = sphi 0, %s54
    %s72 = sphi 0, %s72
    %s74 = sphi 0, %s72
    %s75 = sphi 0, %s74
    %s89 = sphi 0, %s75
    %s93 = sphi 0, %s93
    %s95 = sphi 0, %s93
    %s96 = sphi 0, %s95
    %s110 = sphi 0, %s96
    %s114 = sphi 0, %s114
    %s116 = sphi 0, %s114
    %s117 = sphi 0, %s116
    %s131 = sphi 0, %s117
    %s135 = sphi 0, %s135
    %s137 = sphi 0, %s135
    %s138 = sphi 0, %s137
    %s152 = sphi 0, %s138
    %s156 = sphi 0, %s156
    %s158 = sphi 0, %s156
    %s159 = sphi 0, %s158
    %s173 = sphi 0, %s159
    %s177 = sphi 0, %s177
    %s179 = sphi 0, %s177
    %s180 = sphi 0, %s179
    %s194 = sphi 0, %s180
    %s198 = sphi 0, %s198
    %s200 = sphi 0, %s198
    %s201 = sphi 0, %s200
    %s215 = sphi 0, %s201
    %s219 = sphi 0, %s219
    %s221 = sphi 0, %s219
    %s222 = sphi 0, %s221
    %s236 = sphi 0, %s222
    %s240 = sphi 0, %s240
    %s242 = sphi 0, %s240
    %s243 = sphi 0, %s242
    %s257 = sphi 0, %s243
    %s263 = sphi 0, %s265
    %s266 = sphi 0, %s263
    %s267 = sphi 0, %s266
    %s283 = sphi 0, %s267
  $region4: #{new_model_forward.2} parent=0 // loop_header_branch
    %20 = sbr.rel (%p18) target = $region8
  $region5: #{new_model_forward.2} parent=0 // loop_body
    %s22 = ssub.s32 %s17, 1
    %s23 = ssub.s32 %s17, 2
    %s24 = sadd.s32 %s17, 1
    %s25 = ssub.s32 %s17, %s24
    %p26 = scmp.eq.s32.totalorder %s25, 0
    %s28 = sadd.s32 %s27, 1
    %s29 = scalar_select %p26, %s27, %s28
    %p32 = pneg %p26
    %p33 = scmp.eq.s32.totalorder %s17, 1
    %p34 = por %p32, %p33
    %p35 = scmp.ne.s32.totalorder %s27, %s30
    %p36 = scmp.eq.s32.totalorder %s17, 0
    %p37 = por %p35, %p36
    %p38 = scmp.ne.s32.totalorder %s27, %s30
    %p39 = scmp.eq.s32.totalorder %s22, 1
    %p40 = por %p38, %p39
    %p41 = scmp.ne.s32.totalorder %s30, %s31
    %p42 = scmp.eq.s32.totalorder %s22, 0
    %p43 = por %p41, %p42
    %p44 = scmp.ne.s32.totalorder %s30, %s31
    %p45 = scmp.eq.s32.totalorder %s23, 1
    %p46 = por %p44, %p45
    %p48 = scmp.ne.s32.totalorder %s31, %s47
    %p49 = scmp.eq.s32.totalorder %s23, 0
    %p50 = por %p48, %p49
    %s52 = sadd.s32 %s51, 1
    %p55 = scmp.eq.s32.totalorder %s17, 1
    %p56 = scmp.ne.s32.totalorder %s51, %s53
    %p57 = scmp.eq.s32.totalorder %s17, 0
    %p58 = por %p56, %p57
    %p59 = scmp.ne.s32.totalorder %s51, %s53
    %p60 = scmp.eq.s32.totalorder %s22, 1
    %p61 = por %p59, %p60
    %p62 = scmp.ne.s32.totalorder %s53, %s54
    %p63 = scmp.eq.s32.totalorder %s22, 0
    %p64 = por %p62, %p63
    %p65 = scmp.ne.s32.totalorder %s53, %s54
    %p66 = scmp.eq.s32.totalorder %s23, 1
    %p67 = por %p65, %p66
    %p69 = scmp.ne.s32.totalorder %s54, %s68
    %p70 = scmp.eq.s32.totalorder %s23, 0
    %p71 = por %p69, %p70
    %s73 = sadd.s32 %s72, 1
    %p76 = scmp.eq.s32.totalorder %s17, 1
    %p77 = scmp.ne.s32.totalorder %s72, %s74
    %p78 = scmp.eq.s32.totalorder %s17, 0
    %p79 = por %p77, %p78
    %p80 = scmp.ne.s32.totalorder %s72, %s74
    %p81 = scmp.eq.s32.totalorder %s22, 1
    %p82 = por %p80, %p81
    %p83 = scmp.ne.s32.totalorder %s74, %s75
    %p84 = scmp.eq.s32.totalorder %s22, 0
    %p85 = por %p83, %p84
    %p86 = scmp.ne.s32.totalorder %s74, %s75
    %p87 = scmp.eq.s32.totalorder %s23, 1
    %p88 = por %p86, %p87
    %p90 = scmp.ne.s32.totalorder %s75, %s89
    %p91 = scmp.eq.s32.totalorder %s23, 0
    %p92 = por %p90, %p91
    %s94 = sadd.s32 %s93, 1
    %p97 = scmp.eq.s32.totalorder %s17, 1
    %p98 = scmp.ne.s32.totalorder %s93, %s95
    %p99 = scmp.eq.s32.totalorder %s17, 0
    %p100 = por %p98, %p99
    %p101 = scmp.ne.s32.totalorder %s93, %s95
    %p102 = scmp.eq.s32.totalorder %s22, 1
    %p103 = por %p101, %p102
    %p104 = scmp.ne.s32.totalorder %s95, %s96
    %p105 = scmp.eq.s32.totalorder %s22, 0
    %p106 = por %p104, %p105
    %p107 = scmp.ne.s32.totalorder %s95, %s96
    %p108 = scmp.eq.s32.totalorder %s23, 1
    %p109 = por %p107, %p108
    %p111 = scmp.ne.s32.totalorder %s96, %s110
    %p112 = scmp.eq.s32.totalorder %s23, 0
    %p113 = por %p111, %p112
    %s115 = sadd.s32 %s114, 1
    %p118 = scmp.eq.s32.totalorder %s17, 1
    %p119 = scmp.ne.s32.totalorder %s114, %s116
    %p120 = scmp.eq.s32.totalorder %s17, 0
    %p121 = por %p119, %p120
    %p122 = scmp.ne.s32.totalorder %s114, %s116
    %p123 = scmp.eq.s32.totalorder %s22, 1
    %p124 = por %p122, %p123
    %p125 = scmp.ne.s32.totalorder %s116, %s117
    %p126 = scmp.eq.s32.totalorder %s22, 0
    %p127 = por %p125, %p126
    %p128 = scmp.ne.s32.totalorder %s116, %s117
    %p129 = scmp.eq.s32.totalorder %s23, 1
    %p130 = por %p128, %p129
    %p132 = scmp.ne.s32.totalorder %s117, %s131
    %p133 = scmp.eq.s32.totalorder %s23, 0
    %p134 = por %p132, %p133
    %s136 = sadd.s32 %s135, 1
    %p139 = scmp.eq.s32.totalorder %s17, 1
    %p140 = scmp.ne.s32.totalorder %s135, %s137
    %p141 = scmp.eq.s32.totalorder %s17, 0
    %p142 = por %p140, %p141
    %p143 = scmp.ne.s32.totalorder %s135, %s137
    %p144 = scmp.eq.s32.totalorder %s22, 1
    %p145 = por %p143, %p144
    %p146 = scmp.ne.s32.totalorder %s137, %s138
    %p147 = scmp.eq.s32.totalorder %s22, 0
    %p148 = por %p146, %p147
    %p149 = scmp.ne.s32.totalorder %s137, %s138
    %p150 = scmp.eq.s32.totalorder %s23, 1
    %p151 = por %p149, %p150
    %p153 = scmp.ne.s32.totalorder %s138, %s152
    %p154 = scmp.eq.s32.totalorder %s23, 0
    %p155 = por %p153, %p154
    %s157 = sadd.s32 %s156, 1
    %p160 = scmp.eq.s32.totalorder %s17, 1
    %p161 = scmp.ne.s32.totalorder %s156, %s158
    %p162 = scmp.eq.s32.totalorder %s17, 0
    %p163 = por %p161, %p162
    %p164 = scmp.ne.s32.totalorder %s156, %s158
    %p165 = scmp.eq.s32.totalorder %s22, 1
    %p166 = por %p164, %p165
    %p167 = scmp.ne.s32.totalorder %s158, %s159
    %p168 = scmp.eq.s32.totalorder %s22, 0
    %p169 = por %p167, %p168
    %p170 = scmp.ne.s32.totalorder %s158, %s159
    %p171 = scmp.eq.s32.totalorder %s23, 1
    %p172 = por %p170, %p171
    %p174 = scmp.ne.s32.totalorder %s159, %s173
    %p175 = scmp.eq.s32.totalorder %s23, 0
    %p176 = por %p174, %p175
    %s178 = sadd.s32 %s177, 1
    %p181 = scmp.eq.s32.totalorder %s17, 1
    %p182 = scmp.ne.s32.totalorder %s177, %s179
    %p183 = scmp.eq.s32.totalorder %s17, 0
    %p184 = por %p182, %p183
    %p185 = scmp.ne.s32.totalorder %s177, %s179
    %p186 = scmp.eq.s32.totalorder %s22, 1
    %p187 = por %p185, %p186
    %p188 = scmp.ne.s32.totalorder %s179, %s180
    %p189 = scmp.eq.s32.totalorder %s22, 0
    %p190 = por %p188, %p189
    %p191 = scmp.ne.s32.totalorder %s179, %s180
    %p192 = scmp.eq.s32.totalorder %s23, 1
    %p193 = por %p191, %p192
    %p195 = scmp.ne.s32.totalorder %s180, %s194
    %p196 = scmp.eq.s32.totalorder %s23, 0
    %p197 = por %p195, %p196
    %s199 = sadd.s32 %s198, 1
    %p202 = scmp.eq.s32.totalorder %s17, 1
    %p203 = scmp.ne.s32.totalorder %s198, %s200
    %p204 = scmp.eq.s32.totalorder %s17, 0
    %p205 = por %p203, %p204
    %p206 = scmp.ne.s32.totalorder %s198, %s200
    %p207 = scmp.eq.s32.totalorder %s22, 1
    %p208 = por %p206, %p207
    %p209 = scmp.ne.s32.totalorder %s200, %s201
    %p210 = scmp.eq.s32.totalorder %s22, 0
    %p211 = por %p209, %p210
    %p212 = scmp.ne.s32.totalorder %s200, %s201
    %p213 = scmp.eq.s32.totalorder %s23, 1
    %p214 = por %p212, %p213
    %p216 = scmp.ne.s32.totalorder %s201, %s215
    %p217 = scmp.eq.s32.totalorder %s23, 0
    %p218 = por %p216, %p217
    %s220 = sadd.s32 %s219, 1
    %p223 = scmp.eq.s32.totalorder %s17, 1
    %p224 = scmp.ne.s32.totalorder %s219, %s221
    %p225 = scmp.eq.s32.totalorder %s17, 0
    %p226 = por %p224, %p225
    %p227 = scmp.ne.s32.totalorder %s219, %s221
    %p228 = scmp.eq.s32.totalorder %s22, 1
    %p229 = por %p227, %p228
    %p230 = scmp.ne.s32.totalorder %s221, %s222
    %p231 = scmp.eq.s32.totalorder %s22, 0
    %p232 = por %p230, %p231
    %p233 = scmp.ne.s32.totalorder %s221, %s222
    %p234 = scmp.eq.s32.totalorder %s23, 1
    %p235 = por %p233, %p234
    %p237 = scmp.ne.s32.totalorder %s222, %s236
    %p238 = scmp.eq.s32.totalorder %s23, 0
    %p239 = por %p237, %p238
    %s241 = sadd.s32 %s240, 1
    %p244 = scmp.eq.s32.totalorder %s17, 1
    %p245 = scmp.ne.s32.totalorder %s240, %s242
    %p246 = scmp.eq.s32.totalorder %s17, 0
    %p247 = por %p245, %p246
    %p248 = scmp.ne.s32.totalorder %s240, %s242
    %p249 = scmp.eq.s32.totalorder %s22, 1
    %p250 = por %p248, %p249
    %p251 = scmp.ne.s32.totalorder %s242, %s243
    %p252 = scmp.eq.s32.totalorder %s22, 0
    %p253 = por %p251, %p252
    %p254 = scmp.ne.s32.totalorder %s242, %s243
    %p255 = scmp.eq.s32.totalorder %s23, 1
    %p256 = por %p254, %p255
    %p258 = scmp.ne.s32.totalorder %s243, %s257
    %p259 = scmp.eq.s32.totalorder %s23, 0
    %p260 = por %p258, %p259
    %s261 = ssub.s32 %s17, %s24
    %p262 = scmp.eq.s32.totalorder %s261, 0
    %s264 = sadd.s32 %s263, 1
    %s265 = scalar_select %p262, %s263, %s264
    %p268 = pneg %p262
    %p269 = scmp.eq.s32.totalorder %s17, 1
    %p270 = por %p268, %p269
    %p271 = scmp.ne.s32.totalorder %s263, %s266
    %p272 = scmp.eq.s32.totalorder %s17, 0
    %p273 = por %p271, %p272
    %p274 = scmp.ne.s32.totalorder %s263, %s266
    %p275 = scmp.eq.s32.totalorder %s22, 1
    %p276 = por %p274, %p275
    %p277 = scmp.ne.s32.totalorder %s266, %s267
    %p278 = scmp.eq.s32.totalorder %s22, 0
    %p279 = por %p277, %p278
    %p280 = scmp.ne.s32.totalorder %s266, %s267
    %p281 = scmp.eq.s32.totalorder %s23, 1
    %p282 = por %p280, %p281
    %p284 = scmp.ne.s32.totalorder %s267, %s283
    %p285 = scmp.eq.s32.totalorder %s23, 0
    %p286 = por %p284, %p285
    %p287 = scmp.le.s32.totalorder 1, %s17
    %p288 = scmp.lt.s32.totalorder %s17, 3
    %p289 = pnand %p287, %p288
    %p290 = pneg %p289
    // Predicated region
    $region9: #{new_model_forward.2} parent=5 // pred_check
      _
    $region10: #{new_model_forward.2} parent=5 // pred_check_branch
      %292 = sbr.rel (%p289) target = $region12
    $region11: #{new_model_forward.2} parent=5 // pred_region
      %s293 = ssub.s32 %s17, 1
      // Predicated region
      $region13: #{new_model_forward.2} parent=11 // pred_check
        %p294 = pneg %p64
      $region14: #{new_model_forward.2} parent=11 // pred_check_branch
        %296 = sbr.rel (%p294) target = $region16
      $region15: #{new_model_forward.2} parent=11 // pred_region
        _
      $region16: #{new_model_forward.2} parent=11 // pred_fallthru
        _
      // Predicated region
      $region17: #{new_model_forward.2} parent=11 // pred_check
        %p297 = pneg %p85
      $region18: #{new_model_forward.2} parent=11 // pred_check_branch
        %299 = sbr.rel (%p297) target = $region20
      $region19: #{new_model_forward.2} parent=11 // pred_region
        _
      $region20: #{new_model_forward.2} parent=11 // pred_fallthru
        _
      // Predicated region
      $region21: #{new_model_forward.2} parent=11 // pred_check
        %p300 = pneg %p106
      $region22: #{new_model_forward.2} parent=11 // pred_check_branch
        %302 = sbr.rel (%p300) target = $region24
      $region23: #{new_model_forward.2} parent=11 // pred_region
        _
      $region24: #{new_model_forward.2} parent=11 // pred_fallthru
        _
      // Predicated region
      $region25: #{new_model_forward.2} parent=11 // pred_check
        %p303 = pneg %p127
      $region26: #{new_model_forward.2} parent=11 // pred_check_branch
        %305 = sbr.rel (%p303) target = $region28
      $region27: #{new_model_forward.2} parent=11 // pred_region
        _
      $region28: #{new_model_forward.2} parent=11 // pred_fallthru
        _
      // Predicated region
      $region29: #{new_model_forward.2} parent=11 // pred_check
        %p306 = pneg %p148
      $region30: #{new_model_forward.2} parent=11 // pred_check_branch
        %308 = sbr.rel (%p306) target = $region32
      $region31: #{new_model_forward.2} parent=11 // pred_region
        _
      $region32: #{new_model_forward.2} parent=11 // pred_fallthru
        _
      // Predicated region
      $region33: #{new_model_forward.2} parent=11 // pred_check
        %p309 = pneg %p169
      $region34: #{new_model_forward.2} parent=11 // pred_check_branch
        %311 = sbr.rel (%p309) target = $region36
      $region35: #{new_model_forward.2} parent=11 // pred_region
        _
      $region36: #{new_model_forward.2} parent=11 // pred_fallthru
        _
      // Predicated region
      $region37: #{new_model_forward.2} parent=11 // pred_check
        %p312 = pneg %p190
      $region38: #{new_model_forward.2} parent=11 // pred_check_branch
        %314 = sbr.rel (%p312) target = $region40
      $region39: #{new_model_forward.2} parent=11 // pred_region
        _
      $region40: #{new_model_forward.2} parent=11 // pred_fallthru
        _
      // Predicated region
      $region41: #{new_model_forward.2} parent=11 // pred_check
        %p315 = pneg %p211
      $region42: #{new_model_forward.2} parent=11 // pred_check_branch
        %317 = sbr.rel (%p315) target = $region44
      $region43: #{new_model_forward.2} parent=11 // pred_region
        _
      $region44: #{new_model_forward.2} parent=11 // pred_fallthru
        _
      // Predicated region
      $region45: #{new_model_forward.2} parent=11 // pred_check
        %p318 = pneg %p232
      $region46: #{new_model_forward.2} parent=11 // pred_check_branch
        %320 = sbr.rel (%p318) target = $region48
      $region47: #{new_model_forward.2} parent=11 // pred_region
        _
      $region48: #{new_model_forward.2} parent=11 // pred_fallthru
        _
      // Predicated region
      $region49: #{new_model_forward.2} parent=11 // pred_check
        %p321 = pneg %p253
      $region50: #{new_model_forward.2} parent=11 // pred_check_branch
        %323 = sbr.rel (%p321) target = $region52
      $region51: #{new_model_forward.2} parent=11 // pred_region
        _
      $region52: #{new_model_forward.2} parent=11 // pred_fallthru
        _
    $region12: #{new_model_forward.2} parent=5 // pred_fallthru
      _
    %p324 = scmp.lt.s32.totalorder %s17, 2
    // Predicated region
    $region53: #{new_model_forward.2} parent=5 // pred_check
      %p325 = pneg %p324
    $region54: #{new_model_forward.2} parent=5 // pred_check_branch
      %327 = sbr.rel (%p325) target = $region56
    $region55: #{new_model_forward.2} parent=5 // pred_region
      // Predicated region
      $region57: #{new_model_forward.2} parent=55 // pred_check
        %p328 = pneg %p37
      $region58: #{new_model_forward.2} parent=55 // pred_check_branch
        %330 = sbr.rel (%p328) target = $region60
      $region59: #{new_model_forward.2} parent=55 // pred_region
        %p331 = scmp.lt.s32.totalorder %s17, 1
        %s332 = scalar_select %p331, %s17, 1
        %s333 = smul.addr %s332, 8
        %s334 = smul.addr %s333, 4
        %s335 = scalar_lea.vmem %s0, %s334
      $region60: #{new_model_forward.2} parent=55 // pred_fallthru
        _
    $region56: #{new_model_forward.2} parent=5 // pred_fallthru
      _
    %p336 = scmp.le.s32.totalorder 1, %s17
    %p337 = scmp.lt.s32.totalorder %s17, 3
    %p338 = pnand %p336, %p337
    %p339 = pneg %p338
    // Predicated region
    $region61: #{new_model_forward.2} parent=5 // pred_check
      _
    $region62: #{new_model_forward.2} parent=5 // pred_check_branch
      %341 = sbr.rel (%p338) target = $region64
    $region63: #{new_model_forward.2} parent=5 // pred_region
      %s342 = ssub.s32 %s17, 1
      %p343 = scmp.lt.s32.totalorder %s22, 1
      %s344 = scalar_select %p343, %s22, 1
      %s345 = smul.addr %s344, 8
      %s346 = smul.addr %s345, 4
      %s347 = scalar_lea.vmem %s0, %s346
      %p348 = pneg %p43
      %p349 = pneg %p40
      %p350 = pneg %p64
      %p351 = pneg %p61
      %p352 = pneg %p85
      %p353 = pneg %p82
      %p354 = pneg %p106
      %p355 = pneg %p103
      %p356 = pneg %p127
      %p357 = pneg %p124
      %p358 = pneg %p148
      %p359 = pneg %p145
      %p360 = pneg %p169
      %p361 = pneg %p166
      %p362 = pneg %p190
      %p363 = pneg %p187
      %p364 = pneg %p211
      %p365 = pneg %p208
      %p366 = pneg %p232
      %p367 = pneg %p229
      %p368 = pneg %p253
      %p369 = pneg %p250
      %p370 = pneg %p279
      %p371 = pneg %p276
      %p372 = scmp.lt.s32.totalorder %s22, 1
      %s373 = scalar_select %p372, %s22, 1
      %s374 = scalar_lea.vmem %s11, %s373
      %p375 = scmp.lt.s32.totalorder %s22, 1
      %s376 = scalar_select %p375, %s22, 1
      %s377 = smul.addr %s376, 8
      %s378 = smul.addr %s377, 4
      %s379 = scalar_lea.vmem %s0, %s378
      %p380 = scmp.lt.s32.totalorder %s22, 1
      %s381 = scalar_select %p380, %s22, 1
      %s382 = scalar_lea.vmem %s11, %s381
      %v384 = vld [vmem:[%s379] sm:$0xff]
      %v385 = vld [vmem:[%s379 + $0x8] sm:$0xff]
      %v386 = vld [vmem:[%s379 + $0x10] sm:$0xff]
      %v387 = vld [vmem:[%s379 + $0x18] sm:$0xff]
      %v388 = vld [vmem:[%s1] sm:$0xf]
      %v389 = vld [vmem:[%s1 + $0x4] sm:$0xf]
      %v390 = vld [vmem:[%s1 + $0x8] sm:$0xf]
      %v391 = vld [vmem:[%s1 + $0xc] sm:$0xf]
      %v392 = vld [vmem:[%s1 + $0x10] sm:$0xf]
      %v393 = vld [vmem:[%s1 + $0x14] sm:$0xf]
      %v394 = vld [vmem:[%s1 + $0x18] sm:$0xf]
      %v395 = vld [vmem:[%s1 + $0x1c] sm:$0xf]
      %v396 = vld [vmem:[%s1 + $0x20] sm:$0xf]
      %v397 = vld [vmem:[%s1 + $0x24] sm:$0xf]
      %v398 = vld [vmem:[%s1 + $0x28] sm:$0xf]
      %v399 = vld [vmem:[%s1 + $0x2c] sm:$0xf]
      %v400 = vld [vmem:[%s1 + $0x30] sm:$0xf]
      %v401 = vld [vmem:[%s1 + $0x34] sm:$0xf]
      %v402 = vld [vmem:[%s1 + $0x38] sm:$0xf]
      %v403 = vld [vmem:[%s1 + $0x3c] sm:$0xf]
      %v404 = vld [vmem:[%s1 + $0x40] sm:$0xf]
      %v405 = vld [vmem:[%s1 + $0x44] sm:$0xf]
      %v406 = vld [vmem:[%s1 + $0x48] sm:$0xf]
      %v407 = vld [vmem:[%s1 + $0x4c] sm:$0xf]
      %v408 = vld [vmem:[%s1 + $0x50] sm:$0xf]
      %v409 = vld [vmem:[%s1 + $0x54] sm:$0xf]
      %v410 = vld [vmem:[%s1 + $0x58] sm:$0xf]
      %v411 = vld [vmem:[%s1 + $0x5c] sm:$0xf]
      %v412 = vld [vmem:[%s2] sm:$0xff]
      %v413 = vld [vmem:[%s2 + $0x8] sm:$0xff]
      %v414 = vld [vmem:[%s2 + $0x10] sm:$0xff]
      %v415 = vld [vmem:[%s2 + $0x18] sm:$0xff]
      %v420 = vunpack.c.l.b16 %v384
      %v421 = vunpack.c.h.b16 %v384
      %v422 = vunpack.c.l.b16 %v385
      %v423 = vunpack.c.h.b16 %v385
      %v424 = vunpack.c.l.b16 %v386
      %v425 = vunpack.c.h.b16 %v386
      %v426 = vunpack.c.l.b16 %v387
      %v427 = vunpack.c.h.b16 %v387
      %v428 = vpack.c.b16 %v422, %v420
      %v429 = vpack.c.b16 %v423, %v421
      %v430 = vpack.c.b16 %v426, %v424
      %v431 = vpack.c.b16 %v427, %v425
      %v458 = vunpack.c.l.b16 %v388
      %v459 = vunpack.c.l.b16 %v389
      %v460 = vunpack.c.l.b16 %v390
      %v461 = vunpack.c.l.b16 %v391
      %v462 = vunpack.c.l.b16 %v392
      %v463 = vunpack.c.l.b16 %v393
      %v464 = vunpack.c.l.b16 %v394
      %v465 = vunpack.c.l.b16 %v395
      %v466 = vunpack.c.l.b16 %v396
      %v467 = vunpack.c.l.b16 %v397
      %v468 = vunpack.c.l.b16 %v398
      %v469 = vunpack.c.l.b16 %v399
      %v470 = vunpack.c.l.b16 %v400
      %v471 = vunpack.c.l.b16 %v401
      %v472 = vunpack.c.l.b16 %v402
      %v473 = vunpack.c.l.b16 %v403
      %v474 = vunpack.c.l.b16 %v404
      %v475 = vunpack.c.l.b16 %v405
      %v476 = vunpack.c.l.b16 %v406
      %v477 = vunpack.c.l.b16 %v407
      %v478 = vunpack.c.l.b16 %v408
      %v479 = vunpack.c.l.b16 %v409
      %v480 = vunpack.c.l.b16 %v410
      %v481 = vunpack.c.l.b16 %v411
      %v482 = vpack.c.b16 %v459, %v458
      %v483 = vpack.c.b16 %v461, %v460
      %v484 = vpack.c.b16 %v463, %v462
      %v485 = vpack.c.b16 %v465, %v464
      %v486 = vpack.c.b16 %v467, %v466
      %v487 = vpack.c.b16 %v469, %v468
      %v488 = vpack.c.b16 %v471, %v470
      %v489 = vpack.c.b16 %v473, %v472
      %v490 = vpack.c.b16 %v475, %v474
      %v491 = vpack.c.b16 %v477, %v476
      %v492 = vpack.c.b16 %v479, %v478
      %v493 = vpack.c.b16 %v481, %v480
      %vm506 = vcmask 523264
      %v508 = vsel %vm506, %v429, 0
      %v511 = vsel %vm506, %v431, 0
      %513 = vmatprep.subr.bf16.mxu0 0
      %514 = vmatpush1.bf16.msra.mxu0 %v482
      %515 = vmatprep.subr.bf16.mxu0 0
      %516 = vmatpush1.bf16.msra.mxu0 %v483
      %517 = vmatprep.subr.bf16.mxu0 0
      %518 = vmatpush1.bf16.msra.mxu0 %v484
      %519 = vmatprep.subr.bf16.mxu0 0
      %520 = vmatpush1.bf16.msra.mxu0 %v485
      %521 = vmatprep.subr.bf16.mxu0 0
      %522 = vmatpush1.bf16.msra.mxu0 %v486
      %523 = vmatprep.subr.bf16.mxu0 0
      %524 = vmatpush1.bf16.msra.mxu0 %v487
      %525 = vmatprep.subr.bf16.mxu0 0
      %526 = vmatpush1.bf16.msra.mxu0 %v488
      %527 = vmatprep.subr.bf16.mxu0 0
      %528 = vmatpush1.bf16.msra.mxu0 %v489
      %529 = vmatprep.subr.bf16.mxu0 0
      %530 = vmatpush1.bf16.msra.mxu0 %v490
      %531 = vmatprep.subr.bf16.mxu0 0
      %532 = vmatpush1.bf16.msra.mxu0 %v491
      %533 = vmatprep.subr.bf16.mxu0 0
      %534 = vmatpush1.bf16.msra.mxu0 %v492
      %535 = vmatprep.subr.bf16.mxu0 0
      %536 = vmatpush1.bf16.msra.mxu0 %v493
      %537 = vmatprep.subr.bf16.mxu0 0
      %538 = vmatpush1.bf16.msra.mxu0 0
      %539 = vmatprep.subr.bf16.mxu0 0
      %540 = vmatpush1.bf16.msra.mxu0 0
      %541 = vmatprep.subr.bf16.mxu0 0
      %542 = vmatpush1.bf16.msra.mxu0 0
      %543 = vmatprep.subr.bf16.mxu0 0
      %544 = vmatpush1.bf16.msra.mxu0 0
      %545 = vmatprep.mubr.bf16.mxu0 %v508
      %546 = vmatmul.mubr.bf16.gmra.mrb[0].mxu0 %v428
      %v547 = vpop.f32.mrb[0].mxu0
      %v548 = vadd.f32 %v412, %v547
      %v549 = vpop.f32.mrb[0].mxu0
      %v550 = vpop.f32.mrb[0].mxu0
      %v551 = vadd.f32 %v413, %v550
      %v552 = vpop.f32.mrb[0].mxu0
      %553 = vmatprep.mubr.bf16.mxu0 %v511
      %554 = vmatmul.mubr.bf16.gmra.mrb[0].mxu0 %v430
      %v555 = vpop.f32.mrb[0].mxu0
      %v556 = vadd.f32 %v414, %v555
      %v557 = vpop.f32.mrb[0].mxu0
      %v558 = vpop.f32.mrb[0].mxu0
      %v559 = vadd.f32 %v415, %v558
      %v560 = vpop.f32.mrb[0].mxu0
      %561 = vdwg.mxu0
      %v562 = vlaneseq
      %v563 = vshrl.u32 %v562, 7
      %v564 = vadd.s32 %v563, 8
      %v565 = vadd.s32 %v563, 16
      %v566 = vadd.s32 %v563, 24
      %v567 = vlaneseq
      %v568 = vand.u32 %v567, 127
      %vm569 = vcmp.eq.s32.totalorder %v563, %v568
      %vm570 = vcmp.eq.s32.totalorder %v564, %v568
      %vm571 = vcmp.eq.s32.totalorder %v565, %v568
      %vm572 = vcmp.eq.s32.totalorder %v566, %v568
      %v573 = vsel %vm569, 1, 0
      %v574 = vsel %vm570, 1, 0
      %v575 = vsel %vm571, 1, 0
      %v576 = vsel %vm572, 1, 0
      %v577 = vcvt.s32.f32 %v573
      %v578 = vcvt.s32.f32 %v574
      %v579 = vcvt.s32.f32 %v575
      %v580 = vcvt.s32.f32 %v576
      %vm581 = vcmp.eq.s32.totalorder %v563, 0
      %vm582 = vcmp.eq.s32.totalorder %v564, 0
      %vm583 = vcmp.eq.s32.totalorder %v565, 0
      %vm584 = vcmp.eq.s32.totalorder %v566, 0
      %vm585 = vcmp.eq.s32.totalorder %v568, 0
      %vm586 = vmand %vm581, %vm585
      %vm587 = vmand %vm582, %vm585
      %vm588 = vmand %vm583, %vm585
      %vm589 = vmand %vm584, %vm585
      %vm590 = vcmp.lt.s32.totalorder %v568, 0
      %v591 = vsub.s32 0, %v568
      %v592 = vsel %vm590, %v591, %v568
      %v593 = vshrl.u32 %v592, 5
      %v594 = vand.u32 %v592, 31
      %v595 = vsub.s32 0, %v594
      %v596 = vsel %vm590, %v595, %v594
      %vm597 = vcmp.ne.s32.totalorder %v596, 0
      %vm598 = vcmp.lt.s32.totalorder %v596, 0
      %vm599 = vmand %vm598, %vm597
      %v600 = vadd.s32 %v596, 32
      %v601 = vsel %vm599, %v600, %v596
      %vm602 = vcmp.lt.s32.totalorder %v601, 17
      %v603 = vsel %vm602, 0.0, -1e+30
      %v604 = vld [vmem:[%s5] sm:$0xf]
      %v605 = vld [vmem:[%s5 + $0x4] sm:$0xf]
      %v606 = vld [vmem:[%s5 + $0x8] sm:$0xf]
      %v607 = vld [vmem:[%s5 + $0xc] sm:$0xf]
      %v608 = vld [vmem:[%s5 + $0x10] sm:$0xf]
      %v609 = vld [vmem:[%s5 + $0x14] sm:$0xf]
      %v610 = vld [vmem:[%s5 + $0x18] sm:$0xf]
      %v611 = vld [vmem:[%s5 + $0x1c] sm:$0xf]
      %v612 = vld [vmem:[%s5 + $0x20] sm:$0xf]
      %v613 = vld [vmem:[%s5 + $0x24] sm:$0xf]
      %v614 = vld [vmem:[%s5 + $0x28] sm:$0xf]
      %v615 = vld [vmem:[%s5 + $0x2c] sm:$0xf]
      %v616 = vld [vmem:[%s5 + $0x30] sm:$0xf]
      %v617 = vld [vmem:[%s5 + $0x34] sm:$0xf]
      %v618 = vld [vmem:[%s5 + $0x38] sm:$0xf]
      %v619 = vld [vmem:[%s5 + $0x3c] sm:$0xf]
      %v620 = vld [vmem:[%s6] sm:$0xf]
      %v621 = vld [vmem:[%s6 + $0x4] sm:$0xf]
      %v622 = vld [vmem:[%s6 + $0x8] sm:$0xf]
      %v623 = vld [vmem:[%s6 + $0xc] sm:$0xf]
      %v624 = vld [vmem:[%s6 + $0x10] sm:$0xf]
      %v625 = vld [vmem:[%s6 + $0x14] sm:$0xf]
      %v626 = vld [vmem:[%s6 + $0x18] sm:$0xf]
      %v627 = vld [vmem:[%s6 + $0x1c] sm:$0xf]
      %v628 = vld [vmem:[%s6 + $0x20] sm:$0xf]
      %v629 = vld [vmem:[%s6 + $0x24] sm:$0xf]
      %v630 = vld [vmem:[%s6 + $0x28] sm:$0xf]
      %v631 = vld [vmem:[%s6 + $0x2c] sm:$0xf]
      %v632 = vld [vmem:[%s6 + $0x30] sm:$0xf]
      %v633 = vld [vmem:[%s6 + $0x34] sm:$0xf]
      %v634 = vld [vmem:[%s6 + $0x38] sm:$0xf]
      %v635 = vld [vmem:[%s6 + $0x3c] sm:$0xf]
      %v636 = vld [vmem:[%s7] sm:$0xff]
      %v637 = vld [vmem:[%s7 + $0x8] sm:$0xff]
      %v638 = vld [vmem:[%s7 + $0x10] sm:$0xff]
      %v639 = vld [vmem:[%s7 + $0x18] sm:$0xff]
      %v640 = vld [vmem:[%s7 + $0x20] sm:$0xff]
      %v641 = vld [vmem:[%s7 + $0x28] sm:$0xff]
      %v642 = vld [vmem:[%s7 + $0x30] sm:$0xff]
      %v643 = vld [vmem:[%s7 + $0x38] sm:$0xff]
      %v644 = vld [vmem:[%s7 + $0x40] sm:$0xff]
      %v645 = vld [vmem:[%s7 + $0x48] sm:$0xff]
      %v646 = vld [vmem:[%s7 + $0x50] sm:$0xff]
      %v647 = vld [vmem:[%s7 + $0x58] sm:$0xff]
      %v648 = vld [vmem:[%s8] sm:$0xff]
      %v649 = vld [vmem:[%s8 + $0x8] sm:$0xff]
      %v650 = vld [vmem:[%s8 + $0x10] sm:$0xff]
      %v651 = vld [vmem:[%s8 + $0x18] sm:$0xff]
      %v652 = vld [vmem:[%s8 + $0x20] sm:$0xff]
      %v653 = vld [vmem:[%s8 + $0x28] sm:$0xff]
      %v654 = vld [vmem:[%s8 + $0x30] sm:$0xff]
      %v655 = vld [vmem:[%s8 + $0x38] sm:$0xff]
      %v656 = vld [vmem:[%s8 + $0x40] sm:$0xff]
      %v657 = vld [vmem:[%s8 + $0x48] sm:$0xff]
      %v658 = vld [vmem:[%s8 + $0x50] sm:$0xff]
      %v659 = vld [vmem:[%s8 + $0x58] sm:$0xff]
      %v660 = vld [vmem:[%s9] sm:$0xff]
      %v661 = vld [vmem:[%s9 + $0x8] sm:$0xff]
      %v662 = vld [vmem:[%s9 + $0x10] sm:$0xff]
      %v663 = vld [vmem:[%s9 + $0x18] sm:$0xff]
      %v664 = vld [vmem:[%s9 + $0x20] sm:$0xff]
      %v665 = vld [vmem:[%s9 + $0x28] sm:$0xff]
      %v666 = vld [vmem:[%s9 + $0x30] sm:$0xff]
      %v667 = vld [vmem:[%s9 + $0x38] sm:$0xff]
      %v668 = vld [vmem:[%s9 + $0x40] sm:$0xff]
      %v669 = vld [vmem:[%s9 + $0x48] sm:$0xff]
      %v670 = vld [vmem:[%s9 + $0x50] sm:$0xff]
      %v671 = vld [vmem:[%s9 + $0x58] sm:$0xff]
      %v672 = vld [vmem:[%s9 + $0x60] sm:$0xff]
      %v673 = vld [vmem:[%s9 + $0x68] sm:$0xff]
      %v674 = vld [vmem:[%s9 + $0x70] sm:$0xff]
      %v675 = vld [vmem:[%s9 + $0x78] sm:$0xff]
      %v676 = vld [vmem:[%s9 + $0x80] sm:$0xff]
      %v677 = vld [vmem:[%s9 + $0x88] sm:$0xff]
      %v678 = vld [vmem:[%s9 + $0x90] sm:$0xff]
      %v679 = vld [vmem:[%s9 + $0x98] sm:$0xff]
      %v680 = vld [vmem:[%s9 + $0xa0] sm:$0xff]
      %v681 = vld [vmem:[%s9 + $0xa8] sm:$0xff]
      %v682 = vld [vmem:[%s9 + $0xb0] sm:$0xff]
      %v683 = vld [vmem:[%s9 + $0xb8] sm:$0xff]
      %v684 = vld [vmem:[%s9 + $0xc0] sm:$0xff]
      %v685 = vld [vmem:[%s9 + $0xc8] sm:$0xff]
      %v686 = vld [vmem:[%s9 + $0xd0] sm:$0xff]
      %v687 = vld [vmem:[%s9 + $0xd8] sm:$0xff]
      %v688 = vld [vmem:[%s9 + $0xe0] sm:$0xff]
      %v689 = vld [vmem:[%s9 + $0xe8] sm:$0xff]
      %v690 = vld [vmem:[%s9 + $0xf0] sm:$0xff]
      %v691 = vld [vmem:[%s9 + $0xf8] sm:$0xff]
      %v692 = vld [vmem:[%s9 + $0x100] sm:$0xff]
      %v693 = vld [vmem:[%s9 + $0x108] sm:$0xff]
      %v694 = vld [vmem:[%s9 + $0x110] sm:$0xff]
      %v695 = vld [vmem:[%s9 + $0x118] sm:$0xff]
      %v696 = vld [vmem:[%s9 + $0x120] sm:$0xff]
      %v697 = vld [vmem:[%s9 + $0x128] sm:$0xff]
      %v698 = vld [vmem:[%s9 + $0x130] sm:$0xff]
      %v699 = vld [vmem:[%s9 + $0x138] sm:$0xff]
      %v700 = vld [vmem:[%s10] sm:$0xff]
      %v701 = vld [vmem:[%s10 + $0x8] sm:$0xff]
      %v702 = vld [vmem:[%s10 + $0x10] sm:$0xff]
      %v703 = vld [vmem:[%s10 + $0x18] sm:$0xff]
      %v704 = vld [vmem:[%s10 + $0x20] sm:$0xff]
      %v705 = vld [vmem:[%s10 + $0x28] sm:$0xff]
      %v706 = vld [vmem:[%s10 + $0x30] sm:$0xff]
      %v707 = vld [vmem:[%s10 + $0x38] sm:$0xff]
      %v708 = vld [vmem:[%s10 + $0x40] sm:$0xff]
      %v709 = vld [vmem:[%s10 + $0x48] sm:$0xff]
      %v710 = vld [vmem:[%s10 + $0x50] sm:$0xff]
      %v711 = vld [vmem:[%s10 + $0x58] sm:$0xff]
      %v712 = vld [vmem:[%s10 + $0x60] sm:$0xff]
      %v713 = vld [vmem:[%s10 + $0x68] sm:$0xff]
      %v714 = vld [vmem:[%s10 + $0x70] sm:$0xff]
      %v715 = vld [vmem:[%s10 + $0x78] sm:$0xff]
      %v716 = vld [vmem:[%s10 + $0x80] sm:$0xff]
      %v717 = vld [vmem:[%s10 + $0x88] sm:$0xff]
      %v718 = vld [vmem:[%s10 + $0x90] sm:$0xff]
      %v719 = vld [vmem:[%s10 + $0x98] sm:$0xff]
      %v720 = vld [vmem:[%s10 + $0xa0] sm:$0xff]
      %v721 = vld [vmem:[%s10 + $0xa8] sm:$0xff]
      %v722 = vld [vmem:[%s10 + $0xb0] sm:$0xff]
      %v723 = vld [vmem:[%s10 + $0xb8] sm:$0xff]
      %v724 = vld [vmem:[%s10 + $0xc0] sm:$0xff]
      %v725 = vld [vmem:[%s10 + $0xc8] sm:$0xff]
      %v726 = vld [vmem:[%s10 + $0xd0] sm:$0xff]
      %v727 = vld [vmem:[%s10 + $0xd8] sm:$0xff]
      %v728 = vld [vmem:[%s10 + $0xe0] sm:$0xff]
      %v729 = vld [vmem:[%s10 + $0xe8] sm:$0xff]
      %v730 = vld [vmem:[%s10 + $0xf0] sm:$0xff]
      %v731 = vld [vmem:[%s10 + $0xf8] sm:$0xff]
      %v732 = vld [vmem:[%s10 + $0x100] sm:$0xff]
      %v733 = vld [vmem:[%s10 + $0x108] sm:$0xff]
      %v734 = vld [vmem:[%s10 + $0x110] sm:$0xff]
      %v735 = vld [vmem:[%s10 + $0x118] sm:$0xff]
      %v736 = vld [vmem:[%s10 + $0x120] sm:$0xff]
      %v737 = vld [vmem:[%s10 + $0x128] sm:$0xff]
      %v738 = vld [vmem:[%s10 + $0x130] sm:$0xff]
      %v739 = vld [vmem:[%s10 + $0x138] sm:$0xff]
      %v740 = vpack.c.bf16 %v551, %v548
      %v741 = vpack.c.bf16 %v559, %v556
      %v742 = vld [vmem:[%s3] sm:$0xf]
      %v743 = vld [vmem:[%s3 + $0x4] sm:$0xf]
      %v744 = vld [vmem:[%s3 + $0x8] sm:$0xf]
      %v745 = vld [vmem:[%s3 + $0xc] sm:$0xf]
      %v746 = vld [vmem:[%s3 + $0x10] sm:$0xf]
      %v747 = vld [vmem:[%s3 + $0x14] sm:$0xf]
      %v748 = vld [vmem:[%s3 + $0x18] sm:$0xf]
      %v749 = vld [vmem:[%s3 + $0x1c] sm:$0xf]
      %v758 = vunpack.c.l.b16 %v742
      %v759 = vunpack.c.l.b16 %v743
      %v760 = vunpack.c.l.b16 %v744
      %v761 = vunpack.c.l.b16 %v745
      %v762 = vunpack.c.l.b16 %v746
      %v763 = vunpack.c.l.b16 %v747
      %v764 = vunpack.c.l.b16 %v748
      %v765 = vunpack.c.l.b16 %v749
      %v766 = vpack.c.b16 %v759, %v758
      %v767 = vpack.c.b16 %v761, %v760
      %v768 = vpack.c.b16 %v763, %v762
      %v769 = vpack.c.b16 %v765, %v764
      %v775 = vsel %vm506, %v740, 0
      %v778 = vsel %vm506, %v741, 0
      %780 = vmatprep.subr.bf16.mxu0 0
      %781 = vmatpush1.bf16.msra.mxu0 %v766
      %782 = vmatprep.subr.bf16.mxu0 0
      %783 = vmatpush1.bf16.msra.mxu0 %v767
      %784 = vmatprep.subr.bf16.mxu0 0
      %785 = vmatpush1.bf16.msra.mxu0 %v768
      %786 = vmatprep.subr.bf16.mxu0 0
      %787 = vmatpush1.bf16.msra.mxu0 %v769
      %788 = vmatprep.subr.bf16.mxu0 0
      %789 = vmatpush1.bf16.msra.mxu0 0
      %790 = vmatprep.subr.bf16.mxu0 0
      %791 = vmatpush1.bf16.msra.mxu0 0
      %792 = vmatprep.subr.bf16.mxu0 0
      %793 = vmatpush1.bf16.msra.mxu0 0
      %794 = vmatprep.subr.bf16.mxu0 0
      %795 = vmatpush1.bf16.msra.mxu0 0
      %796 = vmatprep.subr.bf16.mxu0 0
      %797 = vmatpush1.bf16.msra.mxu0 0
      %798 = vmatprep.subr.bf16.mxu0 0
      %799 = vmatpush1.bf16.msra.mxu0 0
      %800 = vmatprep.subr.bf16.mxu0 0
      %801 = vmatpush1.bf16.msra.mxu0 0
      %802 = vmatprep.subr.bf16.mxu0 0
      %803 = vmatpush1.bf16.msra.mxu0 0
      %804 = vmatprep.subr.bf16.mxu0 0
      %805 = vmatpush1.bf16.msra.mxu0 0
      %806 = vmatprep.subr.bf16.mxu0 0
      %807 = vmatpush1.bf16.msra.mxu0 0
      %808 = vmatprep.subr.bf16.mxu0 0
      %809 = vmatpush1.bf16.msra.mxu0 0
      %810 = vmatprep.subr.bf16.mxu0 0
      %811 = vmatpush1.bf16.msra.mxu0 0
      %812 = vmatprep.mubr.bf16.mxu0 0
      %813 = vmatmul.mubr.bf16.gmra.mrb[0].mxu0 %v775
      %v814 = vpop.f32.mrb[0].mxu0
      %v815 = vadd.f32 0.0, %v814
      %v816 = vpop.f32.mrb[0].mxu0
      %v817 = vpop.f32.mrb[0].mxu0
      %v818 = vadd.f32 0.0, %v817
      %v819 = vpop.f32.mrb[0].mxu0
      %820 = vmatprep.mubr.bf16.mxu0 0
      %821 = vmatmul.mubr.bf16.gmra.mrb[0].mxu0 %v778
      %v822 = vpop.f32.mrb[0].mxu0
      %v823 = vadd.f32 0.0, %v822
      %v824 = vpop.f32.mrb[0].mxu0
      %v825 = vpop.f32.mrb[0].mxu0
      %v826 = vadd.f32 0.0, %v825
      %v827 = vpop.f32.mrb[0].mxu0
      %828 = vdwg.mxu0
      %s829 = scalar_lea.vmem %s3, 32
      %v830 = vld [vmem:[%s829] sm:$0xf]
      %v831 = vld [vmem:[%s829 + $0x4] sm:$0xf]
      %v832 = vld [vmem:[%s829 + $0x8] sm:$0xf]
      %v833 = vld [vmem:[%s829 + $0xc] sm:$0xf]
      %v834 = vld [vmem:[%s829 + $0x10] sm:$0xf]
      %v835 = vld [vmem:[%s829 + $0x14] sm:$0xf]
      %v836 = vld [vmem:[%s829 + $0x18] sm:$0xf]
      %v837 = vld [vmem:[%s829 + $0x1c] sm:$0xf]
      %v846 = vunpack.c.l.b16 %v830
      %v847 = vunpack.c.l.b16 %v831
      %v848 = vunpack.c.l.b16 %v832
      %v849 = vunpack.c.l.b16 %v833
      %v850 = vunpack.c.l.b16 %v834
      %v851 = vunpack.c.l.b16 %v835
      %v852 = vunpack.c.l.b16 %v836
      %v853 = vunpack.c.l.b16 %v837
      %v854 = vpack.c.b16 %v847, %v846
      %v855 = vpack.c.b16 %v849, %v848
      %v856 = vpack.c.b16 %v851, %v850
      %v857 = vpack.c.b16 %v853, %v852
      %862 = vmatprep.subr.bf16.mxu0 0
      %863 = vmatpush1.bf16.msra.mxu0 %v854
      %864 = vmatprep.subr.bf16.mxu0 0
      %865 = vmatpush1.bf16.msra.mxu0 %v855
      %866 = vmatprep.subr.bf16.mxu0 0
      %867 = vmatpush1.bf16.msra.mxu0 %v856
      %868 = vmatprep.subr.bf16.mxu0 0
      %869 = vmatpush1.bf16.msra.mxu0 %v857
      %870 = vmatprep.subr.bf16.mxu0 0
      %871 = vmatpush1.bf16.msra.mxu0 0
      %872 = vmatprep.subr.bf16.mxu0 0
      %873 = vmatpush1.bf16.msra.mxu0 0
      %874 = vmatprep.subr.bf16.mxu0 0
      %875 = vmatpush1.bf16.msra.mxu0 0
      %876 = vmatprep.subr.bf16.mxu0 0
      %877 = vmatpush1.bf16.msra.mxu0 0
      %878 = vmatprep.subr.bf16.mxu0 0
      %879 = vmatpush1.bf16.msra.mxu0 0
      %880 = vmatprep.subr.bf16.mxu0 0
      %881 = vmatpush1.bf16.msra.mxu0 0
      %882 = vmatprep.subr.bf16.mxu0 0
      %883 = vmatpush1.bf16.msra.mxu0 0
      %884 = vmatprep.subr.bf16.mxu0 0
      %885 = vmatpush1.bf16.msra.mxu0 0
      %886 = vmatprep.subr.bf16.mxu0 0
      %887 = vmatpush1.bf16.msra.mxu0 0
      %888 = vmatprep.subr.bf16.mxu0 0
      %889 = vmatpush1.bf16.msra.mxu0 0
      %890 = vmatprep.subr.bf16.mxu0 0
      %891 = vmatpush1.bf16.msra.mxu0 0
      %892 = vmatprep.subr.bf16.mxu0 0
      %893 = vmatpush1.bf16.msra.mxu0 0
      %894 = vmatprep.mubr.bf16.mxu0 0
      %895 = vmatmul.mubr.bf16.gmra.mrb[0].mxu0 %v775
      %v896 = vpop.f32.mrb[0].mxu0
      %v897 = vadd.f32 0.0, %v896
      %v898 = vpop.f32.mrb[0].mxu0
      %v899 = vpop.f32.mrb[0].mxu0
      %v900 = vadd.f32 0.0, %v899
      %v901 = vpop.f32.mrb[0].mxu0
      %902 = vmatprep.mubr.bf16.mxu0 0
      %903 = vmatmul.mubr.bf16.gmra.mrb[0].mxu0 %v778
      %v904 = vpop.f32.mrb[0].mxu0
      %v905 = vadd.f32 0.0, %v904
      %v906 = vpop.f32.mrb[0].mxu0
      %v907 = vpop.f32.mrb[0].mxu0
      %v908 = vadd.f32 0.0, %v907
      %v909 = vpop.f32.mrb[0].mxu0
      %910 = vdwg.mxu0
      %s911 = scalar_lea.vmem %s3, 64
      %v912 = vld [vmem:[%s911] sm:$0xf]
      %v913 = vld [vmem:[%s911 + $0x4] sm:$0xf]
      %v914 = vld [vmem:[%s911 + $0x8] sm:$0xf]
      %v915 = vld [vmem:[%s911 + $0xc] sm:$0xf]
      %v916 = vld [vmem:[%s911 + $0x10] sm:$0xf]
      %v917 = vld [vmem:[%s911 + $0x14] sm:$0xf]
      %v918 = vld [vmem:[%s911 + $0x18] sm:$0xf]
      %v919 = vld [vmem:[%s911 + $0x1c] sm:$0xf]
      %v928 = vunpack.c.l.b16 %v912
      %v929 = vunpack.c.l.b16 %v913
      %v930 = vunpack.c.l.b16 %v914
      %v931 = vunpack.c.l.b16 %v915
      %v932 = vunpack.c.l.b16 %v916
      %v933 = vunpack.c.l.b16 %v917
      %v934 = vunpack.c.l.b16 %v918
      %v935 = vunpack.c.l.b16 %v919
      %v936 = vpack.c.b16 %v929, %v928
      %v937 = vpack.c.b16 %v931, %v930
      %v938 = vpack.c.b16 %v933, %v932
      %v939 = vpack.c.b16 %v935, %v934
      %944 = vmatprep.subr.bf16.mxu0 0
      %945 = vmatpush1.bf16.msra.mxu0 %v936
      %946 = vmatprep.subr.bf16.mxu0 0
      %947 = vmatpush1.bf16.msra.mxu0 %v937
      %948 = vmatprep.subr.bf16.mxu0 0
      %949 = vmatpush1.bf16.msra.mxu0 %v938
      %950 = vmatprep.subr.bf16.mxu0 0
      %951 = vmatpush1.bf16.msra.mxu0 %v939
      %952 = vmatprep.subr.bf16.mxu0 0
      %953 = vmatpush1.bf16.msra.mxu0 0
      %954 = vmatprep.subr.bf16.mxu0 0
      %955 = vmatpush1.bf16.msra.mxu0 0
      %956 = vmatprep.subr.bf16.mxu0 0
      %957 = vmatpush1.bf16.msra.mxu0 0
      %958 = vmatprep.subr.bf16.mxu0 0
      %959 = vmatpush1.bf16.msra.mxu0 0
      %960 = vmatprep.subr.bf16.mxu0 0
      %961 = vmatpush1.bf16.msra.mxu0 0
      %962 = vmatprep.subr.bf16.mxu0 0
      %963 = vmatpush1.bf16.msra.mxu0 0
      %964 = vmatprep.subr.bf16.mxu0 0
      %965 = vmatpush1.bf16.msra.mxu0 0
      %966 = vmatprep.subr.bf16.mxu0 0
      %967 = vmatpush1.bf16.msra.mxu0 0
      %968 = vmatprep.subr.bf16.mxu0 0
      %969 = vmatpush1.bf16.msra.mxu0 0
      %970 = vmatprep.subr.bf16.mxu0 0
      %971 = vmatpush1.bf16.msra.mxu0 0
      %972 = vmatprep.subr.bf16.mxu0 0
      %973 = vmatpush1.bf16.msra.mxu0 0
      %974 = vmatprep.subr.bf16.mxu0 0
      %975 = vmatpush1.bf16.msra.mxu0 0
      %976 = vmatprep.mubr.bf16.mxu0 0
      %977 = vmatmul.mubr.bf16.gmra.mrb[0].mxu0 %v775
      %v978 = vpop.f32.mrb[0].mxu0
      %v979 = vadd.f32 0.0, %v978
      %v980 = vpop.f32.mrb[0].mxu0
      %v981 = vpop.f32.mrb[0].mxu0
      %v982 = vadd.f32 0.0, %v981
      %v983 = vpop.f32.mrb[0].mxu0
      %984 = vmatprep.mubr.bf16.mxu0 0
      %985 = vmatmul.mubr.bf16.gmra.mrb[0].mxu0 %v778
      %v986 = vpop.f32.mrb[0].mxu0
      %v987 = vadd.f32 0.0, %v986
      %v988 = vpop.f32.mrb[0].mxu0
      %v989 = vpop.f32.mrb[0].mxu0
      %v990 = vadd.f32 0.0, %v989
      %v991 = vpop.f32.mrb[0].mxu0
      %992 = vdwg.mxu0
      %v993 = vpack.c.bf16 %v900, %v897
      %v994 = vpack.c.bf16 %v908, %v905
      %v1011 = vunpack.c.l.b16 %v604
      %v1012 = vunpack.c.l.b16 %v605
      %v1013 = vunpack.c.l.b16 %v606
      %v1014 = vunpack.c.l.b16 %v607
      %v1015 = vunpack.c.l.b16 %v608
      %v1016 = vunpack.c.l.b16 %v609
      %v1017 = vunpack.c.l.b16 %v610
      %v1018 = vunpack.c.l.b16 %v611
      %v1019 = vunpack.c.l.b16 %v612
      %v1020 = vunpack.c.l.b16 %v613
      %v1021 = vunpack.c.l.b16 %v614
      %v1022 = vunpack.c.l.b16 %v615
      %v1023 = vunpack.c.l.b16 %v616
      %v1024 = vunpack.c.l.b16 %v617
      %v1025 = vunpack.c.l.b16 %v618
      %v1026 = vunpack.c.l.b16 %v619
      %v1027 = vpack.c.b16 %v1012, %v1011
      %v1028 = vpack.c.b16 %v1014, %v1013
      %v1029 = vpack.c.b16 %v1016, %v1015
      %v1030 = vpack.c.b16 %v1018, %v1017
      %v1031 = vpack.c.b16 %v1020, %v1019
      %v1032 = vpack.c.b16 %v1022, %v1021
      %v1033 = vpack.c.b16 %v1024, %v1023
      %v1034 = vpack.c.b16 %v1026, %v1025
      %v1043 = vmul.bf16 %v993, %v1027
      %v1044 = vmul.bf16 %v994, %v1028
      %v1045 = vmul.bf16 %v993, %v1029
      %v1046 = vmul.bf16 %v994, %v1030
      %v1047 = vmul.bf16 %v993, %v1031
      %v1048 = vmul.bf16 %v994, %v1032
      %v1049 = vmul.bf16 %v993, %v1033
      %v1050 = vmul.bf16 %v994, %v1034
      %v1051 = vpack.c.bf16 %v982, %v979
      %v1052 = vpack.c.bf16 %v990, %v987
      %v1053 = vmul.bf16 %v1051, %v1027
      %v1054 = vmul.bf16 %v1052, %v1028
      %v1055 = vmul.bf16 %v1051, %v1029
      %v1056 = vmul.bf16 %v1052, %v1030
      %v1057 = vmul.bf16 %v1051, %v1031
      %v1058 = vmul.bf16 %v1052, %v1032
      %v1059 = vmul.bf16 %v1051, %v1033
      %v1060 = vmul.bf16 %v1052, %v1034
      %v1061 = vpack.c.bf16 %v818, %v815
      %v1062 = vpack.c.bf16 %v826, %v823
      %v1064 = vsel %vm506, %v1061, 0
      %v1067 = vsel %vm506, %v1062, 0
      %v1070 = vsel %vm506, %v1043, 0
      %v1073 = vsel %vm506, %v1044, 0
      %v1076 = vsel %vm506, %v1045, 0
      %v1079 = vsel %vm506, %v1046, 0
      %v1082 = vsel %vm506, %v1047, 0
      %v1085 = vsel %vm506, %v1048, 0
      %v1088 = vsel %vm506, %v1049, 0
      %v1091 = vsel %vm506, %v1050, 0
      %1093 = vmatprep.subr.bf16.mxu0 0
      %1094 = vmatpush1.bf16.xpose.msra.mxu0 %v1070
      %1095 = vmatprep.subr.bf16.mxu0 0
      %1096 = vmatpush1.bf16.xpose.msra.mxu0 %v1073
      %1097 = vmatprep.subr.bf16.mxu0 0
      %1098 = vmatpush1.bf16.xpose.msra.mxu0 %v1076
      %1099 = vmatprep.subr.bf16.mxu0 0
      %1100 = vmatpush1.bf16.xpose.msra.mxu0 %v1079
      %1101 = vmatprep.subr.bf16.mxu0 0
      %1102 = vmatpush1.bf16.xpose.msra.mxu0 %v1082
      %1103 = vmatprep.subr.bf16.mxu0 0
      %1104 = vmatpush1.bf16.xpose.msra.mxu0 %v1085
      %1105 = vmatprep.subr.bf16.mxu0 0
      %1106 = vmatpush1.bf16.xpose.msra.mxu0 %v1088
      %1107 = vmatprep.subr.bf16.mxu0 0
      %1108 = vmatpush1.bf16.xpose.msra.mxu0 %v1091
      %1109 = vmatprep.subr.bf16.mxu0 0
      %1110 = vmatpush1.bf16.xpose.msra.mxu0 0
      %1111 = vmatprep.subr.bf16.mxu0 0
      %1112 = vmatpush1.bf16.xpose.msra.mxu0 0
      %1113 = vmatprep.subr.bf16.mxu0 0
      %1114 = vmatpush1.bf16.xpose.msra.mxu0 0
      %1115 = vmatprep.subr.bf16.mxu0 0
      %1116 = vmatpush1.bf16.xpose.msra.mxu0 0
      %1117 = vmatprep.subr.bf16.mxu0 0
      %1118 = vmatpush1.bf16.xpose.msra.mxu0 0
      %1119 = vmatprep.subr.bf16.mxu0 0
      %1120 = vmatpush1.bf16.xpose.msra.mxu0 0
      %1121 = vmatprep.subr.bf16.mxu0 0
      %1122 = vmatpush1.bf16.xpose.msra.mxu0 0
      %1123 = vmatprep.subr.bf16.mxu0 0
      %1124 = vmatpush1.bf16.xpose.msra.mxu0 0
      %1125 = vmatprep.mubr.bf16.mxu0 0
      %1126 = vmatmul.mubr.bf16.gmra.mrb[0].mxu0 %v1064
      %v1127 = vpop.f32.mrb[0].mxu0
      %v1128 = vadd.f32 %v603, %v1127
      %v1129 = vpop.f32.mrb[0].mxu0
      %v1130 = vpop.f32.mrb[0].mxu0
      %v1131 = vadd.f32 %v603, %v1130
      %v1132 = vpop.f32.mrb[0].mxu0
      %1133 = vmatprep.mubr.bf16.mxu0 0
      %1134 = vmatmul.mubr.bf16.gmra.mrb[0].mxu0 %v1067
      %v1135 = vpop.f32.mrb[0].mxu0
      %v1136 = vadd.f32 %v603, %v1135
      %v1137 = vpop.f32.mrb[0].mxu0
      %v1138 = vpop.f32.mrb[0].mxu0
      %v1139 = vadd.f32 %v603, %v1138
      %v1140 = vpop.f32.mrb[0].mxu0
      %1141 = vdwg.mxu0
      %1142 = vmax.xlane.f32.xlu0 %v1128
      %v1143 = vpop.xlane.xlu0 %1142
      %1144 = vmax.xlane.f32.xlu0 %v1131
      %v1145 = vpop.xlane.xlu0 %1144
      %1146 = vmax.xlane.f32.xlu0 %v1136
      %v1147 = vpop.xlane.xlu0 %1146
      %1148 = vmax.xlane.f32.xlu0 %v1139
      %v1149 = vpop.xlane.xlu0 %1148
      %v1150 = vsub.f32 %v1128, %v1143
      %v1151 = vsub.f32 %v1131, %v1145
      %v1152 = vsub.f32 %v1136, %v1147
      %v1153 = vsub.f32 %v1139, %v1149
      %v1154 = vmul.f32 %v1150, 1.442695
      %v1155 = vpow.pop %v1154
      %v1156 = vmul.f32 %v1151, 1.442695
      %v1157 = vpow.pop %v1156
      %v1158 = vmul.f32 %v1152, 1.442695
      %v1159 = vpow.pop %v1158
      %v1160 = vmul.f32 %v1153, 1.442695
      %v1161 = vpow.pop %v1160
      %v1178 = vunpack.c.l.b16 %v620
      %v1179 = vunpack.c.l.b16 %v621
      %v1180 = vunpack.c.l.b16 %v622
      %v1181 = vunpack.c.l.b16 %v623
      %v1182 = vunpack.c.l.b16 %v624
      %v1183 = vunpack.c.l.b16 %v625
      %v1184 = vunpack.c.l.b16 %v626
      %v1185 = vunpack.c.l.b16 %v627
      %v1186 = vunpack.c.l.b16 %v628
      %v1187 = vunpack.c.l.b16 %v629
      %v1188 = vunpack.c.l.b16 %v630
      %v1189 = vunpack.c.l.b16 %v631
      %v1190 = vunpack.c.l.b16 %v632
      %v1191 = vunpack.c.l.b16 %v633
      %v1192 = vunpack.c.l.b16 %v634
      %v1193 = vunpack.c.l.b16 %v635
      %v1194 = vpack.c.b16 %v1179, %v1178
      %v1195 = vpack.c.b16 %v1181, %v1180
      %v1196 = vpack.c.b16 %v1183, %v1182
      %v1197 = vpack.c.b16 %v1185, %v1184
      %v1198 = vpack.c.b16 %v1187, %v1186
      %v1199 = vpack.c.b16 %v1189, %v1188
      %v1200 = vpack.c.b16 %v1191, %v1190
      %v1201 = vpack.c.b16 %v1193, %v1192
      %1210 = vmatprep.subr.bf16.mxu0 0
      %1211 = vmatpush1.bf16.msra.mxu0 %v1194
      %1212 = vmatprep.subr.bf16.mxu0 0
      %1213 = vmatpush1.bf16.msra.mxu0 %v1195
      %1214 = vmatprep.subr.bf16.mxu0 0
      %1215 = vmatpush1.bf16.msra.mxu0 %v1196
      %1216 = vmatprep.subr.bf16.mxu0 0
      %1217 = vmatpush1.bf16.msra.mxu0 %v1197
      %1218 = vmatprep.subr.bf16.mxu0 0
      %1219 = vmatpush1.bf16.msra.mxu0 %v1198
      %1220 = vmatprep.subr.bf16.mxu0 0
      %1221 = vmatpush1.bf16.msra.mxu0 %v1199
      %1222 = vmatprep.subr.bf16.mxu0 0
      %1223 = vmatpush1.bf16.msra.mxu0 %v1200
      %1224 = vmatprep.subr.bf16.mxu0 0
      %1225 = vmatpush1.bf16.msra.mxu0 %v1201
      %1226 = vmatprep.subr.bf16.mxu0 0
      %1227 = vmatpush1.bf16.msra.mxu0 0
      %1228 = vmatprep.subr.bf16.mxu0 0
      %1229 = vmatpush1.bf16.msra.mxu0 0
      %1230 = vmatprep.subr.bf16.mxu0 0
      %1231 = vmatpush1.bf16.msra.mxu0 0
      %1232 = vmatprep.subr.bf16.mxu0 0
      %1233 = vmatpush1.bf16.msra.mxu0 0
      %1234 = vmatprep.subr.bf16.mxu0 0
      %1235 = vmatpush1.bf16.msra.mxu0 0
      %1236 = vmatprep.subr.bf16.mxu0 0
      %1237 = vmatpush1.bf16.msra.mxu0 0
      %1238 = vmatprep.subr.bf16.mxu0 0
      %1239 = vmatpush1.bf16.msra.mxu0 0
      %1240 = vmatprep.subr.bf16.mxu0 0
      %1241 = vmatpush1.bf16.msra.mxu0 0
      %1242 = vmatprep.mubr.f32.mxu0 0.0
      %1243 = vmatmul.mubr.f32.gmra.mrb[0].mxu0 %v1155
      %v1244 = vpop.f32.mrb[0].mxu0
      %v1245 = vadd.f32 0.0, %v1244
      %v1246 = vpop.f32.mrb[0].mxu0
      %1247 = vmatprep.mubr.f32.mxu0 0.0
      %1248 = vmatmul.mubr.f32.gmra.mrb[0].mxu0 %v1157
      %v1249 = vpop.f32.mrb[0].mxu0
      %v1250 = vadd.f32 0.0, %v1249
      %v1251 = vpop.f32.mrb[0].mxu0
      %1252 = vmatprep.mubr.f32.mxu0 0.0
      %1253 = vmatmul.mubr.f32.gmra.mrb[0].mxu0 %v1159
      %v1254 = vpop.f32.mrb[0].mxu0
      %v1255 = vadd.f32 0.0, %v1254
      %v1256 = vpop.f32.mrb[0].mxu0
      %1257 = vmatprep.mubr.f32.mxu0 0.0
      %1258 = vmatmul.mubr.f32.gmra.mrb[0].mxu0 %v1161
      %v1259 = vpop.f32.mrb[0].mxu0
      %v1260 = vadd.f32 0.0, %v1259
      %v1261 = vpop.f32.mrb[0].mxu0
      %1262 = vdwg.mxu0
      %v1263 = vrcp.pop %v1245
      %v1264 = vmul.f32 %v1155, %v1263
      %v1265 = vrcp.pop %v1250
      %v1266 = vmul.f32 %v1157, %v1265
      %v1267 = vrcp.pop %v1255
      %v1268 = vmul.f32 %v1159, %v1267
      %v1269 = vrcp.pop %v1260
      %v1270 = vmul.f32 %v1161, %v1269
      %1275 = vrot.lane.b32.xlu0 %v1264, 96
      %v1276 = vpop.permute.xlu0 %1275
      %1277 = vrot.lane.b32.xlu0 %v1266, 96
      %v1278 = vpop.permute.xlu0 %1277
      %1279 = vrot.lane.b32.xlu0 %v1268, 96
      %v1280 = vpop.permute.xlu0 %1279
      %1281 = vrot.lane.b32.xlu0 %v1270, 96
      %v1282 = vpop.permute.xlu0 %1281
      %v1287 = vmax.f32 %v1264, %v1276
      %v1288 = vmax.f32 %v1266, %v1278
      %v1289 = vmax.f32 %v1268, %v1280
      %v1290 = vmax.f32 %v1270, %v1282
      %1295 = vrot.lane.b32.xlu0 %v1287, 64
      %v1296 = vpop.permute.xlu0 %1295
      %1297 = vrot.lane.b32.xlu0 %v1288, 64
      %v1298 = vpop.permute.xlu0 %1297
      %1299 = vrot.lane.b32.xlu0 %v1289, 64
      %v1300 = vpop.permute.xlu0 %1299
      %1301 = vrot.lane.b32.xlu0 %v1290, 64
      %v1302 = vpop.permute.xlu0 %1301
      %v1307 = vmax.f32 %v1287, %v1296
      %v1308 = vmax.f32 %v1288, %v1298
      %v1309 = vmax.f32 %v1289, %v1300
      %v1310 = vmax.f32 %v1290, %v1302
      %v1311 = vpack.c.bf16 %v1266, %v1264
      %v1312 = vpack.c.bf16 %v1270, %v1268
      %1313 = vmatprep.subr.bf16.mxu0 0
      %1314 = vmatpush1.bf16.msra.mxu0 %v1053
      %1315 = vmatprep.subr.bf16.mxu0 0
      %1316 = vmatpush1.bf16.msra.mxu0 %v1054
      %1317 = vmatprep.subr.bf16.mxu0 0
      %1318 = vmatpush1.bf16.msra.mxu0 %v1055
      %1319 = vmatprep.subr.bf16.mxu0 0
      %1320 = vmatpush1.bf16.msra.mxu0 %v1056
      %1321 = vmatprep.subr.bf16.mxu0 0
      %1322 = vmatpush1.bf16.msra.mxu0 %v1057
      %1323 = vmatprep.subr.bf16.mxu0 0
      %1324 = vmatpush1.bf16.msra.mxu0 %v1058
      %1325 = vmatprep.subr.bf16.mxu0 0
      %1326 = vmatpush1.bf16.msra.mxu0 %v1059
      %1327 = vmatprep.subr.bf16.mxu0 0
      %1328 = vmatpush1.bf16.msra.mxu0 %v1060
      %1329 = vmatprep.subr.bf16.mxu0 0
      %1330 = vmatpush1.bf16.msra.mxu0 0
      %1331 = vmatprep.subr.bf16.mxu0 0
      %1332 = vmatpush1.bf16.msra.mxu0 0
      %1333 = vmatprep.subr.bf16.mxu0 0
      %1334 = vmatpush1.bf16.msra.mxu0 0
      %1335 = vmatprep.subr.bf16.mxu0 0
      %1336 = vmatpush1.bf16.msra.mxu0 0
      %1337 = vmatprep.subr.bf16.mxu0 0
      %1338 = vmatpush1.bf16.msra.mxu0 0
      %1339 = vmatprep.subr.bf16.mxu0 0
      %1340 = vmatpush1.bf16.msra.mxu0 0
      %1341 = vmatprep.subr.bf16.mxu0 0
      %1342 = vmatpush1.bf16.msra.mxu0 0
      %1343 = vmatprep.subr.bf16.mxu0 0
      %1344 = vmatpush1.bf16.msra.mxu0 0
      %1345 = vmatprep.mubr.bf16.mxu0 0
      %1346 = vmatmul.mubr.bf16.gmra.mrb[0].mxu0 %v1311
      %v1347 = vpop.f32.mrb[0].mxu0
      %v1348 = vadd.f32 0.0, %v1347
      %v1349 = vpop.f32.mrb[0].mxu0
      %v1350 = vpop.f32.mrb[0].mxu0
      %v1351 = vadd.f32 0.0, %v1350
      %v1352 = vpop.f32.mrb[0].mxu0
      %1353 = vmatprep.mubr.bf16.mxu0 0
      %1354 = vmatmul.mubr.bf16.gmra.mrb[0].mxu0 %v1312
      %v1355 = vpop.f32.mrb[0].mxu0
      %v1356 = vadd.f32 0.0, %v1355
      %v1357 = vpop.f32.mrb[0].mxu0
      %v1358 = vpop.f32.mrb[0].mxu0
      %v1359 = vadd.f32 0.0, %v1358
      %v1360 = vpop.f32.mrb[0].mxu0
      %1361 = vdwg.mxu0
      %v1362 = vpack.c.bf16 %v1351, %v1348
      %v1363 = vpack.c.bf16 %v1359, %v1356
      %v1364 = vld [vmem:[%s4] sm:$0xf]
      %v1365 = vld [vmem:[%s4 + $0x4] sm:$0xf]
      %v1366 = vld [vmem:[%s4 + $0x8] sm:$0xf]
      %v1367 = vld [vmem:[%s4 + $0xc] sm:$0xf]
      %v1368 = vld [vmem:[%s4 + $0x10] sm:$0xf]
      %v1369 = vld [vmem:[%s4 + $0x14] sm:$0xf]
      %v1370 = vld [vmem:[%s4 + $0x18] sm:$0xf]
      %v1371 = vld [vmem:[%s4 + $0x1c] sm:$0xf]
      %v1380 = vunpack.c.l.b16 %v1364
      %v1381 = vunpack.c.l.b16 %v1365
      %v1382 = vunpack.c.l.b16 %v1366
      %v1383 = vunpack.c.l.b16 %v1367
      %v1384 = vunpack.c.l.b16 %v1368
      %v1385 = vunpack.c.l.b16 %v1369
      %v1386 = vunpack.c.l.b16 %v1370
      %v1387 = vunpack.c.l.b16 %v1371
      %v1388 = vpack.c.b16 %v1381, %v1380
      %v1389 = vpack.c.b16 %v1383, %v1382
      %v1390 = vpack.c.b16 %v1385, %v1384
      %v1391 = vpack.c.b16 %v1387, %v1386
      %v1397 = vsel %vm506, %v1362, 0
      %v1400 = vsel %vm506, %v1363, 0
      %1402 = vmatprep.subr.bf16.mxu0 0
      %1403 = vmatpush1.bf16.msra.mxu0 %v1388
      %1404 = vmatprep.subr.bf16.mxu0 0
      %1405 = vmatpush1.bf16.msra.mxu0 %v1389
      %1406 = vmatprep.subr.bf16.mxu0 0
      %1407 = vmatpush1.bf16.msra.mxu0 %v1390
      %1408 = vmatprep.subr.bf16.mxu0 0
      %1409 = vmatpush1.bf16.msra.mxu0 %v1391
      %1410 = vmatprep.subr.bf16.mxu0 0
      %1411 = vmatpush1.bf16.msra.mxu0 0
      %1412 = vmatprep.subr.bf16.mxu0 0
      %1413 = vmatpush1.bf16.msra.mxu0 0
      %1414 = vmatprep.subr.bf16.mxu0 0
      %1415 = vmatpush1.bf16.msra.mxu0 0
      %1416 = vmatprep.subr.bf16.mxu0 0
      %1417 = vmatpush1.bf16.msra.mxu0 0
      %1418 = vmatprep.subr.bf16.mxu0 0
      %1419 = vmatpush1.bf16.msra.mxu0 0
      %1420 = vmatprep.subr.bf16.mxu0 0
      %1421 = vmatpush1.bf16.msra.mxu0 0
      %1422 = vmatprep.subr.bf16.mxu0 0
      %1423 = vmatpush1.bf16.msra.mxu0 0
      %1424 = vmatprep.subr.bf16.mxu0 0
      %1425 = vmatpush1.bf16.msra.mxu0 0
      %1426 = vmatprep.subr.bf16.mxu0 0
      %1427 = vmatpush1.bf16.msra.mxu0 0
      %1428 = vmatprep.subr.bf16.mxu0 0
      %1429 = vmatpush1.bf16.msra.mxu0 0
      %1430 = vmatprep.subr.bf16.mxu0 0
      %1431 = vmatpush1.bf16.msra.mxu0 0
      %1432 = vmatprep.subr.bf16.mxu0 0
      %1433 = vmatpush1.bf16.msra.mxu0 0
      %1434 = vmatprep.mubr.bf16.mxu0 0
      %1435 = vmatmul.mubr.bf16.gmra.mrb[0].mxu0 %v1397
      %v1436 = vpop.f32.mrb[0].mxu0
      %v1437 = vadd.f32 0.0, %v1436
      %v1438 = vpop.f32.mrb[0].mxu0
      %v1439 = vpop.f32.mrb[0].mxu0
      %v1440 = vadd.f32 0.0, %v1439
      %v1441 = vpop.f32.mrb[0].mxu0
      %1442 = vmatprep.mubr.bf16.mxu0 0
      %1443 = vmatmul.mubr.bf16.gmra.mrb[0].mxu0 %v1400
      %v1444 = vpop.f32.mrb[0].mxu0
      %v1445 = vadd.f32 0.0, %v1444
      %v1446 = vpop.f32.mrb[0].mxu0
      %v1447 = vpop.f32.mrb[0].mxu0
      %v1448 = vadd.f32 0.0, %v1447
      %v1449 = vpop.f32.mrb[0].mxu0
      %1450 = vdwg.mxu0
      %v1451 = vadd.f32 %v548, %v1437
      %v1452 = vadd.f32 %v551, %v1440
      %v1453 = vadd.f32 %v556, %v1445
      %v1454 = vadd.f32 %v559, %v1448
      %vm1455 = vcmask 261120
      %v1457 = vsel %vm1455, %v1307, 0
      %v1460 = vsel %vm1455, %v1308, 0
      %v1463 = vsel %vm1455, %v1309, 0
      %v1466 = vsel %vm1455, %v1310, 0
      %1468 = vmatprep.subr.mxu0 %v637
      %1469 = vmatpush1.msra.mxu0 %v636
      %1470 = vmatprep.subr.mxu0 %v640
      %1471 = vmatpush1.msra.mxu0 %v639
      %1472 = vmatprep.subr.mxu0 %v643
      %1473 = vmatpush1.msra.mxu0 %v642
      %1474 = vmatprep.subr.mxu0 %v646
      %1475 = vmatpush1.msra.mxu0 %v645
      %1476 = vmatprep.subr.mxu0 0.0
      %1477 = vmatpush1.msra.mxu0 0.0
      %1478 = vmatprep.subr.mxu0 0.0
      %1479 = vmatpush1.msra.mxu0 0.0
      %1480 = vmatprep.subr.mxu0 0.0
      %1481 = vmatpush1.msra.mxu0 0.0
      %1482 = vmatprep.subr.mxu0 0.0
      %1483 = vmatpush1.msra.mxu0 0.0
      %1484 = vmatprep.subr.mxu0 0.0
      %1485 = vmatpush1.msra.mxu0 0.0
      %1486 = vmatprep.subr.mxu0 0.0
      %1487 = vmatpush1.msra.mxu0 0.0
      %1488 = vmatprep.subr.mxu0 0.0
      %1489 = vmatpush1.msra.mxu0 0.0
      %1490 = vmatprep.subr.mxu0 0.0
      %1491 = vmatpush1.msra.mxu0 0.0
      %1492 = vmatprep.subr.mxu0 0.0
      %1493 = vmatpush1.msra.mxu0 0.0
      %1494 = vmatprep.subr.mxu0 0.0
      %1495 = vmatpush1.msra.mxu0 0.0
      %1496 = vmatprep.subr.mxu0 0.0
      %1497 = vmatpush1.msra.mxu0 0.0
      %1498 = vmatprep.subr.mxu0 0.0
      %1499 = vmatpush1.msra.mxu0 0.0
      %1500 = vmatprep.subr.mxu0 0.0
      %1501 = vmatpush1.msra.mxu0 0.0
      %1502 = vmatprep.subr.mxu0 0.0
      %1503 = vmatpush1.msra.mxu0 0.0
      %1504 = vmatprep.subr.mxu0 0.0
      %1505 = vmatpush1.msra.mxu0 0.0
      %1506 = vmatprep.subr.mxu0 0.0
      %1507 = vmatpush1.msra.mxu0 0.0
      %1508 = vmatprep.subr.mxu0 0.0
      %1509 = vmatpush1.msra.mxu0 0.0
      %1510 = vmatprep.subr.mxu0 0.0
      %1511 = vmatpush1.msra.mxu0 0.0
      %1512 = vmatprep.subr.mxu0 0.0
      %1513 = vmatpush1.msra.mxu0 0.0
      %1514 = vmatprep.subr.mxu0 0.0
      %1515 = vmatpush1.msra.mxu0 0.0
      %1516 = vmatprep.subr.mxu0 0.0
      %1517 = vmatpush1.msra.mxu0 0.0
      %1518 = vmatprep.subr.mxu0 0.0
      %1519 = vmatpush1.msra.mxu0 0.0
      %1520 = vmatprep.subr.mxu0 0.0
      %1521 = vmatpush1.msra.mxu0 0.0
      %1522 = vmatprep.subr.mxu0 0.0
      %1523 = vmatpush1.msra.mxu0 0.0
      %1524 = vmatprep.subr.mxu0 0.0
      %1525 = vmatpush1.msra.mxu0 0.0
      %1526 = vmatprep.subr.mxu0 0.0
      %1527 = vmatpush1.msra.mxu0 0.0
      %1528 = vmatprep.subr.mxu0 0.0
      %1529 = vmatpush1.msra.mxu0 0.0
      %1530 = vmatprep.subr.mxu0 0.0
      %1531 = vmatpush1.msra.mxu0 0.0
      %1532 = vmatprep.mubr.f32.mxu0 0.0
      %1533 = vmatmul.mubr.f32.gmra.mrb[0].mxu0 %v1457
      %v1534 = vpop.f32.mrb[0].mxu0
      %v1535 = vadd.f32 0.0, %v1534
      %v1536 = vpop.f32.mrb[0].mxu0
      %v1537 = vadd.f32 0.0, %v1536
      %1538 = vmatprep.mubr.f32.mxu0 0.0
      %1539 = vmatmul.mubr.f32.gmra.mrb[0].mxu0 %v1460
      %v1540 = vpop.f32.mrb[0].mxu0
      %v1541 = vadd.f32 0.0, %v1540
      %v1542 = vpop.f32.mrb[0].mxu0
      %v1543 = vadd.f32 0.0, %v1542
      %1544 = vmatprep.mubr.f32.mxu0 0.0
      %1545 = vmatmul.mubr.f32.gmra.mrb[0].mxu0 %v1463
      %v1546 = vpop.f32.mrb[0].mxu0
      %v1547 = vadd.f32 0.0, %v1546
      %v1548 = vpop.f32.mrb[0].mxu0
      %v1549 = vadd.f32 0.0, %v1548
      %1550 = vmatprep.mubr.f32.mxu0 0.0
      %1551 = vmatmul.mubr.f32.gmra.mrb[0].mxu0 %v1466
      %v1552 = vpop.f32.mrb[0].mxu0
      %v1553 = vadd.f32 0.0, %v1552
      %v1554 = vpop.f32.mrb[0].mxu0
      %v1555 = vadd.f32 0.0, %v1554
      %1556 = vdwg.mxu0
      %1557 = vmatprep.subr.mxu0 0.0
      %1558 = vmatpush1.msra.mxu0 %v638
      %1559 = vmatprep.subr.mxu0 0.0
      %1560 = vmatpush1.msra.mxu0 %v641
      %1561 = vmatprep.subr.mxu0 0.0
      %1562 = vmatpush1.msra.mxu0 %v644
      %1563 = vmatprep.subr.mxu0 0.0
      %1564 = vmatpush1.msra.mxu0 %v647
      %1565 = vmatprep.subr.mxu0 0.0
      %1566 = vmatpush1.msra.mxu0 0.0
      %1567 = vmatprep.subr.mxu0 0.0
      %1568 = vmatpush1.msra.mxu0 0.0
      %1569 = vmatprep.subr.mxu0 0.0
      %1570 = vmatpush1.msra.mxu0 0.0
      %1571 = vmatprep.subr.mxu0 0.0
      %1572 = vmatpush1.msra.mxu0 0.0
      %1573 = vmatprep.subr.mxu0 0.0
      %1574 = vmatpush1.msra.mxu0 0.0
      %1575 = vmatprep.subr.mxu0 0.0
      %1576 = vmatpush1.msra.mxu0 0.0
      %1577 = vmatprep.subr.mxu0 0.0
      %1578 = vmatpush1.msra.mxu0 0.0
      %1579 = vmatprep.subr.mxu0 0.0
      %1580 = vmatpush1.msra.mxu0 0.0
      %1581 = vmatprep.subr.mxu0 0.0
      %1582 = vmatpush1.msra.mxu0 0.0
      %1583 = vmatprep.subr.mxu0 0.0
      %1584 = vmatpush1.msra.mxu0 0.0
      %1585 = vmatprep.subr.mxu0 0.0
      %1586 = vmatpush1.msra.mxu0 0.0
      %1587 = vmatprep.subr.mxu0 0.0
      %1588 = vmatpush1.msra.mxu0 0.0
      %1589 = vmatprep.subr.mxu0 0.0
      %1590 = vmatpush1.msra.mxu0 0.0
      %1591 = vmatprep.subr.mxu0 0.0
      %1592 = vmatpush1.msra.mxu0 0.0
      %1593 = vmatprep.subr.mxu0 0.0
      %1594 = vmatpush1.msra.mxu0 0.0
      %1595 = vmatprep.subr.mxu0 0.0
      %1596 = vmatpush1.msra.mxu0 0.0
      %1597 = vmatprep.subr.mxu0 0.0
      %1598 = vmatpush1.msra.mxu0 0.0
      %1599 = vmatprep.subr.mxu0 0.0
      %1600 = vmatpush1.msra.mxu0 0.0
      %1601 = vmatprep.subr.mxu0 0.0
      %1602 = vmatpush1.msra.mxu0 0.0
      %1603 = vmatprep.subr.mxu0 0.0
      %1604 = vmatpush1.msra.mxu0 0.0
      %1605 = vmatprep.subr.mxu0 0.0
      %1606 = vmatpush1.msra.mxu0 0.0
      %1607 = vmatprep.subr.mxu0 0.0
      %1608 = vmatpush1.msra.mxu0 0.0
      %1609 = vmatprep.subr.mxu0 0.0
      %1610 = vmatpush1.msra.mxu0 0.0
      %1611 = vmatprep.subr.mxu0 0.0
      %1612 = vmatpush1.msra.mxu0 0.0
      %1613 = vmatprep.subr.mxu0 0.0
      %1614 = vmatpush1.msra.mxu0 0.0
      %1615 = vmatprep.subr.mxu0 0.0
      %1616 = vmatpush1.msra.mxu0 0.0
      %1617 = vmatprep.subr.mxu0 0.0
      %1618 = vmatpush1.msra.mxu0 0.0
      %1619 = vmatprep.subr.mxu0 0.0
      %1620 = vmatpush1.msra.mxu0 0.0
      %1621 = vmatprep.mubr.f32.mxu0 0.0
      %1622 = vmatmul.mubr.f32.gmra.mrb[0].mxu0 %v1457
      %v1623 = vpop.f32.mrb[0].mxu0
      %v1624 = vadd.f32 0.0, %v1623
      %v1625 = vpop.f32.mrb[0].mxu0
      %1626 = vmatprep.mubr.f32.mxu0 0.0
      %1627 = vmatmul.mubr.f32.gmra.mrb[0].mxu0 %v1460
      %v1628 = vpop.f32.mrb[0].mxu0
      %v1629 = vadd.f32 0.0, %v1628
      %v1630 = vpop.f32.mrb[0].mxu0
      %1631 = vmatprep.mubr.f32.mxu0 0.0
      %1632 = vmatmul.mubr.f32.gmra.mrb[0].mxu0 %v1463
      %v1633 = vpop.f32.mrb[0].mxu0
      %v1634 = vadd.f32 0.0, %v1633
      %v1635 = vpop.f32.mrb[0].mxu0
      %1636 = vmatprep.mubr.f32.mxu0 0.0
      %1637 = vmatmul.mubr.f32.gmra.mrb[0].mxu0 %v1466
      %v1638 = vpop.f32.mrb[0].mxu0
      %v1639 = vadd.f32 0.0, %v1638
      %v1640 = vpop.f32.mrb[0].mxu0
      %1641 = vdwg.mxu0
      %v1642 = vmul.f32 %v1535, %v648
      %v1643 = vmul.f32 %v1537, %v649
      %v1644 = vmul.f32 %v1624, %v650
      %v1645 = vmul.f32 %v1541, %v651
      %v1646 = vmul.f32 %v1543, %v652
      %v1647 = vmul.f32 %v1629, %v653
      %v1648 = vmul.f32 %v1547, %v654
      %v1649 = vmul.f32 %v1549, %v655
      %v1650 = vmul.f32 %v1634, %v656
      %v1651 = vmul.f32 %v1553, %v657
      %v1652 = vmul.f32 %v1555, %v658
      %v1653 = vmul.f32 %v1639, %v659
      %v1654 = vadd.f32 %v1642, %v1645
      %v1655 = vadd.f32 %v1654, %v1648
      %v1656 = vadd.f32 %v1655, %v1651
      %v1657 = vrot.slane %v1656, 4
      %v1658 = vadd.f32 %v1656, %v1657
      %v1659 = vrot.slane %v1658, 2
      %v1660 = vadd.f32 %v1658, %v1659
      %v1661 = vrot.slane %v1660, 1
      %v1662 = vadd.f32 %v1660, %v1661
      %v1663 = vadd.f32 %v1643, %v1646
      %v1664 = vadd.f32 %v1663, %v1649
      %v1665 = vadd.f32 %v1664, %v1652
      %v1666 = vrot.slane %v1665, 4
      %v1667 = vadd.f32 %v1665, %v1666
      %v1668 = vrot.slane %v1667, 2
      %v1669 = vadd.f32 %v1667, %v1668
      %v1670 = vrot.slane %v1669, 1
      %v1671 = vadd.f32 %v1669, %v1670
      %v1672 = vadd.f32 %v1644, %v1647
      %v1673 = vadd.f32 %v1672, %v1650
      %v1674 = vadd.f32 %v1673, %v1653
      %v1675 = vrot.slane %v1674, 4
      %v1676 = vadd.f32 %v1674, %v1675
      %v1677 = vrot.slane %v1676, 2
      %v1678 = vadd.f32 %v1676, %v1677
      %v1679 = vrot.slane %v1678, 1
      %v1680 = vadd.f32 %v1678, %v1679
      %v1682 = vsel %vm1455, %v660, 0
      %v1685 = vsel %vm1455, %v661, 0
      %v1688 = vsel %vm1455, %v662, 0
      %v1691 = vsel %vm1455, %v663, 0
      %v1694 = vsel %vm1455, %v664, 0
      %v1697 = vsel %vm1455, %v665, 0
      %v1700 = vsel %vm1455, %v666, 0
      %v1703 = vsel %vm1455, %v667, 0
      %v1706 = vsel %vm1455, %v668, 0
      %v1709 = vsel %vm1455, %v669, 0
      %v1712 = vsel %vm1455, %v670, 0
      %v1715 = vsel %vm1455, %v671, 0
      %v1718 = vsel %vm1455, %v672, 0
      %v1721 = vsel %vm1455, %v673, 0
      %v1724 = vsel %vm1455, %v674, 0
      %v1727 = vsel %vm1455, %v675, 0
      %v1730 = vsel %vm1455, %v676, 0
      %v1733 = vsel %vm1455, %v677, 0
      %v1736 = vsel %vm1455, %v678, 0
      %v1739 = vsel %vm1455, %v679, 0
      %v1742 = vsel %vm1455, %v680, 0
      %v1745 = vsel %vm1455, %v681, 0
      %v1748 = vsel %vm1455, %v682, 0
      %v1751 = vsel %vm1455, %v683, 0
      %v1754 = vsel %vm1455, %v684, 0
      %v1757 = vsel %vm1455, %v685, 0
      %v1760 = vsel %vm1455, %v686, 0
      %v1763 = vsel %vm1455, %v687, 0
      %v1766 = vsel %vm1455, %v688, 0
      %v1769 = vsel %vm1455, %v689, 0
      %v1772 = vsel %vm1455, %v690, 0
      %v1775 = vsel %vm1455, %v691, 0
      %v1778 = vsel %vm1455, %v692, 0
      %v1781 = vsel %vm1455, %v693, 0
      %v1784 = vsel %vm1455, %v694, 0
      %v1787 = vsel %vm1455, %v695, 0
      %v1790 = vsel %vm1455, %v696, 0
      %v1793 = vsel %vm1455, %v697, 0
      %v1796 = vsel %vm1455, %v698, 0
      %v1799 = vsel %vm1455, %v699, 0
      %1801 = vmatprep.subr.mxu0 0.0
      %1802 = vmatpush1.msra.mxu0 %v1307
      %1803 = vmatprep.subr.mxu0 0.0
      %1804 = vmatpush1.msra.mxu0 %v1308
      %1805 = vmatprep.subr.mxu0 0.0
      %1806 = vmatpush1.msra.mxu0 %v1309
      %1807 = vmatprep.subr.mxu0 0.0
      %1808 = vmatpush1.msra.mxu0 %v1310
      %1809 = vmatprep.subr.mxu0 0.0
      %1810 = vmatpush1.msra.mxu0 0.0
      %1811 = vmatprep.subr.mxu0 0.0
      %1812 = vmatpush1.msra.mxu0 0.0
      %1813 = vmatprep.subr.mxu0 0.0
      %1814 = vmatpush1.msra.mxu0 0.0
      %1815 = vmatprep.subr.mxu0 0.0
      %1816 = vmatpush1.msra.mxu0 0.0
      %1817 = vmatprep.subr.mxu0 0.0
      %1818 = vmatpush1.msra.mxu0 0.0
      %1819 = vmatprep.subr.mxu0 0.0
      %1820 = vmatpush1.msra.mxu0 0.0
      %1821 = vmatprep.subr.mxu0 0.0
      %1822 = vmatpush1.msra.mxu0 0.0
      %1823 = vmatprep.subr.mxu0 0.0
      %1824 = vmatpush1.msra.mxu0 0.0
      %1825 = vmatprep.subr.mxu0 0.0
      %1826 = vmatpush1.msra.mxu0 0.0
      %1827 = vmatprep.subr.mxu0 0.0
      %1828 = vmatpush1.msra.mxu0 0.0
      %1829 = vmatprep.subr.mxu0 0.0
      %1830 = vmatpush1.msra.mxu0 0.0
      %1831 = vmatprep.subr.mxu0 0.0
      %1832 = vmatpush1.msra.mxu0 0.0
      %1833 = vmatprep.subr.mxu0 0.0
      %1834 = vmatpush1.msra.mxu0 0.0
      %1835 = vmatprep.subr.mxu0 0.0
      %1836 = vmatpush1.msra.mxu0 0.0
      %1837 = vmatprep.subr.mxu0 0.0
      %1838 = vmatpush1.msra.mxu0 0.0
      %1839 = vmatprep.subr.mxu0 0.0
      %1840 = vmatpush1.msra.mxu0 0.0
      %1841 = vmatprep.subr.mxu0 0.0
      %1842 = vmatpush1.msra.mxu0 0.0
      %1843 = vmatprep.subr.mxu0 0.0
      %1844 = vmatpush1.msra.mxu0 0.0
      %1845 = vmatprep.subr.mxu0 0.0
      %1846 = vmatpush1.msra.mxu0 0.0
      %1847 = vmatprep.subr.mxu0 0.0
      %1848 = vmatpush1.msra.mxu0 0.0
      %1849 = vmatprep.subr.mxu0 0.0
      %1850 = vmatpush1.msra.mxu0 0.0
      %1851 = vmatprep.subr.mxu0 0.0
      %1852 = vmatpush1.msra.mxu0 0.0
      %1853 = vmatprep.subr.mxu0 0.0
      %1854 = vmatpush1.msra.mxu0 0.0
      %1855 = vmatprep.subr.mxu0 0.0
      %1856 = vmatpush1.msra.mxu0 0.0
      %1857 = vmatprep.subr.mxu0 0.0
      %1858 = vmatpush1.msra.mxu0 0.0
      %1859 = vmatprep.subr.mxu0 0.0
      %1860 = vmatpush1.msra.mxu0 0.0
      %1861 = vmatprep.subr.mxu0 0.0
      %1862 = vmatpush1.msra.mxu0 0.0
      %1863 = vmatprep.subr.mxu0 0.0
      %1864 = vmatpush1.msra.mxu0 0.0
      %1865 = vmatprep.mubr.f32.mxu0 0.0
      %1866 = vmatmul.mubr.f32.gmra.mrb[0].mxu0 %v1682
      %v1867 = vpop.f32.mrb[0].mxu0
      %v1868 = vadd.f32 0.0, %v1867
      %v1869 = vpop.f32.mrb[0].mxu0
      %1870 = vmatprep.mubr.f32.mxu0 0.0
      %1871 = vmatmul.mubr.f32.gmra.mrb[0].mxu0 %v1685
      %v1872 = vpop.f32.mrb[0].mxu0
      %v1873 = vadd.f32 0.0, %v1872
      %v1874 = vpop.f32.mrb[0].mxu0
      %1875 = vmatprep.mubr.f32.mxu0 0.0
      %1876 = vmatmul.mubr.f32.gmra.mrb[0].mxu0 %v1688
      %v1877 = vpop.f32.mrb[0].mxu0
      %v1878 = vadd.f32 0.0, %v1877
      %v1879 = vpop.f32.mrb[0].mxu0
      %1880 = vmatprep.mubr.f32.mxu0 0.0
      %1881 = vmatmul.mubr.f32.gmra.mrb[0].mxu0 %v1691
      %v1882 = vpop.f32.mrb[0].mxu0
      %v1883 = vadd.f32 0.0, %v1882
      %v1884 = vpop.f32.mrb[0].mxu0
      %1885 = vmatprep.mubr.f32.mxu0 0.0
      %1886 = vmatmul.mubr.f32.gmra.mrb[0].mxu0 %v1694
      %v1887 = vpop.f32.mrb[0].mxu0
      %v1888 = vadd.f32 0.0, %v1887
      %v1889 = vpop.f32.mrb[0].mxu0
      %1890 = vmatprep.mubr.f32.mxu0 0.0
      %1891 = vmatmul.mubr.f32.gmra.mrb[0].mxu0 %v1697
      %v1892 = vpop.f32.mrb[0].mxu0
      %v1893 = vadd.f32 0.0, %v1892
      %v1894 = vpop.f32.mrb[0].mxu0
      %1895 = vmatprep.mubr.f32.mxu0 0.0
      %1896 = vmatmul.mubr.f32.gmra.mrb[0].mxu0 %v1700
      %v1897 = vpop.f32.mrb[0].mxu0
      %v1898 = vadd.f32 0.0, %v1897
      %v1899 = vpop.f32.mrb[0].mxu0
      %1900 = vmatprep.mubr.f32.mxu0 0.0
      %1901 = vmatmul.mubr.f32.gmra.mrb[0].mxu0 %v1703
      %v1902 = vpop.f32.mrb[0].mxu0
      %v1903 = vadd.f32 0.0, %v1902
      %v1904 = vpop.f32.mrb[0].mxu0
      %1905 = vmatprep.mubr.f32.mxu0 0.0
      %1906 = vmatmul.mubr.f32.gmra.mrb[0].mxu0 %v1706
      %v1907 = vpop.f32.mrb[0].mxu0
      %v1908 = vadd.f32 0.0, %v1907
      %v1909 = vpop.f32.mrb[0].mxu0
      %1910 = vmatprep.mubr.f32.mxu0 0.0
      %1911 = vmatmul.mubr.f32.gmra.mrb[0].mxu0 %v1709
      %v1912 = vpop.f32.mrb[0].mxu0
      %v1913 = vadd.f32 0.0, %v1912
      %v1914 = vpop.f32.mrb[0].mxu0
      %1915 = vmatprep.mubr.f32.mxu0 0.0
      %1916 = vmatmul.mubr.f32.gmra.mrb[0].mxu0 %v1712
      %v1917 = vpop.f32.mrb[0].mxu0
      %v1918 = vadd.f32 0.0, %v1917
      %v1919 = vpop.f32.mrb[0].mxu0
      %1920 = vmatprep.mubr.f32.mxu0 0.0
      %1921 = vmatmul.mubr.f32.gmra.mrb[0].mxu0 %v1715
      %v1922 = vpop.f32.mrb[0].mxu0
      %v1923 = vadd.f32 0.0, %v1922
      %v1924 = vpop.f32.mrb[0].mxu0
      %1925 = vmatprep.mubr.f32.mxu0 0.0
      %1926 = vmatmul.mubr.f32.gmra.mrb[0].mxu0 %v1718
      %v1927 = vpop.f32.mrb[0].mxu0
      %v1928 = vadd.f32 0.0, %v1927
      %v1929 = vpop.f32.mrb[0].mxu0
      %1930 = vmatprep.mubr.f32.mxu0 0.0
      %1931 = vmatmul.mubr.f32.gmra.mrb[0].mxu0 %v1721
      %v1932 = vpop.f32.mrb[0].mxu0
      %v1933 = vadd.f32 0.0, %v1932
      %v1934 = vpop.f32.mrb[0].mxu0
      %1935 = vmatprep.mubr.f32.mxu0 0.0
      %1936 = vmatmul.mubr.f32.gmra.mrb[0].mxu0 %v1724
      %v1937 = vpop.f32.mrb[0].mxu0
      %v1938 = vadd.f32 0.0, %v1937
      %v1939 = vpop.f32.mrb[0].mxu0
      %1940 = vmatprep.mubr.f32.mxu0 0.0
      %1941 = vmatmul.mubr.f32.gmra.mrb[0].mxu0 %v1727
      %v1942 = vpop.f32.mrb[0].mxu0
      %v1943 = vadd.f32 0.0, %v1942
      %v1944 = vpop.f32.mrb[0].mxu0
      %1945 = vmatprep.mubr.f32.mxu0 0.0
      %1946 = vmatmul.mubr.f32.gmra.mrb[0].mxu0 %v1730
      %v1947 = vpop.f32.mrb[0].mxu0
      %v1948 = vadd.f32 0.0, %v1947
      %v1949 = vpop.f32.mrb[0].mxu0
      %1950 = vmatprep.mubr.f32.mxu0 0.0
      %1951 = vmatmul.mubr.f32.gmra.mrb[0].mxu0 %v1733
      %v1952 = vpop.f32.mrb[0].mxu0
      %v1953 = vadd.f32 0.0, %v1952
      %v1954 = vpop.f32.mrb[0].mxu0
      %1955 = vmatprep.mubr.f32.mxu0 0.0
      %1956 = vmatmul.mubr.f32.gmra.mrb[0].mxu0 %v1736
      %v1957 = vpop.f32.mrb[0].mxu0
      %v1958 = vadd.f32 0.0, %v1957
      %v1959 = vpop.f32.mrb[0].mxu0
      %1960 = vmatprep.mubr.f32.mxu0 0.0
      %1961 = vmatmul.mubr.f32.gmra.mrb[0].mxu0 %v1739
      %v1962 = vpop.f32.mrb[0].mxu0
      %v1963 = vadd.f32 0.0, %v1962
      %v1964 = vpop.f32.mrb[0].mxu0
      %1965 = vmatprep.mubr.f32.mxu0 0.0
      %1966 = vmatmul.mubr.f32.gmra.mrb[0].mxu0 %v1742
      %v1967 = vpop.f32.mrb[0].mxu0
      %v1968 = vadd.f32 0.0, %v1967
      %v1969 = vpop.f32.mrb[0].mxu0
      %1970 = vmatprep.mubr.f32.mxu0 0.0
      %1971 = vmatmul.mubr.f32.gmra.mrb[0].mxu0 %v1745
      %v1972 = vpop.f32.mrb[0].mxu0
      %v1973 = vadd.f32 0.0, %v1972
      %v1974 = vpop.f32.mrb[0].mxu0
      %1975 = vmatprep.mubr.f32.mxu0 0.0
      %1976 = vmatmul.mubr.f32.gmra.mrb[0].mxu0 %v1748
      %v1977 = vpop.f32.mrb[0].mxu0
      %v1978 = vadd.f32 0.0, %v1977
      %v1979 = vpop.f32.mrb[0].mxu0
      %1980 = vmatprep.mubr.f32.mxu0 0.0
      %1981 = vmatmul.mubr.f32.gmra.mrb[0].mxu0 %v1751
      %v1982 = vpop.f32.mrb[0].mxu0
      %v1983 = vadd.f32 0.0, %v1982
      %v1984 = vpop.f32.mrb[0].mxu0
      %1985 = vmatprep.mubr.f32.mxu0 0.0
      %1986 = vmatmul.mubr.f32.gmra.mrb[0].mxu0 %v1754
      %v1987 = vpop.f32.mrb[0].mxu0
      %v1988 = vadd.f32 0.0, %v1987
      %v1989 = vpop.f32.mrb[0].mxu0
      %1990 = vmatprep.mubr.f32.mxu0 0.0
      %1991 = vmatmul.mubr.f32.gmra.mrb[0].mxu0 %v1757
      %v1992 = vpop.f32.mrb[0].mxu0
      %v1993 = vadd.f32 0.0, %v1992
      %v1994 = vpop.f32.mrb[0].mxu0
      %1995 = vmatprep.mubr.f32.mxu0 0.0
      %1996 = vmatmul.mubr.f32.gmra.mrb[0].mxu0 %v1760
      %v1997 = vpop.f32.mrb[0].mxu0
      %v1998 = vadd.f32 0.0, %v1997
      %v1999 = vpop.f32.mrb[0].mxu0
      %2000 = vmatprep.mubr.f32.mxu0 0.0
      %2001 = vmatmul.mubr.f32.gmra.mrb[0].mxu0 %v1763
      %v2002 = vpop.f32.mrb[0].mxu0
      %v2003 = vadd.f32 0.0, %v2002
      %v2004 = vpop.f32.mrb[0].mxu0
      %2005 = vmatprep.mubr.f32.mxu0 0.0
      %2006 = vmatmul.mubr.f32.gmra.mrb[0].mxu0 %v1766
      %v2007 = vpop.f32.mrb[0].mxu0
      %v2008 = vadd.f32 0.0, %v2007
      %v2009 = vpop.f32.mrb[0].mxu0
      %2010 = vmatprep.mubr.f32.mxu0 0.0
      %2011 = vmatmul.mubr.f32.gmra.mrb[0].mxu0 %v1769
      %v2012 = vpop.f32.mrb[0].mxu0
      %v2013 = vadd.f32 0.0, %v2012
      %v2014 = vpop.f32.mrb[0].mxu0
      %2015 = vmatprep.mubr.f32.mxu0 0.0
      %2016 = vmatmul.mubr.f32.gmra.mrb[0].mxu0 %v1772
      %v2017 = vpop.f32.mrb[0].mxu0
      %v2018 = vadd.f32 0.0, %v2017
      %v2019 = vpop.f32.mrb[0].mxu0
      %2020 = vmatprep.mubr.f32.mxu0 0.0
      %2021 = vmatmul.mubr.f32.gmra.mrb[0].mxu0 %v1775
      %v2022 = vpop.f32.mrb[0].mxu0
      %v2023 = vadd.f32 0.0, %v2022
      %v2024 = vpop.f32.mrb[0].mxu0
      %2025 = vmatprep.mubr.f32.mxu0 0.0
      %2026 = vmatmul.mubr.f32.gmra.mrb[0].mxu0 %v1778
      %v2027 = vpop.f32.mrb[0].mxu0
      %v2028 = vadd.f32 0.0, %v2027
      %v2029 = vpop.f32.mrb[0].mxu0
      %2030 = vmatprep.mubr.f32.mxu0 0.0
      %2031 = vmatmul.mubr.f32.gmra.mrb[0].mxu0 %v1781
      %v2032 = vpop.f32.mrb[0].mxu0
      %v2033 = vadd.f32 0.0, %v2032
      %v2034 = vpop.f32.mrb[0].mxu0
      %2035 = vmatprep.mubr.f32.mxu0 0.0
      %2036 = vmatmul.mubr.f32.gmra.mrb[0].mxu0 %v1784
      %v2037 = vpop.f32.mrb[0].mxu0
      %v2038 = vadd.f32 0.0, %v2037
      %v2039 = vpop.f32.mrb[0].mxu0
      %2040 = vmatprep.mubr.f32.mxu0 0.0
      %2041 = vmatmul.mubr.f32.gmra.mrb[0].mxu0 %v1787
      %v2042 = vpop.f32.mrb[0].mxu0
      %v2043 = vadd.f32 0.0, %v2042
      %v2044 = vpop.f32.mrb[0].mxu0
      %2045 = vmatprep.mubr.f32.mxu0 0.0
      %2046 = vmatmul.mubr.f32.gmra.mrb[0].mxu0 %v1790
      %v2047 = vpop.f32.mrb[0].mxu0
      %v2048 = vadd.f32 0.0, %v2047
      %v2049 = vpop.f32.mrb[0].mxu0
      %2050 = vmatprep.mubr.f32.mxu0 0.0
      %2051 = vmatmul.mubr.f32.gmra.mrb[0].mxu0 %v1793
      %v2052 = vpop.f32.mrb[0].mxu0
      %v2053 = vadd.f32 0.0, %v2052
      %v2054 = vpop.f32.mrb[0].mxu0
      %2055 = vmatprep.mubr.f32.mxu0 0.0
      %2056 = vmatmul.mubr.f32.gmra.mrb[0].mxu0 %v1796
      %v2057 = vpop.f32.mrb[0].mxu0
      %v2058 = vadd.f32 0.0, %v2057
      %v2059 = vpop.f32.mrb[0].mxu0
      %2060 = vmatprep.mubr.f32.mxu0 0.0
      %2061 = vmatmul.mubr.f32.gmra.mrb[0].mxu0 %v1799
      %v2062 = vpop.f32.mrb[0].mxu0
      %v2063 = vadd.f32 0.0, %v2062
      %v2064 = vpop.f32.mrb[0].mxu0
      %2065 = vdwg.mxu0
      %v2066 = vmul.f32 %v1868, %v700
      %v2067 = vmul.f32 %v1873, %v701
      %v2068 = vmul.f32 %v1878, %v702
      %v2069 = vmul.f32 %v1883, %v703
      %v2070 = vmul.f32 %v1888, %v704
      %v2071 = vmul.f32 %v1893, %v705
      %v2072 = vmul.f32 %v1898, %v706
      %v2073 = vmul.f32 %v1903, %v707
      %v2074 = vmul.f32 %v1908, %v708
      %v2075 = vmul.f32 %v1913, %v709
      %v2076 = vmul.f32 %v1918, %v710
      %v2077 = vmul.f32 %v1923, %v711
      %v2078 = vmul.f32 %v1928, %v712
      %v2079 = vmul.f32 %v1933, %v713
      %v2080 = vmul.f32 %v1938, %v714
      %v2081 = vmul.f32 %v1943, %v715
      %v2082 = vmul.f32 %v1948, %v716
      %v2083 = vmul.f32 %v1953, %v717
      %v2084 = vmul.f32 %v1958, %v718
      %v2085 = vmul.f32 %v1963, %v719
      %v2086 = vmul.f32 %v1968, %v720
      %v2087 = vmul.f32 %v1973, %v721
      %v2088 = vmul.f32 %v1978, %v722
      %v2089 = vmul.f32 %v1983, %v723
      %v2090 = vmul.f32 %v1988, %v724
      %v2091 = vmul.f32 %v1993, %v725
      %v2092 = vmul.f32 %v1998, %v726
      %v2093 = vmul.f32 %v2003, %v727
      %v2094 = vmul.f32 %v2008, %v728
      %v2095 = vmul.f32 %v2013, %v729
      %v2096 = vmul.f32 %v2018, %v730
      %v2097 = vmul.f32 %v2023, %v731
      %v2098 = vmul.f32 %v2028, %v732
      %v2099 = vmul.f32 %v2033, %v733
      %v2100 = vmul.f32 %v2038, %v734
      %v2101 = vmul.f32 %v2043, %v735
      %v2102 = vmul.f32 %v2048, %v736
      %v2103 = vmul.f32 %v2053, %v737
      %v2104 = vmul.f32 %v2058, %v738
      %v2105 = vmul.f32 %v2063, %v739
      %v2106 = vsel %vm1455, %v2066, 0.0
      %2107 = vadd.xlane.f32.xlu0 %v2106
      %v2108 = vpop.xlane.xlu0 %2107
      %v2109 = vsel %vm1455, %v2067, 0.0
      %2110 = vadd.xlane.f32.xlu0 %v2109
      %v2111 = vpop.xlane.xlu0 %2110
      %v2112 = vsel %vm1455, %v2068, 0.0
      %2113 = vadd.xlane.f32.xlu0 %v2112
      %v2114 = vpop.xlane.xlu0 %2113
      %v2115 = vsel %vm1455, %v2069, 0.0
      %2116 = vadd.xlane.f32.xlu0 %v2115
      %v2117 = vpop.xlane.xlu0 %2116
      %v2118 = vsel %vm1455, %v2070, 0.0
      %2119 = vadd.xlane.f32.xlu0 %v2118
      %v2120 = vpop.xlane.xlu0 %2119
      %v2121 = vsel %vm1455, %v2071, 0.0
      %2122 = vadd.xlane.f32.xlu0 %v2121
      %v2123 = vpop.xlane.xlu0 %2122
      %v2124 = vsel %vm1455, %v2072, 0.0
      %2125 = vadd.xlane.f32.xlu0 %v2124
      %v2126 = vpop.xlane.xlu0 %2125
      %v2127 = vsel %vm1455, %v2073, 0.0
      %2128 = vadd.xlane.f32.xlu0 %v2127
      %v2129 = vpop.xlane.xlu0 %2128
      %v2130 = vsel %vm1455, %v2074, 0.0
      %2131 = vadd.xlane.f32.xlu0 %v2130
      %v2132 = vpop.xlane.xlu0 %2131
      %v2133 = vsel %vm1455, %v2075, 0.0
      %2134 = vadd.xlane.f32.xlu0 %v2133
      %v2135 = vpop.xlane.xlu0 %2134
      %v2136 = vsel %vm1455, %v2076, 0.0
      %2137 = vadd.xlane.f32.xlu0 %v2136
      %v2138 = vpop.xlane.xlu0 %2137
      %v2139 = vsel %vm1455, %v2077, 0.0
      %2140 = vadd.xlane.f32.xlu0 %v2139
      %v2141 = vpop.xlane.xlu0 %2140
      %v2142 = vsel %vm1455, %v2078, 0.0
      %2143 = vadd.xlane.f32.xlu0 %v2142
      %v2144 = vpop.xlane.xlu0 %2143
      %v2145 = vsel %vm1455, %v2079, 0.0
      %2146 = vadd.xlane.f32.xlu0 %v2145
      %v2147 = vpop.xlane.xlu0 %2146
      %v2148 = vsel %vm1455, %v2080, 0.0
      %2149 = vadd.xlane.f32.xlu0 %v2148
      %v2150 = vpop.xlane.xlu0 %2149
      %v2151 = vsel %vm1455, %v2081, 0.0
      %2152 = vadd.xlane.f32.xlu0 %v2151
      %v2153 = vpop.xlane.xlu0 %2152
      %v2154 = vsel %vm1455, %v2082, 0.0
      %2155 = vadd.xlane.f32.xlu0 %v2154
      %v2156 = vpop.xlane.xlu0 %2155
      %v2157 = vsel %vm1455, %v2083, 0.0
      %2158 = vadd.xlane.f32.xlu0 %v2157
      %v2159 = vpop.xlane.xlu0 %2158
      %v2160 = vsel %vm1455, %v2084, 0.0
      %2161 = vadd.xlane.f32.xlu0 %v2160
      %v2162 = vpop.xlane.xlu0 %2161
      %v2163 = vsel %vm1455, %v2085, 0.0
      %2164 = vadd.xlane.f32.xlu0 %v2163
      %v2165 = vpop.xlane.xlu0 %2164
      %v2166 = vsel %vm1455, %v2086, 0.0
      %2167 = vadd.xlane.f32.xlu0 %v2166
      %v2168 = vpop.xlane.xlu0 %2167
      %v2169 = vsel %vm1455, %v2087, 0.0
      %2170 = vadd.xlane.f32.xlu0 %v2169
      %v2171 = vpop.xlane.xlu0 %2170
      %v2172 = vsel %vm1455, %v2088, 0.0
      %2173 = vadd.xlane.f32.xlu0 %v2172
      %v2174 = vpop.xlane.xlu0 %2173
      %v2175 = vsel %vm1455, %v2089, 0.0
      %2176 = vadd.xlane.f32.xlu0 %v2175
      %v2177 = vpop.xlane.xlu0 %2176
      %v2178 = vsel %vm1455, %v2090, 0.0
      %2179 = vadd.xlane.f32.xlu0 %v2178
      %v2180 = vpop.xlane.xlu0 %2179
      %v2181 = vsel %vm1455, %v2091, 0.0
      %2182 = vadd.xlane.f32.xlu0 %v2181
      %v2183 = vpop.xlane.xlu0 %2182
      %v2184 = vsel %vm1455, %v2092, 0.0
      %2185 = vadd.xlane.f32.xlu0 %v2184
      %v2186 = vpop.xlane.xlu0 %2185
      %v2187 = vsel %vm1455, %v2093, 0.0
      %2188 = vadd.xlane.f32.xlu0 %v2187
      %v2189 = vpop.xlane.xlu0 %2188
      %v2190 = vsel %vm1455, %v2094, 0.0
      %2191 = vadd.xlane.f32.xlu0 %v2190
      %v2192 = vpop.xlane.xlu0 %2191
      %v2193 = vsel %vm1455, %v2095, 0.0
      %2194 = vadd.xlane.f32.xlu0 %v2193
      %v2195 = vpop.xlane.xlu0 %2194
      %v2196 = vsel %vm1455, %v2096, 0.0
      %2197 = vadd.xlane.f32.xlu0 %v2196
      %v2198 = vpop.xlane.xlu0 %2197
      %v2199 = vsel %vm1455, %v2097, 0.0
      %2200 = vadd.xlane.f32.xlu0 %v2199
      %v2201 = vpop.xlane.xlu0 %2200
      %v2202 = vsel %vm1455, %v2098, 0.0
      %2203 = vadd.xlane.f32.xlu0 %v2202
      %v2204 = vpop.xlane.xlu0 %2203
      %v2205 = vsel %vm1455, %v2099, 0.0
      %2206 = vadd.xlane.f32.xlu0 %v2205
      %v2207 = vpop.xlane.xlu0 %2206
      %v2208 = vsel %vm1455, %v2100, 0.0
      %2209 = vadd.xlane.f32.xlu0 %v2208
      %v2210 = vpop.xlane.xlu0 %2209
      %v2211 = vsel %vm1455, %v2101, 0.0
      %2212 = vadd.xlane.f32.xlu0 %v2211
      %v2213 = vpop.xlane.xlu0 %2212
      %v2214 = vsel %vm1455, %v2102, 0.0
      %2215 = vadd.xlane.f32.xlu0 %v2214
      %v2216 = vpop.xlane.xlu0 %2215
      %v2217 = vsel %vm1455, %v2103, 0.0
      %2218 = vadd.xlane.f32.xlu0 %v2217
      %v2219 = vpop.xlane.xlu0 %2218
      %v2220 = vsel %vm1455, %v2104, 0.0
      %2221 = vadd.xlane.f32.xlu0 %v2220
      %v2222 = vpop.xlane.xlu0 %2221
      %v2223 = vsel %vm1455, %v2105, 0.0
      %2224 = vadd.xlane.f32.xlu0 %v2223
      %v2225 = vpop.xlane.xlu0 %2224
      %vm2226 = vcmp.gt.f32.partialorder %v1662, %v2108
      %vm2227 = vcmp.gt.f32.partialorder %v1671, %v2108
      %vm2228 = vcmp.gt.f32.partialorder %v1680, %v2108
      %vm2229 = vcmp.gt.f32.partialorder %v1662, %v2111
      %vm2230 = vcmp.gt.f32.partialorder %v1671, %v2111
      %vm2231 = vcmp.gt.f32.partialorder %v1680, %v2111
      %vm2232 = vcmp.gt.f32.partialorder %v1662, %v2114
      %vm2233 = vcmp.gt.f32.partialorder %v1671, %v2114
      %vm2234 = vcmp.gt.f32.partialorder %v1680, %v2114
      %vm2235 = vcmp.gt.f32.partialorder %v1662, %v2117
      %vm2236 = vcmp.gt.f32.partialorder %v1671, %v2117
      %vm2237 = vcmp.gt.f32.partialorder %v1680, %v2117
      %vm2238 = vcmp.gt.f32.partialorder %v1662, %v2120
      %vm2239 = vcmp.gt.f32.partialorder %v1671, %v2120
      %vm2240 = vcmp.gt.f32.partialorder %v1680, %v2120
      %vm2241 = vcmp.gt.f32.partialorder %v1662, %v2123
      %vm2242 = vcmp.gt.f32.partialorder %v1671, %v2123
      %vm2243 = vcmp.gt.f32.partialorder %v1680, %v2123
      %vm2244 = vcmp.gt.f32.partialorder %v1662, %v2126
      %vm2245 = vcmp.gt.f32.partialorder %v1671, %v2126
      %vm2246 = vcmp.gt.f32.partialorder %v1680, %v2126
      %vm2247 = vcmp.gt.f32.partialorder %v1662, %v2129
      %vm2248 = vcmp.gt.f32.partialorder %v1671, %v2129
      %vm2249 = vcmp.gt.f32.partialorder %v1680, %v2129
      %v2250 = vsel %vm2226, 1, 0
      %v2251 = vsel %vm2227, 1, 0
      %v2252 = vsel %vm2228, 1, 0
      %v2253 = vsel %vm2229, 1, 0
      %v2254 = vsel %vm2230, 1, 0
      %v2255 = vsel %vm2231, 1, 0
      %v2256 = vsel %vm2232, 1, 0
      %v2257 = vsel %vm2233, 1, 0
      %v2258 = vsel %vm2234, 1, 0
      %v2259 = vsel %vm2235, 1, 0
      %v2260 = vsel %vm2236, 1, 0
      %v2261 = vsel %vm2237, 1, 0
      %v2262 = vsel %vm2238, 1, 0
      %v2263 = vsel %vm2239, 1, 0
      %v2264 = vsel %vm2240, 1, 0
      %v2265 = vsel %vm2241, 1, 0
      %v2266 = vsel %vm2242, 1, 0
      %v2267 = vsel %vm2243, 1, 0
      %v2268 = vsel %vm2244, 1, 0
      %v2269 = vsel %vm2245, 1, 0
      %v2270 = vsel %vm2246, 1, 0
      %v2271 = vsel %vm2247, 1, 0
      %v2272 = vsel %vm2248, 1, 0
      %v2273 = vsel %vm2249, 1, 0
      %v2274 = vcvt.s32.f32 %v2250
      %v2275 = vcvt.s32.f32 %v2251
      %v2276 = vcvt.s32.f32 %v2252
      %v2277 = vcvt.s32.f32 %v2253
      %v2278 = vcvt.s32.f32 %v2254
      %v2279 = vcvt.s32.f32 %v2255
      %v2280 = vcvt.s32.f32 %v2256
      %v2281 = vcvt.s32.f32 %v2257
      %v2282 = vcvt.s32.f32 %v2258
      %v2283 = vcvt.s32.f32 %v2259
      %v2284 = vcvt.s32.f32 %v2260
      %v2285 = vcvt.s32.f32 %v2261
      %v2286 = vcvt.s32.f32 %v2262
      %v2287 = vcvt.s32.f32 %v2263
      %v2288 = vcvt.s32.f32 %v2264
      %v2289 = vcvt.s32.f32 %v2265
      %v2290 = vcvt.s32.f32 %v2266
      %v2291 = vcvt.s32.f32 %v2267
      %v2292 = vcvt.s32.f32 %v2268
      %v2293 = vcvt.s32.f32 %v2269
      %v2294 = vcvt.s32.f32 %v2270
      %v2295 = vcvt.s32.f32 %v2271
      %v2296 = vcvt.s32.f32 %v2272
      %v2297 = vcvt.s32.f32 %v2273
      %v2298 = vadd.f32 %v2274, %v2275
      %v2299 = vadd.f32 %v2298, %v2276
      %2300 = vadd.xlane.f32.xlu0 %v2299
      %v2301 = vpop.xlane.xlu0 %2300
      %v2302 = vadd.f32 %v2277, %v2278
      %v2303 = vadd.f32 %v2302, %v2279
      %2304 = vadd.xlane.f32.xlu0 %v2303
      %v2305 = vpop.xlane.xlu0 %2304
      %v2306 = vadd.f32 %v2280, %v2281
      %v2307 = vadd.f32 %v2306, %v2282
      %2308 = vadd.xlane.f32.xlu0 %v2307
      %v2309 = vpop.xlane.xlu0 %2308
      %v2310 = vadd.f32 %v2283, %v2284
      %v2311 = vadd.f32 %v2310, %v2285
      %2312 = vadd.xlane.f32.xlu0 %v2311
      %v2313 = vpop.xlane.xlu0 %2312
      %v2314 = vadd.f32 %v2286, %v2287
      %v2315 = vadd.f32 %v2314, %v2288
      %2316 = vadd.xlane.f32.xlu0 %v2315
      %v2317 = vpop.xlane.xlu0 %2316
      %v2318 = vadd.f32 %v2289, %v2290
      %v2319 = vadd.f32 %v2318, %v2291
      %2320 = vadd.xlane.f32.xlu0 %v2319
      %v2321 = vpop.xlane.xlu0 %2320
      %v2322 = vadd.f32 %v2292, %v2293
      %v2323 = vadd.f32 %v2322, %v2294
      %2324 = vadd.xlane.f32.xlu0 %v2323
      %v2325 = vpop.xlane.xlu0 %2324
      %v2326 = vadd.f32 %v2295, %v2296
      %v2327 = vadd.f32 %v2326, %v2297
      %2328 = vadd.xlane.f32.xlu0 %v2327
      %v2329 = vpop.xlane.xlu0 %2328
      %vm2330 = vcmp.lt.f32.partialorder %v2301, 15.0
      %vm2331 = vcmp.lt.f32.partialorder %v2305, 15.0
      %vm2332 = vcmp.lt.f32.partialorder %v2309, 15.0
      %vm2333 = vcmp.lt.f32.partialorder %v2313, 15.0
      %vm2334 = vcmp.lt.f32.partialorder %v2317, 15.0
      %vm2335 = vcmp.lt.f32.partialorder %v2321, 15.0
      %vm2336 = vcmp.lt.f32.partialorder %v2325, 15.0
      %vm2337 = vcmp.lt.f32.partialorder %v2329, 15.0
      %v2338 = vsel %vm2330, %v2108, inf
      %v2339 = vsel %vm2331, %v2111, inf
      %v2340 = vsel %vm2332, %v2114, inf
      %v2341 = vsel %vm2333, %v2117, inf
      %v2342 = vsel %vm2334, %v2120, inf
      %v2343 = vsel %vm2335, %v2123, inf
      %v2344 = vsel %vm2336, %v2126, inf
      %v2345 = vsel %vm2337, %v2129, inf
      %v2346 = vmin.f32 %v2338, %v2342
      %v2347 = vmin.f32 %v2339, %v2343
      %v2348 = vmin.f32 %v2340, %v2344
      %v2349 = vmin.f32 %v2341, %v2345
      %v2350 = vmin.f32 %v2346, %v2347
      %v2351 = vmin.f32 %v2348, %v2349
      %v2352 = vmin.f32 %v2350, %v2351
      %v2353 = vrot.slane %v2352, 4
      %v2354 = vmin.f32 %v2352, %v2353
      %v2355 = vrot.slane %v2354, 2
      %v2356 = vmin.f32 %v2354, %v2355
      %v2357 = vrot.slane %v2356, 1
      %v2358 = vmin.f32 %v2356, %v2357
      %s2359 = vtos %v2358
      %vm2360 = vcmp.gt.f32.partialorder %v1662, %v2132
      %vm2361 = vcmp.gt.f32.partialorder %v1671, %v2132
      %vm2362 = vcmp.gt.f32.partialorder %v1680, %v2132
      %vm2363 = vcmp.gt.f32.partialorder %v1662, %v2135
      %vm2364 = vcmp.gt.f32.partialorder %v1671, %v2135
      %vm2365 = vcmp.gt.f32.partialorder %v1680, %v2135
      %vm2366 = vcmp.gt.f32.partialorder %v1662, %v2138
      %vm2367 = vcmp.gt.f32.partialorder %v1671, %v2138
      %vm2368 = vcmp.gt.f32.partialorder %v1680, %v2138
      %vm2369 = vcmp.gt.f32.partialorder %v1662, %v2141
      %vm2370 = vcmp.gt.f32.partialorder %v1671, %v2141
      %vm2371 = vcmp.gt.f32.partialorder %v1680, %v2141
      %vm2372 = vcmp.gt.f32.partialorder %v1662, %v2144
      %vm2373 = vcmp.gt.f32.partialorder %v1671, %v2144
      %vm2374 = vcmp.gt.f32.partialorder %v1680, %v2144
      %vm2375 = vcmp.gt.f32.partialorder %v1662, %v2147
      %vm2376 = vcmp.gt.f32.partialorder %v1671, %v2147
      %vm2377 = vcmp.gt.f32.partialorder %v1680, %v2147
      %vm2378 = vcmp.gt.f32.partialorder %v1662, %v2150
      %vm2379 = vcmp.gt.f32.partialorder %v1671, %v2150
      %vm2380 = vcmp.gt.f32.partialorder %v1680, %v2150
      %vm2381 = vcmp.gt.f32.partialorder %v1662, %v2153
      %vm2382 = vcmp.gt.f32.partialorder %v1671, %v2153
      %vm2383 = vcmp.gt.f32.partialorder %v1680, %v2153
      %v2384 = vsel %vm2360, 1, 0
      %v2385 = vsel %vm2361, 1, 0
      %v2386 = vsel %vm2362, 1, 0
      %v2387 = vsel %vm2363, 1, 0
      %v2388 = vsel %vm2364, 1, 0
      %v2389 = vsel %vm2365, 1, 0
      %v2390 = vsel %vm2366, 1, 0
      %v2391 = vsel %vm2367, 1, 0
      %v2392 = vsel %vm2368, 1, 0
      %v2393 = vsel %vm2369, 1, 0
      %v2394 = vsel %vm2370, 1, 0
      %v2395 = vsel %vm2371, 1, 0
      %v2396 = vsel %vm2372, 1, 0
      %v2397 = vsel %vm2373, 1, 0
      %v2398 = vsel %vm2374, 1, 0
      %v2399 = vsel %vm2375, 1, 0
      %v2400 = vsel %vm2376, 1, 0
      %v2401 = vsel %vm2377, 1, 0
      %v2402 = vsel %vm2378, 1, 0
      %v2403 = vsel %vm2379, 1, 0
      %v2404 = vsel %vm2380, 1, 0
      %v2405 = vsel %vm2381, 1, 0
      %v2406 = vsel %vm2382, 1, 0
      %v2407 = vsel %vm2383, 1, 0
      %v2408 = vcvt.s32.f32 %v2384
      %v2409 = vcvt.s32.f32 %v2385
      %v2410 = vcvt.s32.f32 %v2386
      %v2411 = vcvt.s32.f32 %v2387
      %v2412 = vcvt.s32.f32 %v2388
      %v2413 = vcvt.s32.f32 %v2389
      %v2414 = vcvt.s32.f32 %v2390
      %v2415 = vcvt.s32.f32 %v2391
      %v2416 = vcvt.s32.f32 %v2392
      %v2417 = vcvt.s32.f32 %v2393
      %v2418 = vcvt.s32.f32 %v2394
      %v2419 = vcvt.s32.f32 %v2395
      %v2420 = vcvt.s32.f32 %v2396
      %v2421 = vcvt.s32.f32 %v2397
      %v2422 = vcvt.s32.f32 %v2398
      %v2423 = vcvt.s32.f32 %v2399
      %v2424 = vcvt.s32.f32 %v2400
      %v2425 = vcvt.s32.f32 %v2401
      %v2426 = vcvt.s32.f32 %v2402
      %v2427 = vcvt.s32.f32 %v2403
      %v2428 = vcvt.s32.f32 %v2404
      %v2429 = vcvt.s32.f32 %v2405
      %v2430 = vcvt.s32.f32 %v2406
      %v2431 = vcvt.s32.f32 %v2407
      %v2432 = vadd.f32 %v2408, %v2409
      %v2433 = vadd.f32 %v2432, %v2410
      %2434 = vadd.xlane.f32.xlu0 %v2433
      %v2435 = vpop.xlane.xlu0 %2434
      %v2436 = vadd.f32 %v2411, %v2412
      %v2437 = vadd.f32 %v2436, %v2413
      %2438 = vadd.xlane.f32.xlu0 %v2437
      %v2439 = vpop.xlane.xlu0 %2438
      %v2440 = vadd.f32 %v2414, %v2415
      %v2441 = vadd.f32 %v2440, %v2416
      %2442 = vadd.xlane.f32.xlu0 %v2441
      %v2443 = vpop.xlane.xlu0 %2442
      %v2444 = vadd.f32 %v2417, %v2418
      %v2445 = vadd.f32 %v2444, %v2419
      %2446 = vadd.xlane.f32.xlu0 %v2445
      %v2447 = vpop.xlane.xlu0 %2446
      %v2448 = vadd.f32 %v2420, %v2421
      %v2449 = vadd.f32 %v2448, %v2422
      %2450 = vadd.xlane.f32.xlu0 %v2449
      %v2451 = vpop.xlane.xlu0 %2450
      %v2452 = vadd.f32 %v2423, %v2424
      %v2453 = vadd.f32 %v2452, %v2425
      %2454 = vadd.xlane.f32.xlu0 %v2453
      %v2455 = vpop.xlane.xlu0 %2454
      %v2456 = vadd.f32 %v2426, %v2427
      %v2457 = vadd.f32 %v2456, %v2428
      %2458 = vadd.xlane.f32.xlu0 %v2457
      %v2459 = vpop.xlane.xlu0 %2458
      %v2460 = vadd.f32 %v2429, %v2430
      %v2461 = vadd.f32 %v2460, %v2431
      %2462 = vadd.xlane.f32.xlu0 %v2461
      %v2463 = vpop.xlane.xlu0 %2462
      %vm2464 = vcmp.lt.f32.partialorder %v2435, 15.0
      %vm2465 = vcmp.lt.f32.partialorder %v2439, 15.0
      %vm2466 = vcmp.lt.f32.partialorder %v2443, 15.0
      %vm2467 = vcmp.lt.f32.partialorder %v2447, 15.0
      %vm2468 = vcmp.lt.f32.partialorder %v2451, 15.0
      %vm2469 = vcmp.lt.f32.partialorder %v2455, 15.0
      %vm2470 = vcmp.lt.f32.partialorder %v2459, 15.0
      %vm2471 = vcmp.lt.f32.partialorder %v2463, 15.0
      %v2472 = vsel %vm2464, %v2132, inf
      %v2473 = vsel %vm2465, %v2135, inf
      %v2474 = vsel %vm2466, %v2138, inf
      %v2475 = vsel %vm2467, %v2141, inf
      %v2476 = vsel %vm2468, %v2144, inf
      %v2477 = vsel %vm2469, %v2147, inf
      %v2478 = vsel %vm2470, %v2150, inf
      %v2479 = vsel %vm2471, %v2153, inf
      %v2480 = vmin.f32 %v2472, %v2476
      %v2481 = vmin.f32 %v2473, %v2477
      %v2482 = vmin.f32 %v2474, %v2478
      %v2483 = vmin.f32 %v2475, %v2479
      %v2484 = vmin.f32 %v2480, %v2481
      %v2485 = vmin.f32 %v2482, %v2483
      %v2486 = vmin.f32 %v2484, %v2485
      %v2487 = vrot.slane %v2486, 4
      %v2488 = vmin.f32 %v2486, %v2487
      %v2489 = vrot.slane %v2488, 2
      %v2490 = vmin.f32 %v2488, %v2489
      %v2491 = vrot.slane %v2490, 1
      %v2492 = vmin.f32 %v2490, %v2491
      %s2493 = vtos %v2492
      %vm2494 = vcmp.gt.f32.partialorder %v1662, %v2156
      %vm2495 = vcmp.gt.f32.partialorder %v1671, %v2156
      %vm2496 = vcmp.gt.f32.partialorder %v1680, %v2156
      %vm2497 = vcmp.gt.f32.partialorder %v1662, %v2159
      %vm2498 = vcmp.gt.f32.partialorder %v1671, %v2159
      %vm2499 = vcmp.gt.f32.partialorder %v1680, %v2159
      %vm2500 = vcmp.gt.f32.partialorder %v1662, %v2162
      %vm2501 = vcmp.gt.f32.partialorder %v1671, %v2162
      %vm2502 = vcmp.gt.f32.partialorder %v1680, %v2162
      %vm2503 = vcmp.gt.f32.partialorder %v1662, %v2165
      %vm2504 = vcmp.gt.f32.partialorder %v1671, %v2165
      %vm2505 = vcmp.gt.f32.partialorder %v1680, %v2165
      %vm2506 = vcmp.gt.f32.partialorder %v1662, %v2168
      %vm2507 = vcmp.gt.f32.partialorder %v1671, %v2168
      %vm2508 = vcmp.gt.f32.partialorder %v1680, %v2168
      %vm2509 = vcmp.gt.f32.partialorder %v1662, %v2171
      %vm2510 = vcmp.gt.f32.partialorder %v1671, %v2171
      %vm2511 = vcmp.gt.f32.partialorder %v1680, %v2171
      %vm2512 = vcmp.gt.f32.partialorder %v1662, %v2174
      %vm2513 = vcmp.gt.f32.partialorder %v1671, %v2174
      %vm2514 = vcmp.gt.f32.partialorder %v1680, %v2174
      %vm2515 = vcmp.gt.f32.partialorder %v1662, %v2177
      %vm2516 = vcmp.gt.f32.partialorder %v1671, %v2177
      %vm2517 = vcmp.gt.f32.partialorder %v1680, %v2177
      %v2518 = vsel %vm2494, 1, 0
      %v2519 = vsel %vm2495, 1, 0
      %v2520 = vsel %vm2496, 1, 0
      %v2521 = vsel %vm2497, 1, 0
      %v2522 = vsel %vm2498, 1, 0
      %v2523 = vsel %vm2499, 1, 0
      %v2524 = vsel %vm2500, 1, 0
      %v2525 = vsel %vm2501, 1, 0
      %v2526 = vsel %vm2502, 1, 0
      %v2527 = vsel %vm2503, 1, 0
      %v2528 = vsel %vm2504, 1, 0
      %v2529 = vsel %vm2505, 1, 0
      %v2530 = vsel %vm2506, 1, 0
      %v2531 = vsel %vm2507, 1, 0
      %v2532 = vsel %vm2508, 1, 0
      %v2533 = vsel %vm2509, 1, 0
      %v2534 = vsel %vm2510, 1, 0
      %v2535 = vsel %vm2511, 1, 0
      %v2536 = vsel %vm2512, 1, 0
      %v2537 = vsel %vm2513, 1, 0
      %v2538 = vsel %vm2514, 1, 0
      %v2539 = vsel %vm2515, 1, 0
      %v2540 = vsel %vm2516, 1, 0
      %v2541 = vsel %vm2517, 1, 0
      %v2542 = vcvt.s32.f32 %v2518
      %v2543 = vcvt.s32.f32 %v2519
      %v2544 = vcvt.s32.f32 %v2520
      %v2545 = vcvt.s32.f32 %v2521
      %v2546 = vcvt.s32.f32 %v2522
      %v2547 = vcvt.s32.f32 %v2523
      %v2548 = vcvt.s32.f32 %v2524
      %v2549 = vcvt.s32.f32 %v2525
      %v2550 = vcvt.s32.f32 %v2526
      %v2551 = vcvt.s32.f32 %v2527
      %v2552 = vcvt.s32.f32 %v2528
      %v2553 = vcvt.s32.f32 %v2529
      %v2554 = vcvt.s32.f32 %v2530
      %v2555 = vcvt.s32.f32 %v2531
      %v2556 = vcvt.s32.f32 %v2532
      %v2557 = vcvt.s32.f32 %v2533
      %v2558 = vcvt.s32.f32 %v2534
      %v2559 = vcvt.s32.f32 %v2535
      %v2560 = vcvt.s32.f32 %v2536
      %v2561 = vcvt.s32.f32 %v2537
      %v2562 = vcvt.s32.f32 %v2538
      %v2563 = vcvt.s32.f32 %v2539
      %v2564 = vcvt.s32.f32 %v2540
      %v2565 = vcvt.s32.f32 %v2541
      %v2566 = vadd.f32 %v2542, %v2543
      %v2567 = vadd.f32 %v2566, %v2544
      %2568 = vadd.xlane.f32.xlu0 %v2567
      %v2569 = vpop.xlane.xlu0 %2568
      %v2570 = vadd.f32 %v2545, %v2546
      %v2571 = vadd.f32 %v2570, %v2547
      %2572 = vadd.xlane.f32.xlu0 %v2571
      %v2573 = vpop.xlane.xlu0 %2572
      %v2574 = vadd.f32 %v2548, %v2549
      %v2575 = vadd.f32 %v2574, %v2550
      %2576 = vadd.xlane.f32.xlu0 %v2575
      %v2577 = vpop.xlane.xlu0 %2576
      %v2578 = vadd.f32 %v2551, %v2552
      %v2579 = vadd.f32 %v2578, %v2553
      %2580 = vadd.xlane.f32.xlu0 %v2579
      %v2581 = vpop.xlane.xlu0 %2580
      %v2582 = vadd.f32 %v2554, %v2555
      %v2583 = vadd.f32 %v2582, %v2556
      %2584 = vadd.xlane.f32.xlu0 %v2583
      %v2585 = vpop.xlane.xlu0 %2584
      %v2586 = vadd.f32 %v2557, %v2558
      %v2587 = vadd.f32 %v2586, %v2559
      %2588 = vadd.xlane.f32.xlu0 %v2587
      %v2589 = vpop.xlane.xlu0 %2588
      %v2590 = vadd.f32 %v2560, %v2561
      %v2591 = vadd.f32 %v2590, %v2562
      %2592 = vadd.xlane.f32.xlu0 %v2591
      %v2593 = vpop.xlane.xlu0 %2592
      %v2594 = vadd.f32 %v2563, %v2564
      %v2595 = vadd.f32 %v2594, %v2565
      %2596 = vadd.xlane.f32.xlu0 %v2595
      %v2597 = vpop.xlane.xlu0 %2596
      %vm2598 = vcmp.lt.f32.partialorder %v2569, 15.0
      %vm2599 = vcmp.lt.f32.partialorder %v2573, 15.0
      %vm2600 = vcmp.lt.f32.partialorder %v2577, 15.0
      %vm2601 = vcmp.lt.f32.partialorder %v2581, 15.0
      %vm2602 = vcmp.lt.f32.partialorder %v2585, 15.0
      %vm2603 = vcmp.lt.f32.partialorder %v2589, 15.0
      %vm2604 = vcmp.lt.f32.partialorder %v2593, 15.0
      %vm2605 = vcmp.lt.f32.partialorder %v2597, 15.0
      %v2606 = vsel %vm2598, %v2156, inf
      %v2607 = vsel %vm2599, %v2159, inf
      %v2608 = vsel %vm2600, %v2162, inf
      %v2609 = vsel %vm2601, %v2165, inf
      %v2610 = vsel %vm2602, %v2168, inf
      %v2611 = vsel %vm2603, %v2171, inf
      %v2612 = vsel %vm2604, %v2174, inf
      %v2613 = vsel %vm2605, %v2177, inf
      %v2614 = vmin.f32 %v2606, %v2610
      %v2615 = vmin.f32 %v2607, %v2611
      %v2616 = vmin.f32 %v2608, %v2612
      %v2617 = vmin.f32 %v2609, %v2613
      %v2618 = vmin.f32 %v2614, %v2615
      %v2619 = vmin.f32 %v2616, %v2617
      %v2620 = vmin.f32 %v2618, %v2619
      %v2621 = vrot.slane %v2620, 4
      %v2622 = vmin.f32 %v2620, %v2621
      %v2623 = vrot.slane %v2622, 2
      %v2624 = vmin.f32 %v2622, %v2623
      %v2625 = vrot.slane %v2624, 1
      %v2626 = vmin.f32 %v2624, %v2625
      %s2627 = vtos %v2626
      %vm2628 = vcmp.gt.f32.partialorder %v1662, %v2180
      %vm2629 = vcmp.gt.f32.partialorder %v1671, %v2180
      %vm2630 = vcmp.gt.f32.partialorder %v1680, %v2180
      %vm2631 = vcmp.gt.f32.partialorder %v1662, %v2183
      %vm2632 = vcmp.gt.f32.partialorder %v1671, %v2183
      %vm2633 = vcmp.gt.f32.partialorder %v1680, %v2183
      %vm2634 = vcmp.gt.f32.partialorder %v1662, %v2186
      %vm2635 = vcmp.gt.f32.partialorder %v1671, %v2186
      %vm2636 = vcmp.gt.f32.partialorder %v1680, %v2186
      %vm2637 = vcmp.gt.f32.partialorder %v1662, %v2189
      %vm2638 = vcmp.gt.f32.partialorder %v1671, %v2189
      %vm2639 = vcmp.gt.f32.partialorder %v1680, %v2189
      %vm2640 = vcmp.gt.f32.partialorder %v1662, %v2192
      %vm2641 = vcmp.gt.f32.partialorder %v1671, %v2192
      %vm2642 = vcmp.gt.f32.partialorder %v1680, %v2192
      %vm2643 = vcmp.gt.f32.partialorder %v1662, %v2195
      %vm2644 = vcmp.gt.f32.partialorder %v1671, %v2195
      %vm2645 = vcmp.gt.f32.partialorder %v1680, %v2195
      %vm2646 = vcmp.gt.f32.partialorder %v1662, %v2198
      %vm2647 = vcmp.gt.f32.partialorder %v1671, %v2198
      %vm2648 = vcmp.gt.f32.partialorder %v1680, %v2198
      %vm2649 = vcmp.gt.f32.partialorder %v1662, %v2201
      %vm2650 = vcmp.gt.f32.partialorder %v1671, %v2201
      %vm2651 = vcmp.gt.f32.partialorder %v1680, %v2201
      %v2652 = vsel %vm2628, 1, 0
      %v2653 = vsel %vm2629, 1, 0
      %v2654 = vsel %vm2630, 1, 0
      %v2655 = vsel %vm2631, 1, 0
      %v2656 = vsel %vm2632, 1, 0
      %v2657 = vsel %vm2633, 1, 0
      %v2658 = vsel %vm2634, 1, 0
      %v2659 = vsel %vm2635, 1, 0
      %v2660 = vsel %vm2636, 1, 0
      %v2661 = vsel %vm2637, 1, 0
      %v2662 = vsel %vm2638, 1, 0
      %v2663 = vsel %vm2639, 1, 0
      %v2664 = vsel %vm2640, 1, 0
      %v2665 = vsel %vm2641, 1, 0
      %v2666 = vsel %vm2642, 1, 0
      %v2667 = vsel %vm2643, 1, 0
      %v2668 = vsel %vm2644, 1, 0
      %v2669 = vsel %vm2645, 1, 0
      %v2670 = vsel %vm2646, 1, 0
      %v2671 = vsel %vm2647, 1, 0
      %v2672 = vsel %vm2648, 1, 0
      %v2673 = vsel %vm2649, 1, 0
      %v2674 = vsel %vm2650, 1, 0
      %v2675 = vsel %vm2651, 1, 0
      %v2676 = vcvt.s32.f32 %v2652
      %v2677 = vcvt.s32.f32 %v2653
      %v2678 = vcvt.s32.f32 %v2654
      %v2679 = vcvt.s32.f32 %v2655
      %v2680 = vcvt.s32.f32 %v2656
      %v2681 = vcvt.s32.f32 %v2657
      %v2682 = vcvt.s32.f32 %v2658
      %v2683 = vcvt.s32.f32 %v2659
      %v2684 = vcvt.s32.f32 %v2660
      %v2685 = vcvt.s32.f32 %v2661
      %v2686 = vcvt.s32.f32 %v2662
      %v2687 = vcvt.s32.f32 %v2663
      %v2688 = vcvt.s32.f32 %v2664
      %v2689 = vcvt.s32.f32 %v2665
      %v2690 = vcvt.s32.f32 %v2666
      %v2691 = vcvt.s32.f32 %v2667
      %v2692 = vcvt.s32.f32 %v2668
      %v2693 = vcvt.s32.f32 %v2669
      %v2694 = vcvt.s32.f32 %v2670
      %v2695 = vcvt.s32.f32 %v2671
      %v2696 = vcvt.s32.f32 %v2672
      %v2697 = vcvt.s32.f32 %v2673
      %v2698 = vcvt.s32.f32 %v2674
      %v2699 = vcvt.s32.f32 %v2675
      %v2700 = vadd.f32 %v2676, %v2677
      %v2701 = vadd.f32 %v2700, %v2678
      %2702 = vadd.xlane.f32.xlu0 %v2701
      %v2703 = vpop.xlane.xlu0 %2702
      %v2704 = vadd.f32 %v2679, %v2680
      %v2705 = vadd.f32 %v2704, %v2681
      %2706 = vadd.xlane.f32.xlu0 %v2705
      %v2707 = vpop.xlane.xlu0 %2706
      %v2708 = vadd.f32 %v2682, %v2683
      %v2709 = vadd.f32 %v2708, %v2684
      %2710 = vadd.xlane.f32.xlu0 %v2709
      %v2711 = vpop.xlane.xlu0 %2710
      %v2712 = vadd.f32 %v2685, %v2686
      %v2713 = vadd.f32 %v2712, %v2687
      %2714 = vadd.xlane.f32.xlu0 %v2713
      %v2715 = vpop.xlane.xlu0 %2714
      %v2716 = vadd.f32 %v2688, %v2689
      %v2717 = vadd.f32 %v2716, %v2690
      %2718 = vadd.xlane.f32.xlu0 %v2717
      %v2719 = vpop.xlane.xlu0 %2718
      %v2720 = vadd.f32 %v2691, %v2692
      %v2721 = vadd.f32 %v2720, %v2693
      %2722 = vadd.xlane.f32.xlu0 %v2721
      %v2723 = vpop.xlane.xlu0 %2722
      %v2724 = vadd.f32 %v2694, %v2695
      %v2725 = vadd.f32 %v2724, %v2696
      %2726 = vadd.xlane.f32.xlu0 %v2725
      %v2727 = vpop.xlane.xlu0 %2726
      %v2728 = vadd.f32 %v2697, %v2698
      %v2729 = vadd.f32 %v2728, %v2699
      %2730 = vadd.xlane.f32.xlu0 %v2729
      %v2731 = vpop.xlane.xlu0 %2730
      %vm2732 = vcmp.lt.f32.partialorder %v2703, 15.0
      %vm2733 = vcmp.lt.f32.partialorder %v2707, 15.0
      %vm2734 = vcmp.lt.f32.partialorder %v2711, 15.0
      %vm2735 = vcmp.lt.f32.partialorder %v2715, 15.0
      %vm2736 = vcmp.lt.f32.partialorder %v2719, 15.0
      %vm2737 = vcmp.lt.f32.partialorder %v2723, 15.0
      %vm2738 = vcmp.lt.f32.partialorder %v2727, 15.0
      %vm2739 = vcmp.lt.f32.partialorder %v2731, 15.0
      %v2740 = vsel %vm2732, %v2180, inf
      %v2741 = vsel %vm2733, %v2183, inf
      %v2742 = vsel %vm2734, %v2186, inf
      %v2743 = vsel %vm2735, %v2189, inf
      %v2744 = vsel %vm2736, %v2192, inf
      %v2745 = vsel %vm2737, %v2195, inf
      %v2746 = vsel %vm2738, %v2198, inf
      %v2747 = vsel %vm2739, %v2201, inf
      %v2748 = vmin.f32 %v2740, %v2744
      %v2749 = vmin.f32 %v2741, %v2745
      %v2750 = vmin.f32 %v2742, %v2746
      %v2751 = vmin.f32 %v2743, %v2747
      %v2752 = vmin.f32 %v2748, %v2749
      %v2753 = vmin.f32 %v2750, %v2751
      %v2754 = vmin.f32 %v2752, %v2753
      %v2755 = vrot.slane %v2754, 4
      %v2756 = vmin.f32 %v2754, %v2755
      %v2757 = vrot.slane %v2756, 2
      %v2758 = vmin.f32 %v2756, %v2757
      %v2759 = vrot.slane %v2758, 1
      %v2760 = vmin.f32 %v2758, %v2759
      %s2761 = vtos %v2760
      %vm2762 = vcmp.gt.f32.partialorder %v1662, %v2204
      %vm2763 = vcmp.gt.f32.partialorder %v1671, %v2204
      %vm2764 = vcmp.gt.f32.partialorder %v1680, %v2204
      %vm2765 = vcmp.gt.f32.partialorder %v1662, %v2207
      %vm2766 = vcmp.gt.f32.partialorder %v1671, %v2207
      %vm2767 = vcmp.gt.f32.partialorder %v1680, %v2207
      %vm2768 = vcmp.gt.f32.partialorder %v1662, %v2210
      %vm2769 = vcmp.gt.f32.partialorder %v1671, %v2210
      %vm2770 = vcmp.gt.f32.partialorder %v1680, %v2210
      %vm2771 = vcmp.gt.f32.partialorder %v1662, %v2213
      %vm2772 = vcmp.gt.f32.partialorder %v1671, %v2213
      %vm2773 = vcmp.gt.f32.partialorder %v1680, %v2213
      %vm2774 = vcmp.gt.f32.partialorder %v1662, %v2216
      %vm2775 = vcmp.gt.f32.partialorder %v1671, %v2216
      %vm2776 = vcmp.gt.f32.partialorder %v1680, %v2216
      %vm2777 = vcmp.gt.f32.partialorder %v1662, %v2219
      %vm2778 = vcmp.gt.f32.partialorder %v1671, %v2219
      %vm2779 = vcmp.gt.f32.partialorder %v1680, %v2219
      %vm2780 = vcmp.gt.f32.partialorder %v1662, %v2222
      %vm2781 = vcmp.gt.f32.partialorder %v1671, %v2222
      %vm2782 = vcmp.gt.f32.partialorder %v1680, %v2222
      %vm2783 = vcmp.gt.f32.partialorder %v1662, %v2225
      %vm2784 = vcmp.gt.f32.partialorder %v1671, %v2225
      %vm2785 = vcmp.gt.f32.partialorder %v1680, %v2225
      %v2786 = vsel %vm2762, 1, 0
      %v2787 = vsel %vm2763, 1, 0
      %v2788 = vsel %vm2764, 1, 0
      %v2789 = vsel %vm2765, 1, 0
      %v2790 = vsel %vm2766, 1, 0
      %v2791 = vsel %vm2767, 1, 0
      %v2792 = vsel %vm2768, 1, 0
      %v2793 = vsel %vm2769, 1, 0
      %v2794 = vsel %vm2770, 1, 0
      %v2795 = vsel %vm2771, 1, 0
      %v2796 = vsel %vm2772, 1, 0
      %v2797 = vsel %vm2773, 1, 0
      %v2798 = vsel %vm2774, 1, 0
      %v2799 = vsel %vm2775, 1, 0
      %v2800 = vsel %vm2776, 1, 0
      %v2801 = vsel %vm2777, 1, 0
      %v2802 = vsel %vm2778, 1, 0
      %v2803 = vsel %vm2779, 1, 0
      %v2804 = vsel %vm2780, 1, 0
      %v2805 = vsel %vm2781, 1, 0
      %v2806 = vsel %vm2782, 1, 0
      %v2807 = vsel %vm2783, 1, 0
      %v2808 = vsel %vm2784, 1, 0
      %v2809 = vsel %vm2785, 1, 0
      %v2810 = vcvt.s32.f32 %v2786
      %v2811 = vcvt.s32.f32 %v2787
      %v2812 = vcvt.s32.f32 %v2788
      %v2813 = vcvt.s32.f32 %v2789
      %v2814 = vcvt.s32.f32 %v2790
      %v2815 = vcvt.s32.f32 %v2791
      %v2816 = vcvt.s32.f32 %v2792
      %v2817 = vcvt.s32.f32 %v2793
      %v2818 = vcvt.s32.f32 %v2794
      %v2819 = vcvt.s32.f32 %v2795
      %v2820 = vcvt.s32.f32 %v2796
      %v2821 = vcvt.s32.f32 %v2797
      %v2822 = vcvt.s32.f32 %v2798
      %v2823 = vcvt.s32.f32 %v2799
      %v2824 = vcvt.s32.f32 %v2800
      %v2825 = vcvt.s32.f32 %v2801
      %v2826 = vcvt.s32.f32 %v2802
      %v2827 = vcvt.s32.f32 %v2803
      %v2828 = vcvt.s32.f32 %v2804
      %v2829 = vcvt.s32.f32 %v2805
      %v2830 = vcvt.s32.f32 %v2806
      %v2831 = vcvt.s32.f32 %v2807
      %v2832 = vcvt.s32.f32 %v2808
      %v2833 = vcvt.s32.f32 %v2809
      %v2834 = vadd.f32 %v2810, %v2811
      %v2835 = vadd.f32 %v2834, %v2812
      %2836 = vadd.xlane.f32.xlu0 %v2835
      %v2837 = vpop.xlane.xlu0 %2836
      %v2838 = vadd.f32 %v2813, %v2814
      %v2839 = vadd.f32 %v2838, %v2815
      %2840 = vadd.xlane.f32.xlu0 %v2839
      %v2841 = vpop.xlane.xlu0 %2840
      %v2842 = vadd.f32 %v2816, %v2817
      %v2843 = vadd.f32 %v2842, %v2818
      %2844 = vadd.xlane.f32.xlu0 %v2843
      %v2845 = vpop.xlane.xlu0 %2844
      %v2846 = vadd.f32 %v2819, %v2820
      %v2847 = vadd.f32 %v2846, %v2821
      %2848 = vadd.xlane.f32.xlu0 %v2847
      %v2849 = vpop.xlane.xlu0 %2848
      %v2850 = vadd.f32 %v2822, %v2823
      %v2851 = vadd.f32 %v2850, %v2824
      %2852 = vadd.xlane.f32.xlu0 %v2851
      %v2853 = vpop.xlane.xlu0 %2852
      %v2854 = vadd.f32 %v2825, %v2826
      %v2855 = vadd.f32 %v2854, %v2827
      %2856 = vadd.xlane.f32.xlu0 %v2855
      %v2857 = vpop.xlane.xlu0 %2856
      %v2858 = vadd.f32 %v2828, %v2829
      %v2859 = vadd.f32 %v2858, %v2830
      %2860 = vadd.xlane.f32.xlu0 %v2859
      %v2861 = vpop.xlane.xlu0 %2860
      %v2862 = vadd.f32 %v2831, %v2832
      %v2863 = vadd.f32 %v2862, %v2833
      %2864 = vadd.xlane.f32.xlu0 %v2863
      %v2865 = vpop.xlane.xlu0 %2864
      %vm2866 = vcmp.lt.f32.partialorder %v2837, 15.0
      %vm2867 = vcmp.lt.f32.partialorder %v2841, 15.0
      %vm2868 = vcmp.lt.f32.partialorder %v2845, 15.0
      %vm2869 = vcmp.lt.f32.partialorder %v2849, 15.0
      %vm2870 = vcmp.lt.f32.partialorder %v2853, 15.0
      %vm2871 = vcmp.lt.f32.partialorder %v2857, 15.0
      %vm2872 = vcmp.lt.f32.partialorder %v2861, 15.0
      %vm2873 = vcmp.lt.f32.partialorder %v2865, 15.0
      %v2874 = vsel %vm2866, %v2204, inf
      %v2875 = vsel %vm2867, %v2207, inf
      %v2876 = vsel %vm2868, %v2210, inf
      %v2877 = vsel %vm2869, %v2213, inf
      %v2878 = vsel %vm2870, %v2216, inf
      %v2879 = vsel %vm2871, %v2219, inf
      %v2880 = vsel %vm2872, %v2222, inf
      %v2881 = vsel %vm2873, %v2225, inf
      %v2882 = vmin.f32 %v2874, %v2878
      %v2883 = vmin.f32 %v2875, %v2879
      %v2884 = vmin.f32 %v2876, %v2880
      %v2885 = vmin.f32 %v2877, %v2881
      %v2886 = vmin.f32 %v2882, %v2883
      %v2887 = vmin.f32 %v2884, %v2885
      %v2888 = vmin.f32 %v2886, %v2887
      %v2889 = vrot.slane %v2888, 4
      %v2890 = vmin.f32 %v2888, %v2889
      %v2891 = vrot.slane %v2890, 2
      %v2892 = vmin.f32 %v2890, %v2891
      %v2893 = vrot.slane %v2892, 1
      %v2894 = vmin.f32 %v2892, %v2893
      %s2895 = vtos %v2894
      %s2896 = smin.f32 %s2359, %s2493
      %s2897 = smin.f32 %s2896, %s2627
      %s2898 = smin.f32 %s2897, %s2761
      %s2899 = smin.f32 %s2898, %s2895
      %v2900 = vstv %s2899
      %vm2901 = vcmp.ge.f32.partialorder %v1307, %v2900
      %vm2902 = vcmp.ge.f32.partialorder %v1308, %v2900
      %vm2903 = vcmp.ge.f32.partialorder %v1309, %v2900
      %vm2904 = vcmp.ge.f32.partialorder %v1310, %v2900
      %vm2905 = vmor %vm2901, %vm586
      %vm2906 = vmor %vm2902, %vm587
      %vm2907 = vmor %vm2903, %vm588
      %vm2908 = vmor %vm2904, %vm589
      %v2909 = vsel %vm2905, %v1307, 0.0
      %v2910 = vsel %vm2906, %v1308, 0.0
      %v2911 = vsel %vm2907, %v1309, 0.0
      %v2912 = vsel %vm2908, %v1310, 0.0
      %v2913 = vadd.f32 %v2909, %v577
      %v2914 = vadd.f32 %v2910, %v578
      %v2915 = vadd.f32 %v2911, %v579
      %v2916 = vadd.f32 %v2912, %v580
      %v2917 = vmul.f32 %v2913, 0.5
      %v2918 = vmul.f32 %v2914, 0.5
      %v2919 = vmul.f32 %v2915, 0.5
      %v2920 = vmul.f32 %v2916, 0.5
      %v2921 = vsel %vm1455, %v2917, 0.0
      %2922 = vadd.xlane.f32.xlu0 %v2921
      %v2923 = vpop.xlane.xlu0 %2922
      %v2924 = vsel %vm1455, %v2918, 0.0
      %2925 = vadd.xlane.f32.xlu0 %v2924
      %v2926 = vpop.xlane.xlu0 %2925
      %v2927 = vsel %vm1455, %v2919, 0.0
      %2928 = vadd.xlane.f32.xlu0 %v2927
      %v2929 = vpop.xlane.xlu0 %2928
      %v2930 = vsel %vm1455, %v2920, 0.0
      %2931 = vadd.xlane.f32.xlu0 %v2930
      %v2932 = vpop.xlane.xlu0 %2931
      %v2933 = vrcp.pop %v2923
      %v2934 = vmul.f32 %v2917, %v2933
      %v2935 = vrcp.pop %v2926
      %v2936 = vmul.f32 %v2918, %v2935
      %v2937 = vrcp.pop %v2929
      %v2938 = vmul.f32 %v2919, %v2937
      %v2939 = vrcp.pop %v2932
      %v2940 = vmul.f32 %v2920, %v2939
      %v2941 = vpack.c.bf16 %v1452, %v1451
      %v2942 = vpack.c.bf16 %v1454, %v1453
      %s2943 = scalar_lea.vmem %s3, 96
      %v2944 = vld [vmem:[%s2943] sm:$0xf]
      %v2945 = vld [vmem:[%s2943 + $0x4] sm:$0xf]
      %v2946 = vld [vmem:[%s2943 + $0x8] sm:$0xf]
      %v2947 = vld [vmem:[%s2943 + $0xc] sm:$0xf]
      %v2948 = vld [vmem:[%s2943 + $0x10] sm:$0xf]
      %v2949 = vld [vmem:[%s2943 + $0x14] sm:$0xf]
      %v2950 = vld [vmem:[%s2943 + $0x18] sm:$0xf]
      %v2951 = vld [vmem:[%s2943 + $0x1c] sm:$0xf]
      %v2960 = vunpack.c.l.b16 %v2944
      %v2961 = vunpack.c.l.b16 %v2945
      %v2962 = vunpack.c.l.b16 %v2946
      %v2963 = vunpack.c.l.b16 %v2947
      %v2964 = vunpack.c.l.b16 %v2948
      %v2965 = vunpack.c.l.b16 %v2949
      %v2966 = vunpack.c.l.b16 %v2950
      %v2967 = vunpack.c.l.b16 %v2951
      %v2968 = vpack.c.b16 %v2961, %v2960
      %v2969 = vpack.c.b16 %v2963, %v2962
      %v2970 = vpack.c.b16 %v2965, %v2964
      %v2971 = vpack.c.b16 %v2967, %v2966
      %v2977 = vsel %vm506, %v2941, 0
      %v2980 = vsel %vm506, %v2942, 0
      %2982 = vmatprep.subr.bf16.mxu0 0
      %2983 = vmatpush1.bf16.msra.mxu0 %v2968
      %2984 = vmatprep.subr.bf16.mxu0 0
      %2985 = vmatpush1.bf16.msra.mxu0 %v2969
      %2986 = vmatprep.subr.bf16.mxu0 0
      %2987 = vmatpush1.bf16.msra.mxu0 %v2970
      %2988 = vmatprep.subr.bf16.mxu0 0
      %2989 = vmatpush1.bf16.msra.mxu0 %v2971
      %2990 = vmatprep.subr.bf16.mxu0 0
      %2991 = vmatpush1.bf16.msra.mxu0 0
      %2992 = vmatprep.subr.bf16.mxu0 0
      %2993 = vmatpush1.bf16.msra.mxu0 0
      %2994 = vmatprep.subr.bf16.mxu0 0
      %2995 = vmatpush1.bf16.msra.mxu0 0
      %2996 = vmatprep.subr.bf16.mxu0 0
      %2997 = vmatpush1.bf16.msra.mxu0 0
      %2998 = vmatprep.subr.bf16.mxu0 0
      %2999 = vmatpush1.bf16.msra.mxu0 0
      %3000 = vmatprep.subr.bf16.mxu0 0
      %3001 = vmatpush1.bf16.msra.mxu0 0
      %3002 = vmatprep.subr.bf16.mxu0 0
      %3003 = vmatpush1.bf16.msra.mxu0 0
      %3004 = vmatprep.subr.bf16.mxu0 0
      %3005 = vmatpush1.bf16.msra.mxu0 0
      %3006 = vmatprep.subr.bf16.mxu0 0
      %3007 = vmatpush1.bf16.msra.mxu0 0
      %3008 = vmatprep.subr.bf16.mxu0 0
      %3009 = vmatpush1.bf16.msra.mxu0 0
      %3010 = vmatprep.subr.bf16.mxu0 0
      %3011 = vmatpush1.bf16.msra.mxu0 0
      %3012 = vmatprep.subr.bf16.mxu0 0
      %3013 = vmatpush1.bf16.msra.mxu0 0
      %3014 = vmatprep.mubr.bf16.mxu0 0
      %3015 = vmatmul.mubr.bf16.gmra.mrb[0].mxu0 %v2977
      %v3016 = vpop.f32.mrb[0].mxu0
      %v3017 = vadd.f32 0.0, %v3016
      %v3018 = vpop.f32.mrb[0].mxu0
      %v3019 = vpop.f32.mrb[0].mxu0
      %v3020 = vadd.f32 0.0, %v3019
      %v3021 = vpop.f32.mrb[0].mxu0
      %3022 = vmatprep.mubr.bf16.mxu0 0
      %3023 = vmatmul.mubr.bf16.gmra.mrb[0].mxu0 %v2980
      %v3024 = vpop.f32.mrb[0].mxu0
      %v3025 = vadd.f32 0.0, %v3024
      %v3026 = vpop.f32.mrb[0].mxu0
      %v3027 = vpop.f32.mrb[0].mxu0
      %v3028 = vadd.f32 0.0, %v3027
      %v3029 = vpop.f32.mrb[0].mxu0
      %3030 = vdwg.mxu0
      %s3031 = scalar_lea.vmem %s3, 128
      %v3032 = vld [vmem:[%s3031] sm:$0xf]
      %v3033 = vld [vmem:[%s3031 + $0x4] sm:$0xf]
      %v3034 = vld [vmem:[%s3031 + $0x8] sm:$0xf]
      %v3035 = vld [vmem:[%s3031 + $0xc] sm:$0xf]
      %v3036 = vld [vmem:[%s3031 + $0x10] sm:$0xf]
      %v3037 = vld [vmem:[%s3031 + $0x14] sm:$0xf]
      %v3038 = vld [vmem:[%s3031 + $0x18] sm:$0xf]
      %v3039 = vld [vmem:[%s3031 + $0x1c] sm:$0xf]
      %v3048 = vunpack.c.l.b16 %v3032
      %v3049 = vunpack.c.l.b16 %v3033
      %v3050 = vunpack.c.l.b16 %v3034
      %v3051 = vunpack.c.l.b16 %v3035
      %v3052 = vunpack.c.l.b16 %v3036
      %v3053 = vunpack.c.l.b16 %v3037
      %v3054 = vunpack.c.l.b16 %v3038
      %v3055 = vunpack.c.l.b16 %v3039
      %v3056 = vpack.c.b16 %v3049, %v3048
      %v3057 = vpack.c.b16 %v3051, %v3050
      %v3058 = vpack.c.b16 %v3053, %v3052
      %v3059 = vpack.c.b16 %v3055, %v3054
      %3064 = vmatprep.subr.bf16.mxu0 0
      %3065 = vmatpush1.bf16.msra.mxu0 %v3056
      %3066 = vmatprep.subr.bf16.mxu0 0
      %3067 = vmatpush1.bf16.msra.mxu0 %v3057
      %3068 = vmatprep.subr.bf16.mxu0 0
      %3069 = vmatpush1.bf16.msra.mxu0 %v3058
      %3070 = vmatprep.subr.bf16.mxu0 0
      %3071 = vmatpush1.bf16.msra.mxu0 %v3059
      %3072 = vmatprep.subr.bf16.mxu0 0
      %3073 = vmatpush1.bf16.msra.mxu0 0
      %3074 = vmatprep.subr.bf16.mxu0 0
      %3075 = vmatpush1.bf16.msra.mxu0 0
      %3076 = vmatprep.subr.bf16.mxu0 0
      %3077 = vmatpush1.bf16.msra.mxu0 0
      %3078 = vmatprep.subr.bf16.mxu0 0
      %3079 = vmatpush1.bf16.msra.mxu0 0
      %3080 = vmatprep.subr.bf16.mxu0 0
      %3081 = vmatpush1.bf16.msra.mxu0 0
      %3082 = vmatprep.subr.bf16.mxu0 0
      %3083 = vmatpush1.bf16.msra.mxu0 0
      %3084 = vmatprep.subr.bf16.mxu0 0
      %3085 = vmatpush1.bf16.msra.mxu0 0
      %3086 = vmatprep.subr.bf16.mxu0 0
      %3087 = vmatpush1.bf16.msra.mxu0 0
      %3088 = vmatprep.subr.bf16.mxu0 0
      %3089 = vmatpush1.bf16.msra.mxu0 0
      %3090 = vmatprep.subr.bf16.mxu0 0
      %3091 = vmatpush1.bf16.msra.mxu0 0
      %3092 = vmatprep.subr.bf16.mxu0 0
      %3093 = vmatpush1.bf16.msra.mxu0 0
      %3094 = vmatprep.subr.bf16.mxu0 0
      %3095 = vmatpush1.bf16.msra.mxu0 0
      %3096 = vmatprep.mubr.bf16.mxu0 0
      %3097 = vmatmul.mubr.bf16.gmra.mrb[0].mxu0 %v2977
      %v3098 = vpop.f32.mrb[0].mxu0
      %v3099 = vadd.f32 0.0, %v3098
      %v3100 = vpop.f32.mrb[0].mxu0
      %v3101 = vpop.f32.mrb[0].mxu0
      %v3102 = vadd.f32 0.0, %v3101
      %v3103 = vpop.f32.mrb[0].mxu0
      %3104 = vmatprep.mubr.bf16.mxu0 0
      %3105 = vmatmul.mubr.bf16.gmra.mrb[0].mxu0 %v2980
      %v3106 = vpop.f32.mrb[0].mxu0
      %v3107 = vadd.f32 0.0, %v3106
      %v3108 = vpop.f32.mrb[0].mxu0
      %v3109 = vpop.f32.mrb[0].mxu0
      %v3110 = vadd.f32 0.0, %v3109
      %v3111 = vpop.f32.mrb[0].mxu0
      %3112 = vdwg.mxu0
      %v3113 = vpack.c.bf16 %v3102, %v3099
      %v3114 = vpack.c.bf16 %v3110, %v3107
      %v3115 = vmul.bf16 %v3113, %v1027
      %v3116 = vmul.bf16 %v3114, %v1028
      %v3117 = vmul.bf16 %v3113, %v1029
      %v3118 = vmul.bf16 %v3114, %v1030
      %v3119 = vmul.bf16 %v3113, %v1031
      %v3120 = vmul.bf16 %v3114, %v1032
      %v3121 = vmul.bf16 %v3113, %v1033
      %v3122 = vmul.bf16 %v3114, %v1034
      %v3123 = vpack.c.bf16 %v3020, %v3017
      %v3124 = vpack.c.bf16 %v3028, %v3025
      %v3126 = vsel %vm506, %v3123, 0
      %v3129 = vsel %vm506, %v3124, 0
      %v3132 = vsel %vm506, %v3115, 0
      %v3135 = vsel %vm506, %v3116, 0
      %v3138 = vsel %vm506, %v3117, 0
      %v3141 = vsel %vm506, %v3118, 0
      %v3144 = vsel %vm506, %v3119, 0
      %v3147 = vsel %vm506, %v3120, 0
      %v3150 = vsel %vm506, %v3121, 0
      %v3153 = vsel %vm506, %v3122, 0
      %3155 = vmatprep.subr.bf16.mxu0 0
      %3156 = vmatpush1.bf16.xpose.msra.mxu0 %v3132
      %3157 = vmatprep.subr.bf16.mxu0 0
      %3158 = vmatpush1.bf16.xpose.msra.mxu0 %v3135
      %3159 = vmatprep.subr.bf16.mxu0 0
      %3160 = vmatpush1.bf16.xpose.msra.mxu0 %v3138
      %3161 = vmatprep.subr.bf16.mxu0 0
      %3162 = vmatpush1.bf16.xpose.msra.mxu0 %v3141
      %3163 = vmatprep.subr.bf16.mxu0 0
      %3164 = vmatpush1.bf16.xpose.msra.mxu0 %v3144
      %3165 = vmatprep.subr.bf16.mxu0 0
      %3166 = vmatpush1.bf16.xpose.msra.mxu0 %v3147
      %3167 = vmatprep.subr.bf16.mxu0 0
      %3168 = vmatpush1.bf16.xpose.msra.mxu0 %v3150
      %3169 = vmatprep.subr.bf16.mxu0 0
      %3170 = vmatpush1.bf16.xpose.msra.mxu0 %v3153
      %3171 = vmatprep.subr.bf16.mxu0 0
      %3172 = vmatpush1.bf16.xpose.msra.mxu0 0
      %3173 = vmatprep.subr.bf16.mxu0 0
      %3174 = vmatpush1.bf16.xpose.msra.mxu0 0
      %3175 = vmatprep.subr.bf16.mxu0 0
      %3176 = vmatpush1.bf16.xpose.msra.mxu0 0
      %3177 = vmatprep.subr.bf16.mxu0 0
      %3178 = vmatpush1.bf16.xpose.msra.mxu0 0
      %3179 = vmatprep.subr.bf16.mxu0 0
      %3180 = vmatpush1.bf16.xpose.msra.mxu0 0
      %3181 = vmatprep.subr.bf16.mxu0 0
      %3182 = vmatpush1.bf16.xpose.msra.mxu0 0
      %3183 = vmatprep.subr.bf16.mxu0 0
      %3184 = vmatpush1.bf16.xpose.msra.mxu0 0
      %3185 = vmatprep.subr.bf16.mxu0 0
      %3186 = vmatpush1.bf16.xpose.msra.mxu0 0
      %3187 = vmatprep.mubr.bf16.mxu0 0
      %3188 = vmatmul.mubr.bf16.gmra.mrb[0].mxu0 %v3126
      %v3189 = vpop.f32.mrb[0].mxu0
      %v3190 = vadd.f32 %v603, %v3189
      %v3191 = vpop.f32.mrb[0].mxu0
      %v3192 = vpop.f32.mrb[0].mxu0
      %v3193 = vadd.f32 %v603, %v3192
      %v3194 = vpop.f32.mrb[0].mxu0
      %3195 = vmatprep.mubr.bf16.mxu0 0
      %3196 = vmatmul.mubr.bf16.gmra.mrb[0].mxu0 %v3129
      %v3197 = vpop.f32.mrb[0].mxu0
      %v3198 = vadd.f32 %v603, %v3197
      %v3199 = vpop.f32.mrb[0].mxu0
      %v3200 = vpop.f32.mrb[0].mxu0
      %v3201 = vadd.f32 %v603, %v3200
      %v3202 = vpop.f32.mrb[0].mxu0
      %3203 = vdwg.mxu0
      %3204 = vmax.xlane.f32.xlu0 %v3190
      %v3205 = vpop.xlane.xlu0 %3204
      %3206 = vmax.xlane.f32.xlu0 %v3193
      %v3207 = vpop.xlane.xlu0 %3206
      %3208 = vmax.xlane.f32.xlu0 %v3198
      %v3209 = vpop.xlane.xlu0 %3208
      %3210 = vmax.xlane.f32.xlu0 %v3201
      %v3211 = vpop.xlane.xlu0 %3210
      %v3212 = vsub.f32 %v3190, %v3205
      %v3213 = vsub.f32 %v3193, %v3207
      %v3214 = vsub.f32 %v3198, %v3209
      %v3215 = vsub.f32 %v3201, %v3211
      %v3216 = vmul.f32 %v3212, 1.442695
      %v3217 = vpow.pop %v3216
      %v3218 = vmul.f32 %v3213, 1.442695
      %v3219 = vpow.pop %v3218
      %v3220 = vmul.f32 %v3214, 1.442695
      %v3221 = vpow.pop %v3220
      %v3222 = vmul.f32 %v3215, 1.442695
      %v3223 = vpow.pop %v3222
      %3224 = vmatprep.subr.bf16.mxu0 0
      %3225 = vmatpush1.bf16.msra.mxu0 %v1194
      %3226 = vmatprep.subr.bf16.mxu0 0
      %3227 = vmatpush1.bf16.msra.mxu0 %v1195
      %3228 = vmatprep.subr.bf16.mxu0 0
      %3229 = vmatpush1.bf16.msra.mxu0 %v1196
      %3230 = vmatprep.subr.bf16.mxu0 0
      %3231 = vmatpush1.bf16.msra.mxu0 %v1197
      %3232 = vmatprep.subr.bf16.mxu0 0
      %3233 = vmatpush1.bf16.msra.mxu0 %v1198
      %3234 = vmatprep.subr.bf16.mxu0 0
      %3235 = vmatpush1.bf16.msra.mxu0 %v1199
      %3236 = vmatprep.subr.bf16.mxu0 0
      %3237 = vmatpush1.bf16.msra.mxu0 %v1200
      %3238 = vmatprep.subr.bf16.mxu0 0
      %3239 = vmatpush1.bf16.msra.mxu0 %v1201
      %3240 = vmatprep.subr.bf16.mxu0 0
      %3241 = vmatpush1.bf16.msra.mxu0 0
      %3242 = vmatprep.subr.bf16.mxu0 0
      %3243 = vmatpush1.bf16.msra.mxu0 0
      %3244 = vmatprep.subr.bf16.mxu0 0
      %3245 = vmatpush1.bf16.msra.mxu0 0
      %3246 = vmatprep.subr.bf16.mxu0 0
      %3247 = vmatpush1.bf16.msra.mxu0 0
      %3248 = vmatprep.subr.bf16.mxu0 0
      %3249 = vmatpush1.bf16.msra.mxu0 0
      %3250 = vmatprep.subr.bf16.mxu0 0
      %3251 = vmatpush1.bf16.msra.mxu0 0
      %3252 = vmatprep.subr.bf16.mxu0 0
      %3253 = vmatpush1.bf16.msra.mxu0 0
      %3254 = vmatprep.subr.bf16.mxu0 0
      %3255 = vmatpush1.bf16.msra.mxu0 0
      %3256 = vmatprep.mubr.f32.mxu0 0.0
      %3257 = vmatmul.mubr.f32.gmra.mrb[0].mxu0 %v3217
      %v3258 = vpop.f32.mrb[0].mxu0
      %v3259 = vadd.f32 0.0, %v3258
      %v3260 = vpop.f32.mrb[0].mxu0
      %3261 = vmatprep.mubr.f32.mxu0 0.0
      %3262 = vmatmul.mubr.f32.gmra.mrb[0].mxu0 %v3219
      %v3263 = vpop.f32.mrb[0].mxu0
      %v3264 = vadd.f32 0.0, %v3263
      %v3265 = vpop.f32.mrb[0].mxu0
      %3266 = vmatprep.mubr.f32.mxu0 0.0
      %3267 = vmatmul.mubr.f32.gmra.mrb[0].mxu0 %v3221
      %v3268 = vpop.f32.mrb[0].mxu0
      %v3269 = vadd.f32 0.0, %v3268
      %v3270 = vpop.f32.mrb[0].mxu0
      %3271 = vmatprep.mubr.f32.mxu0 0.0
      %3272 = vmatmul.mubr.f32.gmra.mrb[0].mxu0 %v3223
      %v3273 = vpop.f32.mrb[0].mxu0
      %v3274 = vadd.f32 0.0, %v3273
      %v3275 = vpop.f32.mrb[0].mxu0
      %3276 = vdwg.mxu0
      %v3277 = vrcp.pop %v3259
      %v3278 = vmul.f32 %v3217, %v3277
      %v3279 = vrcp.pop %v3264
      %v3280 = vmul.f32 %v3219, %v3279
      %v3281 = vrcp.pop %v3269
      %v3282 = vmul.f32 %v3221, %v3281
      %v3283 = vrcp.pop %v3274
      %v3284 = vmul.f32 %v3223, %v3283
      %3289 = vrot.lane.b32.xlu0 %v3278, 96
      %v3290 = vpop.permute.xlu0 %3289
      %3291 = vrot.lane.b32.xlu0 %v3280, 96
      %v3292 = vpop.permute.xlu0 %3291
      %3293 = vrot.lane.b32.xlu0 %v3282, 96
      %v3294 = vpop.permute.xlu0 %3293
      %3295 = vrot.lane.b32.xlu0 %v3284, 96
      %v3296 = vpop.permute.xlu0 %3295
      %v3301 = vmax.f32 %v3278, %v3290
      %v3302 = vmax.f32 %v3280, %v3292
      %v3303 = vmax.f32 %v3282, %v3294
      %v3304 = vmax.f32 %v3284, %v3296
      %3309 = vrot.lane.b32.xlu0 %v3301, 64
      %v3310 = vpop.permute.xlu0 %3309
      %3311 = vrot.lane.b32.xlu0 %v3302, 64
      %v3312 = vpop.permute.xlu0 %3311
      %3313 = vrot.lane.b32.xlu0 %v3303, 64
      %v3314 = vpop.permute.xlu0 %3313
      %3315 = vrot.lane.b32.xlu0 %v3304, 64
      %v3316 = vpop.permute.xlu0 %3315
      %v3321 = vmax.f32 %v3301, %v3310
      %v3322 = vmax.f32 %v3302, %v3312
      %v3323 = vmax.f32 %v3303, %v3314
      %v3324 = vmax.f32 %v3304, %v3316
      %v3326 = vsel %vm1455, %v3321, 0
      %v3329 = vsel %vm1455, %v3322, 0
      %v3332 = vsel %vm1455, %v3323, 0
      %v3335 = vsel %vm1455, %v3324, 0
      %3337 = vmatprep.subr.mxu0 %v637
      %3338 = vmatpush1.msra.mxu0 %v636
      %3339 = vmatprep.subr.mxu0 %v640
      %3340 = vmatpush1.msra.mxu0 %v639
      %3341 = vmatprep.subr.mxu0 %v643
      %3342 = vmatpush1.msra.mxu0 %v642
      %3343 = vmatprep.subr.mxu0 %v646
      %3344 = vmatpush1.msra.mxu0 %v645
      %3345 = vmatprep.subr.mxu0 0.0
      %3346 = vmatpush1.msra.mxu0 0.0
      %3347 = vmatprep.subr.mxu0 0.0
      %3348 = vmatpush1.msra.mxu0 0.0
      %3349 = vmatprep.subr.mxu0 0.0
      %3350 = vmatpush1.msra.mxu0 0.0
      %3351 = vmatprep.subr.mxu0 0.0
      %3352 = vmatpush1.msra.mxu0 0.0
      %3353 = vmatprep.subr.mxu0 0.0
      %3354 = vmatpush1.msra.mxu0 0.0
      %3355 = vmatprep.subr.mxu0 0.0
      %3356 = vmatpush1.msra.mxu0 0.0
      %3357 = vmatprep.subr.mxu0 0.0
      %3358 = vmatpush1.msra.mxu0 0.0
      %3359 = vmatprep.subr.mxu0 0.0
      %3360 = vmatpush1.msra.mxu0 0.0
      %3361 = vmatprep.subr.mxu0 0.0
      %3362 = vmatpush1.msra.mxu0 0.0
      %3363 = vmatprep.subr.mxu0 0.0
      %3364 = vmatpush1.msra.mxu0 0.0
      %3365 = vmatprep.subr.mxu0 0.0
      %3366 = vmatpush1.msra.mxu0 0.0
      %3367 = vmatprep.subr.mxu0 0.0
      %3368 = vmatpush1.msra.mxu0 0.0
      %3369 = vmatprep.subr.mxu0 0.0
      %3370 = vmatpush1.msra.mxu0 0.0
      %3371 = vmatprep.subr.mxu0 0.0
      %3372 = vmatpush1.msra.mxu0 0.0
      %3373 = vmatprep.subr.mxu0 0.0
      %3374 = vmatpush1.msra.mxu0 0.0
      %3375 = vmatprep.subr.mxu0 0.0
      %3376 = vmatpush1.msra.mxu0 0.0
      %3377 = vmatprep.subr.mxu0 0.0
      %3378 = vmatpush1.msra.mxu0 0.0
      %3379 = vmatprep.subr.mxu0 0.0
      %3380 = vmatpush1.msra.mxu0 0.0
      %3381 = vmatprep.subr.mxu0 0.0
      %3382 = vmatpush1.msra.mxu0 0.0
      %3383 = vmatprep.subr.mxu0 0.0
      %3384 = vmatpush1.msra.mxu0 0.0
      %3385 = vmatprep.subr.mxu0 0.0
      %3386 = vmatpush1.msra.mxu0 0.0
      %3387 = vmatprep.subr.mxu0 0.0
      %3388 = vmatpush1.msra.mxu0 0.0
      %3389 = vmatprep.subr.mxu0 0.0
      %3390 = vmatpush1.msra.mxu0 0.0
      %3391 = vmatprep.subr.mxu0 0.0
      %3392 = vmatpush1.msra.mxu0 0.0
      %3393 = vmatprep.subr.mxu0 0.0
      %3394 = vmatpush1.msra.mxu0 0.0
      %3395 = vmatprep.subr.mxu0 0.0
      %3396 = vmatpush1.msra.mxu0 0.0
      %3397 = vmatprep.subr.mxu0 0.0
      %3398 = vmatpush1.msra.mxu0 0.0
      %3399 = vmatprep.subr.mxu0 0.0
      %3400 = vmatpush1.msra.mxu0 0.0
      %3401 = vmatprep.mubr.f32.mxu0 0.0
      %3402 = vmatmul.mubr.f32.gmra.mrb[0].mxu0 %v3326
      %v3403 = vpop.f32.mrb[0].mxu0
      %v3404 = vadd.f32 0.0, %v3403
      %v3405 = vpop.f32.mrb[0].mxu0
      %v3406 = vadd.f32 0.0, %v3405
      %3407 = vmatprep.mubr.f32.mxu0 0.0
      %3408 = vmatmul.mubr.f32.gmra.mrb[0].mxu0 %v3329
      %v3409 = vpop.f32.mrb[0].mxu0
      %v3410 = vadd.f32 0.0, %v3409
      %v3411 = vpop.f32.mrb[0].mxu0
      %v3412 = vadd.f32 0.0, %v3411
      %3413 = vmatprep.mubr.f32.mxu0 0.0
      %3414 = vmatmul.mubr.f32.gmra.mrb[0].mxu0 %v3332
      %v3415 = vpop.f32.mrb[0].mxu0
      %v3416 = vadd.f32 0.0, %v3415
      %v3417 = vpop.f32.mrb[0].mxu0
      %v3418 = vadd.f32 0.0, %v3417
      %3419 = vmatprep.mubr.f32.mxu0 0.0
      %3420 = vmatmul.mubr.f32.gmra.mrb[0].mxu0 %v3335
      %v3421 = vpop.f32.mrb[0].mxu0
      %v3422 = vadd.f32 0.0, %v3421
      %v3423 = vpop.f32.mrb[0].mxu0
      %v3424 = vadd.f32 0.0, %v3423
      %3425 = vdwg.mxu0
      %3426 = vmatprep.subr.mxu0 0.0
      %3427 = vmatpush1.msra.mxu0 %v638
      %3428 = vmatprep.subr.mxu0 0.0
      %3429 = vmatpush1.msra.mxu0 %v641
      %3430 = vmatprep.subr.mxu0 0.0
      %3431 = vmatpush1.msra.mxu0 %v644
      %3432 = vmatprep.subr.mxu0 0.0
      %3433 = vmatpush1.msra.mxu0 %v647
      %3434 = vmatprep.subr.mxu0 0.0
      %3435 = vmatpush1.msra.mxu0 0.0
      %3436 = vmatprep.subr.mxu0 0.0
      %3437 = vmatpush1.msra.mxu0 0.0
      %3438 = vmatprep.subr.mxu0 0.0
      %3439 = vmatpush1.msra.mxu0 0.0
      %3440 = vmatprep.subr.mxu0 0.0
      %3441 = vmatpush1.msra.mxu0 0.0
      %3442 = vmatprep.subr.mxu0 0.0
      %3443 = vmatpush1.msra.mxu0 0.0
      %3444 = vmatprep.subr.mxu0 0.0
      %3445 = vmatpush1.msra.mxu0 0.0
      %3446 = vmatprep.subr.mxu0 0.0
      %3447 = vmatpush1.msra.mxu0 0.0
      %3448 = vmatprep.subr.mxu0 0.0
      %3449 = vmatpush1.msra.mxu0 0.0
      %3450 = vmatprep.subr.mxu0 0.0
      %3451 = vmatpush1.msra.mxu0 0.0
      %3452 = vmatprep.subr.mxu0 0.0
      %3453 = vmatpush1.msra.mxu0 0.0
      %3454 = vmatprep.subr.mxu0 0.0
      %3455 = vmatpush1.msra.mxu0 0.0
      %3456 = vmatprep.subr.mxu0 0.0
      %3457 = vmatpush1.msra.mxu0 0.0
      %3458 = vmatprep.subr.mxu0 0.0
      %3459 = vmatpush1.msra.mxu0 0.0
      %3460 = vmatprep.subr.mxu0 0.0
      %3461 = vmatpush1.msra.mxu0 0.0
      %3462 = vmatprep.subr.mxu0 0.0
      %3463 = vmatpush1.msra.mxu0 0.0
      %3464 = vmatprep.subr.mxu0 0.0
      %3465 = vmatpush1.msra.mxu0 0.0
      %3466 = vmatprep.subr.mxu0 0.0
      %3467 = vmatpush1.msra.mxu0 0.0
      %3468 = vmatprep.subr.mxu0 0.0
      %3469 = vmatpush1.msra.mxu0 0.0
      %3470 = vmatprep.subr.mxu0 0.0
      %3471 = vmatpush1.msra.mxu0 0.0
      %3472 = vmatprep.subr.mxu0 0.0
      %3473 = vmatpush1.msra.mxu0 0.0
      %3474 = vmatprep.subr.mxu0 0.0
      %3475 = vmatpush1.msra.mxu0 0.0
      %3476 = vmatprep.subr.mxu0 0.0
      %3477 = vmatpush1.msra.mxu0 0.0
      %3478 = vmatprep.subr.mxu0 0.0
      %3479 = vmatpush1.msra.mxu0 0.0
      %3480 = vmatprep.subr.mxu0 0.0
      %3481 = vmatpush1.msra.mxu0 0.0
      %3482 = vmatprep.subr.mxu0 0.0
      %3483 = vmatpush1.msra.mxu0 0.0
      %3484 = vmatprep.subr.mxu0 0.0
      %3485 = vmatpush1.msra.mxu0 0.0
      %3486 = vmatprep.subr.mxu0 0.0
      %3487 = vmatpush1.msra.mxu0 0.0
      %3488 = vmatprep.subr.mxu0 0.0
      %3489 = vmatpush1.msra.mxu0 0.0
      %3490 = vmatprep.mubr.f32.mxu0 0.0
      %3491 = vmatmul.mubr.f32.gmra.mrb[0].mxu0 %v3326
      %v3492 = vpop.f32.mrb[0].mxu0
      %v3493 = vadd.f32 0.0, %v3492
      %v3494 = vpop.f32.mrb[0].mxu0
      %3495 = vmatprep.mubr.f32.mxu0 0.0
      %3496 = vmatmul.mubr.f32.gmra.mrb[0].mxu0 %v3329
      %v3497 = vpop.f32.mrb[0].mxu0
      %v3498 = vadd.f32 0.0, %v3497
      %v3499 = vpop.f32.mrb[0].mxu0
      %3500 = vmatprep.mubr.f32.mxu0 0.0
      %3501 = vmatmul.mubr.f32.gmra.mrb[0].mxu0 %v3332
      %v3502 = vpop.f32.mrb[0].mxu0
      %v3503 = vadd.f32 0.0, %v3502
      %v3504 = vpop.f32.mrb[0].mxu0
      %3505 = vmatprep.mubr.f32.mxu0 0.0
      %3506 = vmatmul.mubr.f32.gmra.mrb[0].mxu0 %v3335
      %v3507 = vpop.f32.mrb[0].mxu0
      %v3508 = vadd.f32 0.0, %v3507
      %v3509 = vpop.f32.mrb[0].mxu0
      %3510 = vdwg.mxu0
      %v3511 = vmul.f32 %v3404, %v648
      %v3512 = vmul.f32 %v3406, %v649
      %v3513 = vmul.f32 %v3493, %v650
      %v3514 = vmul.f32 %v3410, %v651
      %v3515 = vmul.f32 %v3412, %v652
      %v3516 = vmul.f32 %v3498, %v653
      %v3517 = vmul.f32 %v3416, %v654
      %v3518 = vmul.f32 %v3418, %v655
      %v3519 = vmul.f32 %v3503, %v656
      %v3520 = vmul.f32 %v3422, %v657
      %v3521 = vmul.f32 %v3424, %v658
      %v3522 = vmul.f32 %v3508, %v659
      %v3523 = vadd.f32 %v3511, %v3514
      %v3524 = vadd.f32 %v3523, %v3517
      %v3525 = vadd.f32 %v3524, %v3520
      %v3526 = vrot.slane %v3525, 4
      %v3527 = vadd.f32 %v3525, %v3526
      %v3528 = vrot.slane %v3527, 2
      %v3529 = vadd.f32 %v3527, %v3528
      %v3530 = vrot.slane %v3529, 1
      %v3531 = vadd.f32 %v3529, %v3530
      %v3532 = vadd.f32 %v3512, %v3515
      %v3533 = vadd.f32 %v3532, %v3518
      %v3534 = vadd.f32 %v3533, %v3521
      %v3535 = vrot.slane %v3534, 4
      %v3536 = vadd.f32 %v3534, %v3535
      %v3537 = vrot.slane %v3536, 2
      %v3538 = vadd.f32 %v3536, %v3537
      %v3539 = vrot.slane %v3538, 1
      %v3540 = vadd.f32 %v3538, %v3539
      %v3541 = vadd.f32 %v3513, %v3516
      %v3542 = vadd.f32 %v3541, %v3519
      %v3543 = vadd.f32 %v3542, %v3522
      %v3544 = vrot.slane %v3543, 4
      %v3545 = vadd.f32 %v3543, %v3544
      %v3546 = vrot.slane %v3545, 2
      %v3547 = vadd.f32 %v3545, %v3546
      %v3548 = vrot.slane %v3547, 1
      %v3549 = vadd.f32 %v3547, %v3548
      %3550 = vmatprep.subr.mxu0 0.0
      %3551 = vmatpush1.msra.mxu0 %v3321
      %3552 = vmatprep.subr.mxu0 0.0
      %3553 = vmatpush1.msra.mxu0 %v3322
      %3554 = vmatprep.subr.mxu0 0.0
      %3555 = vmatpush1.msra.mxu0 %v3323
      %3556 = vmatprep.subr.mxu0 0.0
      %3557 = vmatpush1.msra.mxu0 %v3324
      %3558 = vmatprep.subr.mxu0 0.0
      %3559 = vmatpush1.msra.mxu0 0.0
      %3560 = vmatprep.subr.mxu0 0.0
      %3561 = vmatpush1.msra.mxu0 0.0
      %3562 = vmatprep.subr.mxu0 0.0
      %3563 = vmatpush1.msra.mxu0 0.0
      %3564 = vmatprep.subr.mxu0 0.0
      %3565 = vmatpush1.msra.mxu0 0.0
      %3566 = vmatprep.subr.mxu0 0.0
      %3567 = vmatpush1.msra.mxu0 0.0
      %3568 = vmatprep.subr.mxu0 0.0
      %3569 = vmatpush1.msra.mxu0 0.0
      %3570 = vmatprep.subr.mxu0 0.0
      %3571 = vmatpush1.msra.mxu0 0.0
      %3572 = vmatprep.subr.mxu0 0.0
      %3573 = vmatpush1.msra.mxu0 0.0
      %3574 = vmatprep.subr.mxu0 0.0
      %3575 = vmatpush1.msra.mxu0 0.0
      %3576 = vmatprep.subr.mxu0 0.0
      %3577 = vmatpush1.msra.mxu0 0.0
      %3578 = vmatprep.subr.mxu0 0.0
      %3579 = vmatpush1.msra.mxu0 0.0
      %3580 = vmatprep.subr.mxu0 0.0
      %3581 = vmatpush1.msra.mxu0 0.0
      %3582 = vmatprep.subr.mxu0 0.0
      %3583 = vmatpush1.msra.mxu0 0.0
      %3584 = vmatprep.subr.mxu0 0.0
      %3585 = vmatpush1.msra.mxu0 0.0
      %3586 = vmatprep.subr.mxu0 0.0
      %3587 = vmatpush1.msra.mxu0 0.0
      %3588 = vmatprep.subr.mxu0 0.0
      %3589 = vmatpush1.msra.mxu0 0.0
      %3590 = vmatprep.subr.mxu0 0.0
      %3591 = vmatpush1.msra.mxu0 0.0
      %3592 = vmatprep.subr.mxu0 0.0
      %3593 = vmatpush1.msra.mxu0 0.0
      %3594 = vmatprep.subr.mxu0 0.0
      %3595 = vmatpush1.msra.mxu0 0.0
      %3596 = vmatprep.subr.mxu0 0.0
      %3597 = vmatpush1.msra.mxu0 0.0
      %3598 = vmatprep.subr.mxu0 0.0
      %3599 = vmatpush1.msra.mxu0 0.0
      %3600 = vmatprep.subr.mxu0 0.0
      %3601 = vmatpush1.msra.mxu0 0.0
      %3602 = vmatprep.subr.mxu0 0.0
      %3603 = vmatpush1.msra.mxu0 0.0
      %3604 = vmatprep.subr.mxu0 0.0
      %3605 = vmatpush1.msra.mxu0 0.0
      %3606 = vmatprep.subr.mxu0 0.0
      %3607 = vmatpush1.msra.mxu0 0.0
      %3608 = vmatprep.subr.mxu0 0.0
      %3609 = vmatpush1.msra.mxu0 0.0
      %3610 = vmatprep.subr.mxu0 0.0
      %3611 = vmatpush1.msra.mxu0 0.0
      %3612 = vmatprep.subr.mxu0 0.0
      %3613 = vmatpush1.msra.mxu0 0.0
      %3614 = vmatprep.mubr.f32.mxu0 0.0
      %3615 = vmatmul.mubr.f32.gmra.mrb[0].mxu0 %v1682
      %v3616 = vpop.f32.mrb[0].mxu0
      %v3617 = vadd.f32 0.0, %v3616
      %v3618 = vpop.f32.mrb[0].mxu0
      %3619 = vmatprep.mubr.f32.mxu0 0.0
      %3620 = vmatmul.mubr.f32.gmra.mrb[0].mxu0 %v1685
      %v3621 = vpop.f32.mrb[0].mxu0
      %v3622 = vadd.f32 0.0, %v3621
      %v3623 = vpop.f32.mrb[0].mxu0
      %3624 = vmatprep.mubr.f32.mxu0 0.0
      %3625 = vmatmul.mubr.f32.gmra.mrb[0].mxu0 %v1688
      %v3626 = vpop.f32.mrb[0].mxu0
      %v3627 = vadd.f32 0.0, %v3626
      %v3628 = vpop.f32.mrb[0].mxu0
      %3629 = vmatprep.mubr.f32.mxu0 0.0
      %3630 = vmatmul.mubr.f32.gmra.mrb[0].mxu0 %v1691
      %v3631 = vpop.f32.mrb[0].mxu0
      %v3632 = vadd.f32 0.0, %v3631
      %v3633 = vpop.f32.mrb[0].mxu0
      %3634 = vmatprep.mubr.f32.mxu0 0.0
      %3635 = vmatmul.mubr.f32.gmra.mrb[0].mxu0 %v1694
      %v3636 = vpop.f32.mrb[0].mxu0
      %v3637 = vadd.f32 0.0, %v3636
      %v3638 = vpop.f32.mrb[0].mxu0
      %3639 = vmatprep.mubr.f32.mxu0 0.0
      %3640 = vmatmul.mubr.f32.gmra.mrb[0].mxu0 %v1697
      %v3641 = vpop.f32.mrb[0].mxu0
      %v3642 = vadd.f32 0.0, %v3641
      %v3643 = vpop.f32.mrb[0].mxu0
      %3644 = vmatprep.mubr.f32.mxu0 0.0
      %3645 = vmatmul.mubr.f32.gmra.mrb[0].mxu0 %v1700
      %v3646 = vpop.f32.mrb[0].mxu0
      %v3647 = vadd.f32 0.0, %v3646
      %v3648 = vpop.f32.mrb[0].mxu0
      %3649 = vmatprep.mubr.f32.mxu0 0.0
      %3650 = vmatmul.mubr.f32.gmra.mrb[0].mxu0 %v1703
      %v3651 = vpop.f32.mrb[0].mxu0
      %v3652 = vadd.f32 0.0, %v3651
      %v3653 = vpop.f32.mrb[0].mxu0
      %3654 = vmatprep.mubr.f32.mxu0 0.0
      %3655 = vmatmul.mubr.f32.gmra.mrb[0].mxu0 %v1706
      %v3656 = vpop.f32.mrb[0].mxu0
      %v3657 = vadd.f32 0.0, %v3656
      %v3658 = vpop.f32.mrb[0].mxu0
      %3659 = vmatprep.mubr.f32.mxu0 0.0
      %3660 = vmatmul.mubr.f32.gmra.mrb[0].mxu0 %v1709
      %v3661 = vpop.f32.mrb[0].mxu0
      %v3662 = vadd.f32 0.0, %v3661
      %v3663 = vpop.f32.mrb[0].mxu0
      %3664 = vmatprep.mubr.f32.mxu0 0.0
      %3665 = vmatmul.mubr.f32.gmra.mrb[0].mxu0 %v1712
      %v3666 = vpop.f32.mrb[0].mxu0
      %v3667 = vadd.f32 0.0, %v3666
      %v3668 = vpop.f32.mrb[0].mxu0
      %3669 = vmatprep.mubr.f32.mxu0 0.0
      %3670 = vmatmul.mubr.f32.gmra.mrb[0].mxu0 %v1715
      %v3671 = vpop.f32.mrb[0].mxu0
      %v3672 = vadd.f32 0.0, %v3671
      %v3673 = vpop.f32.mrb[0].mxu0
      %3674 = vmatprep.mubr.f32.mxu0 0.0
      %3675 = vmatmul.mubr.f32.gmra.mrb[0].mxu0 %v1718
      %v3676 = vpop.f32.mrb[0].mxu0
      %v3677 = vadd.f32 0.0, %v3676
      %v3678 = vpop.f32.mrb[0].mxu0
      %3679 = vmatprep.mubr.f32.mxu0 0.0
      %3680 = vmatmul.mubr.f32.gmra.mrb[0].mxu0 %v1721
      %v3681 = vpop.f32.mrb[0].mxu0
      %v3682 = vadd.f32 0.0, %v3681
      %v3683 = vpop.f32.mrb[0].mxu0
      %3684 = vmatprep.mubr.f32.mxu0 0.0
      %3685 = vmatmul.mubr.f32.gmra.mrb[0].mxu0 %v1724
      %v3686 = vpop.f32.mrb[0].mxu0
      %v3687 = vadd.f32 0.0, %v3686
      %v3688 = vpop.f32.mrb[0].mxu0
      %3689 = vmatprep.mubr.f32.mxu0 0.0
      %3690 = vmatmul.mubr.f32.gmra.mrb[0].mxu0 %v1727
      %v3691 = vpop.f32.mrb[0].mxu0
      %v3692 = vadd.f32 0.0, %v3691
      %v3693 = vpop.f32.mrb[0].mxu0
      %3694 = vmatprep.mubr.f32.mxu0 0.0
      %3695 = vmatmul.mubr.f32.gmra.mrb[0].mxu0 %v1730
      %v3696 = vpop.f32.mrb[0].mxu0
      %v3697 = vadd.f32 0.0, %v3696
      %v3698 = vpop.f32.mrb[0].mxu0
      %3699 = vmatprep.mubr.f32.mxu0 0.0
      %3700 = vmatmul.mubr.f32.gmra.mrb[0].mxu0 %v1733
      %v3701 = vpop.f32.mrb[0].mxu0
      %v3702 = vadd.f32 0.0, %v3701
      %v3703 = vpop.f32.mrb[0].mxu0
      %3704 = vmatprep.mubr.f32.mxu0 0.0
      %3705 = vmatmul.mubr.f32.gmra.mrb[0].mxu0 %v1736
      %v3706 = vpop.f32.mrb[0].mxu0
      %v3707 = vadd.f32 0.0, %v3706
      %v3708 = vpop.f32.mrb[0].mxu0
      %3709 = vmatprep.mubr.f32.mxu0 0.0
      %3710 = vmatmul.mubr.f32.gmra.mrb[0].mxu0 %v1739
      %v3711 = vpop.f32.mrb[0].mxu0
      %v3712 = vadd.f32 0.0, %v3711
      %v3713 = vpop.f32.mrb[0].mxu0
      %3714 = vmatprep.mubr.f32.mxu0 0.0
      %3715 = vmatmul.mubr.f32.gmra.mrb[0].mxu0 %v1742
      %v3716 = vpop.f32.mrb[0].mxu0
      %v3717 = vadd.f32 0.0, %v3716
      %v3718 = vpop.f32.mrb[0].mxu0
      %3719 = vmatprep.mubr.f32.mxu0 0.0
      %3720 = vmatmul.mubr.f32.gmra.mrb[0].mxu0 %v1745
      %v3721 = vpop.f32.mrb[0].mxu0
      %v3722 = vadd.f32 0.0, %v3721
      %v3723 = vpop.f32.mrb[0].mxu0
      %3724 = vmatprep.mubr.f32.mxu0 0.0
      %3725 = vmatmul.mubr.f32.gmra.mrb[0].mxu0 %v1748
      %v3726 = vpop.f32.mrb[0].mxu0
      %v3727 = vadd.f32 0.0, %v3726
      %v3728 = vpop.f32.mrb[0].mxu0
      %3729 = vmatprep.mubr.f32.mxu0 0.0
      %3730 = vmatmul.mubr.f32.gmra.mrb[0].mxu0 %v1751
      %v3731 = vpop.f32.mrb[0].mxu0
      %v3732 = vadd.f32 0.0, %v3731
      %v3733 = vpop.f32.mrb[0].mxu0
      %3734 = vmatprep.mubr.f32.mxu0 0.0
      %3735 = vmatmul.mubr.f32.gmra.mrb[0].mxu0 %v1754
      %v3736 = vpop.f32.mrb[0].mxu0
      %v3737 = vadd.f32 0.0, %v3736
      %v3738 = vpop.f32.mrb[0].mxu0
      %3739 = vmatprep.mubr.f32.mxu0 0.0
      %3740 = vmatmul.mubr.f32.gmra.mrb[0].mxu0 %v1757
      %v3741 = vpop.f32.mrb[0].mxu0
      %v3742 = vadd.f32 0.0, %v3741
      %v3743 = vpop.f32.mrb[0].mxu0
      %3744 = vmatprep.mubr.f32.mxu0 0.0
      %3745 = vmatmul.mubr.f32.gmra.mrb[0].mxu0 %v1760
      %v3746 = vpop.f32.mrb[0].mxu0
      %v3747 = vadd.f32 0.0, %v3746
      %v3748 = vpop.f32.mrb[0].mxu0
      %3749 = vmatprep.mubr.f32.mxu0 0.0
      %3750 = vmatmul.mubr.f32.gmra.mrb[0].mxu0 %v1763
      %v3751 = vpop.f32.mrb[0].mxu0
      %v3752 = vadd.f32 0.0, %v3751
      %v3753 = vpop.f32.mrb[0].mxu0
      %3754 = vmatprep.mubr.f32.mxu0 0.0
      %3755 = vmatmul.mubr.f32.gmra.mrb[0].mxu0 %v1766
      %v3756 = vpop.f32.mrb[0].mxu0
      %v3757 = vadd.f32 0.0, %v3756
      %v3758 = vpop.f32.mrb[0].mxu0
      %3759 = vmatprep.mubr.f32.mxu0 0.0
      %3760 = vmatmul.mubr.f32.gmra.mrb[0].mxu0 %v1769
      %v3761 = vpop.f32.mrb[0].mxu0
      %v3762 = vadd.f32 0.0, %v3761
      %v3763 = vpop.f32.mrb[0].mxu0
      %3764 = vmatprep.mubr.f32.mxu0 0.0
      %3765 = vmatmul.mubr.f32.gmra.mrb[0].mxu0 %v1772
      %v3766 = vpop.f32.mrb[0].mxu0
      %v3767 = vadd.f32 0.0, %v3766
      %v3768 = vpop.f32.mrb[0].mxu0
      %3769 = vmatprep.mubr.f32.mxu0 0.0
      %3770 = vmatmul.mubr.f32.gmra.mrb[0].mxu0 %v1775
      %v3771 = vpop.f32.mrb[0].mxu0
      %v3772 = vadd.f32 0.0, %v3771
      %v3773 = vpop.f32.mrb[0].mxu0
      %3774 = vmatprep.mubr.f32.mxu0 0.0
      %3775 = vmatmul.mubr.f32.gmra.mrb[0].mxu0 %v1778
      %v3776 = vpop.f32.mrb[0].mxu0
      %v3777 = vadd.f32 0.0, %v3776
      %v3778 = vpop.f32.mrb[0].mxu0
      %3779 = vmatprep.mubr.f32.mxu0 0.0
      %3780 = vmatmul.mubr.f32.gmra.mrb[0].mxu0 %v1781
      %v3781 = vpop.f32.mrb[0].mxu0
      %v3782 = vadd.f32 0.0, %v3781
      %v3783 = vpop.f32.mrb[0].mxu0
      %3784 = vmatprep.mubr.f32.mxu0 0.0
      %3785 = vmatmul.mubr.f32.gmra.mrb[0].mxu0 %v1784
      %v3786 = vpop.f32.mrb[0].mxu0
      %v3787 = vadd.f32 0.0, %v3786
      %v3788 = vpop.f32.mrb[0].mxu0
      %3789 = vmatprep.mubr.f32.mxu0 0.0
      %3790 = vmatmul.mubr.f32.gmra.mrb[0].mxu0 %v1787
      %v3791 = vpop.f32.mrb[0].mxu0
      %v3792 = vadd.f32 0.0, %v3791
      %v3793 = vpop.f32.mrb[0].mxu0
      %3794 = vmatprep.mubr.f32.mxu0 0.0
      %3795 = vmatmul.mubr.f32.gmra.mrb[0].mxu0 %v1790
      %v3796 = vpop.f32.mrb[0].mxu0
      %v3797 = vadd.f32 0.0, %v3796
      %v3798 = vpop.f32.mrb[0].mxu0
      %3799 = vmatprep.mubr.f32.mxu0 0.0
      %3800 = vmatmul.mubr.f32.gmra.mrb[0].mxu0 %v1793
      %v3801 = vpop.f32.mrb[0].mxu0
      %v3802 = vadd.f32 0.0, %v3801
      %v3803 = vpop.f32.mrb[0].mxu0
      %3804 = vmatprep.mubr.f32.mxu0 0.0
      %3805 = vmatmul.mubr.f32.gmra.mrb[0].mxu0 %v1796
      %v3806 = vpop.f32.mrb[0].mxu0
      %v3807 = vadd.f32 0.0, %v3806
      %v3808 = vpop.f32.mrb[0].mxu0
      %3809 = vmatprep.mubr.f32.mxu0 0.0
      %3810 = vmatmul.mubr.f32.gmra.mrb[0].mxu0 %v1799
      %v3811 = vpop.f32.mrb[0].mxu0
      %v3812 = vadd.f32 0.0, %v3811
      %v3813 = vpop.f32.mrb[0].mxu0
      %3814 = vdwg.mxu0
      %v3815 = vmul.f32 %v3617, %v700
      %v3816 = vmul.f32 %v3622, %v701
      %v3817 = vmul.f32 %v3627, %v702
      %v3818 = vmul.f32 %v3632, %v703
      %v3819 = vmul.f32 %v3637, %v704
      %v3820 = vmul.f32 %v3642, %v705
      %v3821 = vmul.f32 %v3647, %v706
      %v3822 = vmul.f32 %v3652, %v707
      %v3823 = vmul.f32 %v3657, %v708
      %v3824 = vmul.f32 %v3662, %v709
      %v3825 = vmul.f32 %v3667, %v710
      %v3826 = vmul.f32 %v3672, %v711
      %v3827 = vmul.f32 %v3677, %v712
      %v3828 = vmul.f32 %v3682, %v713
      %v3829 = vmul.f32 %v3687, %v714
      %v3830 = vmul.f32 %v3692, %v715
      %v3831 = vmul.f32 %v3697, %v716
      %v3832 = vmul.f32 %v3702, %v717
      %v3833 = vmul.f32 %v3707, %v718
      %v3834 = vmul.f32 %v3712, %v719
      %v3835 = vmul.f32 %v3717, %v720
      %v3836 = vmul.f32 %v3722, %v721
      %v3837 = vmul.f32 %v3727, %v722
      %v3838 = vmul.f32 %v3732, %v723
      %v3839 = vmul.f32 %v3737, %v724
      %v3840 = vmul.f32 %v3742, %v725
      %v3841 = vmul.f32 %v3747, %v726
      %v3842 = vmul.f32 %v3752, %v727
      %v3843 = vmul.f32 %v3757, %v728
      %v3844 = vmul.f32 %v3762, %v729
      %v3845 = vmul.f32 %v3767, %v730
      %v3846 = vmul.f32 %v3772, %v731
      %v3847 = vmul.f32 %v3777, %v732
      %v3848 = vmul.f32 %v3782, %v733
      %v3849 = vmul.f32 %v3787, %v734
      %v3850 = vmul.f32 %v3792, %v735
      %v3851 = vmul.f32 %v3797, %v736
      %v3852 = vmul.f32 %v3802, %v737
      %v3853 = vmul.f32 %v3807, %v738
      %v3854 = vmul.f32 %v3812, %v739
      %v3855 = vsel %vm1455, %v3815, 0.0
      %3856 = vadd.xlane.f32.xlu0 %v3855
      %v3857 = vpop.xlane.xlu0 %3856
      %v3858 = vsel %vm1455, %v3816, 0.0
      %3859 = vadd.xlane.f32.xlu0 %v3858
      %v3860 = vpop.xlane.xlu0 %3859
      %v3861 = vsel %vm1455, %v3817, 0.0
      %3862 = vadd.xlane.f32.xlu0 %v3861
      %v3863 = vpop.xlane.xlu0 %3862
      %v3864 = vsel %vm1455, %v3818, 0.0
      %3865 = vadd.xlane.f32.xlu0 %v3864
      %v3866 = vpop.xlane.xlu0 %3865
      %v3867 = vsel %vm1455, %v3819, 0.0
      %3868 = vadd.xlane.f32.xlu0 %v3867
      %v3869 = vpop.xlane.xlu0 %3868
      %v3870 = vsel %vm1455, %v3820, 0.0
      %3871 = vadd.xlane.f32.xlu0 %v3870
      %v3872 = vpop.xlane.xlu0 %3871
      %v3873 = vsel %vm1455, %v3821, 0.0
      %3874 = vadd.xlane.f32.xlu0 %v3873
      %v3875 = vpop.xlane.xlu0 %3874
      %v3876 = vsel %vm1455, %v3822, 0.0
      %3877 = vadd.xlane.f32.xlu0 %v3876
      %v3878 = vpop.xlane.xlu0 %3877
      %v3879 = vsel %vm1455, %v3823, 0.0
      %3880 = vadd.xlane.f32.xlu0 %v3879
      %v3881 = vpop.xlane.xlu0 %3880
      %v3882 = vsel %vm1455, %v3824, 0.0
      %3883 = vadd.xlane.f32.xlu0 %v3882
      %v3884 = vpop.xlane.xlu0 %3883
      %v3885 = vsel %vm1455, %v3825, 0.0
      %3886 = vadd.xlane.f32.xlu0 %v3885
      %v3887 = vpop.xlane.xlu0 %3886
      %v3888 = vsel %vm1455, %v3826, 0.0
      %3889 = vadd.xlane.f32.xlu0 %v3888
      %v3890 = vpop.xlane.xlu0 %3889
      %v3891 = vsel %vm1455, %v3827, 0.0
      %3892 = vadd.xlane.f32.xlu0 %v3891
      %v3893 = vpop.xlane.xlu0 %3892
      %v3894 = vsel %vm1455, %v3828, 0.0
      %3895 = vadd.xlane.f32.xlu0 %v3894
      %v3896 = vpop.xlane.xlu0 %3895
      %v3897 = vsel %vm1455, %v3829, 0.0
      %3898 = vadd.xlane.f32.xlu0 %v3897
      %v3899 = vpop.xlane.xlu0 %3898
      %v3900 = vsel %vm1455, %v3830, 0.0
      %3901 = vadd.xlane.f32.xlu0 %v3900
      %v3902 = vpop.xlane.xlu0 %3901
      %v3903 = vsel %vm1455, %v3831, 0.0
      %3904 = vadd.xlane.f32.xlu0 %v3903
      %v3905 = vpop.xlane.xlu0 %3904
      %v3906 = vsel %vm1455, %v3832, 0.0
      %3907 = vadd.xlane.f32.xlu0 %v3906
      %v3908 = vpop.xlane.xlu0 %3907
      %v3909 = vsel %vm1455, %v3833, 0.0
      %3910 = vadd.xlane.f32.xlu0 %v3909
      %v3911 = vpop.xlane.xlu0 %3910
      %v3912 = vsel %vm1455, %v3834, 0.0
      %3913 = vadd.xlane.f32.xlu0 %v3912
      %v3914 = vpop.xlane.xlu0 %3913
      %v3915 = vsel %vm1455, %v3835, 0.0
      %3916 = vadd.xlane.f32.xlu0 %v3915
      %v3917 = vpop.xlane.xlu0 %3916
      %v3918 = vsel %vm1455, %v3836, 0.0
      %3919 = vadd.xlane.f32.xlu0 %v3918
      %v3920 = vpop.xlane.xlu0 %3919
      %v3921 = vsel %vm1455, %v3837, 0.0
      %3922 = vadd.xlane.f32.xlu0 %v3921
      %v3923 = vpop.xlane.xlu0 %3922
      %v3924 = vsel %vm1455, %v3838, 0.0
      %3925 = vadd.xlane.f32.xlu0 %v3924
      %v3926 = vpop.xlane.xlu0 %3925
      %v3927 = vsel %vm1455, %v3839, 0.0
      %3928 = vadd.xlane.f32.xlu0 %v3927
      %v3929 = vpop.xlane.xlu0 %3928
      %v3930 = vsel %vm1455, %v3840, 0.0
      %3931 = vadd.xlane.f32.xlu0 %v3930
      %v3932 = vpop.xlane.xlu0 %3931
      %v3933 = vsel %vm1455, %v3841, 0.0
      %3934 = vadd.xlane.f32.xlu0 %v3933
      %v3935 = vpop.xlane.xlu0 %3934
      %v3936 = vsel %vm1455, %v3842, 0.0
      %3937 = vadd.xlane.f32.xlu0 %v3936
      %v3938 = vpop.xlane.xlu0 %3937
      %v3939 = vsel %vm1455, %v3843, 0.0
      %3940 = vadd.xlane.f32.xlu0 %v3939
      %v3941 = vpop.xlane.xlu0 %3940
      %v3942 = vsel %vm1455, %v3844, 0.0
      %3943 = vadd.xlane.f32.xlu0 %v3942
      %v3944 = vpop.xlane.xlu0 %3943
      %v3945 = vsel %vm1455, %v3845, 0.0
      %3946 = vadd.xlane.f32.xlu0 %v3945
      %v3947 = vpop.xlane.xlu0 %3946
      %v3948 = vsel %vm1455, %v3846, 0.0
      %3949 = vadd.xlane.f32.xlu0 %v3948
      %v3950 = vpop.xlane.xlu0 %3949
      %v3951 = vsel %vm1455, %v3847, 0.0
      %3952 = vadd.xlane.f32.xlu0 %v3951
      %v3953 = vpop.xlane.xlu0 %3952
      %v3954 = vsel %vm1455, %v3848, 0.0
      %3955 = vadd.xlane.f32.xlu0 %v3954
      %v3956 = vpop.xlane.xlu0 %3955
      %v3957 = vsel %vm1455, %v3849, 0.0
      %3958 = vadd.xlane.f32.xlu0 %v3957
      %v3959 = vpop.xlane.xlu0 %3958
      %v3960 = vsel %vm1455, %v3850, 0.0
      %3961 = vadd.xlane.f32.xlu0 %v3960
      %v3962 = vpop.xlane.xlu0 %3961
      %v3963 = vsel %vm1455, %v3851, 0.0
      %3964 = vadd.xlane.f32.xlu0 %v3963
      %v3965 = vpop.xlane.xlu0 %3964
      %v3966 = vsel %vm1455, %v3852, 0.0
      %3967 = vadd.xlane.f32.xlu0 %v3966
      %v3968 = vpop.xlane.xlu0 %3967
      %v3969 = vsel %vm1455, %v3853, 0.0
      %3970 = vadd.xlane.f32.xlu0 %v3969
      %v3971 = vpop.xlane.xlu0 %3970
      %v3972 = vsel %vm1455, %v3854, 0.0
      %3973 = vadd.xlane.f32.xlu0 %v3972
      %v3974 = vpop.xlane.xlu0 %3973
      %vm3975 = vcmp.gt.f32.partialorder %v3531, %v3857
      %vm3976 = vcmp.gt.f32.partialorder %v3540, %v3857
      %vm3977 = vcmp.gt.f32.partialorder %v3549, %v3857
      %vm3978 = vcmp.gt.f32.partialorder %v3531, %v3860
      %vm3979 = vcmp.gt.f32.partialorder %v3540, %v3860
      %vm3980 = vcmp.gt.f32.partialorder %v3549, %v3860
      %vm3981 = vcmp.gt.f32.partialorder %v3531, %v3863
      %vm3982 = vcmp.gt.f32.partialorder %v3540, %v3863
      %vm3983 = vcmp.gt.f32.partialorder %v3549, %v3863
      %vm3984 = vcmp.gt.f32.partialorder %v3531, %v3866
      %vm3985 = vcmp.gt.f32.partialorder %v3540, %v3866
      %vm3986 = vcmp.gt.f32.partialorder %v3549, %v3866
      %vm3987 = vcmp.gt.f32.partialorder %v3531, %v3869
      %vm3988 = vcmp.gt.f32.partialorder %v3540, %v3869
      %vm3989 = vcmp.gt.f32.partialorder %v3549, %v3869
      %vm3990 = vcmp.gt.f32.partialorder %v3531, %v3872
      %vm3991 = vcmp.gt.f32.partialorder %v3540, %v3872
      %vm3992 = vcmp.gt.f32.partialorder %v3549, %v3872
      %vm3993 = vcmp.gt.f32.partialorder %v3531, %v3875
      %vm3994 = vcmp.gt.f32.partialorder %v3540, %v3875
      %vm3995 = vcmp.gt.f32.partialorder %v3549, %v3875
      %vm3996 = vcmp.gt.f32.partialorder %v3531, %v3878
      %vm3997 = vcmp.gt.f32.partialorder %v3540, %v3878
      %vm3998 = vcmp.gt.f32.partialorder %v3549, %v3878
      %v3999 = vsel %vm3975, 1, 0
      %v4000 = vsel %vm3976, 1, 0
      %v4001 = vsel %vm3977, 1, 0
      %v4002 = vsel %vm3978, 1, 0
      %v4003 = vsel %vm3979, 1, 0
      %v4004 = vsel %vm3980, 1, 0
      %v4005 = vsel %vm3981, 1, 0
      %v4006 = vsel %vm3982, 1, 0
      %v4007 = vsel %vm3983, 1, 0
      %v4008 = vsel %vm3984, 1, 0
      %v4009 = vsel %vm3985, 1, 0
      %v4010 = vsel %vm3986, 1, 0
      %v4011 = vsel %vm3987, 1, 0
      %v4012 = vsel %vm3988, 1, 0
      %v4013 = vsel %vm3989, 1, 0
      %v4014 = vsel %vm3990, 1, 0
      %v4015 = vsel %vm3991, 1, 0
      %v4016 = vsel %vm3992, 1, 0
      %v4017 = vsel %vm3993, 1, 0
      %v4018 = vsel %vm3994, 1, 0
      %v4019 = vsel %vm3995, 1, 0
      %v4020 = vsel %vm3996, 1, 0
      %v4021 = vsel %vm3997, 1, 0
      %v4022 = vsel %vm3998, 1, 0
      %v4023 = vcvt.s32.f32 %v3999
      %v4024 = vcvt.s32.f32 %v4000
      %v4025 = vcvt.s32.f32 %v4001
      %v4026 = vcvt.s32.f32 %v4002
      %v4027 = vcvt.s32.f32 %v4003
      %v4028 = vcvt.s32.f32 %v4004
      %v4029 = vcvt.s32.f32 %v4005
      %v4030 = vcvt.s32.f32 %v4006
      %v4031 = vcvt.s32.f32 %v4007
      %v4032 = vcvt.s32.f32 %v4008
      %v4033 = vcvt.s32.f32 %v4009
      %v4034 = vcvt.s32.f32 %v4010
      %v4035 = vcvt.s32.f32 %v4011
      %v4036 = vcvt.s32.f32 %v4012
      %v4037 = vcvt.s32.f32 %v4013
      %v4038 = vcvt.s32.f32 %v4014
      %v4039 = vcvt.s32.f32 %v4015
      %v4040 = vcvt.s32.f32 %v4016
      %v4041 = vcvt.s32.f32 %v4017
      %v4042 = vcvt.s32.f32 %v4018
      %v4043 = vcvt.s32.f32 %v4019
      %v4044 = vcvt.s32.f32 %v4020
      %v4045 = vcvt.s32.f32 %v4021
      %v4046 = vcvt.s32.f32 %v4022
      %v4047 = vadd.f32 %v4023, %v4024
      %v4048 = vadd.f32 %v4047, %v4025
      %4049 = vadd.xlane.f32.xlu0 %v4048
      %v4050 = vpop.xlane.xlu0 %4049
      %v4051 = vadd.f32 %v4026, %v4027
      %v4052 = vadd.f32 %v4051, %v4028
      %4053 = vadd.xlane.f32.xlu0 %v4052
      %v4054 = vpop.xlane.xlu0 %4053
      %v4055 = vadd.f32 %v4029, %v4030
      %v4056 = vadd.f32 %v4055, %v4031
      %4057 = vadd.xlane.f32.xlu0 %v4056
      %v4058 = vpop.xlane.xlu0 %4057
      %v4059 = vadd.f32 %v4032, %v4033
      %v4060 = vadd.f32 %v4059, %v4034
      %4061 = vadd.xlane.f32.xlu0 %v4060
      %v4062 = vpop.xlane.xlu0 %4061
      %v4063 = vadd.f32 %v4035, %v4036
      %v4064 = vadd.f32 %v4063, %v4037
      %4065 = vadd.xlane.f32.xlu0 %v4064
      %v4066 = vpop.xlane.xlu0 %4065
      %v4067 = vadd.f32 %v4038, %v4039
      %v4068 = vadd.f32 %v4067, %v4040
      %4069 = vadd.xlane.f32.xlu0 %v4068
      %v4070 = vpop.xlane.xlu0 %4069
      %v4071 = vadd.f32 %v4041, %v4042
      %v4072 = vadd.f32 %v4071, %v4043
      %4073 = vadd.xlane.f32.xlu0 %v4072
      %v4074 = vpop.xlane.xlu0 %4073
      %v4075 = vadd.f32 %v4044, %v4045
      %v4076 = vadd.f32 %v4075, %v4046
      %4077 = vadd.xlane.f32.xlu0 %v4076
      %v4078 = vpop.xlane.xlu0 %4077
      %vm4079 = vcmp.lt.f32.partialorder %v4050, 15.0
      %vm4080 = vcmp.lt.f32.partialorder %v4054, 15.0
      %vm4081 = vcmp.lt.f32.partialorder %v4058, 15.0
      %vm4082 = vcmp.lt.f32.partialorder %v4062, 15.0
      %vm4083 = vcmp.lt.f32.partialorder %v4066, 15.0
      %vm4084 = vcmp.lt.f32.partialorder %v4070, 15.0
      %vm4085 = vcmp.lt.f32.partialorder %v4074, 15.0
      %vm4086 = vcmp.lt.f32.partialorder %v4078, 15.0
      %v4087 = vsel %vm4079, %v3857, inf
      %v4088 = vsel %vm4080, %v3860, inf
      %v4089 = vsel %vm4081, %v3863, inf
      %v4090 = vsel %vm4082, %v3866, inf
      %v4091 = vsel %vm4083, %v3869, inf
      %v4092 = vsel %vm4084, %v3872, inf
      %v4093 = vsel %vm4085, %v3875, inf
      %v4094 = vsel %vm4086, %v3878, inf
      %v4095 = vmin.f32 %v4087, %v4091
      %v4096 = vmin.f32 %v4088, %v4092
      %v4097 = vmin.f32 %v4089, %v4093
      %v4098 = vmin.f32 %v4090, %v4094
      %v4099 = vmin.f32 %v4095, %v4096
      %v4100 = vmin.f32 %v4097, %v4098
      %v4101 = vmin.f32 %v4099, %v4100
      %v4102 = vrot.slane %v4101, 4
      %v4103 = vmin.f32 %v4101, %v4102
      %v4104 = vrot.slane %v4103, 2
      %v4105 = vmin.f32 %v4103, %v4104
      %v4106 = vrot.slane %v4105, 1
      %v4107 = vmin.f32 %v4105, %v4106
      %s4108 = vtos %v4107
      %vm4109 = vcmp.gt.f32.partialorder %v3531, %v3881
      %vm4110 = vcmp.gt.f32.partialorder %v3540, %v3881
      %vm4111 = vcmp.gt.f32.partialorder %v3549, %v3881
      %vm4112 = vcmp.gt.f32.partialorder %v3531, %v3884
      %vm4113 = vcmp.gt.f32.partialorder %v3540, %v3884
      %vm4114 = vcmp.gt.f32.partialorder %v3549, %v3884
      %vm4115 = vcmp.gt.f32.partialorder %v3531, %v3887
      %vm4116 = vcmp.gt.f32.partialorder %v3540, %v3887
      %vm4117 = vcmp.gt.f32.partialorder %v3549, %v3887
      %vm4118 = vcmp.gt.f32.partialorder %v3531, %v3890
      %vm4119 = vcmp.gt.f32.partialorder %v3540, %v3890
      %vm4120 = vcmp.gt.f32.partialorder %v3549, %v3890
      %vm4121 = vcmp.gt.f32.partialorder %v3531, %v3893
      %vm4122 = vcmp.gt.f32.partialorder %v3540, %v3893
      %vm4123 = vcmp.gt.f32.partialorder %v3549, %v3893
      %vm4124 = vcmp.gt.f32.partialorder %v3531, %v3896
      %vm4125 = vcmp.gt.f32.partialorder %v3540, %v3896
      %vm4126 = vcmp.gt.f32.partialorder %v3549, %v3896
      %vm4127 = vcmp.gt.f32.partialorder %v3531, %v3899
      %vm4128 = vcmp.gt.f32.partialorder %v3540, %v3899
      %vm4129 = vcmp.gt.f32.partialorder %v3549, %v3899
      %vm4130 = vcmp.gt.f32.partialorder %v3531, %v3902
      %vm4131 = vcmp.gt.f32.partialorder %v3540, %v3902
      %vm4132 = vcmp.gt.f32.partialorder %v3549, %v3902
      %v4133 = vsel %vm4109, 1, 0
      %v4134 = vsel %vm4110, 1, 0
      %v4135 = vsel %vm4111, 1, 0
      %v4136 = vsel %vm4112, 1, 0
      %v4137 = vsel %vm4113, 1, 0
      %v4138 = vsel %vm4114, 1, 0
      %v4139 = vsel %vm4115, 1, 0
      %v4140 = vsel %vm4116, 1, 0
      %v4141 = vsel %vm4117, 1, 0
      %v4142 = vsel %vm4118, 1, 0
      %v4143 = vsel %vm4119, 1, 0
      %v4144 = vsel %vm4120, 1, 0
      %v4145 = vsel %vm4121, 1, 0
      %v4146 = vsel %vm4122, 1, 0
      %v4147 = vsel %vm4123, 1, 0
      %v4148 = vsel %vm4124, 1, 0
      %v4149 = vsel %vm4125, 1, 0
      %v4150 = vsel %vm4126, 1, 0
      %v4151 = vsel %vm4127, 1, 0
      %v4152 = vsel %vm4128, 1, 0
      %v4153 = vsel %vm4129, 1, 0
      %v4154 = vsel %vm4130, 1, 0
      %v4155 = vsel %vm4131, 1, 0
      %v4156 = vsel %vm4132, 1, 0
      %v4157 = vcvt.s32.f32 %v4133
      %v4158 = vcvt.s32.f32 %v4134
      %v4159 = vcvt.s32.f32 %v4135
      %v4160 = vcvt.s32.f32 %v4136
      %v4161 = vcvt.s32.f32 %v4137
      %v4162 = vcvt.s32.f32 %v4138
      %v4163 = vcvt.s32.f32 %v4139
      %v4164 = vcvt.s32.f32 %v4140
      %v4165 = vcvt.s32.f32 %v4141
      %v4166 = vcvt.s32.f32 %v4142
      %v4167 = vcvt.s32.f32 %v4143
      %v4168 = vcvt.s32.f32 %v4144
      %v4169 = vcvt.s32.f32 %v4145
      %v4170 = vcvt.s32.f32 %v4146
      %v4171 = vcvt.s32.f32 %v4147
      %v4172 = vcvt.s32.f32 %v4148
      %v4173 = vcvt.s32.f32 %v4149
      %v4174 = vcvt.s32.f32 %v4150
      %v4175 = vcvt.s32.f32 %v4151
      %v4176 = vcvt.s32.f32 %v4152
      %v4177 = vcvt.s32.f32 %v4153
      %v4178 = vcvt.s32.f32 %v4154
      %v4179 = vcvt.s32.f32 %v4155
      %v4180 = vcvt.s32.f32 %v4156
      %v4181 = vadd.f32 %v4157, %v4158
      %v4182 = vadd.f32 %v4181, %v4159
      %4183 = vadd.xlane.f32.xlu0 %v4182
      %v4184 = vpop.xlane.xlu0 %4183
      %v4185 = vadd.f32 %v4160, %v4161
      %v4186 = vadd.f32 %v4185, %v4162
      %4187 = vadd.xlane.f32.xlu0 %v4186
      %v4188 = vpop.xlane.xlu0 %4187
      %v4189 = vadd.f32 %v4163, %v4164
      %v4190 = vadd.f32 %v4189, %v4165
      %4191 = vadd.xlane.f32.xlu0 %v4190
      %v4192 = vpop.xlane.xlu0 %4191
      %v4193 = vadd.f32 %v4166, %v4167
      %v4194 = vadd.f32 %v4193, %v4168
      %4195 = vadd.xlane.f32.xlu0 %v4194
      %v4196 = vpop.xlane.xlu0 %4195
      %v4197 = vadd.f32 %v4169, %v4170
      %v4198 = vadd.f32 %v4197, %v4171
      %4199 = vadd.xlane.f32.xlu0 %v4198
      %v4200 = vpop.xlane.xlu0 %4199
      %v4201 = vadd.f32 %v4172, %v4173
      %v4202 = vadd.f32 %v4201, %v4174
      %4203 = vadd.xlane.f32.xlu0 %v4202
      %v4204 = vpop.xlane.xlu0 %4203
      %v4205 = vadd.f32 %v4175, %v4176
      %v4206 = vadd.f32 %v4205, %v4177
      %4207 = vadd.xlane.f32.xlu0 %v4206
      %v4208 = vpop.xlane.xlu0 %4207
      %v4209 = vadd.f32 %v4178, %v4179
      %v4210 = vadd.f32 %v4209, %v4180
      %4211 = vadd.xlane.f32.xlu0 %v4210
      %v4212 = vpop.xlane.xlu0 %4211
      %vm4213 = vcmp.lt.f32.partialorder %v4184, 15.0
      %vm4214 = vcmp.lt.f32.partialorder %v4188, 15.0
      %vm4215 = vcmp.lt.f32.partialorder %v4192, 15.0
      %vm4216 = vcmp.lt.f32.partialorder %v4196, 15.0
      %vm4217 = vcmp.lt.f32.partialorder %v4200, 15.0
      %vm4218 = vcmp.lt.f32.partialorder %v4204, 15.0
      %vm4219 = vcmp.lt.f32.partialorder %v4208, 15.0
      %vm4220 = vcmp.lt.f32.partialorder %v4212, 15.0
      %v4221 = vsel %vm4213, %v3881, inf
      %v4222 = vsel %vm4214, %v3884, inf
      %v4223 = vsel %vm4215, %v3887, inf
      %v4224 = vsel %vm4216, %v3890, inf
      %v4225 = vsel %vm4217, %v3893, inf
      %v4226 = vsel %vm4218, %v3896, inf
      %v4227 = vsel %vm4219, %v3899, inf
      %v4228 = vsel %vm4220, %v3902, inf
      %v4229 = vmin.f32 %v4221, %v4225
      %v4230 = vmin.f32 %v4222, %v4226
      %v4231 = vmin.f32 %v4223, %v4227
      %v4232 = vmin.f32 %v4224, %v4228
      %v4233 = vmin.f32 %v4229, %v4230
      %v4234 = vmin.f32 %v4231, %v4232
      %v4235 = vmin.f32 %v4233, %v4234
      %v4236 = vrot.slane %v4235, 4
      %v4237 = vmin.f32 %v4235, %v4236
      %v4238 = vrot.slane %v4237, 2
      %v4239 = vmin.f32 %v4237, %v4238
      %v4240 = vrot.slane %v4239, 1
      %v4241 = vmin.f32 %v4239, %v4240
      %s4242 = vtos %v4241
      %vm4243 = vcmp.gt.f32.partialorder %v3531, %v3905
      %vm4244 = vcmp.gt.f32.partialorder %v3540, %v3905
      %vm4245 = vcmp.gt.f32.partialorder %v3549, %v3905
      %vm4246 = vcmp.gt.f32.partialorder %v3531, %v3908
      %vm4247 = vcmp.gt.f32.partialorder %v3540, %v3908
      %vm4248 = vcmp.gt.f32.partialorder %v3549, %v3908
      %vm4249 = vcmp.gt.f32.partialorder %v3531, %v3911
      %vm4250 = vcmp.gt.f32.partialorder %v3540, %v3911
      %vm4251 = vcmp.gt.f32.partialorder %v3549, %v3911
      %vm4252 = vcmp.gt.f32.partialorder %v3531, %v3914
      %vm4253 = vcmp.gt.f32.partialorder %v3540, %v3914
      %vm4254 = vcmp.gt.f32.partialorder %v3549, %v3914
      %vm4255 = vcmp.gt.f32.partialorder %v3531, %v3917
      %vm4256 = vcmp.gt.f32.partialorder %v3540, %v3917
      %vm4257 = vcmp.gt.f32.partialorder %v3549, %v3917
      %vm4258 = vcmp.gt.f32.partialorder %v3531, %v3920
      %vm4259 = vcmp.gt.f32.partialorder %v3540, %v3920
      %vm4260 = vcmp.gt.f32.partialorder %v3549, %v3920
      %vm4261 = vcmp.gt.f32.partialorder %v3531, %v3923
      %vm4262 = vcmp.gt.f32.partialorder %v3540, %v3923
      %vm4263 = vcmp.gt.f32.partialorder %v3549, %v3923
      %vm4264 = vcmp.gt.f32.partialorder %v3531, %v3926
      %vm4265 = vcmp.gt.f32.partialorder %v3540, %v3926
      %vm4266 = vcmp.gt.f32.partialorder %v3549, %v3926
      %v4267 = vsel %vm4243, 1, 0
      %v4268 = vsel %vm4244, 1, 0
      %v4269 = vsel %vm4245, 1, 0
      %v4270 = vsel %vm4246, 1, 0
      %v4271 = vsel %vm4247, 1, 0
      %v4272 = vsel %vm4248, 1, 0
      %v4273 = vsel %vm4249, 1, 0
      %v4274 = vsel %vm4250, 1, 0
      %v4275 = vsel %vm4251, 1, 0
      %v4276 = vsel %vm4252, 1, 0
      %v4277 = vsel %vm4253, 1, 0
      %v4278 = vsel %vm4254, 1, 0
      %v4279 = vsel %vm4255, 1, 0
      %v4280 = vsel %vm4256, 1, 0
      %v4281 = vsel %vm4257, 1, 0
      %v4282 = vsel %vm4258, 1, 0
      %v4283 = vsel %vm4259, 1, 0
      %v4284 = vsel %vm4260, 1, 0
      %v4285 = vsel %vm4261, 1, 0
      %v4286 = vsel %vm4262, 1, 0
      %v4287 = vsel %vm4263, 1, 0
      %v4288 = vsel %vm4264, 1, 0
      %v4289 = vsel %vm4265, 1, 0
      %v4290 = vsel %vm4266, 1, 0
      %v4291 = vcvt.s32.f32 %v4267
      %v4292 = vcvt.s32.f32 %v4268
      %v4293 = vcvt.s32.f32 %v4269
      %v4294 = vcvt.s32.f32 %v4270
      %v4295 = vcvt.s32.f32 %v4271
      %v4296 = vcvt.s32.f32 %v4272
      %v4297 = vcvt.s32.f32 %v4273
      %v4298 = vcvt.s32.f32 %v4274
      %v4299 = vcvt.s32.f32 %v4275
      %v4300 = vcvt.s32.f32 %v4276
      %v4301 = vcvt.s32.f32 %v4277
      %v4302 = vcvt.s32.f32 %v4278
      %v4303 = vcvt.s32.f32 %v4279
      %v4304 = vcvt.s32.f32 %v4280
      %v4305 = vcvt.s32.f32 %v4281
      %v4306 = vcvt.s32.f32 %v4282
      %v4307 = vcvt.s32.f32 %v4283
      %v4308 = vcvt.s32.f32 %v4284
      %v4309 = vcvt.s32.f32 %v4285
      %v4310 = vcvt.s32.f32 %v4286
      %v4311 = vcvt.s32.f32 %v4287
      %v4312 = vcvt.s32.f32 %v4288
      %v4313 = vcvt.s32.f32 %v4289
      %v4314 = vcvt.s32.f32 %v4290
      %v4315 = vadd.f32 %v4291, %v4292
      %v4316 = vadd.f32 %v4315, %v4293
      %4317 = vadd.xlane.f32.xlu0 %v4316
      %v4318 = vpop.xlane.xlu0 %4317
      %v4319 = vadd.f32 %v4294, %v4295
      %v4320 = vadd.f32 %v4319, %v4296
      %4321 = vadd.xlane.f32.xlu0 %v4320
      %v4322 = vpop.xlane.xlu0 %4321
      %v4323 = vadd.f32 %v4297, %v4298
      %v4324 = vadd.f32 %v4323, %v4299
      %4325 = vadd.xlane.f32.xlu0 %v4324
      %v4326 = vpop.xlane.xlu0 %4325
      %v4327 = vadd.f32 %v4300, %v4301
      %v4328 = vadd.f32 %v4327, %v4302
      %4329 = vadd.xlane.f32.xlu0 %v4328
      %v4330 = vpop.xlane.xlu0 %4329
      %v4331 = vadd.f32 %v4303, %v4304
      %v4332 = vadd.f32 %v4331, %v4305
      %4333 = vadd.xlane.f32.xlu0 %v4332
      %v4334 = vpop.xlane.xlu0 %4333
      %v4335 = vadd.f32 %v4306, %v4307
      %v4336 = vadd.f32 %v4335, %v4308
      %4337 = vadd.xlane.f32.xlu0 %v4336
      %v4338 = vpop.xlane.xlu0 %4337
      %v4339 = vadd.f32 %v4309, %v4310
      %v4340 = vadd.f32 %v4339, %v4311
      %4341 = vadd.xlane.f32.xlu0 %v4340
      %v4342 = vpop.xlane.xlu0 %4341
      %v4343 = vadd.f32 %v4312, %v4313
      %v4344 = vadd.f32 %v4343, %v4314
      %4345 = vadd.xlane.f32.xlu0 %v4344
      %v4346 = vpop.xlane.xlu0 %4345
      %vm4347 = vcmp.lt.f32.partialorder %v4318, 15.0
      %vm4348 = vcmp.lt.f32.partialorder %v4322, 15.0
      %vm4349 = vcmp.lt.f32.partialorder %v4326, 15.0
      %vm4350 = vcmp.lt.f32.partialorder %v4330, 15.0
      %vm4351 = vcmp.lt.f32.partialorder %v4334, 15.0
      %vm4352 = vcmp.lt.f32.partialorder %v4338, 15.0
      %vm4353 = vcmp.lt.f32.partialorder %v4342, 15.0
      %vm4354 = vcmp.lt.f32.partialorder %v4346, 15.0
      %v4355 = vsel %vm4347, %v3905, inf
      %v4356 = vsel %vm4348, %v3908, inf
      %v4357 = vsel %vm4349, %v3911, inf
      %v4358 = vsel %vm4350, %v3914, inf
      %v4359 = vsel %vm4351, %v3917, inf
      %v4360 = vsel %vm4352, %v3920, inf
      %v4361 = vsel %vm4353, %v3923, inf
      %v4362 = vsel %vm4354, %v3926, inf
      %v4363 = vmin.f32 %v4355, %v4359
      %v4364 = vmin.f32 %v4356, %v4360
      %v4365 = vmin.f32 %v4357, %v4361
      %v4366 = vmin.f32 %v4358, %v4362
      %v4367 = vmin.f32 %v4363, %v4364
      %v4368 = vmin.f32 %v4365, %v4366
      %v4369 = vmin.f32 %v4367, %v4368
      %v4370 = vrot.slane %v4369, 4
      %v4371 = vmin.f32 %v4369, %v4370
      %v4372 = vrot.slane %v4371, 2
      %v4373 = vmin.f32 %v4371, %v4372
      %v4374 = vrot.slane %v4373, 1
      %v4375 = vmin.f32 %v4373, %v4374
      %s4376 = vtos %v4375
      %vm4377 = vcmp.gt.f32.partialorder %v3531, %v3929
      %vm4378 = vcmp.gt.f32.partialorder %v3540, %v3929
      %vm4379 = vcmp.gt.f32.partialorder %v3549, %v3929
      %vm4380 = vcmp.gt.f32.partialorder %v3531, %v3932
      %vm4381 = vcmp.gt.f32.partialorder %v3540, %v3932
      %vm4382 = vcmp.gt.f32.partialorder %v3549, %v3932
      %vm4383 = vcmp.gt.f32.partialorder %v3531, %v3935
      %vm4384 = vcmp.gt.f32.partialorder %v3540, %v3935
      %vm4385 = vcmp.gt.f32.partialorder %v3549, %v3935
      %vm4386 = vcmp.gt.f32.partialorder %v3531, %v3938
      %vm4387 = vcmp.gt.f32.partialorder %v3540, %v3938
      %vm4388 = vcmp.gt.f32.partialorder %v3549, %v3938
      %vm4389 = vcmp.gt.f32.partialorder %v3531, %v3941
      %vm4390 = vcmp.gt.f32.partialorder %v3540, %v3941
      %vm4391 = vcmp.gt.f32.partialorder %v3549, %v3941
      %vm4392 = vcmp.gt.f32.partialorder %v3531, %v3944
      %vm4393 = vcmp.gt.f32.partialorder %v3540, %v3944
      %vm4394 = vcmp.gt.f32.partialorder %v3549, %v3944
      %vm4395 = vcmp.gt.f32.partialorder %v3531, %v3947
      %vm4396 = vcmp.gt.f32.partialorder %v3540, %v3947
      %vm4397 = vcmp.gt.f32.partialorder %v3549, %v3947
      %vm4398 = vcmp.gt.f32.partialorder %v3531, %v3950
      %vm4399 = vcmp.gt.f32.partialorder %v3540, %v3950
      %vm4400 = vcmp.gt.f32.partialorder %v3549, %v3950
      %v4401 = vsel %vm4377, 1, 0
      %v4402 = vsel %vm4378, 1, 0
      %v4403 = vsel %vm4379, 1, 0
      %v4404 = vsel %vm4380, 1, 0
      %v4405 = vsel %vm4381, 1, 0
      %v4406 = vsel %vm4382, 1, 0
      %v4407 = vsel %vm4383, 1, 0
      %v4408 = vsel %vm4384, 1, 0
      %v4409 = vsel %vm4385, 1, 0
      %v4410 = vsel %vm4386, 1, 0
      %v4411 = vsel %vm4387, 1, 0
      %v4412 = vsel %vm4388, 1, 0
      %v4413 = vsel %vm4389, 1, 0
      %v4414 = vsel %vm4390, 1, 0
      %v4415 = vsel %vm4391, 1, 0
      %v4416 = vsel %vm4392, 1, 0
      %v4417 = vsel %vm4393, 1, 0
      %v4418 = vsel %vm4394, 1, 0
      %v4419 = vsel %vm4395, 1, 0
      %v4420 = vsel %vm4396, 1, 0
      %v4421 = vsel %vm4397, 1, 0
      %v4422 = vsel %vm4398, 1, 0
      %v4423 = vsel %vm4399, 1, 0
      %v4424 = vsel %vm4400, 1, 0
      %v4425 = vcvt.s32.f32 %v4401
      %v4426 = vcvt.s32.f32 %v4402
      %v4427 = vcvt.s32.f32 %v4403
      %v4428 = vcvt.s32.f32 %v4404
      %v4429 = vcvt.s32.f32 %v4405
      %v4430 = vcvt.s32.f32 %v4406
      %v4431 = vcvt.s32.f32 %v4407
      %v4432 = vcvt.s32.f32 %v4408
      %v4433 = vcvt.s32.f32 %v4409
      %v4434 = vcvt.s32.f32 %v4410
      %v4435 = vcvt.s32.f32 %v4411
      %v4436 = vcvt.s32.f32 %v4412
      %v4437 = vcvt.s32.f32 %v4413
      %v4438 = vcvt.s32.f32 %v4414
      %v4439 = vcvt.s32.f32 %v4415
      %v4440 = vcvt.s32.f32 %v4416
      %v4441 = vcvt.s32.f32 %v4417
      %v4442 = vcvt.s32.f32 %v4418
      %v4443 = vcvt.s32.f32 %v4419
      %v4444 = vcvt.s32.f32 %v4420
      %v4445 = vcvt.s32.f32 %v4421
      %v4446 = vcvt.s32.f32 %v4422
      %v4447 = vcvt.s32.f32 %v4423
      %v4448 = vcvt.s32.f32 %v4424
      %v4449 = vadd.f32 %v4425, %v4426
      %v4450 = vadd.f32 %v4449, %v4427
      %4451 = vadd.xlane.f32.xlu0 %v4450
      %v4452 = vpop.xlane.xlu0 %4451
      %v4453 = vadd.f32 %v4428, %v4429
      %v4454 = vadd.f32 %v4453, %v4430
      %4455 = vadd.xlane.f32.xlu0 %v4454
      %v4456 = vpop.xlane.xlu0 %4455
      %v4457 = vadd.f32 %v4431, %v4432
      %v4458 = vadd.f32 %v4457, %v4433
      %4459 = vadd.xlane.f32.xlu0 %v4458
      %v4460 = vpop.xlane.xlu0 %4459
      %v4461 = vadd.f32 %v4434, %v4435
      %v4462 = vadd.f32 %v4461, %v4436
      %4463 = vadd.xlane.f32.xlu0 %v4462
      %v4464 = vpop.xlane.xlu0 %4463
      %v4465 = vadd.f32 %v4437, %v4438
      %v4466 = vadd.f32 %v4465, %v4439
      %4467 = vadd.xlane.f32.xlu0 %v4466
      %v4468 = vpop.xlane.xlu0 %4467
      %v4469 = vadd.f32 %v4440, %v4441
      %v4470 = vadd.f32 %v4469, %v4442
      %4471 = vadd.xlane.f32.xlu0 %v4470
      %v4472 = vpop.xlane.xlu0 %4471
      %v4473 = vadd.f32 %v4443, %v4444
      %v4474 = vadd.f32 %v4473, %v4445
      %4475 = vadd.xlane.f32.xlu0 %v4474
      %v4476 = vpop.xlane.xlu0 %4475
      %v4477 = vadd.f32 %v4446, %v4447
      %v4478 = vadd.f32 %v4477, %v4448
      %4479 = vadd.xlane.f32.xlu0 %v4478
      %v4480 = vpop.xlane.xlu0 %4479
      %vm4481 = vcmp.lt.f32.partialorder %v4452, 15.0
      %vm4482 = vcmp.lt.f32.partialorder %v4456, 15.0
      %vm4483 = vcmp.lt.f32.partialorder %v4460, 15.0
      %vm4484 = vcmp.lt.f32.partialorder %v4464, 15.0
      %vm4485 = vcmp.lt.f32.partialorder %v4468, 15.0
      %vm4486 = vcmp.lt.f32.partialorder %v4472, 15.0
      %vm4487 = vcmp.lt.f32.partialorder %v4476, 15.0
      %vm4488 = vcmp.lt.f32.partialorder %v4480, 15.0
      %v4489 = vsel %vm4481, %v3929, inf
      %v4490 = vsel %vm4482, %v3932, inf
      %v4491 = vsel %vm4483, %v3935, inf
      %v4492 = vsel %vm4484, %v3938, inf
      %v4493 = vsel %vm4485, %v3941, inf
      %v4494 = vsel %vm4486, %v3944, inf
      %v4495 = vsel %vm4487, %v3947, inf
      %v4496 = vsel %vm4488, %v3950, inf
      %v4497 = vmin.f32 %v4489, %v4493
      %v4498 = vmin.f32 %v4490, %v4494
      %v4499 = vmin.f32 %v4491, %v4495
      %v4500 = vmin.f32 %v4492, %v4496
      %v4501 = vmin.f32 %v4497, %v4498
      %v4502 = vmin.f32 %v4499, %v4500
      %v4503 = vmin.f32 %v4501, %v4502
      %v4504 = vrot.slane %v4503, 4
      %v4505 = vmin.f32 %v4503, %v4504
      %v4506 = vrot.slane %v4505, 2
      %v4507 = vmin.f32 %v4505, %v4506
      %v4508 = vrot.slane %v4507, 1
      %v4509 = vmin.f32 %v4507, %v4508
      %s4510 = vtos %v4509
      %vm4511 = vcmp.gt.f32.partialorder %v3531, %v3953
      %vm4512 = vcmp.gt.f32.partialorder %v3540, %v3953
      %vm4513 = vcmp.gt.f32.partialorder %v3549, %v3953
      %vm4514 = vcmp.gt.f32.partialorder %v3531, %v3956
      %vm4515 = vcmp.gt.f32.partialorder %v3540, %v3956
      %vm4516 = vcmp.gt.f32.partialorder %v3549, %v3956
      %vm4517 = vcmp.gt.f32.partialorder %v3531, %v3959
      %vm4518 = vcmp.gt.f32.partialorder %v3540, %v3959
      %vm4519 = vcmp.gt.f32.partialorder %v3549, %v3959
      %vm4520 = vcmp.gt.f32.partialorder %v3531, %v3962
      %vm4521 = vcmp.gt.f32.partialorder %v3540, %v3962
      %vm4522 = vcmp.gt.f32.partialorder %v3549, %v3962
      %vm4523 = vcmp.gt.f32.partialorder %v3531, %v3965
      %vm4524 = vcmp.gt.f32.partialorder %v3540, %v3965
      %vm4525 = vcmp.gt.f32.partialorder %v3549, %v3965
      %vm4526 = vcmp.gt.f32.partialorder %v3531, %v3968
      %vm4527 = vcmp.gt.f32.partialorder %v3540, %v3968
      %vm4528 = vcmp.gt.f32.partialorder %v3549, %v3968
      %vm4529 = vcmp.gt.f32.partialorder %v3531, %v3971
      %vm4530 = vcmp.gt.f32.partialorder %v3540, %v3971
      %vm4531 = vcmp.gt.f32.partialorder %v3549, %v3971
      %vm4532 = vcmp.gt.f32.partialorder %v3531, %v3974
      %vm4533 = vcmp.gt.f32.partialorder %v3540, %v3974
      %vm4534 = vcmp.gt.f32.partialorder %v3549, %v3974
      %v4535 = vsel %vm4511, 1, 0
      %v4536 = vsel %vm4512, 1, 0
      %v4537 = vsel %vm4513, 1, 0
      %v4538 = vsel %vm4514, 1, 0
      %v4539 = vsel %vm4515, 1, 0
      %v4540 = vsel %vm4516, 1, 0
      %v4541 = vsel %vm4517, 1, 0
      %v4542 = vsel %vm4518, 1, 0
      %v4543 = vsel %vm4519, 1, 0
      %v4544 = vsel %vm4520, 1, 0
      %v4545 = vsel %vm4521, 1, 0
      %v4546 = vsel %vm4522, 1, 0
      %v4547 = vsel %vm4523, 1, 0
      %v4548 = vsel %vm4524, 1, 0
      %v4549 = vsel %vm4525, 1, 0
      %v4550 = vsel %vm4526, 1, 0
      %v4551 = vsel %vm4527, 1, 0
      %v4552 = vsel %vm4528, 1, 0
      %v4553 = vsel %vm4529, 1, 0
      %v4554 = vsel %vm4530, 1, 0
      %v4555 = vsel %vm4531, 1, 0
      %v4556 = vsel %vm4532, 1, 0
      %v4557 = vsel %vm4533, 1, 0
      %v4558 = vsel %vm4534, 1, 0
      %v4559 = vcvt.s32.f32 %v4535
      %v4560 = vcvt.s32.f32 %v4536
      %v4561 = vcvt.s32.f32 %v4537
      %v4562 = vcvt.s32.f32 %v4538
      %v4563 = vcvt.s32.f32 %v4539
      %v4564 = vcvt.s32.f32 %v4540
      %v4565 = vcvt.s32.f32 %v4541
      %v4566 = vcvt.s32.f32 %v4542
      %v4567 = vcvt.s32.f32 %v4543
      %v4568 = vcvt.s32.f32 %v4544
      %v4569 = vcvt.s32.f32 %v4545
      %v4570 = vcvt.s32.f32 %v4546
      %v4571 = vcvt.s32.f32 %v4547
      %v4572 = vcvt.s32.f32 %v4548
      %v4573 = vcvt.s32.f32 %v4549
      %v4574 = vcvt.s32.f32 %v4550
      %v4575 = vcvt.s32.f32 %v4551
      %v4576 = vcvt.s32.f32 %v4552
      %v4577 = vcvt.s32.f32 %v4553
      %v4578 = vcvt.s32.f32 %v4554
      %v4579 = vcvt.s32.f32 %v4555
      %v4580 = vcvt.s32.f32 %v4556
      %v4581 = vcvt.s32.f32 %v4557
      %v4582 = vcvt.s32.f32 %v4558
      %v4583 = vadd.f32 %v4559, %v4560
      %v4584 = vadd.f32 %v4583, %v4561
      %4585 = vadd.xlane.f32.xlu0 %v4584
      %v4586 = vpop.xlane.xlu0 %4585
      %v4587 = vadd.f32 %v4562, %v4563
      %v4588 = vadd.f32 %v4587, %v4564
      %4589 = vadd.xlane.f32.xlu0 %v4588
      %v4590 = vpop.xlane.xlu0 %4589
      %v4591 = vadd.f32 %v4565, %v4566
      %v4592 = vadd.f32 %v4591, %v4567
      %4593 = vadd.xlane.f32.xlu0 %v4592
      %v4594 = vpop.xlane.xlu0 %4593
      %v4595 = vadd.f32 %v4568, %v4569
      %v4596 = vadd.f32 %v4595, %v4570
      %4597 = vadd.xlane.f32.xlu0 %v4596
      %v4598 = vpop.xlane.xlu0 %4597
      %v4599 = vadd.f32 %v4571, %v4572
      %v4600 = vadd.f32 %v4599, %v4573
      %4601 = vadd.xlane.f32.xlu0 %v4600
      %v4602 = vpop.xlane.xlu0 %4601
      %v4603 = vadd.f32 %v4574, %v4575
      %v4604 = vadd.f32 %v4603, %v4576
      %4605 = vadd.xlane.f32.xlu0 %v4604
      %v4606 = vpop.xlane.xlu0 %4605
      %v4607 = vadd.f32 %v4577, %v4578
      %v4608 = vadd.f32 %v4607, %v4579
      %4609 = vadd.xlane.f32.xlu0 %v4608
      %v4610 = vpop.xlane.xlu0 %4609
      %v4611 = vadd.f32 %v4580, %v4581
      %v4612 = vadd.f32 %v4611, %v4582
      %4613 = vadd.xlane.f32.xlu0 %v4612
      %v4614 = vpop.xlane.xlu0 %4613
      %vm4615 = vcmp.lt.f32.partialorder %v4586, 15.0
      %vm4616 = vcmp.lt.f32.partialorder %v4590, 15.0
      %vm4617 = vcmp.lt.f32.partialorder %v4594, 15.0
      %vm4618 = vcmp.lt.f32.partialorder %v4598, 15.0
      %vm4619 = vcmp.lt.f32.partialorder %v4602, 15.0
      %vm4620 = vcmp.lt.f32.partialorder %v4606, 15.0
      %vm4621 = vcmp.lt.f32.partialorder %v4610, 15.0
      %vm4622 = vcmp.lt.f32.partialorder %v4614, 15.0
      %v4623 = vsel %vm4615, %v3953, inf
      %v4624 = vsel %vm4616, %v3956, inf
      %v4625 = vsel %vm4617, %v3959, inf
      %v4626 = vsel %vm4618, %v3962, inf
      %v4627 = vsel %vm4619, %v3965, inf
      %v4628 = vsel %vm4620, %v3968, inf
      %v4629 = vsel %vm4621, %v3971, inf
      %v4630 = vsel %vm4622, %v3974, inf
      %v4631 = vmin.f32 %v4623, %v4627
      %v4632 = vmin.f32 %v4624, %v4628
      %v4633 = vmin.f32 %v4625, %v4629
      %v4634 = vmin.f32 %v4626, %v4630
      %v4635 = vmin.f32 %v4631, %v4632
      %v4636 = vmin.f32 %v4633, %v4634
      %v4637 = vmin.f32 %v4635, %v4636
      %v4638 = vrot.slane %v4637, 4
      %v4639 = vmin.f32 %v4637, %v4638
      %v4640 = vrot.slane %v4639, 2
      %v4641 = vmin.f32 %v4639, %v4640
      %v4642 = vrot.slane %v4641, 1
      %v4643 = vmin.f32 %v4641, %v4642
      %s4644 = vtos %v4643
      %s4645 = smin.f32 %s4108, %s4242
      %s4646 = smin.f32 %s4645, %s4376
      %s4647 = smin.f32 %s4646, %s4510
      %s4648 = smin.f32 %s4647, %s4644
      %v4649 = vstv %s4648
      %vm4650 = vcmp.ge.f32.partialorder %v3321, %v4649
      %vm4651 = vmor %vm4650, %vm586
      %v4652 = vsel %vm4651, %v3321, 0.0
      %v4653 = vadd.f32 %v4652, %v577
      %v4654 = vmul.f32 %v4653, 0.5
      %vm4655 = vcmask 253952
      %v4656 = vsel %vm4655, %v4654, 0.0
      %4657 = vadd.xlane.f32.xlu0 %v4656
      %v4658 = vpop.xlane.xlu0 %4657
      %v4659 = vrcp.pop %v4658
      %v4660 = vmul.f32 %v4654, %v4659
      %v4662 = vsel %vm1455, %v4660, 0
      %4664 = vmatprep.subr.mxu0 0.0
      %4665 = vmatpush1.msra.mxu0 %v2934
      %4666 = vmatprep.subr.mxu0 0.0
      %4667 = vmatpush1.msra.mxu0 %v2936
      %4668 = vmatprep.subr.mxu0 0.0
      %4669 = vmatpush1.msra.mxu0 %v2938
      %4670 = vmatprep.subr.mxu0 0.0
      %4671 = vmatpush1.msra.mxu0 %v2940
      %4672 = vmatprep.subr.mxu0 0.0
      %4673 = vmatpush1.msra.mxu0 0.0
      %4674 = vmatprep.subr.mxu0 0.0
      %4675 = vmatpush1.msra.mxu0 0.0
      %4676 = vmatprep.subr.mxu0 0.0
      %4677 = vmatpush1.msra.mxu0 0.0
      %4678 = vmatprep.subr.mxu0 0.0
      %4679 = vmatpush1.msra.mxu0 0.0
      %4680 = vmatprep.subr.mxu0 0.0
      %4681 = vmatpush1.msra.mxu0 0.0
      %4682 = vmatprep.subr.mxu0 0.0
      %4683 = vmatpush1.msra.mxu0 0.0
      %4684 = vmatprep.subr.mxu0 0.0
      %4685 = vmatpush1.msra.mxu0 0.0
      %4686 = vmatprep.subr.mxu0 0.0
      %4687 = vmatpush1.msra.mxu0 0.0
      %4688 = vmatprep.subr.mxu0 0.0
      %4689 = vmatpush1.msra.mxu0 0.0
      %4690 = vmatprep.subr.mxu0 0.0
      %4691 = vmatpush1.msra.mxu0 0.0
      %4692 = vmatprep.subr.mxu0 0.0
      %4693 = vmatpush1.msra.mxu0 0.0
      %4694 = vmatprep.subr.mxu0 0.0
      %4695 = vmatpush1.msra.mxu0 0.0
      %4696 = vmatprep.subr.mxu0 0.0
      %4697 = vmatpush1.msra.mxu0 0.0
      %4698 = vmatprep.subr.mxu0 0.0
      %4699 = vmatpush1.msra.mxu0 0.0
      %4700 = vmatprep.subr.mxu0 0.0
      %4701 = vmatpush1.msra.mxu0 0.0
      %4702 = vmatprep.subr.mxu0 0.0
      %4703 = vmatpush1.msra.mxu0 0.0
      %4704 = vmatprep.subr.mxu0 0.0
      %4705 = vmatpush1.msra.mxu0 0.0
      %4706 = vmatprep.subr.mxu0 0.0
      %4707 = vmatpush1.msra.mxu0 0.0
      %4708 = vmatprep.subr.mxu0 0.0
      %4709 = vmatpush1.msra.mxu0 0.0
      %4710 = vmatprep.subr.mxu0 0.0
      %4711 = vmatpush1.msra.mxu0 0.0
      %4712 = vmatprep.subr.mxu0 0.0
      %4713 = vmatpush1.msra.mxu0 0.0
      %4714 = vmatprep.subr.mxu0 0.0
      %4715 = vmatpush1.msra.mxu0 0.0
      %4716 = vmatprep.subr.mxu0 0.0
      %4717 = vmatpush1.msra.mxu0 0.0
      %4718 = vmatprep.subr.mxu0 0.0
      %4719 = vmatpush1.msra.mxu0 0.0
      %4720 = vmatprep.subr.mxu0 0.0
      %4721 = vmatpush1.msra.mxu0 0.0
      %4722 = vmatprep.subr.mxu0 0.0
      %4723 = vmatpush1.msra.mxu0 0.0
      %4724 = vmatprep.subr.mxu0 0.0
      %4725 = vmatpush1.msra.mxu0 0.0
      %4726 = vmatprep.subr.mxu0 0.0
      %4727 = vmatpush1.msra.mxu0 0.0
      %4728 = vmatprep.mubr.f32.mxu0 0.0
      %4729 = vmatmul.mubr.f32.gmra.mrb[0].mxu0 %v4662
      %v4730 = vpop.f32.mrb[0].mxu0
      %v4731 = vadd.f32 0.0, %v4730
      %v4732 = vpop.f32.mrb[0].mxu0
      %4733 = vdwg.mxu0
      %vm4734 = vcmp.ge.s32.totalorder %v568, 1
      %vm4735 = vcmp.lt.s32.totalorder %v568, 17
      %vm4736 = vmand %vm4734, %vm4735
      %v4737 = vsel %vm4736, %v4731, -inf
      %v4738 = vsel %vm4655, %v4737, -inf
      %4739 = vmax.xlane.f32.xlu0 %v4738
      %v4740 = vpop.xlane.xlu0 %4739
      %v4741 = vrot.slane %v4740, 4
      %v4742 = vmax.f32 %v4740, %v4741
      %v4743 = vrot.slane %v4742, 2
      %v4744 = vmax.f32 %v4742, %v4743
      %v4745 = vrot.slane %v4744, 1
      %v4746 = vmax.f32 %v4744, %v4745
      %s4747 = vtos %v4746
      %v4748 = vstv %s4747
      %v4749 = vrcp.pop %v4748
      %v4750 = vmul.f32 %v4731, %v4749
      %v4751 = vsel %vm1455, %v4750, 0.0
      %4752 = vst [vmem:[%s382] sm:$0x1] %v4751
      %p4753 = scmp.lt.s32.totalorder %s22, 1
      %s4754 = scalar_select %p4753, %s22, 1
      %s4755 = scalar_lea.vmem %s11, %s4754
      // Predicated region
      $region65: #{new_model_forward.2} parent=63 // pred_check
        %p4756 = pneg %p276
      $region66: #{new_model_forward.2} parent=63 // pred_check_branch
        %4758 = sbr.rel (%p4756) target = $region68
      $region67: #{new_model_forward.2} parent=63 // pred_region
        _
      $region68: #{new_model_forward.2} parent=63 // pred_fallthru
        _
    $region64: #{new_model_forward.2} parent=5 // pred_fallthru
      _
    %p4759 = scmp.le.s32.totalorder 2, %s17
    // Predicated region
    $region69: #{new_model_forward.2} parent=5 // pred_check
      %p4760 = pneg %p4759
    $region70: #{new_model_forward.2} parent=5 // pred_check_branch
      %4762 = sbr.rel (%p4760) target = $region72
    $region71: #{new_model_forward.2} parent=5 // pred_region
      %s4763 = ssub.s32 %s17, 2
      // Predicated region
      $region73: #{new_model_forward.2} parent=71 // pred_check
        %p4764 = pneg %p282
      $region74: #{new_model_forward.2} parent=71 // pred_check_branch
        %4766 = sbr.rel (%p4764) target = $region76
      $region75: #{new_model_forward.2} parent=71 // pred_region
        %p4767 = scmp.lt.s32.totalorder %s23, 1
        %s4768 = scalar_select %p4767, %s23, 1
        %s4769 = scalar_lea.vmem %s11, %s4768
      $region76: #{new_model_forward.2} parent=71 // pred_fallthru
        _
    $region72: #{new_model_forward.2} parent=5 // pred_fallthru
      _
  $region6: #{new_model_forward.2} parent=0 // loop_footer
    %s21 = sadd.s32 1, %s17
  $region7: #{new_model_forward.2} parent=0 // loop_footer_branch
    %16 = sbr.rel target = $region3
  $region8: #{new_model_forward.2} parent=0 // loop_exit
    _

</llo_original>
